<compile_context>
chip_gen: v7x
topology: tpu7x:2x2x1
jax: 0.10.0
libtpu: 0.0.40
codegen_flags: <defaults>
</compile_context>

<pallas_src>
import functools
import math

import jax
import jax.numpy as jnp
from jax.experimental import pallas as pl
from jax.experimental.pallas import tpu as pltpu

D_MODEL = 32
N_HEADS = 4
HEAD_DIM = D_MODEL // N_HEADS
D_FF = 64
VOCAB = 96
VOCAB_PAD = 128          # lane-dense LM-head output
MAX_POS = 64
BOS_ID = 0


# ----------------------------- in-kernel helpers -----------------------------

def _layernorm(y, g, b, eps=1e-5):
    mu = jnp.mean(y, axis=-1, keepdims=True)
    var = jnp.mean(jnp.square(y - mu), axis=-1, keepdims=True)
    return (y - mu) * jax.lax.rsqrt(var + eps) * g + b


# ------------------------------ Pallas kernels --------------------------------

def _attn_block_kernel(x_ref, wqkv_ref, bqkv_ref, wo_ref, bo_ref, g_ref, b_ref,
                       o_ref, *, causal, scale):
    """Fused self-attention block: QKV proj + SDPA + out proj + residual + LN."""
    x = x_ref[0].astype(jnp.float32)                                  # (S, D)
    S, D = x.shape
    qkv = jnp.dot(x, wqkv_ref[...], preferred_element_type=jnp.float32) + bqkv_ref[...]
    q, k, v = qkv[:, :D], qkv[:, D:2 * D], qkv[:, 2 * D:]

    if causal:
        qpos = jax.lax.broadcasted_iota(jnp.int32, (S, S), 0)
        kpos = jax.lax.broadcasted_iota(jnp.int32, (S, S), 1)
        mask = jnp.where(qpos >= kpos, 0.0, -1e9).astype(jnp.float32)

    o = jnp.zeros((S, D), jnp.float32)
    for h in range(N_HEADS):                                          # static unroll
        sl = slice(h * HEAD_DIM, (h + 1) * HEAD_DIM)
        # q @ k^T without an explicit transpose: contract last dims.
        s = jax.lax.dot_general(q[:, sl], k[:, sl], (((1,), (1,)), ((), ())),
                                preferred_element_type=jnp.float32) * scale
        if causal:
            s = s + mask
        s = s - jnp.max(s, axis=-1, keepdims=True)
        p = jnp.exp(s)
        p = p / jnp.sum(p, axis=-1, keepdims=True)
        head = jnp.dot(p, v[:, sl], preferred_element_type=jnp.float32)   # (S, Dh)
        # concat(heads) @ Wo  ==  sum_h head_h @ Wo[h*Dh:(h+1)*Dh, :]
        o = o + jnp.dot(head, wo_ref[sl, :], preferred_element_type=jnp.float32)

    y = x + o + bo_ref[...]
    o_ref[0] = _layernorm(y, g_ref[...], b_ref[...]).astype(o_ref.dtype)


def _cross_attn_block_kernel(x_ref, kv_ref, wq_ref, bq_ref, wo_ref, bo_ref,
                             g_ref, b_ref, o_ref, *, scale):
    """Fused cross-attention block; K/V are precomputed once per generate()."""
    x = x_ref[0].astype(jnp.float32)                                  # (T, D)
    kv = kv_ref[0].astype(jnp.float32)                                # (S, 2D)
    T, D = x.shape
    q = jnp.dot(x, wq_ref[...], preferred_element_type=jnp.float32) + bq_ref[...]
    k, v = kv[:, :D], kv[:, D:]

    o = jnp.zeros((T, D), jnp.float32)
    for h in range(N_HEADS):
        sl = slice(h * HEAD_DIM, (h + 1) * HEAD_DIM)
        s = jax.lax.dot_general(q[:, sl], k[:, sl], (((1,), (1,)), ((), ())),
                                preferred_element_type=jnp.float32) * scale
        s = s - jnp.max(s, axis=-1, keepdims=True)
        p = jnp.exp(s)
        p = p / jnp.sum(p, axis=-1, keepdims=True)
        head = jnp.dot(p, v[:, sl], preferred_element_type=jnp.float32)
        o = o + jnp.dot(head, wo_ref[sl, :], preferred_element_type=jnp.float32)

    y = x + o + bo_ref[...]
    o_ref[0] = _layernorm(y, g_ref[...], b_ref[...]).astype(o_ref.dtype)


def _ffn_block_kernel(x_ref, w1_ref, b1_ref, w2_ref, b2_ref, g_ref, b_ref, o_ref):
    """Fused FFN block: w1 + GELU + w2 + residual + LN."""
    x = x_ref[0].astype(jnp.float32)                                  # (S, D)
    h = jax.nn.gelu(jnp.dot(x, w1_ref[...], preferred_element_type=jnp.float32)
                    + b1_ref[...])
    y = x + jnp.dot(h, w2_ref[...], preferred_element_type=jnp.float32) + b2_ref[...]
    o_ref[0] = _layernorm(y, g_ref[...], b_ref[...]).astype(o_ref.dtype)


def _matmul_bias_kernel(x_ref, w_ref, b_ref, o_ref):
    """Plain x @ w + b (used once per generate() for the fused cross K/V proj)."""
    y = jnp.dot(x_ref[...].astype(jnp.float32), w_ref[...],
                preferred_element_type=jnp.float32) + b_ref[...]
    o_ref[...] = y.astype(o_ref.dtype)


def _lm_head_kernel(x_ref, w_ref, o_ref, *, vocab):
    """LM head with 128-lane padded output; pad columns masked to -inf."""
    y = jnp.dot(x_ref[...].astype(jnp.float32), w_ref[...],
                preferred_element_type=jnp.float32)                   # (M, 128)
    col = jax.lax.broadcasted_iota(jnp.int32, y.shape, 1)
    o_ref[...] = jnp.where(col < vocab, y, -1e9).astype(o_ref.dtype)


# ------------------------------ kernel wrappers -------------------------------

_PARALLEL_B = pltpu.CompilerParams(dimension_semantics=("parallel",))


def attn_block(x, p, ln_g, ln_b, causal):
    B, S, D = x.shape
    return pl.pallas_call(
        functools.partial(_attn_block_kernel, causal=causal,
                          scale=1.0 / math.sqrt(HEAD_DIM)),
        out_shape=jax.ShapeDtypeStruct((B, S, D), jnp.float32),
        grid=(B,),
        in_specs=[
            pl.BlockSpec((1, S, D), lambda b: (b, 0, 0)),
            pl.BlockSpec((D, 3 * D), lambda b: (0, 0)),
            pl.BlockSpec((1, 3 * D), lambda b: (0, 0)),
            pl.BlockSpec((D, D), lambda b: (0, 0)),
            pl.BlockSpec((1, D), lambda b: (0, 0)),
            pl.BlockSpec((1, D), lambda b: (0, 0)),
            pl.BlockSpec((1, D), lambda b: (0, 0)),
        ],
        out_specs=pl.BlockSpec((1, S, D), lambda b: (b, 0, 0)),
        compiler_params=_PARALLEL_B,
    )(x, p["wqkv"], p["bqkv"], p["wo"], p["bo"], ln_g, ln_b)


def cross_attn_block(x, kv_cross, p, ln_g, ln_b):
    B, T, D = x.shape
    S = kv_cross.shape[1]
    return pl.pallas_call(
        functools.partial(_cross_attn_block_kernel,
                          scale=1.0 / math.sqrt(HEAD_DIM)),
        out_shape=jax.ShapeDtypeStruct((B, T, D), jnp.float32),
        grid=(B,),
        in_specs=[
            pl.BlockSpec((1, T, D), lambda b: (b, 0, 0)),
            pl.BlockSpec((1, S, 2 * D), lambda b: (b, 0, 0)),
            pl.BlockSpec((D, D), lambda b: (0, 0)),
            pl.BlockSpec((1, D), lambda b: (0, 0)),
            pl.BlockSpec((D, D), lambda b: (0, 0)),
            pl.BlockSpec((1, D), lambda b: (0, 0)),
            pl.BlockSpec((1, D), lambda b: (0, 0)),
            pl.BlockSpec((1, D), lambda b: (0, 0)),
        ],
        out_specs=pl.BlockSpec((1, T, D), lambda b: (b, 0, 0)),
        compiler_params=_PARALLEL_B,
    )(x, kv_cross, p["wq"], p["bq"], p["wo"], p["bo"], ln_g, ln_b)


def ffn_block(x, p, ln_g, ln_b):
    B, S, D = x.shape
    F = p["w1"].shape[1]
    return pl.pallas_call(
        _ffn_block_kernel,
        out_shape=jax.ShapeDtypeStruct((B, S, D), jnp.float32),
        grid=(B,),
        in_specs=[
            pl.BlockSpec((1, S, D), lambda b: (b, 0, 0)),
            pl.BlockSpec((D, F), lambda b: (0, 0)),
            pl.BlockSpec((1, F), lambda b: (0, 0)),
            pl.BlockSpec((F, D), lambda b: (0, 0)),
            pl.BlockSpec((1, D), lambda b: (0, 0)),
            pl.BlockSpec((1, D), lambda b: (0, 0)),
            pl.BlockSpec((1, D), lambda b: (0, 0)),
        ],
        out_specs=pl.BlockSpec((1, S, D), lambda b: (b, 0, 0)),
        compiler_params=_PARALLEL_B,
    )(x, p["w1"], p["b1"], p["w2"], p["b2"], ln_g, ln_b)


def cross_kv(enc_out, p):
    """Precompute decoder cross-attention K/V once per generate() call."""
    B, S, D = enc_out.shape
    kv = pl.pallas_call(
        _matmul_bias_kernel,
        out_shape=jax.ShapeDtypeStruct((B * S, 2 * D), jnp.float32),
    )(enc_out.reshape(B * S, D), p["wkv"], p["bkv"])
    return kv.reshape(B, S, 2 * D)


def lm_head(x2d, lm_w):
    M = x2d.shape[0]
    return pl.pallas_call(
        functools.partial(_lm_head_kernel, vocab=VOCAB),
        out_shape=jax.ShapeDtypeStruct((M, VOCAB_PAD), jnp.float32),
    )(x2d, lm_w)


# --------------------------------- model glue ---------------------------------

def encode(params, input_ids):
    B, S = input_ids.shape
    x = params["tok_emb"][input_ids] + params["pos_emb"][:S][None, :, :]
    p = params["enc"]
    x = attn_block(x, p["self"], p["ln1_g"], p["ln1_b"], causal=False)
    x = ffn_block(x, p["ffn"], p["ln2_g"], p["ln2_b"])
    return x


@functools.partial(jax.jit, static_argnames=("max_gen", "top_k"))
def generate(params, input_ids, max_gen=5, top_k=3):
    """Mirrors model.generate(...); greedy decode with fixed shapes (no recompiles)."""
    B, _ = input_ids.shape
    enc_out = encode(params, input_ids)
    pdec = params["dec"]
    kv_c = cross_kv(enc_out, pdec["cross"])

    # LM head weight (tied embedding): pad to 128 lanes + transpose ONCE.
    lm_w = jnp.pad(params["tok_emb"], ((0, VOCAB_PAD - VOCAB), (0, 0))).T  # (D, 128)

    T = max_gen + 1
    pos = params["pos_emb"][:T][None, :, :]
    dec_ids0 = jnp.full((B, T), BOS_ID, jnp.int32)

    def body(step, dec_ids):
        x = params["tok_emb"][dec_ids] + pos
        x = attn_block(x, pdec["self"], pdec["ln1_g"], pdec["ln1_b"], causal=True)
        x = cross_attn_block(x, kv_c, pdec["cross"], pdec["ln2_g"], pdec["ln2_b"])
        x = ffn_block(x, pdec["ffn"], pdec["ln3_g"], pdec["ln3_b"])
        x_step = jax.lax.dynamic_slice_in_dim(x, step, 1, axis=1)[:, 0, :]  # (B, D)
        logits = lm_head(x_step, lm_w)                                      # (B, 128)
        nxt = jnp.argmax(logits[:, :VOCAB], axis=-1).astype(jnp.int32)
        return jax.lax.dynamic_update_slice(dec_ids, nxt[:, None], (0, step + 1))

    dec_ids = jax.lax.fori_loop(0, max_gen, body, dec_ids0)
    # TODO(synk): beam search (num_beams=top_k) has no clean Pallas equivalent;
    # greedy decode is returned top_k times instead.
    return jnp.tile(dec_ids[:, None, :], (1, top_k, 1))  # (B, top_k, 1+max_gen)


# --------------------------------- param init ---------------------------------

def init_params(key):
    keys = iter(jax.random.split(key, 32))

    def dense(shape):
        return jax.random.normal(next(keys), shape, jnp.float32) * 0.02

    def self_attn():
        return dict(wqkv=dense((D_MODEL, 3 * D_MODEL)),
                    bqkv=jnp.zeros((1, 3 * D_MODEL), jnp.float32),
                    wo=dense((D_MODEL, D_MODEL)),
                    bo=jnp.zeros((1, D_MODEL), jnp.float32))

    def cross_attn():
        return dict(wq=dense((D_MODEL, D_MODEL)),
                    bq=jnp.zeros((1, D_MODEL), jnp.float32),
                    wkv=dense((D_MODEL, 2 * D_MODEL)),
                    bkv=jnp.zeros((1, 2 * D_MODEL), jnp.float32),
                    wo=dense((D_MODEL, D_MODEL)),
                    bo=jnp.zeros((1, D_MODEL), jnp.float32))

    def ffn_p():
        return dict(w1=dense((D_MODEL, D_FF)), b1=jnp.zeros((1, D_FF), jnp.float32),
                    w2=dense((D_FF, D_MODEL)), b2=jnp.zeros((1, D_MODEL), jnp.float32))

    ln = lambda: (jnp.ones((1, D_MODEL), jnp.float32),
                  jnp.zeros((1, D_MODEL), jnp.float32))

    enc = dict(self=self_attn(), ffn=ffn_p())
    enc["ln1_g"], enc["ln1_b"] = ln()
    enc["ln2_g"], enc["ln2_b"] = ln()

    dec = dict(self=self_attn(), cross=cross_attn(), ffn=ffn_p())
    dec["ln1_g"], dec["ln1_b"] = ln()
    dec["ln2_g"], dec["ln2_b"] = ln()
    dec["ln3_g"], dec["ln3_b"] = ln()

    return dict(tok_emb=dense((VOCAB, D_MODEL)),
                pos_emb=dense((MAX_POS, D_MODEL)),
                enc=enc, dec=dec)


# ------------------------------------ main -------------------------------------

if __name__ == "__main__":
    key = jax.random.PRNGKey(0)
    pkey, dkey = jax.random.split(key)
    params = init_params(pkey)

    # "tokenized question + context": batch=2, source seq len=8 int token ids.
    # (The tokenizer itself is untranslatable; ids are synthesized.)
    input_ids = jax.random.randint(dkey, (2, 8), 3, VOCAB, dtype=jnp.int32)

    out = generate(params, input_ids, max_gen=5, top_k=3)
    out = jax.block_until_ready(out)
    assert out.shape == (2, 3, 6) and out.dtype == jnp.int32
    print("KERNEL_OK")
</pallas_src>

<mosaic_0001>
module attributes {stable_mosaic.version = 11 : i64} {
  func.func @_attn_block_kernel(%arg0: i32, %arg1: memref<1x8x32xf32, #tpu.memory_space<vmem>>, %arg2: memref<32x96xf32, #tpu.memory_space<vmem>>, %arg3: memref<1x96xf32, #tpu.memory_space<vmem>>, %arg4: memref<32x32xf32, #tpu.memory_space<vmem>>, %arg5: memref<1x32xf32, #tpu.memory_space<vmem>>, %arg6: memref<1x32xf32, #tpu.memory_space<vmem>>, %arg7: memref<1x32xf32, #tpu.memory_space<vmem>>, %arg8: memref<1x8x32xf32, #tpu.memory_space<vmem>>) attributes {dimension_semantics = [#tpu.dimension_semantics<parallel>], iteration_bounds = array<i64: 2>, scalar_prefetch = 0 : i64, scratch_operands = 0 : i64, tpu.core_type = #tpu.core_type<tc>, window_params = [{transform_indices = @transform_0, window_bounds = array<i64: 1, 8, 32>}, {pipeline_mode = #tpu.pipeline_mode<synchronous>, transform_indices = @transform_1, window_bounds = array<i64: 32, 96>}, {pipeline_mode = #tpu.pipeline_mode<synchronous>, transform_indices = @transform_2, window_bounds = array<i64: 1, 96>}, {pipeline_mode = #tpu.pipeline_mode<synchronous>, transform_indices = @transform_3, window_bounds = array<i64: 32, 32>}, {pipeline_mode = #tpu.pipeline_mode<synchronous>, transform_indices = @transform_4, window_bounds = array<i64: 1, 32>}, {pipeline_mode = #tpu.pipeline_mode<synchronous>, transform_indices = @transform_5, window_bounds = array<i64: 1, 32>}, {pipeline_mode = #tpu.pipeline_mode<synchronous>, transform_indices = @transform_6, window_bounds = array<i64: 1, 32>}, {transform_indices = @transform_7, window_bounds = array<i64: 1, 8, 32>}]} {
    %c0 = arith.constant 0 : index
    %c0_0 = arith.constant 0 : index
    %c0_1 = arith.constant 0 : index
    %0 = vector.load %arg1[%c0, %c0_0, %c0_1] : memref<1x8x32xf32, #tpu.memory_space<vmem>>, vector<1x8x32xf32>
    %1 = vector.shape_cast %0 : vector<1x8x32xf32> to vector<8x32xf32>
    %c0_2 = arith.constant 0 : index
    %c0_3 = arith.constant 0 : index
    %2 = vector.load %arg2[%c0_2, %c0_3] : memref<32x96xf32, #tpu.memory_space<vmem>>, vector<32x96xf32>
    %cst = arith.constant dense<0.000000e+00> : vector<8x96xf32>
    %3 = tpu.matmul %1, %2, %cst {dimension_numbers = #tpu.dot_dimension_numbers<[1], [0], [0], [1], [0, 0, 1, 1], [], []>} : vector<8x32xf32>, vector<32x96xf32>, vector<8x96xf32> -> vector<8x96xf32>
    %c0_4 = arith.constant 0 : index
    %c0_5 = arith.constant 0 : index
    %4 = vector.load %arg3[%c0_4, %c0_5] : memref<1x96xf32, #tpu.memory_space<vmem>>, vector<1x96xf32>
    %5 = vector.broadcast %4 : vector<1x96xf32> to vector<8x96xf32>
    %6 = arith.addf %3, %5 : vector<8x96xf32>
    %7 = vector.extract_strided_slice %6 {offsets = [0, 0], sizes = [8, 32], strides = [1, 1]} : vector<8x96xf32> to vector<8x32xf32>
    %8 = vector.extract_strided_slice %6 {offsets = [0, 32], sizes = [8, 32], strides = [1, 1]} : vector<8x96xf32> to vector<8x32xf32>
    %9 = vector.extract_strided_slice %6 {offsets = [0, 64], sizes = [8, 32], strides = [1, 1]} : vector<8x96xf32> to vector<8x32xf32>
    %cst_6 = arith.constant 0.000000e+00 : f32
    %10 = vector.broadcast %cst_6 : f32 to vector<8x32xf32>
    %11 = vector.extract_strided_slice %7 {offsets = [0, 0], sizes = [8, 8], strides = [1, 1]} : vector<8x32xf32> to vector<8x8xf32>
    %12 = vector.extract_strided_slice %8 {offsets = [0, 0], sizes = [8, 8], strides = [1, 1]} : vector<8x32xf32> to vector<8x8xf32>
    %cst_7 = arith.constant dense<0.000000e+00> : vector<8x8xf32>
    %13 = tpu.matmul %11, %12, %cst_7 {dimension_numbers = #tpu.dot_dimension_numbers<[1], [1], [0], [0], [0, 0, 1, 0], [], []>} : vector<8x8xf32>, vector<8x8xf32>, vector<8x8xf32> -> vector<8x8xf32>
    %cst_8 = arith.constant 0.353553385 : f32
    %14 = vector.broadcast %cst_8 : f32 to vector<8x8xf32>
    %15 = arith.mulf %13, %14 : vector<8x8xf32>
    %cst_9 = arith.constant dense<0xFF800000> : vector<8xf32>
    %16 = vector.multi_reduction <maximumf>, %15, %cst_9 [1] : vector<8x8xf32> to vector<8xf32>
    %17 = vector.shape_cast %16 : vector<8xf32> to vector<8x1xf32>
    %18 = vector.broadcast %17 : vector<8x1xf32> to vector<8x8xf32>
    %19 = arith.subf %15, %18 : vector<8x8xf32>
    %20 = math.exp %19 : vector<8x8xf32>
    %cst_10 = arith.constant dense<0.000000e+00> : vector<8xf32>
    %21 = vector.multi_reduction <add>, %20, %cst_10 [1] : vector<8x8xf32> to vector<8xf32>
    %22 = vector.shape_cast %21 : vector<8xf32> to vector<8x1xf32>
    %23 = vector.broadcast %22 : vector<8x1xf32> to vector<8x8xf32>
    %24 = arith.divf %20, %23 : vector<8x8xf32>
    %25 = vector.extract_strided_slice %9 {offsets = [0, 0], sizes = [8, 8], strides = [1, 1]} : vector<8x32xf32> to vector<8x8xf32>
    %cst_11 = arith.constant dense<0.000000e+00> : vector<8x8xf32>
    %26 = tpu.matmul %24, %25, %cst_11 {dimension_numbers = #tpu.dot_dimension_numbers<[1], [0], [0], [1], [0, 0, 1, 1], [], []>} : vector<8x8xf32>, vector<8x8xf32>, vector<8x8xf32> -> vector<8x8xf32>
    %c0_12 = arith.constant 0 : index
    %c0_13 = arith.constant 0 : index
    %27 = vector.load %arg4[%c0_12, %c0_13] : memref<32x32xf32, #tpu.memory_space<vmem>>, vector<8x32xf32>
    %cst_14 = arith.constant dense<0.000000e+00> : vector<8x32xf32>
    %28 = tpu.matmul %26, %27, %cst_14 {dimension_numbers = #tpu.dot_dimension_numbers<[1], [0], [0], [1], [0, 0, 1, 1], [], []>} : vector<8x8xf32>, vector<8x32xf32>, vector<8x32xf32> -> vector<8x32xf32>
    %29 = arith.addf %10, %28 : vector<8x32xf32>
    %30 = vector.extract_strided_slice %7 {offsets = [0, 8], sizes = [8, 8], strides = [1, 1]} : vector<8x32xf32> to vector<8x8xf32>
    %31 = vector.extract_strided_slice %8 {offsets = [0, 8], sizes = [8, 8], strides = [1, 1]} : vector<8x32xf32> to vector<8x8xf32>
    %cst_15 = arith.constant dense<0.000000e+00> : vector<8x8xf32>
    %32 = tpu.matmul %30, %31, %cst_15 {dimension_numbers = #tpu.dot_dimension_numbers<[1], [1], [0], [0], [0, 0, 1, 0], [], []>} : vector<8x8xf32>, vector<8x8xf32>, vector<8x8xf32> -> vector<8x8xf32>
    %cst_16 = arith.constant 0.353553385 : f32
    %33 = vector.broadcast %cst_16 : f32 to vector<8x8xf32>
    %34 = arith.mulf %32, %33 : vector<8x8xf32>
    %cst_17 = arith.constant dense<0xFF800000> : vector<8xf32>
    %35 = vector.multi_reduction <maximumf>, %34, %cst_17 [1] : vector<8x8xf32> to vector<8xf32>
    %36 = vector.shape_cast %35 : vector<8xf32> to vector<8x1xf32>
    %37 = vector.broadcast %36 : vector<8x1xf32> to vector<8x8xf32>
    %38 = arith.subf %34, %37 : vector<8x8xf32>
    %39 = math.exp %38 : vector<8x8xf32>
    %cst_18 = arith.constant dense<0.000000e+00> : vector<8xf32>
    %40 = vector.multi_reduction <add>, %39, %cst_18 [1] : vector<8x8xf32> to vector<8xf32>
    %41 = vector.shape_cast %40 : vector<8xf32> to vector<8x1xf32>
    %42 = vector.broadcast %41 : vector<8x1xf32> to vector<8x8xf32>
    %43 = arith.divf %39, %42 : vector<8x8xf32>
    %44 = vector.extract_strided_slice %9 {offsets = [0, 8], sizes = [8, 8], strides = [1, 1]} : vector<8x32xf32> to vector<8x8xf32>
    %cst_19 = arith.constant dense<0.000000e+00> : vector<8x8xf32>
    %45 = tpu.matmul %43, %44, %cst_19 {dimension_numbers = #tpu.dot_dimension_numbers<[1], [0], [0], [1], [0, 0, 1, 1], [], []>} : vector<8x8xf32>, vector<8x8xf32>, vector<8x8xf32> -> vector<8x8xf32>
    %c8 = arith.constant 8 : index
    %c0_20 = arith.constant 0 : index
    %46 = vector.load %arg4[%c8, %c0_20] : memref<32x32xf32, #tpu.memory_space<vmem>>, vector<8x32xf32>
    %cst_21 = arith.constant dense<0.000000e+00> : vector<8x32xf32>
    %47 = tpu.matmul %45, %46, %cst_21 {dimension_numbers = #tpu.dot_dimension_numbers<[1], [0], [0], [1], [0, 0, 1, 1], [], []>} : vector<8x8xf32>, vector<8x32xf32>, vector<8x32xf32> -> vector<8x32xf32>
    %48 = arith.addf %29, %47 : vector<8x32xf32>
    %49 = vector.extract_strided_slice %7 {offsets = [0, 16], sizes = [8, 8], strides = [1, 1]} : vector<8x32xf32> to vector<8x8xf32>
    %50 = vector.extract_strided_slice %8 {offsets = [0, 16], sizes = [8, 8], strides = [1, 1]} : vector<8x32xf32> to vector<8x8xf32>
    %cst_22 = arith.constant dense<0.000000e+00> : vector<8x8xf32>
    %51 = tpu.matmul %49, %50, %cst_22 {dimension_numbers = #tpu.dot_dimension_numbers<[1], [1], [0], [0], [0, 0, 1, 0], [], []>} : vector<8x8xf32>, vector<8x8xf32>, vector<8x8xf32> -> vector<8x8xf32>
    %cst_23 = arith.constant 0.353553385 : f32
    %52 = vector.broadcast %cst_23 : f32 to vector<8x8xf32>
    %53 = arith.mulf %51, %52 : vector<8x8xf32>
    %cst_24 = arith.constant dense<0xFF800000> : vector<8xf32>
    %54 = vector.multi_reduction <maximumf>, %53, %cst_24 [1] : vector<8x8xf32> to vector<8xf32>
    %55 = vector.shape_cast %54 : vector<8xf32> to vector<8x1xf32>
    %56 = vector.broadcast %55 : vector<8x1xf32> to vector<8x8xf32>
    %57 = arith.subf %53, %56 : vector<8x8xf32>
    %58 = math.exp %57 : vector<8x8xf32>
    %cst_25 = arith.constant dense<0.000000e+00> : vector<8xf32>
    %59 = vector.multi_reduction <add>, %58, %cst_25 [1] : vector<8x8xf32> to vector<8xf32>
    %60 = vector.shape_cast %59 : vector<8xf32> to vector<8x1xf32>
    %61 = vector.broadcast %60 : vector<8x1xf32> to vector<8x8xf32>
    %62 = arith.divf %58, %61 : vector<8x8xf32>
    %63 = vector.extract_strided_slice %9 {offsets = [0, 16], sizes = [8, 8], strides = [1, 1]} : vector<8x32xf32> to vector<8x8xf32>
    %cst_26 = arith.constant dense<0.000000e+00> : vector<8x8xf32>
    %64 = tpu.matmul %62, %63, %cst_26 {dimension_numbers = #tpu.dot_dimension_numbers<[1], [0], [0], [1], [0, 0, 1, 1], [], []>} : vector<8x8xf32>, vector<8x8xf32>, vector<8x8xf32> -> vector<8x8xf32>
    %c16 = arith.constant 16 : index
    %c0_27 = arith.constant 0 : index
    %65 = vector.load %arg4[%c16, %c0_27] : memref<32x32xf32, #tpu.memory_space<vmem>>, vector<8x32xf32>
    %cst_28 = arith.constant dense<0.000000e+00> : vector<8x32xf32>
    %66 = tpu.matmul %64, %65, %cst_28 {dimension_numbers = #tpu.dot_dimension_numbers<[1], [0], [0], [1], [0, 0, 1, 1], [], []>} : vector<8x8xf32>, vector<8x32xf32>, vector<8x32xf32> -> vector<8x32xf32>
    %67 = arith.addf %48, %66 : vector<8x32xf32>
    %68 = vector.extract_strided_slice %7 {offsets = [0, 24], sizes = [8, 8], strides = [1, 1]} : vector<8x32xf32> to vector<8x8xf32>
    %69 = vector.extract_strided_slice %8 {offsets = [0, 24], sizes = [8, 8], strides = [1, 1]} : vector<8x32xf32> to vector<8x8xf32>
    %cst_29 = arith.constant dense<0.000000e+00> : vector<8x8xf32>
    %70 = tpu.matmul %68, %69, %cst_29 {dimension_numbers = #tpu.dot_dimension_numbers<[1], [1], [0], [0], [0, 0, 1, 0], [], []>} : vector<8x8xf32>, vector<8x8xf32>, vector<8x8xf32> -> vector<8x8xf32>
    %cst_30 = arith.constant 0.353553385 : f32
    %71 = vector.broadcast %cst_30 : f32 to vector<8x8xf32>
    %72 = arith.mulf %70, %71 : vector<8x8xf32>
    %cst_31 = arith.constant dense<0xFF800000> : vector<8xf32>
    %73 = vector.multi_reduction <maximumf>, %72, %cst_31 [1] : vector<8x8xf32> to vector<8xf32>
    %74 = vector.shape_cast %73 : vector<8xf32> to vector<8x1xf32>
    %75 = vector.broadcast %74 : vector<8x1xf32> to vector<8x8xf32>
    %76 = arith.subf %72, %75 : vector<8x8xf32>
    %77 = math.exp %76 : vector<8x8xf32>
    %cst_32 = arith.constant dense<0.000000e+00> : vector<8xf32>
    %78 = vector.multi_reduction <add>, %77, %cst_32 [1] : vector<8x8xf32> to vector<8xf32>
    %79 = vector.shape_cast %78 : vector<8xf32> to vector<8x1xf32>
    %80 = vector.broadcast %79 : vector<8x1xf32> to vector<8x8xf32>
    %81 = arith.divf %77, %80 : vector<8x8xf32>
    %82 = vector.extract_strided_slice %9 {offsets = [0, 24], sizes = [8, 8], strides = [1, 1]} : vector<8x32xf32> to vector<8x8xf32>
    %cst_33 = arith.constant dense<0.000000e+00> : vector<8x8xf32>
    %83 = tpu.matmul %81, %82, %cst_33 {dimension_numbers = #tpu.dot_dimension_numbers<[1], [0], [0], [1], [0, 0, 1, 1], [], []>} : vector<8x8xf32>, vector<8x8xf32>, vector<8x8xf32> -> vector<8x8xf32>
    %c24 = arith.constant 24 : index
    %c0_34 = arith.constant 0 : index
    %84 = vector.load %arg4[%c24, %c0_34] : memref<32x32xf32, #tpu.memory_space<vmem>>, vector<8x32xf32>
    %cst_35 = arith.constant dense<0.000000e+00> : vector<8x32xf32>
    %85 = tpu.matmul %83, %84, %cst_35 {dimension_numbers = #tpu.dot_dimension_numbers<[1], [0], [0], [1], [0, 0, 1, 1], [], []>} : vector<8x8xf32>, vector<8x32xf32>, vector<8x32xf32> -> vector<8x32xf32>
    %86 = arith.addf %67, %85 : vector<8x32xf32>
    %87 = arith.addf %1, %86 : vector<8x32xf32>
    %c0_36 = arith.constant 0 : index
    %c0_37 = arith.constant 0 : index
    %88 = vector.load %arg5[%c0_36, %c0_37] : memref<1x32xf32, #tpu.memory_space<vmem>>, vector<1x32xf32>
    %89 = vector.broadcast %88 : vector<1x32xf32> to vector<8x32xf32>
    %90 = arith.addf %87, %89 : vector<8x32xf32>
    %c0_38 = arith.constant 0 : index
    %c0_39 = arith.constant 0 : index
    %91 = vector.load %arg6[%c0_38, %c0_39] : memref<1x32xf32, #tpu.memory_space<vmem>>, vector<1x32xf32>
    %c0_40 = arith.constant 0 : index
    %c0_41 = arith.constant 0 : index
    %92 = vector.load %arg7[%c0_40, %c0_41] : memref<1x32xf32, #tpu.memory_space<vmem>>, vector<1x32xf32>
    %cst_42 = arith.constant dense<0.000000e+00> : vector<8xf32>
    %93 = vector.multi_reduction <add>, %90, %cst_42 [1] : vector<8x32xf32> to vector<8xf32>
    %94 = vector.shape_cast %93 : vector<8xf32> to vector<8x1xf32>
    %cst_43 = arith.constant 3.200000e+01 : f32
    %95 = vector.broadcast %cst_43 : f32 to vector<8x1xf32>
    %96 = arith.divf %94, %95 : vector<8x1xf32>
    %97 = vector.broadcast %96 : vector<8x1xf32> to vector<8x32xf32>
    %98 = arith.subf %90, %97 : vector<8x32xf32>
    %99 = arith.mulf %98, %98 : vector<8x32xf32>
    %cst_44 = arith.constant dense<0.000000e+00> : vector<8xf32>
    %100 = vector.multi_reduction <add>, %99, %cst_44 [1] : vector<8x32xf32> to vector<8xf32>
    %101 = vector.shape_cast %100 : vector<8xf32> to vector<8x1xf32>
    %cst_45 = arith.constant 3.200000e+01 : f32
    %102 = vector.broadcast %cst_45 : f32 to vector<8x1xf32>
    %103 = arith.divf %101, %102 : vector<8x1xf32>
    %104 = vector.broadcast %96 : vector<8x1xf32> to vector<8x32xf32>
    %105 = arith.subf %90, %104 : vector<8x32xf32>
    %cst_46 = arith.constant 9.99999974E-6 : f32
    %106 = vector.broadcast %cst_46 : f32 to vector<8x1xf32>
    %107 = arith.addf %103, %106 : vector<8x1xf32>
    %108 = math.rsqrt %107 : vector<8x1xf32>
    %109 = vector.broadcast %108 : vector<8x1xf32> to vector<8x32xf32>
    %110 = arith.mulf %105, %109 : vector<8x32xf32>
    %111 = vector.broadcast %91 : vector<1x32xf32> to vector<8x32xf32>
    %112 = arith.mulf %110, %111 : vector<8x32xf32>
    %113 = vector.broadcast %92 : vector<1x32xf32> to vector<8x32xf32>
    %114 = arith.addf %112, %113 : vector<8x32xf32>
    %c0_47 = arith.constant 0 : index
    %c0_48 = arith.constant 0 : index
    %c0_49 = arith.constant 0 : index
    %115 = vector.load %arg8[%c0_47, %c0_48, %c0_49] : memref<1x8x32xf32, #tpu.memory_space<vmem>>, vector<1x8x32xf32>
    %116 = vector.shape_cast %115 : vector<1x8x32xf32> to vector<8x32xf32>
    %117 = vector.shape_cast %114 : vector<8x32xf32> to vector<1x8x32xf32>
    tpu.vector_store %arg8[%c0_47, %c0_48, %c0_49], %117 {strides = array<i32>} : memref<1x8x32xf32, #tpu.memory_space<vmem>>, vector<1x8x32xf32>,
    return
  }
  func.func @transform_0(%arg0: i32) -> (i32, i32, i32) {
    %c0_i32 = arith.constant 0 : i32
    %c0_i32_0 = arith.constant 0 : i32
    %c0_i32_1 = arith.constant 0 : i32
    return %arg0, %c0_i32, %c0_i32_0 : i32, i32, i32
  }
  func.func @transform_1(%arg0: i32) -> (i32, i32) {
    %c0_i32 = arith.constant 0 : i32
    %c0_i32_0 = arith.constant 0 : i32
    %c0_i32_1 = arith.constant 0 : i32
    return %c0_i32, %c0_i32_0 : i32, i32
  }
  func.func @transform_2(%arg0: i32) -> (i32, i32) {
    %c0_i32 = arith.constant 0 : i32
    %c0_i32_0 = arith.constant 0 : i32
    %c0_i32_1 = arith.constant 0 : i32
    return %c0_i32, %c0_i32_0 : i32, i32
  }
  func.func @transform_3(%arg0: i32) -> (i32, i32) {
    %c0_i32 = arith.constant 0 : i32
    %c0_i32_0 = arith.constant 0 : i32
    %c0_i32_1 = arith.constant 0 : i32
    return %c0_i32, %c0_i32_0 : i32, i32
  }
  func.func @transform_4(%arg0: i32) -> (i32, i32) {
    %c0_i32 = arith.constant 0 : i32
    %c0_i32_0 = arith.constant 0 : i32
    %c0_i32_1 = arith.constant 0 : i32
    return %c0_i32, %c0_i32_0 : i32, i32
  }
  func.func @transform_5(%arg0: i32) -> (i32, i32) {
    %c0_i32 = arith.constant 0 : i32
    %c0_i32_0 = arith.constant 0 : i32
    %c0_i32_1 = arith.constant 0 : i32
    return %c0_i32, %c0_i32_0 : i32, i32
  }
  func.func @transform_6(%arg0: i32) -> (i32, i32) {
    %c0_i32 = arith.constant 0 : i32
    %c0_i32_0 = arith.constant 0 : i32
    %c0_i32_1 = arith.constant 0 : i32
    return %c0_i32, %c0_i32_0 : i32, i32
  }
  func.func @transform_7(%arg0: i32) -> (i32, i32, i32) {
    %c0_i32 = arith.constant 0 : i32
    %c0_i32_0 = arith.constant 0 : i32
    %c0_i32_1 = arith.constant 0 : i32
    return %arg0, %c0_i32, %c0_i32_0 : i32, i32, i32
  }
}

module attributes {stable_mosaic.version = 11 : i64} {
  func.func @_matmul_bias_kernel(%arg0: memref<16x32xf32, #tpu.memory_space<vmem>>, %arg1: memref<32x64xf32, #tpu.memory_space<vmem>>, %arg2: memref<1x64xf32, #tpu.memory_space<vmem>>, %arg3: memref<16x64xf32, #tpu.memory_space<vmem>>) attributes {dimension_semantics = [], scalar_prefetch = 0 : i64, scratch_operands = 0 : i64, tpu.core_type = #tpu.core_type<tc>} {
    %c0 = arith.constant 0 : index
    %c0_0 = arith.constant 0 : index
    %0 = vector.load %arg0[%c0, %c0_0] : memref<16x32xf32, #tpu.memory_space<vmem>>, vector<16x32xf32>
    %c0_1 = arith.constant 0 : index
    %c0_2 = arith.constant 0 : index
    %1 = vector.load %arg1[%c0_1, %c0_2] : memref<32x64xf32, #tpu.memory_space<vmem>>, vector<32x64xf32>
    %cst = arith.constant dense<0.000000e+00> : vector<16x64xf32>
    %2 = tpu.matmul %0, %1, %cst {dimension_numbers = #tpu.dot_dimension_numbers<[1], [0], [0], [1], [0, 0, 1, 1], [], []>} : vector<16x32xf32>, vector<32x64xf32>, vector<16x64xf32> -> vector<16x64xf32>
    %c0_3 = arith.constant 0 : index
    %c0_4 = arith.constant 0 : index
    %3 = vector.load %arg2[%c0_3, %c0_4] : memref<1x64xf32, #tpu.memory_space<vmem>>, vector<1x64xf32>
    %4 = vector.broadcast %3 : vector<1x64xf32> to vector<16x64xf32>
    %5 = arith.addf %2, %4 : vector<16x64xf32>
    %c0_5 = arith.constant 0 : index
    %c0_6 = arith.constant 0 : index
    %6 = vector.load %arg3[%c0_5, %c0_6] : memref<16x64xf32, #tpu.memory_space<vmem>>, vector<16x64xf32>
    tpu.vector_store %arg3[%c0_5, %c0_6], %5 {strides = array<i32>} : memref<16x64xf32, #tpu.memory_space<vmem>>, vector<16x64xf32>,
    return
  }
}

module attributes {stable_mosaic.version = 11 : i64} {
  func.func @_ffn_block_kernel(%arg0: i32, %arg1: memref<1x8x32xf32, #tpu.memory_space<vmem>>, %arg2: memref<32x64xf32, #tpu.memory_space<vmem>>, %arg3: memref<1x64xf32, #tpu.memory_space<vmem>>, %arg4: memref<64x32xf32, #tpu.memory_space<vmem>>, %arg5: memref<1x32xf32, #tpu.memory_space<vmem>>, %arg6: memref<1x32xf32, #tpu.memory_space<vmem>>, %arg7: memref<1x32xf32, #tpu.memory_space<vmem>>, %arg8: memref<1x8x32xf32, #tpu.memory_space<vmem>>) attributes {dimension_semantics = [#tpu.dimension_semantics<parallel>], iteration_bounds = array<i64: 2>, scalar_prefetch = 0 : i64, scratch_operands = 0 : i64, tpu.core_type = #tpu.core_type<tc>, window_params = [{transform_indices = @transform_0, window_bounds = array<i64: 1, 8, 32>}, {pipeline_mode = #tpu.pipeline_mode<synchronous>, transform_indices = @transform_1, window_bounds = array<i64: 32, 64>}, {pipeline_mode = #tpu.pipeline_mode<synchronous>, transform_indices = @transform_2, window_bounds = array<i64: 1, 64>}, {pipeline_mode = #tpu.pipeline_mode<synchronous>, transform_indices = @transform_3, window_bounds = array<i64: 64, 32>}, {pipeline_mode = #tpu.pipeline_mode<synchronous>, transform_indices = @transform_4, window_bounds = array<i64: 1, 32>}, {pipeline_mode = #tpu.pipeline_mode<synchronous>, transform_indices = @transform_5, window_bounds = array<i64: 1, 32>}, {pipeline_mode = #tpu.pipeline_mode<synchronous>, transform_indices = @transform_6, window_bounds = array<i64: 1, 32>}, {transform_indices = @transform_7, window_bounds = array<i64: 1, 8, 32>}]} {
    %c0 = arith.constant 0 : index
    %c0_0 = arith.constant 0 : index
    %c0_1 = arith.constant 0 : index
    %0 = vector.load %arg1[%c0, %c0_0, %c0_1] : memref<1x8x32xf32, #tpu.memory_space<vmem>>, vector<1x8x32xf32>
    %1 = vector.shape_cast %0 : vector<1x8x32xf32> to vector<8x32xf32>
    %c0_2 = arith.constant 0 : index
    %c0_3 = arith.constant 0 : index
    %2 = vector.load %arg2[%c0_2, %c0_3] : memref<32x64xf32, #tpu.memory_space<vmem>>, vector<32x64xf32>
    %cst = arith.constant dense<0.000000e+00> : vector<8x64xf32>
    %3 = tpu.matmul %1, %2, %cst {dimension_numbers = #tpu.dot_dimension_numbers<[1], [0], [0], [1], [0, 0, 1, 1], [], []>} : vector<8x32xf32>, vector<32x64xf32>, vector<8x64xf32> -> vector<8x64xf32>
    %c0_4 = arith.constant 0 : index
    %c0_5 = arith.constant 0 : index
    %4 = vector.load %arg3[%c0_4, %c0_5] : memref<1x64xf32, #tpu.memory_space<vmem>>, vector<1x64xf32>
    %5 = vector.broadcast %4 : vector<1x64xf32> to vector<8x64xf32>
    %6 = arith.addf %3, %5 : vector<8x64xf32>
    %7 = arith.mulf %6, %6 : vector<8x64xf32>
    %8 = arith.mulf %6, %7 : vector<8x64xf32>
    %cst_6 = arith.constant 4.471500e-02 : f32
    %9 = vector.broadcast %cst_6 : f32 to vector<8x64xf32>
    %10 = arith.mulf %9, %8 : vector<8x64xf32>
    %11 = arith.addf %6, %10 : vector<8x64xf32>
    %cst_7 = arith.constant 0.797884583 : f32
    %12 = vector.broadcast %cst_7 : f32 to vector<8x64xf32>
    %13 = arith.mulf %12, %11 : vector<8x64xf32>
    %14 = math.tanh %13 : vector<8x64xf32>
    %cst_8 = arith.constant 1.000000e+00 : f32
    %15 = vector.broadcast %cst_8 : f32 to vector<8x64xf32>
    %16 = arith.addf %15, %14 : vector<8x64xf32>
    %cst_9 = arith.constant 5.000000e-01 : f32
    %17 = vector.broadcast %cst_9 : f32 to vector<8x64xf32>
    %18 = arith.mulf %17, %16 : vector<8x64xf32>
    %19 = arith.mulf %6, %18 : vector<8x64xf32>
    %c0_10 = arith.constant 0 : index
    %c0_11 = arith.constant 0 : index
    %20 = vector.load %arg4[%c0_10, %c0_11] : memref<64x32xf32, #tpu.memory_space<vmem>>, vector<64x32xf32>
    %cst_12 = arith.constant dense<0.000000e+00> : vector<8x32xf32>
    %21 = tpu.matmul %19, %20, %cst_12 {dimension_numbers = #tpu.dot_dimension_numbers<[1], [0], [0], [1], [0, 0, 1, 1], [], []>} : vector<8x64xf32>, vector<64x32xf32>, vector<8x32xf32> -> vector<8x32xf32>
    %22 = arith.addf %1, %21 : vector<8x32xf32>
    %c0_13 = arith.constant 0 : index
    %c0_14 = arith.constant 0 : index
    %23 = vector.load %arg5[%c0_13, %c0_14] : memref<1x32xf32, #tpu.memory_space<vmem>>, vector<1x32xf32>
    %24 = vector.broadcast %23 : vector<1x32xf32> to vector<8x32xf32>
    %25 = arith.addf %22, %24 : vector<8x32xf32>
    %c0_15 = arith.constant 0 : index
    %c0_16 = arith.constant 0 : index
    %26 = vector.load %arg6[%c0_15, %c0_16] : memref<1x32xf32, #tpu.memory_space<vmem>>, vector<1x32xf32>
    %c0_17 = arith.constant 0 : index
    %c0_18 = arith.constant 0 : index
    %27 = vector.load %arg7[%c0_17, %c0_18] : memref<1x32xf32, #tpu.memory_space<vmem>>, vector<1x32xf32>
    %cst_19 = arith.constant dense<0.000000e+00> : vector<8xf32>
    %28 = vector.multi_reduction <add>, %25, %cst_19 [1] : vector<8x32xf32> to vector<8xf32>
    %29 = vector.shape_cast %28 : vector<8xf32> to vector<8x1xf32>
    %cst_20 = arith.constant 3.200000e+01 : f32
    %30 = vector.broadcast %cst_20 : f32 to vector<8x1xf32>
    %31 = arith.divf %29, %30 : vector<8x1xf32>
    %32 = vector.broadcast %31 : vector<8x1xf32> to vector<8x32xf32>
    %33 = arith.subf %25, %32 : vector<8x32xf32>
    %34 = arith.mulf %33, %33 : vector<8x32xf32>
    %cst_21 = arith.constant dense<0.000000e+00> : vector<8xf32>
    %35 = vector.multi_reduction <add>, %34, %cst_21 [1] : vector<8x32xf32> to vector<8xf32>
    %36 = vector.shape_cast %35 : vector<8xf32> to vector<8x1xf32>
    %cst_22 = arith.constant 3.200000e+01 : f32
    %37 = vector.broadcast %cst_22 : f32 to vector<8x1xf32>
    %38 = arith.divf %36, %37 : vector<8x1xf32>
    %39 = vector.broadcast %31 : vector<8x1xf32> to vector<8x32xf32>
    %40 = arith.subf %25, %39 : vector<8x32xf32>
    %cst_23 = arith.constant 9.99999974E-6 : f32
    %41 = vector.broadcast %cst_23 : f32 to vector<8x1xf32>
    %42 = arith.addf %38, %41 : vector<8x1xf32>
    %43 = math.rsqrt %42 : vector<8x1xf32>
    %44 = vector.broadcast %43 : vector<8x1xf32> to vector<8x32xf32>
    %45 = arith.mulf %40, %44 : vector<8x32xf32>
    %46 = vector.broadcast %26 : vector<1x32xf32> to vector<8x32xf32>
    %47 = arith.mulf %45, %46 : vector<8x32xf32>
    %48 = vector.broadcast %27 : vector<1x32xf32> to vector<8x32xf32>
    %49 = arith.addf %47, %48 : vector<8x32xf32>
    %c0_24 = arith.constant 0 : index
    %c0_25 = arith.constant 0 : index
    %c0_26 = arith.constant 0 : index
    %50 = vector.load %arg8[%c0_24, %c0_25, %c0_26] : memref<1x8x32xf32, #tpu.memory_space<vmem>>, vector<1x8x32xf32>
    %51 = vector.shape_cast %50 : vector<1x8x32xf32> to vector<8x32xf32>
    %52 = vector.shape_cast %49 : vector<8x32xf32> to vector<1x8x32xf32>
    tpu.vector_store %arg8[%c0_24, %c0_25, %c0_26], %52 {strides = array<i32>} : memref<1x8x32xf32, #tpu.memory_space<vmem>>, vector<1x8x32xf32>,
    return
  }
  func.func @transform_0(%arg0: i32) -> (i32, i32, i32) {
    %c0_i32 = arith.constant 0 : i32
    %c0_i32_0 = arith.constant 0 : i32
    %c0_i32_1 = arith.constant 0 : i32
    return %arg0, %c0_i32, %c0_i32_0 : i32, i32, i32
  }
  func.func @transform_1(%arg0: i32) -> (i32, i32) {
    %c0_i32 = arith.constant 0 : i32
    %c0_i32_0 = arith.constant 0 : i32
    %c0_i32_1 = arith.constant 0 : i32
    return %c0_i32, %c0_i32_0 : i32, i32
  }
  func.func @transform_2(%arg0: i32) -> (i32, i32) {
    %c0_i32 = arith.constant 0 : i32
    %c0_i32_0 = arith.constant 0 : i32
    %c0_i32_1 = arith.constant 0 : i32
    return %c0_i32, %c0_i32_0 : i32, i32
  }
  func.func @transform_3(%arg0: i32) -> (i32, i32) {
    %c0_i32 = arith.constant 0 : i32
    %c0_i32_0 = arith.constant 0 : i32
    %c0_i32_1 = arith.constant 0 : i32
    return %c0_i32, %c0_i32_0 : i32, i32
  }
  func.func @transform_4(%arg0: i32) -> (i32, i32) {
    %c0_i32 = arith.constant 0 : i32
    %c0_i32_0 = arith.constant 0 : i32
    %c0_i32_1 = arith.constant 0 : i32
    return %c0_i32, %c0_i32_0 : i32, i32
  }
  func.func @transform_5(%arg0: i32) -> (i32, i32) {
    %c0_i32 = arith.constant 0 : i32
    %c0_i32_0 = arith.constant 0 : i32
    %c0_i32_1 = arith.constant 0 : i32
    return %c0_i32, %c0_i32_0 : i32, i32
  }
  func.func @transform_6(%arg0: i32) -> (i32, i32) {
    %c0_i32 = arith.constant 0 : i32
    %c0_i32_0 = arith.constant 0 : i32
    %c0_i32_1 = arith.constant 0 : i32
    return %c0_i32, %c0_i32_0 : i32, i32
  }
  func.func @transform_7(%arg0: i32) -> (i32, i32, i32) {
    %c0_i32 = arith.constant 0 : i32
    %c0_i32_0 = arith.constant 0 : i32
    %c0_i32_1 = arith.constant 0 : i32
    return %arg0, %c0_i32, %c0_i32_0 : i32, i32, i32
  }
}

module attributes {stable_mosaic.version = 11 : i64} {
  func.func @_attn_block_kernel(%arg0: i32, %arg1: memref<1x6x32xf32, #tpu.memory_space<vmem>>, %arg2: memref<32x96xf32, #tpu.memory_space<vmem>>, %arg3: memref<1x96xf32, #tpu.memory_space<vmem>>, %arg4: memref<32x32xf32, #tpu.memory_space<vmem>>, %arg5: memref<1x32xf32, #tpu.memory_space<vmem>>, %arg6: memref<1x32xf32, #tpu.memory_space<vmem>>, %arg7: memref<1x32xf32, #tpu.memory_space<vmem>>, %arg8: memref<1x6x32xf32, #tpu.memory_space<vmem>>) attributes {dimension_semantics = [#tpu.dimension_semantics<parallel>], iteration_bounds = array<i64: 2>, scalar_prefetch = 0 : i64, scratch_operands = 0 : i64, tpu.core_type = #tpu.core_type<tc>, window_params = [{transform_indices = @transform_0, window_bounds = array<i64: 1, 6, 32>}, {pipeline_mode = #tpu.pipeline_mode<synchronous>, transform_indices = @transform_1, window_bounds = array<i64: 32, 96>}, {pipeline_mode = #tpu.pipeline_mode<synchronous>, transform_indices = @transform_2, window_bounds = array<i64: 1, 96>}, {pipeline_mode = #tpu.pipeline_mode<synchronous>, transform_indices = @transform_3, window_bounds = array<i64: 32, 32>}, {pipeline_mode = #tpu.pipeline_mode<synchronous>, transform_indices = @transform_4, window_bounds = array<i64: 1, 32>}, {pipeline_mode = #tpu.pipeline_mode<synchronous>, transform_indices = @transform_5, window_bounds = array<i64: 1, 32>}, {pipeline_mode = #tpu.pipeline_mode<synchronous>, transform_indices = @transform_6, window_bounds = array<i64: 1, 32>}, {transform_indices = @transform_7, window_bounds = array<i64: 1, 6, 32>}]} {
    %c0 = arith.constant 0 : index
    %c0_0 = arith.constant 0 : index
    %c0_1 = arith.constant 0 : index
    %0 = vector.load %arg1[%c0, %c0_0, %c0_1] : memref<1x6x32xf32, #tpu.memory_space<vmem>>, vector<1x6x32xf32>
    %1 = vector.shape_cast %0 : vector<1x6x32xf32> to vector<6x32xf32>
    %c0_2 = arith.constant 0 : index
    %c0_3 = arith.constant 0 : index
    %2 = vector.load %arg2[%c0_2, %c0_3] : memref<32x96xf32, #tpu.memory_space<vmem>>, vector<32x96xf32>
    %cst = arith.constant dense<0.000000e+00> : vector<6x96xf32>
    %3 = tpu.matmul %1, %2, %cst {dimension_numbers = #tpu.dot_dimension_numbers<[1], [0], [0], [1], [0, 0, 1, 1], [], []>} : vector<6x32xf32>, vector<32x96xf32>, vector<6x96xf32> -> vector<6x96xf32>
    %c0_4 = arith.constant 0 : index
    %c0_5 = arith.constant 0 : index
    %4 = vector.load %arg3[%c0_4, %c0_5] : memref<1x96xf32, #tpu.memory_space<vmem>>, vector<1x96xf32>
    %5 = vector.broadcast %4 : vector<1x96xf32> to vector<6x96xf32>
    %6 = arith.addf %3, %5 : vector<6x96xf32>
    %7 = vector.extract_strided_slice %6 {offsets = [0, 0], sizes = [6, 32], strides = [1, 1]} : vector<6x96xf32> to vector<6x32xf32>
    %8 = vector.extract_strided_slice %6 {offsets = [0, 32], sizes = [6, 32], strides = [1, 1]} : vector<6x96xf32> to vector<6x32xf32>
    %9 = vector.extract_strided_slice %6 {offsets = [0, 64], sizes = [6, 32], strides = [1, 1]} : vector<6x96xf32> to vector<6x32xf32>
    %10 = tpu.iota {dimensions = array<i32: 0>} : vector<6x6xi32>
    %11 = tpu.iota {dimensions = array<i32: 1>} : vector<6x6xi32>
    %12 = arith.cmpi sge, %10, %11 : vector<6x6xi32>
    %cst_6 = arith.constant 0.000000e+00 : f32
    %cst_7 = arith.constant -1.000000e+09 : f32
    %13 = vector.broadcast %cst_6 : f32 to vector<6x6xf32>
    %14 = vector.broadcast %cst_7 : f32 to vector<6x6xf32>
    %15 = arith.select %12, %13, %14 : vector<6x6xi1>, vector<6x6xf32>
    %cst_8 = arith.constant 0.000000e+00 : f32
    %16 = vector.broadcast %cst_8 : f32 to vector<6x32xf32>
    %17 = vector.extract_strided_slice %7 {offsets = [0, 0], sizes = [6, 8], strides = [1, 1]} : vector<6x32xf32> to vector<6x8xf32>
    %18 = vector.extract_strided_slice %8 {offsets = [0, 0], sizes = [6, 8], strides = [1, 1]} : vector<6x32xf32> to vector<6x8xf32>
    %cst_9 = arith.constant dense<0.000000e+00> : vector<6x6xf32>
    %19 = tpu.matmul %17, %18, %cst_9 {dimension_numbers = #tpu.dot_dimension_numbers<[1], [1], [0], [0], [0, 0, 1, 0], [], []>} : vector<6x8xf32>, vector<6x8xf32>, vector<6x6xf32> -> vector<6x6xf32>
    %cst_10 = arith.constant 0.353553385 : f32
    %20 = vector.broadcast %cst_10 : f32 to vector<6x6xf32>
    %21 = arith.mulf %19, %20 : vector<6x6xf32>
    %22 = arith.addf %21, %15 : vector<6x6xf32>
    %cst_11 = arith.constant dense<0xFF800000> : vector<6xf32>
    %23 = vector.multi_reduction <maximumf>, %22, %cst_11 [1] : vector<6x6xf32> to vector<6xf32>
    %24 = vector.shape_cast %23 : vector<6xf32> to vector<6x1xf32>
    %25 = vector.broadcast %24 : vector<6x1xf32> to vector<6x6xf32>
    %26 = arith.subf %22, %25 : vector<6x6xf32>
    %27 = math.exp %26 : vector<6x6xf32>
    %cst_12 = arith.constant dense<0.000000e+00> : vector<6xf32>
    %28 = vector.multi_reduction <add>, %27, %cst_12 [1] : vector<6x6xf32> to vector<6xf32>
    %29 = vector.shape_cast %28 : vector<6xf32> to vector<6x1xf32>
    %30 = vector.broadcast %29 : vector<6x1xf32> to vector<6x6xf32>
    %31 = arith.divf %27, %30 : vector<6x6xf32>
    %32 = vector.extract_strided_slice %9 {offsets = [0, 0], sizes = [6, 8], strides = [1, 1]} : vector<6x32xf32> to vector<6x8xf32>
    %cst_13 = arith.constant dense<0.000000e+00> : vector<6x8xf32>
    %33 = tpu.matmul %31, %32, %cst_13 {dimension_numbers = #tpu.dot_dimension_numbers<[1], [0], [0], [1], [0, 0, 1, 1], [], []>} : vector<6x6xf32>, vector<6x8xf32>, vector<6x8xf32> -> vector<6x8xf32>
    %c0_14 = arith.constant 0 : index
    %c0_15 = arith.constant 0 : index
    %34 = vector.load %arg4[%c0_14, %c0_15] : memref<32x32xf32, #tpu.memory_space<vmem>>, vector<8x32xf32>
    %cst_16 = arith.constant dense<0.000000e+00> : vector<6x32xf32>
    %35 = tpu.matmul %33, %34, %cst_16 {dimension_numbers = #tpu.dot_dimension_numbers<[1], [0], [0], [1], [0, 0, 1, 1], [], []>} : vector<6x8xf32>, vector<8x32xf32>, vector<6x32xf32> -> vector<6x32xf32>
    %36 = arith.addf %16, %35 : vector<6x32xf32>
    %37 = vector.extract_strided_slice %7 {offsets = [0, 8], sizes = [6, 8], strides = [1, 1]} : vector<6x32xf32> to vector<6x8xf32>
    %38 = vector.extract_strided_slice %8 {offsets = [0, 8], sizes = [6, 8], strides = [1, 1]} : vector<6x32xf32> to vector<6x8xf32>
    %cst_17 = arith.constant dense<0.000000e+00> : vector<6x6xf32>
    %39 = tpu.matmul %37, %38, %cst_17 {dimension_numbers = #tpu.dot_dimension_numbers<[1], [1], [0], [0], [0, 0, 1, 0], [], []>} : vector<6x8xf32>, vector<6x8xf32>, vector<6x6xf32> -> vector<6x6xf32>
    %cst_18 = arith.constant 0.353553385 : f32
    %40 = vector.broadcast %cst_18 : f32 to vector<6x6xf32>
    %41 = arith.mulf %39, %40 : vector<6x6xf32>
    %42 = arith.addf %41, %15 : vector<6x6xf32>
    %cst_19 = arith.constant dense<0xFF800000> : vector<6xf32>
    %43 = vector.multi_reduction <maximumf>, %42, %cst_19 [1] : vector<6x6xf32> to vector<6xf32>
    %44 = vector.shape_cast %43 : vector<6xf32> to vector<6x1xf32>
    %45 = vector.broadcast %44 : vector<6x1xf32> to vector<6x6xf32>
    %46 = arith.subf %42, %45 : vector<6x6xf32>
    %47 = math.exp %46 : vector<6x6xf32>
    %cst_20 = arith.constant dense<0.000000e+00> : vector<6xf32>
    %48 = vector.multi_reduction <add>, %47, %cst_20 [1] : vector<6x6xf32> to vector<6xf32>
    %49 = vector.shape_cast %48 : vector<6xf32> to vector<6x1xf32>
    %50 = vector.broadcast %49 : vector<6x1xf32> to vector<6x6xf32>
    %51 = arith.divf %47, %50 : vector<6x6xf32>
    %52 = vector.extract_strided_slice %9 {offsets = [0, 8], sizes = [6, 8], strides = [1, 1]} : vector<6x32xf32> to vector<6x8xf32>
    %cst_21 = arith.constant dense<0.000000e+00> : vector<6x8xf32>
    %53 = tpu.matmul %51, %52, %cst_21 {dimension_numbers = #tpu.dot_dimension_numbers<[1], [0], [0], [1], [0, 0, 1, 1], [], []>} : vector<6x6xf32>, vector<6x8xf32>, vector<6x8xf32> -> vector<6x8xf32>
    %c8 = arith.constant 8 : index
    %c0_22 = arith.constant 0 : index
    %54 = vector.load %arg4[%c8, %c0_22] : memref<32x32xf32, #tpu.memory_space<vmem>>, vector<8x32xf32>
    %cst_23 = arith.constant dense<0.000000e+00> : vector<6x32xf32>
    %55 = tpu.matmul %53, %54, %cst_23 {dimension_numbers = #tpu.dot_dimension_numbers<[1], [0], [0], [1], [0, 0, 1, 1], [], []>} : vector<6x8xf32>, vector<8x32xf32>, vector<6x32xf32> -> vector<6x32xf32>
    %56 = arith.addf %36, %55 : vector<6x32xf32>
    %57 = vector.extract_strided_slice %7 {offsets = [0, 16], sizes = [6, 8], strides = [1, 1]} : vector<6x32xf32> to vector<6x8xf32>
    %58 = vector.extract_strided_slice %8 {offsets = [0, 16], sizes = [6, 8], strides = [1, 1]} : vector<6x32xf32> to vector<6x8xf32>
    %cst_24 = arith.constant dense<0.000000e+00> : vector<6x6xf32>
    %59 = tpu.matmul %57, %58, %cst_24 {dimension_numbers = #tpu.dot_dimension_numbers<[1], [1], [0], [0], [0, 0, 1, 0], [], []>} : vector<6x8xf32>, vector<6x8xf32>, vector<6x6xf32> -> vector<6x6xf32>
    %cst_25 = arith.constant 0.353553385 : f32
    %60 = vector.broadcast %cst_25 : f32 to vector<6x6xf32>
    %61 = arith.mulf %59, %60 : vector<6x6xf32>
    %62 = arith.addf %61, %15 : vector<6x6xf32>
    %cst_26 = arith.constant dense<0xFF800000> : vector<6xf32>
    %63 = vector.multi_reduction <maximumf>, %62, %cst_26 [1] : vector<6x6xf32> to vector<6xf32>
    %64 = vector.shape_cast %63 : vector<6xf32> to vector<6x1xf32>
    %65 = vector.broadcast %64 : vector<6x1xf32> to vector<6x6xf32>
    %66 = arith.subf %62, %65 : vector<6x6xf32>
    %67 = math.exp %66 : vector<6x6xf32>
    %cst_27 = arith.constant dense<0.000000e+00> : vector<6xf32>
    %68 = vector.multi_reduction <add>, %67, %cst_27 [1] : vector<6x6xf32> to vector<6xf32>
    %69 = vector.shape_cast %68 : vector<6xf32> to vector<6x1xf32>
    %70 = vector.broadcast %69 : vector<6x1xf32> to vector<6x6xf32>
    %71 = arith.divf %67, %70 : vector<6x6xf32>
    %72 = vector.extract_strided_slice %9 {offsets = [0, 16], sizes = [6, 8], strides = [1, 1]} : vector<6x32xf32> to vector<6x8xf32>
    %cst_28 = arith.constant dense<0.000000e+00> : vector<6x8xf32>
    %73 = tpu.matmul %71, %72, %cst_28 {dimension_numbers = #tpu.dot_dimension_numbers<[1], [0], [0], [1], [0, 0, 1, 1], [], []>} : vector<6x6xf32>, vector<6x8xf32>, vector<6x8xf32> -> vector<6x8xf32>
    %c16 = arith.constant 16 : index
    %c0_29 = arith.constant 0 : index
    %74 = vector.load %arg4[%c16, %c0_29] : memref<32x32xf32, #tpu.memory_space<vmem>>, vector<8x32xf32>
    %cst_30 = arith.constant dense<0.000000e+00> : vector<6x32xf32>
    %75 = tpu.matmul %73, %74, %cst_30 {dimension_numbers = #tpu.dot_dimension_numbers<[1], [0], [0], [1], [0, 0, 1, 1], [], []>} : vector<6x8xf32>, vector<8x32xf32>, vector<6x32xf32> -> vector<6x32xf32>
    %76 = arith.addf %56, %75 : vector<6x32xf32>
    %77 = vector.extract_strided_slice %7 {offsets = [0, 24], sizes = [6, 8], strides = [1, 1]} : vector<6x32xf32> to vector<6x8xf32>
    %78 = vector.extract_strided_slice %8 {offsets = [0, 24], sizes = [6, 8], strides = [1, 1]} : vector<6x32xf32> to vector<6x8xf32>
    %cst_31 = arith.constant dense<0.000000e+00> : vector<6x6xf32>
    %79 = tpu.matmul %77, %78, %cst_31 {dimension_numbers = #tpu.dot_dimension_numbers<[1], [1], [0], [0], [0, 0, 1, 0], [], []>} : vector<6x8xf32>, vector<6x8xf32>, vector<6x6xf32> -> vector<6x6xf32>
    %cst_32 = arith.constant 0.353553385 : f32
    %80 = vector.broadcast %cst_32 : f32 to vector<6x6xf32>
    %81 = arith.mulf %79, %80 : vector<6x6xf32>
    %82 = arith.addf %81, %15 : vector<6x6xf32>
    %cst_33 = arith.constant dense<0xFF800000> : vector<6xf32>
    %83 = vector.multi_reduction <maximumf>, %82, %cst_33 [1] : vector<6x6xf32> to vector<6xf32>
    %84 = vector.shape_cast %83 : vector<6xf32> to vector<6x1xf32>
    %85 = vector.broadcast %84 : vector<6x1xf32> to vector<6x6xf32>
    %86 = arith.subf %82, %85 : vector<6x6xf32>
    %87 = math.exp %86 : vector<6x6xf32>
    %cst_34 = arith.constant dense<0.000000e+00> : vector<6xf32>
    %88 = vector.multi_reduction <add>, %87, %cst_34 [1] : vector<6x6xf32> to vector<6xf32>
    %89 = vector.shape_cast %88 : vector<6xf32> to vector<6x1xf32>
    %90 = vector.broadcast %89 : vector<6x1xf32> to vector<6x6xf32>
    %91 = arith.divf %87, %90 : vector<6x6xf32>
    %92 = vector.extract_strided_slice %9 {offsets = [0, 24], sizes = [6, 8], strides = [1, 1]} : vector<6x32xf32> to vector<6x8xf32>
    %cst_35 = arith.constant dense<0.000000e+00> : vector<6x8xf32>
    %93 = tpu.matmul %91, %92, %cst_35 {dimension_numbers = #tpu.dot_dimension_numbers<[1], [0], [0], [1], [0, 0, 1, 1], [], []>} : vector<6x6xf32>, vector<6x8xf32>, vector<6x8xf32> -> vector<6x8xf32>
    %c24 = arith.constant 24 : index
    %c0_36 = arith.constant 0 : index
    %94 = vector.load %arg4[%c24, %c0_36] : memref<32x32xf32, #tpu.memory_space<vmem>>, vector<8x32xf32>
    %cst_37 = arith.constant dense<0.000000e+00> : vector<6x32xf32>
    %95 = tpu.matmul %93, %94, %cst_37 {dimension_numbers = #tpu.dot_dimension_numbers<[1], [0], [0], [1], [0, 0, 1, 1], [], []>} : vector<6x8xf32>, vector<8x32xf32>, vector<6x32xf32> -> vector<6x32xf32>
    %96 = arith.addf %76, %95 : vector<6x32xf32>
    %97 = arith.addf %1, %96 : vector<6x32xf32>
    %c0_38 = arith.constant 0 : index
    %c0_39 = arith.constant 0 : index
    %98 = vector.load %arg5[%c0_38, %c0_39] : memref<1x32xf32, #tpu.memory_space<vmem>>, vector<1x32xf32>
    %99 = vector.broadcast %98 : vector<1x32xf32> to vector<6x32xf32>
    %100 = arith.addf %97, %99 : vector<6x32xf32>
    %c0_40 = arith.constant 0 : index
    %c0_41 = arith.constant 0 : index
    %101 = vector.load %arg6[%c0_40, %c0_41] : memref<1x32xf32, #tpu.memory_space<vmem>>, vector<1x32xf32>
    %c0_42 = arith.constant 0 : index
    %c0_43 = arith.constant 0 : index
    %102 = vector.load %arg7[%c0_42, %c0_43] : memref<1x32xf32, #tpu.memory_space<vmem>>, vector<1x32xf32>
    %cst_44 = arith.constant dense<0.000000e+00> : vector<6xf32>
    %103 = vector.multi_reduction <add>, %100, %cst_44 [1] : vector<6x32xf32> to vector<6xf32>
    %104 = vector.shape_cast %103 : vector<6xf32> to vector<6x1xf32>
    %cst_45 = arith.constant 3.200000e+01 : f32
    %105 = vector.broadcast %cst_45 : f32 to vector<6x1xf32>
    %106 = arith.divf %104, %105 : vector<6x1xf32>
    %107 = vector.broadcast %106 : vector<6x1xf32> to vector<6x32xf32>
    %108 = arith.subf %100, %107 : vector<6x32xf32>
    %109 = arith.mulf %108, %108 : vector<6x32xf32>
    %cst_46 = arith.constant dense<0.000000e+00> : vector<6xf32>
    %110 = vector.multi_reduction <add>, %109, %cst_46 [1] : vector<6x32xf32> to vector<6xf32>
    %111 = vector.shape_cast %110 : vector<6xf32> to vector<6x1xf32>
    %cst_47 = arith.constant 3.200000e+01 : f32
    %112 = vector.broadcast %cst_47 : f32 to vector<6x1xf32>
    %113 = arith.divf %111, %112 : vector<6x1xf32>
    %114 = vector.broadcast %106 : vector<6x1xf32> to vector<6x32xf32>
    %115 = arith.subf %100, %114 : vector<6x32xf32>
    %cst_48 = arith.constant 9.99999974E-6 : f32
    %116 = vector.broadcast %cst_48 : f32 to vector<6x1xf32>
    %117 = arith.addf %113, %116 : vector<6x1xf32>
    %118 = math.rsqrt %117 : vector<6x1xf32>
    %119 = vector.broadcast %118 : vector<6x1xf32> to vector<6x32xf32>
    %120 = arith.mulf %115, %119 : vector<6x32xf32>
    %121 = vector.broadcast %101 : vector<1x32xf32> to vector<6x32xf32>
    %122 = arith.mulf %120, %121 : vector<6x32xf32>
    %123 = vector.broadcast %102 : vector<1x32xf32> to vector<6x32xf32>
    %124 = arith.addf %122, %123 : vector<6x32xf32>
    %c0_49 = arith.constant 0 : index
    %c0_50 = arith.constant 0 : index
    %c0_51 = arith.constant 0 : index
    %125 = vector.load %arg8[%c0_49, %c0_50, %c0_51] : memref<1x6x32xf32, #tpu.memory_space<vmem>>, vector<1x6x32xf32>
    %126 = vector.shape_cast %125 : vector<1x6x32xf32> to vector<6x32xf32>
    %127 = vector.shape_cast %124 : vector<6x32xf32> to vector<1x6x32xf32>
    tpu.vector_store %arg8[%c0_49, %c0_50, %c0_51], %127 {strides = array<i32>} : memref<1x6x32xf32, #tpu.memory_space<vmem>>, vector<1x6x32xf32>,
    return
  }
  func.func @transform_0(%arg0: i32) -> (i32, i32, i32) {
    %c0_i32 = arith.constant 0 : i32
    %c0_i32_0 = arith.constant 0 : i32
    %c0_i32_1 = arith.constant 0 : i32
    return %arg0, %c0_i32, %c0_i32_0 : i32, i32, i32
  }
  func.func @transform_1(%arg0: i32) -> (i32, i32) {
    %c0_i32 = arith.constant 0 : i32
    %c0_i32_0 = arith.constant 0 : i32
    %c0_i32_1 = arith.constant 0 : i32
    return %c0_i32, %c0_i32_0 : i32, i32
  }
  func.func @transform_2(%arg0: i32) -> (i32, i32) {
    %c0_i32 = arith.constant 0 : i32
    %c0_i32_0 = arith.constant 0 : i32
    %c0_i32_1 = arith.constant 0 : i32
    return %c0_i32, %c0_i32_0 : i32, i32
  }
  func.func @transform_3(%arg0: i32) -> (i32, i32) {
    %c0_i32 = arith.constant 0 : i32
    %c0_i32_0 = arith.constant 0 : i32
    %c0_i32_1 = arith.constant 0 : i32
    return %c0_i32, %c0_i32_0 : i32, i32
  }
  func.func @transform_4(%arg0: i32) -> (i32, i32) {
    %c0_i32 = arith.constant 0 : i32
    %c0_i32_0 = arith.constant 0 : i32
    %c0_i32_1 = arith.constant 0 : i32
    return %c0_i32, %c0_i32_0 : i32, i32
  }
  func.func @transform_5(%arg0: i32) -> (i32, i32) {
    %c0_i32 = arith.constant 0 : i32
    %c0_i32_0 = arith.constant 0 : i32
    %c0_i32_1 = arith.constant 0 : i32
    return %c0_i32, %c0_i32_0 : i32, i32
  }
  func.func @transform_6(%arg0: i32) -> (i32, i32) {
    %c0_i32 = arith.constant 0 : i32
    %c0_i32_0 = arith.constant 0 : i32
    %c0_i32_1 = arith.constant 0 : i32
    return %c0_i32, %c0_i32_0 : i32, i32
  }
  func.func @transform_7(%arg0: i32) -> (i32, i32, i32) {
    %c0_i32 = arith.constant 0 : i32
    %c0_i32_0 = arith.constant 0 : i32
    %c0_i32_1 = arith.constant 0 : i32
    return %arg0, %c0_i32, %c0_i32_0 : i32, i32, i32
  }
}

module attributes {stable_mosaic.version = 11 : i64} {
  func.func @_cross_attn_block_kernel(%arg0: i32, %arg1: memref<1x6x32xf32, #tpu.memory_space<vmem>>, %arg2: memref<1x8x64xf32, #tpu.memory_space<vmem>>, %arg3: memref<32x32xf32, #tpu.memory_space<vmem>>, %arg4: memref<1x32xf32, #tpu.memory_space<vmem>>, %arg5: memref<32x32xf32, #tpu.memory_space<vmem>>, %arg6: memref<1x32xf32, #tpu.memory_space<vmem>>, %arg7: memref<1x32xf32, #tpu.memory_space<vmem>>, %arg8: memref<1x32xf32, #tpu.memory_space<vmem>>, %arg9: memref<1x6x32xf32, #tpu.memory_space<vmem>>) attributes {dimension_semantics = [#tpu.dimension_semantics<parallel>], iteration_bounds = array<i64: 2>, scalar_prefetch = 0 : i64, scratch_operands = 0 : i64, tpu.core_type = #tpu.core_type<tc>, window_params = [{transform_indices = @transform_0, window_bounds = array<i64: 1, 6, 32>}, {transform_indices = @transform_1, window_bounds = array<i64: 1, 8, 64>}, {pipeline_mode = #tpu.pipeline_mode<synchronous>, transform_indices = @transform_2, window_bounds = array<i64: 32, 32>}, {pipeline_mode = #tpu.pipeline_mode<synchronous>, transform_indices = @transform_3, window_bounds = array<i64: 1, 32>}, {pipeline_mode = #tpu.pipeline_mode<synchronous>, transform_indices = @transform_4, window_bounds = array<i64: 32, 32>}, {pipeline_mode = #tpu.pipeline_mode<synchronous>, transform_indices = @transform_5, window_bounds = array<i64: 1, 32>}, {pipeline_mode = #tpu.pipeline_mode<synchronous>, transform_indices = @transform_6, window_bounds = array<i64: 1, 32>}, {pipeline_mode = #tpu.pipeline_mode<synchronous>, transform_indices = @transform_7, window_bounds = array<i64: 1, 32>}, {transform_indices = @transform_8, window_bounds = array<i64: 1, 6, 32>}]} {
    %c0 = arith.constant 0 : index
    %c0_0 = arith.constant 0 : index
    %c0_1 = arith.constant 0 : index
    %0 = vector.load %arg1[%c0, %c0_0, %c0_1] : memref<1x6x32xf32, #tpu.memory_space<vmem>>, vector<1x6x32xf32>
    %1 = vector.shape_cast %0 : vector<1x6x32xf32> to vector<6x32xf32>
    %c0_2 = arith.constant 0 : index
    %c0_3 = arith.constant 0 : index
    %c0_4 = arith.constant 0 : index
    %2 = vector.load %arg2[%c0_2, %c0_3, %c0_4] : memref<1x8x64xf32, #tpu.memory_space<vmem>>, vector<1x8x64xf32>
    %3 = vector.shape_cast %2 : vector<1x8x64xf32> to vector<8x64xf32>
    %c0_5 = arith.constant 0 : index
    %c0_6 = arith.constant 0 : index
    %4 = vector.load %arg3[%c0_5, %c0_6] : memref<32x32xf32, #tpu.memory_space<vmem>>, vector<32x32xf32>
    %cst = arith.constant dense<0.000000e+00> : vector<6x32xf32>
    %5 = tpu.matmul %1, %4, %cst {dimension_numbers = #tpu.dot_dimension_numbers<[1], [0], [0], [1], [0, 0, 1, 1], [], []>} : vector<6x32xf32>, vector<32x32xf32>, vector<6x32xf32> -> vector<6x32xf32>
    %c0_7 = arith.constant 0 : index
    %c0_8 = arith.constant 0 : index
    %6 = vector.load %arg4[%c0_7, %c0_8] : memref<1x32xf32, #tpu.memory_space<vmem>>, vector<1x32xf32>
    %7 = vector.broadcast %6 : vector<1x32xf32> to vector<6x32xf32>
    %8 = arith.addf %5, %7 : vector<6x32xf32>
    %9 = vector.extract_strided_slice %3 {offsets = [0, 0], sizes = [8, 32], strides = [1, 1]} : vector<8x64xf32> to vector<8x32xf32>
    %10 = vector.extract_strided_slice %3 {offsets = [0, 32], sizes = [8, 32], strides = [1, 1]} : vector<8x64xf32> to vector<8x32xf32>
    %cst_9 = arith.constant 0.000000e+00 : f32
    %11 = vector.broadcast %cst_9 : f32 to vector<6x32xf32>
    %12 = vector.extract_strided_slice %8 {offsets = [0, 0], sizes = [6, 8], strides = [1, 1]} : vector<6x32xf32> to vector<6x8xf32>
    %13 = vector.extract_strided_slice %9 {offsets = [0, 0], sizes = [8, 8], strides = [1, 1]} : vector<8x32xf32> to vector<8x8xf32>
    %cst_10 = arith.constant dense<0.000000e+00> : vector<6x8xf32>
    %14 = tpu.matmul %12, %13, %cst_10 {dimension_numbers = #tpu.dot_dimension_numbers<[1], [1], [0], [0], [0, 0, 1, 0], [], []>} : vector<6x8xf32>, vector<8x8xf32>, vector<6x8xf32> -> vector<6x8xf32>
    %cst_11 = arith.constant 0.353553385 : f32
    %15 = vector.broadcast %cst_11 : f32 to vector<6x8xf32>
    %16 = arith.mulf %14, %15 : vector<6x8xf32>
    %cst_12 = arith.constant dense<0xFF800000> : vector<6xf32>
    %17 = vector.multi_reduction <maximumf>, %16, %cst_12 [1] : vector<6x8xf32> to vector<6xf32>
    %18 = vector.shape_cast %17 : vector<6xf32> to vector<6x1xf32>
    %19 = vector.broadcast %18 : vector<6x1xf32> to vector<6x8xf32>
    %20 = arith.subf %16, %19 : vector<6x8xf32>
    %21 = math.exp %20 : vector<6x8xf32>
    %cst_13 = arith.constant dense<0.000000e+00> : vector<6xf32>
    %22 = vector.multi_reduction <add>, %21, %cst_13 [1] : vector<6x8xf32> to vector<6xf32>
    %23 = vector.shape_cast %22 : vector<6xf32> to vector<6x1xf32>
    %24 = vector.broadcast %23 : vector<6x1xf32> to vector<6x8xf32>
    %25 = arith.divf %21, %24 : vector<6x8xf32>
    %26 = vector.extract_strided_slice %10 {offsets = [0, 0], sizes = [8, 8], strides = [1, 1]} : vector<8x32xf32> to vector<8x8xf32>
    %cst_14 = arith.constant dense<0.000000e+00> : vector<6x8xf32>
    %27 = tpu.matmul %25, %26, %cst_14 {dimension_numbers = #tpu.dot_dimension_numbers<[1], [0], [0], [1], [0, 0, 1, 1], [], []>} : vector<6x8xf32>, vector<8x8xf32>, vector<6x8xf32> -> vector<6x8xf32>
    %c0_15 = arith.constant 0 : index
    %c0_16 = arith.constant 0 : index
    %28 = vector.load %arg5[%c0_15, %c0_16] : memref<32x32xf32, #tpu.memory_space<vmem>>, vector<8x32xf32>
    %cst_17 = arith.constant dense<0.000000e+00> : vector<6x32xf32>
    %29 = tpu.matmul %27, %28, %cst_17 {dimension_numbers = #tpu.dot_dimension_numbers<[1], [0], [0], [1], [0, 0, 1, 1], [], []>} : vector<6x8xf32>, vector<8x32xf32>, vector<6x32xf32> -> vector<6x32xf32>
    %30 = arith.addf %11, %29 : vector<6x32xf32>
    %31 = vector.extract_strided_slice %8 {offsets = [0, 8], sizes = [6, 8], strides = [1, 1]} : vector<6x32xf32> to vector<6x8xf32>
    %32 = vector.extract_strided_slice %9 {offsets = [0, 8], sizes = [8, 8], strides = [1, 1]} : vector<8x32xf32> to vector<8x8xf32>
    %cst_18 = arith.constant dense<0.000000e+00> : vector<6x8xf32>
    %33 = tpu.matmul %31, %32, %cst_18 {dimension_numbers = #tpu.dot_dimension_numbers<[1], [1], [0], [0], [0, 0, 1, 0], [], []>} : vector<6x8xf32>, vector<8x8xf32>, vector<6x8xf32> -> vector<6x8xf32>
    %cst_19 = arith.constant 0.353553385 : f32
    %34 = vector.broadcast %cst_19 : f32 to vector<6x8xf32>
    %35 = arith.mulf %33, %34 : vector<6x8xf32>
    %cst_20 = arith.constant dense<0xFF800000> : vector<6xf32>
    %36 = vector.multi_reduction <maximumf>, %35, %cst_20 [1] : vector<6x8xf32> to vector<6xf32>
    %37 = vector.shape_cast %36 : vector<6xf32> to vector<6x1xf32>
    %38 = vector.broadcast %37 : vector<6x1xf32> to vector<6x8xf32>
    %39 = arith.subf %35, %38 : vector<6x8xf32>
    %40 = math.exp %39 : vector<6x8xf32>
    %cst_21 = arith.constant dense<0.000000e+00> : vector<6xf32>
    %41 = vector.multi_reduction <add>, %40, %cst_21 [1] : vector<6x8xf32> to vector<6xf32>
    %42 = vector.shape_cast %41 : vector<6xf32> to vector<6x1xf32>
    %43 = vector.broadcast %42 : vector<6x1xf32> to vector<6x8xf32>
    %44 = arith.divf %40, %43 : vector<6x8xf32>
    %45 = vector.extract_strided_slice %10 {offsets = [0, 8], sizes = [8, 8], strides = [1, 1]} : vector<8x32xf32> to vector<8x8xf32>
    %cst_22 = arith.constant dense<0.000000e+00> : vector<6x8xf32>
    %46 = tpu.matmul %44, %45, %cst_22 {dimension_numbers = #tpu.dot_dimension_numbers<[1], [0], [0], [1], [0, 0, 1, 1], [], []>} : vector<6x8xf32>, vector<8x8xf32>, vector<6x8xf32> -> vector<6x8xf32>
    %c8 = arith.constant 8 : index
    %c0_23 = arith.constant 0 : index
    %47 = vector.load %arg5[%c8, %c0_23] : memref<32x32xf32, #tpu.memory_space<vmem>>, vector<8x32xf32>
    %cst_24 = arith.constant dense<0.000000e+00> : vector<6x32xf32>
    %48 = tpu.matmul %46, %47, %cst_24 {dimension_numbers = #tpu.dot_dimension_numbers<[1], [0], [0], [1], [0, 0, 1, 1], [], []>} : vector<6x8xf32>, vector<8x32xf32>, vector<6x32xf32> -> vector<6x32xf32>
    %49 = arith.addf %30, %48 : vector<6x32xf32>
    %50 = vector.extract_strided_slice %8 {offsets = [0, 16], sizes = [6, 8], strides = [1, 1]} : vector<6x32xf32> to vector<6x8xf32>
    %51 = vector.extract_strided_slice %9 {offsets = [0, 16], sizes = [8, 8], strides = [1, 1]} : vector<8x32xf32> to vector<8x8xf32>
    %cst_25 = arith.constant dense<0.000000e+00> : vector<6x8xf32>
    %52 = tpu.matmul %50, %51, %cst_25 {dimension_numbers = #tpu.dot_dimension_numbers<[1], [1], [0], [0], [0, 0, 1, 0], [], []>} : vector<6x8xf32>, vector<8x8xf32>, vector<6x8xf32> -> vector<6x8xf32>
    %cst_26 = arith.constant 0.353553385 : f32
    %53 = vector.broadcast %cst_26 : f32 to vector<6x8xf32>
    %54 = arith.mulf %52, %53 : vector<6x8xf32>
    %cst_27 = arith.constant dense<0xFF800000> : vector<6xf32>
    %55 = vector.multi_reduction <maximumf>, %54, %cst_27 [1] : vector<6x8xf32> to vector<6xf32>
    %56 = vector.shape_cast %55 : vector<6xf32> to vector<6x1xf32>
    %57 = vector.broadcast %56 : vector<6x1xf32> to vector<6x8xf32>
    %58 = arith.subf %54, %57 : vector<6x8xf32>
    %59 = math.exp %58 : vector<6x8xf32>
    %cst_28 = arith.constant dense<0.000000e+00> : vector<6xf32>
    %60 = vector.multi_reduction <add>, %59, %cst_28 [1] : vector<6x8xf32> to vector<6xf32>
    %61 = vector.shape_cast %60 : vector<6xf32> to vector<6x1xf32>
    %62 = vector.broadcast %61 : vector<6x1xf32> to vector<6x8xf32>
    %63 = arith.divf %59, %62 : vector<6x8xf32>
    %64 = vector.extract_strided_slice %10 {offsets = [0, 16], sizes = [8, 8], strides = [1, 1]} : vector<8x32xf32> to vector<8x8xf32>
    %cst_29 = arith.constant dense<0.000000e+00> : vector<6x8xf32>
    %65 = tpu.matmul %63, %64, %cst_29 {dimension_numbers = #tpu.dot_dimension_numbers<[1], [0], [0], [1], [0, 0, 1, 1], [], []>} : vector<6x8xf32>, vector<8x8xf32>, vector<6x8xf32> -> vector<6x8xf32>
    %c16 = arith.constant 16 : index
    %c0_30 = arith.constant 0 : index
    %66 = vector.load %arg5[%c16, %c0_30] : memref<32x32xf32, #tpu.memory_space<vmem>>, vector<8x32xf32>
    %cst_31 = arith.constant dense<0.000000e+00> : vector<6x32xf32>
    %67 = tpu.matmul %65, %66, %cst_31 {dimension_numbers = #tpu.dot_dimension_numbers<[1], [0], [0], [1], [0, 0, 1, 1], [], []>} : vector<6x8xf32>, vector<8x32xf32>, vector<6x32xf32> -> vector<6x32xf32>
    %68 = arith.addf %49, %67 : vector<6x32xf32>
    %69 = vector.extract_strided_slice %8 {offsets = [0, 24], sizes = [6, 8], strides = [1, 1]} : vector<6x32xf32> to vector<6x8xf32>
    %70 = vector.extract_strided_slice %9 {offsets = [0, 24], sizes = [8, 8], strides = [1, 1]} : vector<8x32xf32> to vector<8x8xf32>
    %cst_32 = arith.constant dense<0.000000e+00> : vector<6x8xf32>
    %71 = tpu.matmul %69, %70, %cst_32 {dimension_numbers = #tpu.dot_dimension_numbers<[1], [1], [0], [0], [0, 0, 1, 0], [], []>} : vector<6x8xf32>, vector<8x8xf32>, vector<6x8xf32> -> vector<6x8xf32>
    %cst_33 = arith.constant 0.353553385 : f32
    %72 = vector.broadcast %cst_33 : f32 to vector<6x8xf32>
    %73 = arith.mulf %71, %72 : vector<6x8xf32>
    %cst_34 = arith.constant dense<0xFF800000> : vector<6xf32>
    %74 = vector.multi_reduction <maximumf>, %73, %cst_34 [1] : vector<6x8xf32> to vector<6xf32>
    %75 = vector.shape_cast %74 : vector<6xf32> to vector<6x1xf32>
    %76 = vector.broadcast %75 : vector<6x1xf32> to vector<6x8xf32>
    %77 = arith.subf %73, %76 : vector<6x8xf32>
    %78 = math.exp %77 : vector<6x8xf32>
    %cst_35 = arith.constant dense<0.000000e+00> : vector<6xf32>
    %79 = vector.multi_reduction <add>, %78, %cst_35 [1] : vector<6x8xf32> to vector<6xf32>
    %80 = vector.shape_cast %79 : vector<6xf32> to vector<6x1xf32>
    %81 = vector.broadcast %80 : vector<6x1xf32> to vector<6x8xf32>
    %82 = arith.divf %78, %81 : vector<6x8xf32>
    %83 = vector.extract_strided_slice %10 {offsets = [0, 24], sizes = [8, 8], strides = [1, 1]} : vector<8x32xf32> to vector<8x8xf32>
    %cst_36 = arith.constant dense<0.000000e+00> : vector<6x8xf32>
    %84 = tpu.matmul %82, %83, %cst_36 {dimension_numbers = #tpu.dot_dimension_numbers<[1], [0], [0], [1], [0, 0, 1, 1], [], []>} : vector<6x8xf32>, vector<8x8xf32>, vector<6x8xf32> -> vector<6x8xf32>
    %c24 = arith.constant 24 : index
    %c0_37 = arith.constant 0 : index
    %85 = vector.load %arg5[%c24, %c0_37] : memref<32x32xf32, #tpu.memory_space<vmem>>, vector<8x32xf32>
    %cst_38 = arith.constant dense<0.000000e+00> : vector<6x32xf32>
    %86 = tpu.matmul %84, %85, %cst_38 {dimension_numbers = #tpu.dot_dimension_numbers<[1], [0], [0], [1], [0, 0, 1, 1], [], []>} : vector<6x8xf32>, vector<8x32xf32>, vector<6x32xf32> -> vector<6x32xf32>
    %87 = arith.addf %68, %86 : vector<6x32xf32>
    %88 = arith.addf %1, %87 : vector<6x32xf32>
    %c0_39 = arith.constant 0 : index
    %c0_40 = arith.constant 0 : index
    %89 = vector.load %arg6[%c0_39, %c0_40] : memref<1x32xf32, #tpu.memory_space<vmem>>, vector<1x32xf32>
    %90 = vector.broadcast %89 : vector<1x32xf32> to vector<6x32xf32>
    %91 = arith.addf %88, %90 : vector<6x32xf32>
    %c0_41 = arith.constant 0 : index
    %c0_42 = arith.constant 0 : index
    %92 = vector.load %arg7[%c0_41, %c0_42] : memref<1x32xf32, #tpu.memory_space<vmem>>, vector<1x32xf32>
    %c0_43 = arith.constant 0 : index
    %c0_44 = arith.constant 0 : index
    %93 = vector.load %arg8[%c0_43, %c0_44] : memref<1x32xf32, #tpu.memory_space<vmem>>, vector<1x32xf32>
    %cst_45 = arith.constant dense<0.000000e+00> : vector<6xf32>
    %94 = vector.multi_reduction <add>, %91, %cst_45 [1] : vector<6x32xf32> to vector<6xf32>
    %95 = vector.shape_cast %94 : vector<6xf32> to vector<6x1xf32>
    %cst_46 = arith.constant 3.200000e+01 : f32
    %96 = vector.broadcast %cst_46 : f32 to vector<6x1xf32>
    %97 = arith.divf %95, %96 : vector<6x1xf32>
    %98 = vector.broadcast %97 : vector<6x1xf32> to vector<6x32xf32>
    %99 = arith.subf %91, %98 : vector<6x32xf32>
    %100 = arith.mulf %99, %99 : vector<6x32xf32>
    %cst_47 = arith.constant dense<0.000000e+00> : vector<6xf32>
    %101 = vector.multi_reduction <add>, %100, %cst_47 [1] : vector<6x32xf32> to vector<6xf32>
    %102 = vector.shape_cast %101 : vector<6xf32> to vector<6x1xf32>
    %cst_48 = arith.constant 3.200000e+01 : f32
    %103 = vector.broadcast %cst_48 : f32 to vector<6x1xf32>
    %104 = arith.divf %102, %103 : vector<6x1xf32>
    %105 = vector.broadcast %97 : vector<6x1xf32> to vector<6x32xf32>
    %106 = arith.subf %91, %105 : vector<6x32xf32>
    %cst_49 = arith.constant 9.99999974E-6 : f32
    %107 = vector.broadcast %cst_49 : f32 to vector<6x1xf32>
    %108 = arith.addf %104, %107 : vector<6x1xf32>
    %109 = math.rsqrt %108 : vector<6x1xf32>
    %110 = vector.broadcast %109 : vector<6x1xf32> to vector<6x32xf32>
    %111 = arith.mulf %106, %110 : vector<6x32xf32>
    %112 = vector.broadcast %92 : vector<1x32xf32> to vector<6x32xf32>
    %113 = arith.mulf %111, %112 : vector<6x32xf32>
    %114 = vector.broadcast %93 : vector<1x32xf32> to vector<6x32xf32>
    %115 = arith.addf %113, %114 : vector<6x32xf32>
    %c0_50 = arith.constant 0 : index
    %c0_51 = arith.constant 0 : index
    %c0_52 = arith.constant 0 : index
    %116 = vector.load %arg9[%c0_50, %c0_51, %c0_52] : memref<1x6x32xf32, #tpu.memory_space<vmem>>, vector<1x6x32xf32>
    %117 = vector.shape_cast %116 : vector<1x6x32xf32> to vector<6x32xf32>
    %118 = vector.shape_cast %115 : vector<6x32xf32> to vector<1x6x32xf32>
    tpu.vector_store %arg9[%c0_50, %c0_51, %c0_52], %118 {strides = array<i32>} : memref<1x6x32xf32, #tpu.memory_space<vmem>>, vector<1x6x32xf32>,
    return
  }
  func.func @transform_0(%arg0: i32) -> (i32, i32, i32) {
    %c0_i32 = arith.constant 0 : i32
    %c0_i32_0 = arith.constant 0 : i32
    %c0_i32_1 = arith.constant 0 : i32
    return %arg0, %c0_i32, %c0_i32_0 : i32, i32, i32
  }
  func.func @transform_1(%arg0: i32) -> (i32, i32, i32) {
    %c0_i32 = arith.constant 0 : i32
    %c0_i32_0 = arith.constant 0 : i32
    %c0_i32_1 = arith.constant 0 : i32
    return %arg0, %c0_i32, %c0_i32_0 : i32, i32, i32
  }
  func.func @transform_2(%arg0: i32) -> (i32, i32) {
    %c0_i32 = arith.constant 0 : i32
    %c0_i32_0 = arith.constant 0 : i32
    %c0_i32_1 = arith.constant 0 : i32
    return %c0_i32, %c0_i32_0 : i32, i32
  }
  func.func @transform_3(%arg0: i32) -> (i32, i32) {
    %c0_i32 = arith.constant 0 : i32
    %c0_i32_0 = arith.constant 0 : i32
    %c0_i32_1 = arith.constant 0 : i32
    return %c0_i32, %c0_i32_0 : i32, i32
  }
  func.func @transform_4(%arg0: i32) -> (i32, i32) {
    %c0_i32 = arith.constant 0 : i32
    %c0_i32_0 = arith.constant 0 : i32
    %c0_i32_1 = arith.constant 0 : i32
    return %c0_i32, %c0_i32_0 : i32, i32
  }
  func.func @transform_5(%arg0: i32) -> (i32, i32) {
    %c0_i32 = arith.constant 0 : i32
    %c0_i32_0 = arith.constant 0 : i32
    %c0_i32_1 = arith.constant 0 : i32
    return %c0_i32, %c0_i32_0 : i32, i32
  }
  func.func @transform_6(%arg0: i32) -> (i32, i32) {
    %c0_i32 = arith.constant 0 : i32
    %c0_i32_0 = arith.constant 0 : i32
    %c0_i32_1 = arith.constant 0 : i32
    return %c0_i32, %c0_i32_0 : i32, i32
  }
  func.func @transform_7(%arg0: i32) -> (i32, i32) {
    %c0_i32 = arith.constant 0 : i32
    %c0_i32_0 = arith.constant 0 : i32
    %c0_i32_1 = arith.constant 0 : i32
    return %c0_i32, %c0_i32_0 : i32, i32
  }
  func.func @transform_8(%arg0: i32) -> (i32, i32, i32) {
    %c0_i32 = arith.constant 0 : i32
    %c0_i32_0 = arith.constant 0 : i32
    %c0_i32_1 = arith.constant 0 : i32
    return %arg0, %c0_i32, %c0_i32_0 : i32, i32, i32
  }
}

module attributes {stable_mosaic.version = 11 : i64} {
  func.func @_ffn_block_kernel(%arg0: i32, %arg1: memref<1x6x32xf32, #tpu.memory_space<vmem>>, %arg2: memref<32x64xf32, #tpu.memory_space<vmem>>, %arg3: memref<1x64xf32, #tpu.memory_space<vmem>>, %arg4: memref<64x32xf32, #tpu.memory_space<vmem>>, %arg5: memref<1x32xf32, #tpu.memory_space<vmem>>, %arg6: memref<1x32xf32, #tpu.memory_space<vmem>>, %arg7: memref<1x32xf32, #tpu.memory_space<vmem>>, %arg8: memref<1x6x32xf32, #tpu.memory_space<vmem>>) attributes {dimension_semantics = [#tpu.dimension_semantics<parallel>], iteration_bounds = array<i64: 2>, scalar_prefetch = 0 : i64, scratch_operands = 0 : i64, tpu.core_type = #tpu.core_type<tc>, window_params = [{transform_indices = @transform_0, window_bounds = array<i64: 1, 6, 32>}, {pipeline_mode = #tpu.pipeline_mode<synchronous>, transform_indices = @transform_1, window_bounds = array<i64: 32, 64>}, {pipeline_mode = #tpu.pipeline_mode<synchronous>, transform_indices = @transform_2, window_bounds = array<i64: 1, 64>}, {pipeline_mode = #tpu.pipeline_mode<synchronous>, transform_indices = @transform_3, window_bounds = array<i64: 64, 32>}, {pipeline_mode = #tpu.pipeline_mode<synchronous>, transform_indices = @transform_4, window_bounds = array<i64: 1, 32>}, {pipeline_mode = #tpu.pipeline_mode<synchronous>, transform_indices = @transform_5, window_bounds = array<i64: 1, 32>}, {pipeline_mode = #tpu.pipeline_mode<synchronous>, transform_indices = @transform_6, window_bounds = array<i64: 1, 32>}, {transform_indices = @transform_7, window_bounds = array<i64: 1, 6, 32>}]} {
    %c0 = arith.constant 0 : index
    %c0_0 = arith.constant 0 : index
    %c0_1 = arith.constant 0 : index
    %0 = vector.load %arg1[%c0, %c0_0, %c0_1] : memref<1x6x32xf32, #tpu.memory_space<vmem>>, vector<1x6x32xf32>
    %1 = vector.shape_cast %0 : vector<1x6x32xf32> to vector<6x32xf32>
    %c0_2 = arith.constant 0 : index
    %c0_3 = arith.constant 0 : index
    %2 = vector.load %arg2[%c0_2, %c0_3] : memref<32x64xf32, #tpu.memory_space<vmem>>, vector<32x64xf32>
    %cst = arith.constant dense<0.000000e+00> : vector<6x64xf32>
    %3 = tpu.matmul %1, %2, %cst {dimension_numbers = #tpu.dot_dimension_numbers<[1], [0], [0], [1], [0, 0, 1, 1], [], []>} : vector<6x32xf32>, vector<32x64xf32>, vector<6x64xf32> -> vector<6x64xf32>
    %c0_4 = arith.constant 0 : index
    %c0_5 = arith.constant 0 : index
    %4 = vector.load %arg3[%c0_4, %c0_5] : memref<1x64xf32, #tpu.memory_space<vmem>>, vector<1x64xf32>
    %5 = vector.broadcast %4 : vector<1x64xf32> to vector<6x64xf32>
    %6 = arith.addf %3, %5 : vector<6x64xf32>
    %7 = arith.mulf %6, %6 : vector<6x64xf32>
    %8 = arith.mulf %6, %7 : vector<6x64xf32>
    %cst_6 = arith.constant 4.471500e-02 : f32
    %9 = vector.broadcast %cst_6 : f32 to vector<6x64xf32>
    %10 = arith.mulf %9, %8 : vector<6x64xf32>
    %11 = arith.addf %6, %10 : vector<6x64xf32>
    %cst_7 = arith.constant 0.797884583 : f32
    %12 = vector.broadcast %cst_7 : f32 to vector<6x64xf32>
    %13 = arith.mulf %12, %11 : vector<6x64xf32>
    %14 = math.tanh %13 : vector<6x64xf32>
    %cst_8 = arith.constant 1.000000e+00 : f32
    %15 = vector.broadcast %cst_8 : f32 to vector<6x64xf32>
    %16 = arith.addf %15, %14 : vector<6x64xf32>
    %cst_9 = arith.constant 5.000000e-01 : f32
    %17 = vector.broadcast %cst_9 : f32 to vector<6x64xf32>
    %18 = arith.mulf %17, %16 : vector<6x64xf32>
    %19 = arith.mulf %6, %18 : vector<6x64xf32>
    %c0_10 = arith.constant 0 : index
    %c0_11 = arith.constant 0 : index
    %20 = vector.load %arg4[%c0_10, %c0_11] : memref<64x32xf32, #tpu.memory_space<vmem>>, vector<64x32xf32>
    %cst_12 = arith.constant dense<0.000000e+00> : vector<6x32xf32>
    %21 = tpu.matmul %19, %20, %cst_12 {dimension_numbers = #tpu.dot_dimension_numbers<[1], [0], [0], [1], [0, 0, 1, 1], [], []>} : vector<6x64xf32>, vector<64x32xf32>, vector<6x32xf32> -> vector<6x32xf32>
    %22 = arith.addf %1, %21 : vector<6x32xf32>
    %c0_13 = arith.constant 0 : index
    %c0_14 = arith.constant 0 : index
    %23 = vector.load %arg5[%c0_13, %c0_14] : memref<1x32xf32, #tpu.memory_space<vmem>>, vector<1x32xf32>
    %24 = vector.broadcast %23 : vector<1x32xf32> to vector<6x32xf32>
    %25 = arith.addf %22, %24 : vector<6x32xf32>
    %c0_15 = arith.constant 0 : index
    %c0_16 = arith.constant 0 : index
    %26 = vector.load %arg6[%c0_15, %c0_16] : memref<1x32xf32, #tpu.memory_space<vmem>>, vector<1x32xf32>
    %c0_17 = arith.constant 0 : index
    %c0_18 = arith.constant 0 : index
    %27 = vector.load %arg7[%c0_17, %c0_18] : memref<1x32xf32, #tpu.memory_space<vmem>>, vector<1x32xf32>
    %cst_19 = arith.constant dense<0.000000e+00> : vector<6xf32>
    %28 = vector.multi_reduction <add>, %25, %cst_19 [1] : vector<6x32xf32> to vector<6xf32>
    %29 = vector.shape_cast %28 : vector<6xf32> to vector<6x1xf32>
    %cst_20 = arith.constant 3.200000e+01 : f32
    %30 = vector.broadcast %cst_20 : f32 to vector<6x1xf32>
    %31 = arith.divf %29, %30 : vector<6x1xf32>
    %32 = vector.broadcast %31 : vector<6x1xf32> to vector<6x32xf32>
    %33 = arith.subf %25, %32 : vector<6x32xf32>
    %34 = arith.mulf %33, %33 : vector<6x32xf32>
    %cst_21 = arith.constant dense<0.000000e+00> : vector<6xf32>
    %35 = vector.multi_reduction <add>, %34, %cst_21 [1] : vector<6x32xf32> to vector<6xf32>
    %36 = vector.shape_cast %35 : vector<6xf32> to vector<6x1xf32>
    %cst_22 = arith.constant 3.200000e+01 : f32
    %37 = vector.broadcast %cst_22 : f32 to vector<6x1xf32>
    %38 = arith.divf %36, %37 : vector<6x1xf32>
    %39 = vector.broadcast %31 : vector<6x1xf32> to vector<6x32xf32>
    %40 = arith.subf %25, %39 : vector<6x32xf32>
    %cst_23 = arith.constant 9.99999974E-6 : f32
    %41 = vector.broadcast %cst_23 : f32 to vector<6x1xf32>
    %42 = arith.addf %38, %41 : vector<6x1xf32>
    %43 = math.rsqrt %42 : vector<6x1xf32>
    %44 = vector.broadcast %43 : vector<6x1xf32> to vector<6x32xf32>
    %45 = arith.mulf %40, %44 : vector<6x32xf32>
    %46 = vector.broadcast %26 : vector<1x32xf32> to vector<6x32xf32>
    %47 = arith.mulf %45, %46 : vector<6x32xf32>
    %48 = vector.broadcast %27 : vector<1x32xf32> to vector<6x32xf32>
    %49 = arith.addf %47, %48 : vector<6x32xf32>
    %c0_24 = arith.constant 0 : index
    %c0_25 = arith.constant 0 : index
    %c0_26 = arith.constant 0 : index
    %50 = vector.load %arg8[%c0_24, %c0_25, %c0_26] : memref<1x6x32xf32, #tpu.memory_space<vmem>>, vector<1x6x32xf32>
    %51 = vector.shape_cast %50 : vector<1x6x32xf32> to vector<6x32xf32>
    %52 = vector.shape_cast %49 : vector<6x32xf32> to vector<1x6x32xf32>
    tpu.vector_store %arg8[%c0_24, %c0_25, %c0_26], %52 {strides = array<i32>} : memref<1x6x32xf32, #tpu.memory_space<vmem>>, vector<1x6x32xf32>,
    return
  }
  func.func @transform_0(%arg0: i32) -> (i32, i32, i32) {
    %c0_i32 = arith.constant 0 : i32
    %c0_i32_0 = arith.constant 0 : i32
    %c0_i32_1 = arith.constant 0 : i32
    return %arg0, %c0_i32, %c0_i32_0 : i32, i32, i32
  }
  func.func @transform_1(%arg0: i32) -> (i32, i32) {
    %c0_i32 = arith.constant 0 : i32
    %c0_i32_0 = arith.constant 0 : i32
    %c0_i32_1 = arith.constant 0 : i32
    return %c0_i32, %c0_i32_0 : i32, i32
  }
  func.func @transform_2(%arg0: i32) -> (i32, i32) {
    %c0_i32 = arith.constant 0 : i32
    %c0_i32_0 = arith.constant 0 : i32
    %c0_i32_1 = arith.constant 0 : i32
    return %c0_i32, %c0_i32_0 : i32, i32
  }
  func.func @transform_3(%arg0: i32) -> (i32, i32) {
    %c0_i32 = arith.constant 0 : i32
    %c0_i32_0 = arith.constant 0 : i32
    %c0_i32_1 = arith.constant 0 : i32
    return %c0_i32, %c0_i32_0 : i32, i32
  }
  func.func @transform_4(%arg0: i32) -> (i32, i32) {
    %c0_i32 = arith.constant 0 : i32
    %c0_i32_0 = arith.constant 0 : i32
    %c0_i32_1 = arith.constant 0 : i32
    return %c0_i32, %c0_i32_0 : i32, i32
  }
  func.func @transform_5(%arg0: i32) -> (i32, i32) {
    %c0_i32 = arith.constant 0 : i32
    %c0_i32_0 = arith.constant 0 : i32
    %c0_i32_1 = arith.constant 0 : i32
    return %c0_i32, %c0_i32_0 : i32, i32
  }
  func.func @transform_6(%arg0: i32) -> (i32, i32) {
    %c0_i32 = arith.constant 0 : i32
    %c0_i32_0 = arith.constant 0 : i32
    %c0_i32_1 = arith.constant 0 : i32
    return %c0_i32, %c0_i32_0 : i32, i32
  }
  func.func @transform_7(%arg0: i32) -> (i32, i32, i32) {
    %c0_i32 = arith.constant 0 : i32
    %c0_i32_0 = arith.constant 0 : i32
    %c0_i32_1 = arith.constant 0 : i32
    return %arg0, %c0_i32, %c0_i32_0 : i32, i32, i32
  }
}

module attributes {stable_mosaic.version = 11 : i64} {
  func.func @_lm_head_kernel(%arg0: memref<2x32xf32, #tpu.memory_space<vmem>>, %arg1: memref<32x128xf32, #tpu.memory_space<vmem>>, %arg2: memref<2x128xf32, #tpu.memory_space<vmem>>) attributes {dimension_semantics = [], scalar_prefetch = 0 : i64, scratch_operands = 0 : i64, tpu.core_type = #tpu.core_type<tc>} {
    %c0 = arith.constant 0 : index
    %c0_0 = arith.constant 0 : index
    %0 = vector.load %arg0[%c0, %c0_0] : memref<2x32xf32, #tpu.memory_space<vmem>>, vector<2x32xf32>
    %c0_1 = arith.constant 0 : index
    %c0_2 = arith.constant 0 : index
    %1 = vector.load %arg1[%c0_1, %c0_2] : memref<32x128xf32, #tpu.memory_space<vmem>>, vector<32x128xf32>
    %cst = arith.constant dense<0.000000e+00> : vector<2x128xf32>
    %2 = tpu.matmul %0, %1, %cst {dimension_numbers = #tpu.dot_dimension_numbers<[1], [0], [0], [1], [0, 0, 1, 1], [], []>} : vector<2x32xf32>, vector<32x128xf32>, vector<2x128xf32> -> vector<2x128xf32>
    %3 = tpu.iota {dimensions = array<i32: 1>} : vector<2x128xi32>
    %c96_i32 = arith.constant 96 : i32
    %4 = vector.broadcast %c96_i32 : i32 to vector<2x128xi32>
    %5 = arith.cmpi slt, %3, %4 : vector<2x128xi32>
    %cst_3 = arith.constant -1.000000e+09 : f32
    %6 = vector.broadcast %cst_3 : f32 to vector<2x128xf32>
    %7 = arith.select %5, %2, %6 : vector<2x128xi1>, vector<2x128xf32>
    %c0_4 = arith.constant 0 : index
    %c0_5 = arith.constant 0 : index
    %8 = vector.load %arg2[%c0_4, %c0_5] : memref<2x128xf32, #tpu.memory_space<vmem>>, vector<2x128xf32>
    tpu.vector_store %arg2[%c0_4, %c0_5], %7 {strides = array<i32>} : memref<2x128xf32, #tpu.memory_space<vmem>>, vector<2x128xf32>,
    return
  }
}

</mosaic_0001>

<llo_original>
// kernel: generate.5
$region0: #{generate.5}
  #allocation0 [shape = 'u32[]', space=smem, size = 0x4, offset = 0x4, fixed_abs, tag = 'smem constant byte address 0x4 - core index']
  #allocation1 [shape = 'u32[144,128]{1,0:T(1,128)}', space=vmem, size = 0x12000, scoped, tag = 'internal scratch']
  %s0 = inlined_call_operand.vmem [shape: f32[16,32], index: 0, kind: input, shape index: {}]
  %s1 = inlined_call_operand.vmem [shape: f32[32,64], index: 1, kind: input, shape index: {}]
  %s2 = inlined_call_operand.vmem [shape: f32[1,64], index: 2, kind: input, shape index: {}]
  %s3 = inlined_call_operand.vmem [shape: f32[16,64], index: 3, kind: output, shape index: {}]
  %s4 = sld [smem:[#allocation0]]
  $region22: #{generate.5} parent=0
    _
  %s6 = ssub.s32 1, %s4
  %s7 = scalar_select 0, %s6, %s4
  // Predicated region
  $region2: #{generate.5} parent=0 // pred_check
    _
  $region3: #{generate.5} parent=0 // pred_check_branch
    %9 = sbr.rel (0) target = $region5
  $region4: #{generate.5} parent=0 // pred_region
    _
  $region5: #{generate.5} parent=0 // pred_fallthru
    _
  // Predicated region
  $region6: #{generate.5} parent=0 // pred_check
    _
  $region7: #{generate.5} parent=0 // pred_check_branch
    %11 = sbr.rel (0) target = $region9
  $region8: #{generate.5} parent=0 // pred_region
    _
  $region9: #{generate.5} parent=0 // pred_fallthru
    _
  // Predicated region
  $region10: #{generate.5} parent=0 // pred_check
    _
  $region11: #{generate.5} parent=0 // pred_check_branch
    %13 = sbr.rel (0) target = $region13
  $region12: #{generate.5} parent=0 // pred_region
    _
  $region13: #{generate.5} parent=0 // pred_fallthru
    _
  %v14 = vld [vmem:[%s0] sm:$0xff]
  %v15 = vld [vmem:[%s0 + $0x8] sm:$0xff]
  %v16 = vld [vmem:[%s1] sm:$0xff]
  %v17 = vld [vmem:[%s1 + $0x8] sm:$0xff]
  %v18 = vld [vmem:[%s1 + $0x10] sm:$0xff]
  %v19 = vld [vmem:[%s1 + $0x18] sm:$0xff]
  %v20 = vld [vmem:[%s2] sm:$0x1]
  %v22 = vlaneseq
  %v23 = vshrl.u32 %v22, 7
  %v24 = vsub.s32 0, %v23
  %v25 = vrot.slane %v20, %v24
  %vm27 = vcmask 261120
  %v29 = vsel %vm27, %v14, 0
  %v32 = vsel %vm27, %v15, 0
  %34 = vmatprep.subr.mxu0 0.0
  %35 = vmatpush1.msra.mxu0 %v16
  %36 = vmatprep.subr.mxu0 0.0
  %37 = vmatpush1.msra.mxu0 %v17
  %38 = vmatprep.subr.mxu0 0.0
  %39 = vmatpush1.msra.mxu0 %v18
  %40 = vmatprep.subr.mxu0 0.0
  %41 = vmatpush1.msra.mxu0 %v19
  %42 = vmatprep.subr.mxu0 0.0
  %43 = vmatpush1.msra.mxu0 0.0
  %44 = vmatprep.subr.mxu0 0.0
  %45 = vmatpush1.msra.mxu0 0.0
  %46 = vmatprep.subr.mxu0 0.0
  %47 = vmatpush1.msra.mxu0 0.0
  %48 = vmatprep.subr.mxu0 0.0
  %49 = vmatpush1.msra.mxu0 0.0
  %50 = vmatprep.subr.mxu0 0.0
  %51 = vmatpush1.msra.mxu0 0.0
  %52 = vmatprep.subr.mxu0 0.0
  %53 = vmatpush1.msra.mxu0 0.0
  %54 = vmatprep.subr.mxu0 0.0
  %55 = vmatpush1.msra.mxu0 0.0
  %56 = vmatprep.subr.mxu0 0.0
  %57 = vmatpush1.msra.mxu0 0.0
  %58 = vmatprep.subr.mxu0 0.0
  %59 = vmatpush1.msra.mxu0 0.0
  %60 = vmatprep.subr.mxu0 0.0
  %61 = vmatpush1.msra.mxu0 0.0
  %62 = vmatprep.subr.mxu0 0.0
  %63 = vmatpush1.msra.mxu0 0.0
  %64 = vmatprep.subr.mxu0 0.0
  %65 = vmatpush1.msra.mxu0 0.0
  %66 = vmatprep.subr.mxu0 0.0
  %67 = vmatpush1.msra.mxu0 0.0
  %68 = vmatprep.subr.mxu0 0.0
  %69 = vmatpush1.msra.mxu0 0.0
  %70 = vmatprep.subr.mxu0 0.0
  %71 = vmatpush1.msra.mxu0 0.0
  %72 = vmatprep.subr.mxu0 0.0
  %73 = vmatpush1.msra.mxu0 0.0
  %74 = vmatprep.subr.mxu0 0.0
  %75 = vmatpush1.msra.mxu0 0.0
  %76 = vmatprep.subr.mxu0 0.0
  %77 = vmatpush1.msra.mxu0 0.0
  %78 = vmatprep.subr.mxu0 0.0
  %79 = vmatpush1.msra.mxu0 0.0
  %80 = vmatprep.subr.mxu0 0.0
  %81 = vmatpush1.msra.mxu0 0.0
  %82 = vmatprep.subr.mxu0 0.0
  %83 = vmatpush1.msra.mxu0 0.0
  %84 = vmatprep.subr.mxu0 0.0
  %85 = vmatpush1.msra.mxu0 0.0
  %86 = vmatprep.subr.mxu0 0.0
  %87 = vmatpush1.msra.mxu0 0.0
  %88 = vmatprep.subr.mxu0 0.0
  %89 = vmatpush1.msra.mxu0 0.0
  %90 = vmatprep.subr.mxu0 0.0
  %91 = vmatpush1.msra.mxu0 0.0
  %92 = vmatprep.subr.mxu0 0.0
  %93 = vmatpush1.msra.mxu0 0.0
  %94 = vmatprep.subr.mxu0 0.0
  %95 = vmatpush1.msra.mxu0 0.0
  %96 = vmatprep.subr.mxu0 0.0
  %97 = vmatpush1.msra.mxu0 0.0
  %98 = vmatprep.mubr.f32.mxu0 0.0
  %99 = vmatmul.mubr.f32.gmra.mrb[0].mxu0 %v29
  %v100 = vpop.f32.mrb[0].mxu0
  %v101 = vadd.f32 %v25, %v100
  %v102 = vpop.f32.mrb[0].mxu0
  %103 = vmatprep.mubr.f32.mxu0 0.0
  %104 = vmatmul.mubr.f32.gmra.mrb[0].mxu0 %v32
  %v105 = vpop.f32.mrb[0].mxu0
  %v106 = vadd.f32 %v25, %v105
  %v107 = vpop.f32.mrb[0].mxu0
  %108 = vdwg.mxu0
  %vm109 = vcmask 523264
  %110 = vst.msk [vmem:[%s3] sm:$0xff] %vm109, %v101
  %111 = vst.msk [vmem:[%s3 + $0x8] sm:$0xff] %vm109, %v106
  // Predicated region
  $region14: #{generate.5} parent=0 // pred_check
    _
  $region15: #{generate.5} parent=0 // pred_check_branch
    %113 = sbr.rel (0) target = $region17
  $region16: #{generate.5} parent=0 // pred_region
    _
  $region17: #{generate.5} parent=0 // pred_fallthru
    _
  // Predicated region
  $region18: #{generate.5} parent=0 // pred_check
    _
  $region19: #{generate.5} parent=0 // pred_check_branch
    %115 = sbr.rel (0) target = $region21
  $region20: #{generate.5} parent=0 // pred_region
    _
  $region21: #{generate.5} parent=0 // pred_fallthru
    _

// kernel: generate.4
$region0: #{generate.4}
  #allocation0 [shape = 'u32[]', space=smem, size = 0x4, offset = 0x4, fixed_abs, tag = 'smem constant byte address 0x4 - core index']
  #allocation1 [shape = 'u32[144,128]{1,0:T(1,128)}', space=vmem, size = 0x12000, scoped, tag = 'internal scratch']
  %s0 = inlined_call_operand.vmem [shape: f32[2,8,32], index: 0, kind: input, shape index: {}]
  %s1 = inlined_call_operand.vmem [shape: f32[32,64], index: 1, kind: input, shape index: {}]
  %s2 = inlined_call_operand.vmem [shape: f32[1,64], index: 2, kind: input, shape index: {}]
  %s3 = inlined_call_operand.vmem [shape: f32[64,32], index: 3, kind: input, shape index: {}]
  %s4 = inlined_call_operand.vmem [shape: f32[1,32], index: 4, kind: input, shape index: {}]
  %s5 = inlined_call_operand.vmem [shape: f32[1,32], index: 5, kind: input, shape index: {}]
  %s6 = inlined_call_operand.vmem [shape: f32[1,32], index: 6, kind: input, shape index: {}]
  %s7 = inlined_call_operand.vmem [shape: f32[2,8,32], index: 7, kind: output, shape index: {}]
  %s8 = sld [smem:[#allocation0]]
  $region61: #{generate.4} parent=0
    _
  %s10 = ssub.s32 1, %s8
  %s11 = scalar_select 0, %s10, %s8
  loop: start=0, step=1, limit=4
  $region2: #{generate.4} parent=0 // loop_pre_header
    _
  $region3: #{generate.4} parent=0 // loop_header
    %s13 = sphi 0, %s17
    %p14 = scmp.ge.s32.totalorder %s13, 4
    %s23 = sphi 0, %s25
    %s26 = sphi 0, %s23
    %s27 = sphi 0, %s26
    %s43 = sphi 0, %s27
    %s47 = sphi 0, %s47
    %s49 = sphi 0, %s47
    %s50 = sphi 0, %s49
    %s64 = sphi 0, %s50
    %s68 = sphi 0, %s68
    %s70 = sphi 0, %s68
    %s71 = sphi 0, %s70
    %s85 = sphi 0, %s71
    %s89 = sphi 0, %s89
    %s91 = sphi 0, %s89
    %s92 = sphi 0, %s91
    %s106 = sphi 0, %s92
    %s110 = sphi 0, %s110
    %s112 = sphi 0, %s110
    %s113 = sphi 0, %s112
    %s127 = sphi 0, %s113
    %s131 = sphi 0, %s131
    %s133 = sphi 0, %s131
    %s134 = sphi 0, %s133
    %s148 = sphi 0, %s134
    %s152 = sphi 0, %s152
    %s154 = sphi 0, %s152
    %s155 = sphi 0, %s154
    %s169 = sphi 0, %s155
    %s175 = sphi 0, %s177
    %s178 = sphi 0, %s175
    %s179 = sphi 0, %s178
    %s195 = sphi 0, %s179
  $region4: #{generate.4} parent=0 // loop_header_branch
    %16 = sbr.rel (%p14) target = $region8
  $region5: #{generate.4} parent=0 // loop_body
    %s18 = ssub.s32 %s13, 1
    %s19 = ssub.s32 %s13, 2
    %s20 = sadd.s32 %s13, 1
    %s21 = ssub.s32 %s13, %s20
    %p22 = scmp.eq.s32.totalorder %s21, 0
    %s24 = sadd.s32 %s23, 1
    %s25 = scalar_select %p22, %s23, %s24
    %p28 = pneg %p22
    %p29 = scmp.eq.s32.totalorder %s13, 1
    %p30 = por %p28, %p29
    %p31 = scmp.ne.s32.totalorder %s23, %s26
    %p32 = scmp.eq.s32.totalorder %s13, 0
    %p33 = por %p31, %p32
    %p34 = scmp.ne.s32.totalorder %s23, %s26
    %p35 = scmp.eq.s32.totalorder %s18, 1
    %p36 = por %p34, %p35
    %p37 = scmp.ne.s32.totalorder %s26, %s27
    %p38 = scmp.eq.s32.totalorder %s18, 0
    %p39 = por %p37, %p38
    %p40 = scmp.ne.s32.totalorder %s26, %s27
    %p41 = scmp.eq.s32.totalorder %s19, 1
    %p42 = por %p40, %p41
    %p44 = scmp.ne.s32.totalorder %s27, %s43
    %p45 = scmp.eq.s32.totalorder %s19, 0
    %p46 = por %p44, %p45
    %s48 = sadd.s32 %s47, 1
    %p51 = scmp.eq.s32.totalorder %s13, 1
    %p52 = scmp.ne.s32.totalorder %s47, %s49
    %p53 = scmp.eq.s32.totalorder %s13, 0
    %p54 = por %p52, %p53
    %p55 = scmp.ne.s32.totalorder %s47, %s49
    %p56 = scmp.eq.s32.totalorder %s18, 1
    %p57 = por %p55, %p56
    %p58 = scmp.ne.s32.totalorder %s49, %s50
    %p59 = scmp.eq.s32.totalorder %s18, 0
    %p60 = por %p58, %p59
    %p61 = scmp.ne.s32.totalorder %s49, %s50
    %p62 = scmp.eq.s32.totalorder %s19, 1
    %p63 = por %p61, %p62
    %p65 = scmp.ne.s32.totalorder %s50, %s64
    %p66 = scmp.eq.s32.totalorder %s19, 0
    %p67 = por %p65, %p66
    %s69 = sadd.s32 %s68, 1
    %p72 = scmp.eq.s32.totalorder %s13, 1
    %p73 = scmp.ne.s32.totalorder %s68, %s70
    %p74 = scmp.eq.s32.totalorder %s13, 0
    %p75 = por %p73, %p74
    %p76 = scmp.ne.s32.totalorder %s68, %s70
    %p77 = scmp.eq.s32.totalorder %s18, 1
    %p78 = por %p76, %p77
    %p79 = scmp.ne.s32.totalorder %s70, %s71
    %p80 = scmp.eq.s32.totalorder %s18, 0
    %p81 = por %p79, %p80
    %p82 = scmp.ne.s32.totalorder %s70, %s71
    %p83 = scmp.eq.s32.totalorder %s19, 1
    %p84 = por %p82, %p83
    %p86 = scmp.ne.s32.totalorder %s71, %s85
    %p87 = scmp.eq.s32.totalorder %s19, 0
    %p88 = por %p86, %p87
    %s90 = sadd.s32 %s89, 1
    %p93 = scmp.eq.s32.totalorder %s13, 1
    %p94 = scmp.ne.s32.totalorder %s89, %s91
    %p95 = scmp.eq.s32.totalorder %s13, 0
    %p96 = por %p94, %p95
    %p97 = scmp.ne.s32.totalorder %s89, %s91
    %p98 = scmp.eq.s32.totalorder %s18, 1
    %p99 = por %p97, %p98
    %p100 = scmp.ne.s32.totalorder %s91, %s92
    %p101 = scmp.eq.s32.totalorder %s18, 0
    %p102 = por %p100, %p101
    %p103 = scmp.ne.s32.totalorder %s91, %s92
    %p104 = scmp.eq.s32.totalorder %s19, 1
    %p105 = por %p103, %p104
    %p107 = scmp.ne.s32.totalorder %s92, %s106
    %p108 = scmp.eq.s32.totalorder %s19, 0
    %p109 = por %p107, %p108
    %s111 = sadd.s32 %s110, 1
    %p114 = scmp.eq.s32.totalorder %s13, 1
    %p115 = scmp.ne.s32.totalorder %s110, %s112
    %p116 = scmp.eq.s32.totalorder %s13, 0
    %p117 = por %p115, %p116
    %p118 = scmp.ne.s32.totalorder %s110, %s112
    %p119 = scmp.eq.s32.totalorder %s18, 1
    %p120 = por %p118, %p119
    %p121 = scmp.ne.s32.totalorder %s112, %s113
    %p122 = scmp.eq.s32.totalorder %s18, 0
    %p123 = por %p121, %p122
    %p124 = scmp.ne.s32.totalorder %s112, %s113
    %p125 = scmp.eq.s32.totalorder %s19, 1
    %p126 = por %p124, %p125
    %p128 = scmp.ne.s32.totalorder %s113, %s127
    %p129 = scmp.eq.s32.totalorder %s19, 0
    %p130 = por %p128, %p129
    %s132 = sadd.s32 %s131, 1
    %p135 = scmp.eq.s32.totalorder %s13, 1
    %p136 = scmp.ne.s32.totalorder %s131, %s133
    %p137 = scmp.eq.s32.totalorder %s13, 0
    %p138 = por %p136, %p137
    %p139 = scmp.ne.s32.totalorder %s131, %s133
    %p140 = scmp.eq.s32.totalorder %s18, 1
    %p141 = por %p139, %p140
    %p142 = scmp.ne.s32.totalorder %s133, %s134
    %p143 = scmp.eq.s32.totalorder %s18, 0
    %p144 = por %p142, %p143
    %p145 = scmp.ne.s32.totalorder %s133, %s134
    %p146 = scmp.eq.s32.totalorder %s19, 1
    %p147 = por %p145, %p146
    %p149 = scmp.ne.s32.totalorder %s134, %s148
    %p150 = scmp.eq.s32.totalorder %s19, 0
    %p151 = por %p149, %p150
    %s153 = sadd.s32 %s152, 1
    %p156 = scmp.eq.s32.totalorder %s13, 1
    %p157 = scmp.ne.s32.totalorder %s152, %s154
    %p158 = scmp.eq.s32.totalorder %s13, 0
    %p159 = por %p157, %p158
    %p160 = scmp.ne.s32.totalorder %s152, %s154
    %p161 = scmp.eq.s32.totalorder %s18, 1
    %p162 = por %p160, %p161
    %p163 = scmp.ne.s32.totalorder %s154, %s155
    %p164 = scmp.eq.s32.totalorder %s18, 0
    %p165 = por %p163, %p164
    %p166 = scmp.ne.s32.totalorder %s154, %s155
    %p167 = scmp.eq.s32.totalorder %s19, 1
    %p168 = por %p166, %p167
    %p170 = scmp.ne.s32.totalorder %s155, %s169
    %p171 = scmp.eq.s32.totalorder %s19, 0
    %p172 = por %p170, %p171
    %s173 = ssub.s32 %s13, %s20
    %p174 = scmp.eq.s32.totalorder %s173, 0
    %s176 = sadd.s32 %s175, 1
    %s177 = scalar_select %p174, %s175, %s176
    %p180 = pneg %p174
    %p181 = scmp.eq.s32.totalorder %s13, 1
    %p182 = por %p180, %p181
    %p183 = scmp.ne.s32.totalorder %s175, %s178
    %p184 = scmp.eq.s32.totalorder %s13, 0
    %p185 = por %p183, %p184
    %p186 = scmp.ne.s32.totalorder %s175, %s178
    %p187 = scmp.eq.s32.totalorder %s18, 1
    %p188 = por %p186, %p187
    %p189 = scmp.ne.s32.totalorder %s178, %s179
    %p190 = scmp.eq.s32.totalorder %s18, 0
    %p191 = por %p189, %p190
    %p192 = scmp.ne.s32.totalorder %s178, %s179
    %p193 = scmp.eq.s32.totalorder %s19, 1
    %p194 = por %p192, %p193
    %p196 = scmp.ne.s32.totalorder %s179, %s195
    %p197 = scmp.eq.s32.totalorder %s19, 0
    %p198 = por %p196, %p197
    %p199 = scmp.le.s32.totalorder 1, %s13
    %p200 = scmp.lt.s32.totalorder %s13, 3
    %p201 = pnand %p199, %p200
    %p202 = pneg %p201
    // Predicated region
    $region9: #{generate.4} parent=5 // pred_check
      _
    $region10: #{generate.4} parent=5 // pred_check_branch
      %204 = sbr.rel (%p201) target = $region12
    $region11: #{generate.4} parent=5 // pred_region
      %s205 = ssub.s32 %s13, 1
      // Predicated region
      $region13: #{generate.4} parent=11 // pred_check
        %p206 = pneg %p60
      $region14: #{generate.4} parent=11 // pred_check_branch
        %208 = sbr.rel (%p206) target = $region16
      $region15: #{generate.4} parent=11 // pred_region
        _
      $region16: #{generate.4} parent=11 // pred_fallthru
        _
      // Predicated region
      $region17: #{generate.4} parent=11 // pred_check
        %p209 = pneg %p81
      $region18: #{generate.4} parent=11 // pred_check_branch
        %211 = sbr.rel (%p209) target = $region20
      $region19: #{generate.4} parent=11 // pred_region
        _
      $region20: #{generate.4} parent=11 // pred_fallthru
        _
      // Predicated region
      $region21: #{generate.4} parent=11 // pred_check
        %p212 = pneg %p102
      $region22: #{generate.4} parent=11 // pred_check_branch
        %214 = sbr.rel (%p212) target = $region24
      $region23: #{generate.4} parent=11 // pred_region
        _
      $region24: #{generate.4} parent=11 // pred_fallthru
        _
      // Predicated region
      $region25: #{generate.4} parent=11 // pred_check
        %p215 = pneg %p123
      $region26: #{generate.4} parent=11 // pred_check_branch
        %217 = sbr.rel (%p215) target = $region28
      $region27: #{generate.4} parent=11 // pred_region
        _
      $region28: #{generate.4} parent=11 // pred_fallthru
        _
      // Predicated region
      $region29: #{generate.4} parent=11 // pred_check
        %p218 = pneg %p144
      $region30: #{generate.4} parent=11 // pred_check_branch
        %220 = sbr.rel (%p218) target = $region32
      $region31: #{generate.4} parent=11 // pred_region
        _
      $region32: #{generate.4} parent=11 // pred_fallthru
        _
      // Predicated region
      $region33: #{generate.4} parent=11 // pred_check
        %p221 = pneg %p165
      $region34: #{generate.4} parent=11 // pred_check_branch
        %223 = sbr.rel (%p221) target = $region36
      $region35: #{generate.4} parent=11 // pred_region
        _
      $region36: #{generate.4} parent=11 // pred_fallthru
        _
    $region12: #{generate.4} parent=5 // pred_fallthru
      _
    %p224 = scmp.lt.s32.totalorder %s13, 2
    // Predicated region
    $region37: #{generate.4} parent=5 // pred_check
      %p225 = pneg %p224
    $region38: #{generate.4} parent=5 // pred_check_branch
      %227 = sbr.rel (%p225) target = $region40
    $region39: #{generate.4} parent=5 // pred_region
      // Predicated region
      $region41: #{generate.4} parent=39 // pred_check
        %p228 = pneg %p33
      $region42: #{generate.4} parent=39 // pred_check_branch
        %230 = sbr.rel (%p228) target = $region44
      $region43: #{generate.4} parent=39 // pred_region
        %p231 = scmp.lt.s32.totalorder %s13, 1
        %s232 = scalar_select %p231, %s13, 1
        %s233 = smul.addr %s232, 8
        %s234 = scalar_lea.vmem %s0, %s233
      $region44: #{generate.4} parent=39 // pred_fallthru
        _
    $region40: #{generate.4} parent=5 // pred_fallthru
      _
    %p235 = scmp.le.s32.totalorder 1, %s13
    %p236 = scmp.lt.s32.totalorder %s13, 3
    %p237 = pnand %p235, %p236
    %p238 = pneg %p237
    // Predicated region
    $region45: #{generate.4} parent=5 // pred_check
      _
    $region46: #{generate.4} parent=5 // pred_check_branch
      %240 = sbr.rel (%p237) target = $region48
    $region47: #{generate.4} parent=5 // pred_region
      %s241 = ssub.s32 %s13, 1
      %p242 = scmp.lt.s32.totalorder %s18, 1
      %s243 = scalar_select %p242, %s18, 1
      %s244 = smul.addr %s243, 8
      %s245 = scalar_lea.vmem %s0, %s244
      %p246 = pneg %p39
      %p247 = pneg %p36
      %p248 = pneg %p60
      %p249 = pneg %p57
      %p250 = pneg %p81
      %p251 = pneg %p78
      %p252 = pneg %p102
      %p253 = pneg %p99
      %p254 = pneg %p123
      %p255 = pneg %p120
      %p256 = pneg %p144
      %p257 = pneg %p141
      %p258 = pneg %p165
      %p259 = pneg %p162
      %p260 = pneg %p191
      %p261 = pneg %p188
      %p262 = scmp.lt.s32.totalorder %s18, 1
      %s263 = scalar_select %p262, %s18, 1
      %s264 = smul.addr %s263, 8
      %s265 = scalar_lea.vmem %s7, %s264
      %p266 = scmp.lt.s32.totalorder %s18, 1
      %s267 = scalar_select %p266, %s18, 1
      %s268 = smul.addr %s267, 8
      %s269 = scalar_lea.vmem %s0, %s268
      %p270 = scmp.lt.s32.totalorder %s18, 1
      %s271 = scalar_select %p270, %s18, 1
      %s272 = smul.addr %s271, 8
      %s273 = scalar_lea.vmem %s7, %s272
      %v274 = vld [vmem:[%s269] sm:$0xff]
      %v275 = vld [vmem:[%s1] sm:$0xff]
      %v276 = vld [vmem:[%s1 + $0x8] sm:$0xff]
      %v277 = vld [vmem:[%s1 + $0x10] sm:$0xff]
      %v278 = vld [vmem:[%s1 + $0x18] sm:$0xff]
      %v279 = vld [vmem:[%s2] sm:$0x1]
      %v281 = vlaneseq
      %v282 = vshrl.u32 %v281, 7
      %v283 = vsub.s32 0, %v282
      %v284 = vrot.slane %v279, %v283
      %vm286 = vcmask 261120
      %v288 = vsel %vm286, %v274, 0
      %290 = vmatprep.subr.mxu0 0.0
      %291 = vmatpush1.msra.mxu0 %v275
      %292 = vmatprep.subr.mxu0 0.0
      %293 = vmatpush1.msra.mxu0 %v276
      %294 = vmatprep.subr.mxu0 0.0
      %295 = vmatpush1.msra.mxu0 %v277
      %296 = vmatprep.subr.mxu0 0.0
      %297 = vmatpush1.msra.mxu0 %v278
      %298 = vmatprep.subr.mxu0 0.0
      %299 = vmatpush1.msra.mxu0 0.0
      %300 = vmatprep.subr.mxu0 0.0
      %301 = vmatpush1.msra.mxu0 0.0
      %302 = vmatprep.subr.mxu0 0.0
      %303 = vmatpush1.msra.mxu0 0.0
      %304 = vmatprep.subr.mxu0 0.0
      %305 = vmatpush1.msra.mxu0 0.0
      %306 = vmatprep.subr.mxu0 0.0
      %307 = vmatpush1.msra.mxu0 0.0
      %308 = vmatprep.subr.mxu0 0.0
      %309 = vmatpush1.msra.mxu0 0.0
      %310 = vmatprep.subr.mxu0 0.0
      %311 = vmatpush1.msra.mxu0 0.0
      %312 = vmatprep.subr.mxu0 0.0
      %313 = vmatpush1.msra.mxu0 0.0
      %314 = vmatprep.subr.mxu0 0.0
      %315 = vmatpush1.msra.mxu0 0.0
      %316 = vmatprep.subr.mxu0 0.0
      %317 = vmatpush1.msra.mxu0 0.0
      %318 = vmatprep.subr.mxu0 0.0
      %319 = vmatpush1.msra.mxu0 0.0
      %320 = vmatprep.subr.mxu0 0.0
      %321 = vmatpush1.msra.mxu0 0.0
      %322 = vmatprep.subr.mxu0 0.0
      %323 = vmatpush1.msra.mxu0 0.0
      %324 = vmatprep.subr.mxu0 0.0
      %325 = vmatpush1.msra.mxu0 0.0
      %326 = vmatprep.subr.mxu0 0.0
      %327 = vmatpush1.msra.mxu0 0.0
      %328 = vmatprep.subr.mxu0 0.0
      %329 = vmatpush1.msra.mxu0 0.0
      %330 = vmatprep.subr.mxu0 0.0
      %331 = vmatpush1.msra.mxu0 0.0
      %332 = vmatprep.subr.mxu0 0.0
      %333 = vmatpush1.msra.mxu0 0.0
      %334 = vmatprep.subr.mxu0 0.0
      %335 = vmatpush1.msra.mxu0 0.0
      %336 = vmatprep.subr.mxu0 0.0
      %337 = vmatpush1.msra.mxu0 0.0
      %338 = vmatprep.subr.mxu0 0.0
      %339 = vmatpush1.msra.mxu0 0.0
      %340 = vmatprep.subr.mxu0 0.0
      %341 = vmatpush1.msra.mxu0 0.0
      %342 = vmatprep.subr.mxu0 0.0
      %343 = vmatpush1.msra.mxu0 0.0
      %344 = vmatprep.subr.mxu0 0.0
      %345 = vmatpush1.msra.mxu0 0.0
      %346 = vmatprep.subr.mxu0 0.0
      %347 = vmatpush1.msra.mxu0 0.0
      %348 = vmatprep.subr.mxu0 0.0
      %349 = vmatpush1.msra.mxu0 0.0
      %350 = vmatprep.subr.mxu0 0.0
      %351 = vmatpush1.msra.mxu0 0.0
      %352 = vmatprep.subr.mxu0 0.0
      %353 = vmatpush1.msra.mxu0 0.0
      %354 = vmatprep.mubr.f32.mxu0 0.0
      %355 = vmatmul.mubr.f32.gmra.mrb[0].mxu0 %v288
      %v356 = vpop.f32.mrb[0].mxu0
      %v357 = vadd.f32 %v284, %v356
      %v358 = vpop.f32.mrb[0].mxu0
      %359 = vdwg.mxu0
      %v360 = vmul.f32 %v357, %v357
      %v361 = vmul.f32 %v357, %v360
      %v362 = vmul.f32 %v361, 0.044715
      %v363 = vadd.f32 %v357, %v362
      %v364 = vmul.f32 %v363, 0.7978846
      %v365 = vtanh.pop %v364
      %v366 = vadd.f32 %v365, 1.0
      %v367 = vmul.f32 %v366, 0.5
      %v368 = vmul.f32 %v357, %v367
      %v369 = vld [vmem:[%s3] sm:$0xff]
      %v370 = vld [vmem:[%s3 + $0x8] sm:$0xff]
      %v371 = vld [vmem:[%s3 + $0x10] sm:$0xff]
      %v372 = vld [vmem:[%s3 + $0x18] sm:$0xff]
      %v373 = vld [vmem:[%s3 + $0x20] sm:$0xff]
      %v374 = vld [vmem:[%s3 + $0x28] sm:$0xff]
      %v375 = vld [vmem:[%s3 + $0x30] sm:$0xff]
      %v376 = vld [vmem:[%s3 + $0x38] sm:$0xff]
      %vm377 = vcmask 523264
      %v379 = vsel %vm377, %v368, 0
      %381 = vmatprep.subr.mxu0 0.0
      %382 = vmatpush1.msra.mxu0 %v369
      %383 = vmatprep.subr.mxu0 0.0
      %384 = vmatpush1.msra.mxu0 %v370
      %385 = vmatprep.subr.mxu0 0.0
      %386 = vmatpush1.msra.mxu0 %v371
      %387 = vmatprep.subr.mxu0 0.0
      %388 = vmatpush1.msra.mxu0 %v372
      %389 = vmatprep.subr.mxu0 0.0
      %390 = vmatpush1.msra.mxu0 %v373
      %391 = vmatprep.subr.mxu0 0.0
      %392 = vmatpush1.msra.mxu0 %v374
      %393 = vmatprep.subr.mxu0 0.0
      %394 = vmatpush1.msra.mxu0 %v375
      %395 = vmatprep.subr.mxu0 0.0
      %396 = vmatpush1.msra.mxu0 %v376
      %397 = vmatprep.subr.mxu0 0.0
      %398 = vmatpush1.msra.mxu0 0.0
      %399 = vmatprep.subr.mxu0 0.0
      %400 = vmatpush1.msra.mxu0 0.0
      %401 = vmatprep.subr.mxu0 0.0
      %402 = vmatpush1.msra.mxu0 0.0
      %403 = vmatprep.subr.mxu0 0.0
      %404 = vmatpush1.msra.mxu0 0.0
      %405 = vmatprep.subr.mxu0 0.0
      %406 = vmatpush1.msra.mxu0 0.0
      %407 = vmatprep.subr.mxu0 0.0
      %408 = vmatpush1.msra.mxu0 0.0
      %409 = vmatprep.subr.mxu0 0.0
      %410 = vmatpush1.msra.mxu0 0.0
      %411 = vmatprep.subr.mxu0 0.0
      %412 = vmatpush1.msra.mxu0 0.0
      %413 = vmatprep.subr.mxu0 0.0
      %414 = vmatpush1.msra.mxu0 0.0
      %415 = vmatprep.subr.mxu0 0.0
      %416 = vmatpush1.msra.mxu0 0.0
      %417 = vmatprep.subr.mxu0 0.0
      %418 = vmatpush1.msra.mxu0 0.0
      %419 = vmatprep.subr.mxu0 0.0
      %420 = vmatpush1.msra.mxu0 0.0
      %421 = vmatprep.subr.mxu0 0.0
      %422 = vmatpush1.msra.mxu0 0.0
      %423 = vmatprep.subr.mxu0 0.0
      %424 = vmatpush1.msra.mxu0 0.0
      %425 = vmatprep.subr.mxu0 0.0
      %426 = vmatpush1.msra.mxu0 0.0
      %427 = vmatprep.subr.mxu0 0.0
      %428 = vmatpush1.msra.mxu0 0.0
      %429 = vmatprep.subr.mxu0 0.0
      %430 = vmatpush1.msra.mxu0 0.0
      %431 = vmatprep.subr.mxu0 0.0
      %432 = vmatpush1.msra.mxu0 0.0
      %433 = vmatprep.subr.mxu0 0.0
      %434 = vmatpush1.msra.mxu0 0.0
      %435 = vmatprep.subr.mxu0 0.0
      %436 = vmatpush1.msra.mxu0 0.0
      %437 = vmatprep.subr.mxu0 0.0
      %438 = vmatpush1.msra.mxu0 0.0
      %439 = vmatprep.subr.mxu0 0.0
      %440 = vmatpush1.msra.mxu0 0.0
      %441 = vmatprep.subr.mxu0 0.0
      %442 = vmatpush1.msra.mxu0 0.0
      %443 = vmatprep.subr.mxu0 0.0
      %444 = vmatpush1.msra.mxu0 0.0
      %445 = vmatprep.mubr.f32.mxu0 0.0
      %446 = vmatmul.mubr.f32.gmra.mrb[0].mxu0 %v379
      %v447 = vpop.f32.mrb[0].mxu0
      %v448 = vadd.f32 0.0, %v447
      %v449 = vpop.f32.mrb[0].mxu0
      %450 = vdwg.mxu0
      %v451 = vadd.f32 %v274, %v448
      %v452 = vld [vmem:[%s4] sm:$0x1]
      %v454 = vlaneseq
      %v455 = vshrl.u32 %v454, 7
      %v456 = vsub.s32 0, %v455
      %v457 = vrot.slane %v452, %v456
      %v459 = vadd.f32 %v451, %v457
      %v460 = vld [vmem:[%s5] sm:$0x1]
      %v461 = vld [vmem:[%s6] sm:$0x1]
      %v462 = vsel %vm286, %v459, 0.0
      %463 = vadd.xlane.f32.xlu0 %v462
      %v464 = vpop.xlane.xlu0 %463
      %v465 = vrcp.pop 32.0
      %v466 = vmul.f32 %v464, %v465
      %v467 = vsub.f32 %v459, %v466
      %v468 = vmul.f32 %v467, %v467
      %v469 = vsel %vm286, %v468, 0.0
      %470 = vadd.xlane.f32.xlu0 %v469
      %v471 = vpop.xlane.xlu0 %470
      %v472 = vmul.f32 %v471, %v465
      %v473 = vadd.f32 %v472, 1e-05
      %v474 = vrsqrt.pop %v473
      %v475 = vmul.f32 %v467, %v474
      %v477 = vlaneseq
      %v478 = vshrl.u32 %v477, 7
      %v479 = vsub.s32 0, %v478
      %v480 = vrot.slane %v460, %v479
      %v482 = vmul.f32 %v475, %v480
      %v484 = vlaneseq
      %v485 = vshrl.u32 %v484, 7
      %v486 = vsub.s32 0, %v485
      %v487 = vrot.slane %v461, %v486
      %v489 = vadd.f32 %v482, %v487
      %490 = vst.msk [vmem:[%s273] sm:$0xff] %vm286, %v489
      %p491 = scmp.lt.s32.totalorder %s18, 1
      %s492 = scalar_select %p491, %s18, 1
      %s493 = smul.addr %s492, 8
      %s494 = scalar_lea.vmem %s7, %s493
      // Predicated region
      $region49: #{generate.4} parent=47 // pred_check
        %p495 = pneg %p188
      $region50: #{generate.4} parent=47 // pred_check_branch
        %497 = sbr.rel (%p495) target = $region52
      $region51: #{generate.4} parent=47 // pred_region
        _
      $region52: #{generate.4} parent=47 // pred_fallthru
        _
    $region48: #{generate.4} parent=5 // pred_fallthru
      _
    %p498 = scmp.le.s32.totalorder 2, %s13
    // Predicated region
    $region53: #{generate.4} parent=5 // pred_check
      %p499 = pneg %p498
    $region54: #{generate.4} parent=5 // pred_check_branch
      %501 = sbr.rel (%p499) target = $region56
    $region55: #{generate.4} parent=5 // pred_region
      %s502 = ssub.s32 %s13, 2
      // Predicated region
      $region57: #{generate.4} parent=55 // pred_check
        %p503 = pneg %p194
      $region58: #{generate.4} parent=55 // pred_check_branch
        %505 = sbr.rel (%p503) target = $region60
      $region59: #{generate.4} parent=55 // pred_region
        %p506 = scmp.lt.s32.totalorder %s19, 1
        %s507 = scalar_select %p506, %s19, 1
        %s508 = smul.addr %s507, 8
        %s509 = scalar_lea.vmem %s7, %s508
      $region60: #{generate.4} parent=55 // pred_fallthru
        _
    $region56: #{generate.4} parent=5 // pred_fallthru
      _
  $region6: #{generate.4} parent=0 // loop_footer
    %s17 = sadd.s32 1, %s13
  $region7: #{generate.4} parent=0 // loop_footer_branch
    %12 = sbr.rel target = $region3
  $region8: #{generate.4} parent=0 // loop_exit
    _

// kernel: generate.3
$region0: #{generate.3}
  #allocation0 [shape = 'u32[]', space=smem, size = 0x4, offset = 0x4, fixed_abs, tag = 'smem constant byte address 0x4 - core index']
  #allocation1 [shape = 'u32[144,128]{1,0:T(1,128)}', space=vmem, size = 0x12000, scoped, tag = 'internal scratch']
  %s0 = inlined_call_operand.vmem [shape: f32[2,8,32], index: 0, kind: input, shape index: {}]
  %s1 = inlined_call_operand.vmem [shape: f32[32,96], index: 1, kind: input, shape index: {}]
  %s2 = inlined_call_operand.vmem [shape: f32[1,96], index: 2, kind: input, shape index: {}]
  %s3 = inlined_call_operand.vmem [shape: f32[32,32], index: 3, kind: input, shape index: {}]
  %s4 = inlined_call_operand.vmem [shape: f32[1,32], index: 4, kind: input, shape index: {}]
  %s5 = inlined_call_operand.vmem [shape: f32[1,32], index: 5, kind: input, shape index: {}]
  %s6 = inlined_call_operand.vmem [shape: f32[1,32], index: 6, kind: input, shape index: {}]
  %s7 = inlined_call_operand.vmem [shape: f32[2,8,32], index: 7, kind: output, shape index: {}]
  %s8 = sld [smem:[#allocation0]]
  $region61: #{generate.3} parent=0
    _
  %s10 = ssub.s32 1, %s8
  %s11 = scalar_select 0, %s10, %s8
  loop: start=0, step=1, limit=4
  $region2: #{generate.3} parent=0 // loop_pre_header
    _
  $region3: #{generate.3} parent=0 // loop_header
    %s13 = sphi 0, %s17
    %p14 = scmp.ge.s32.totalorder %s13, 4
    %s23 = sphi 0, %s25
    %s26 = sphi 0, %s23
    %s27 = sphi 0, %s26
    %s43 = sphi 0, %s27
    %s47 = sphi 0, %s47
    %s49 = sphi 0, %s47
    %s50 = sphi 0, %s49
    %s64 = sphi 0, %s50
    %s68 = sphi 0, %s68
    %s70 = sphi 0, %s68
    %s71 = sphi 0, %s70
    %s85 = sphi 0, %s71
    %s89 = sphi 0, %s89
    %s91 = sphi 0, %s89
    %s92 = sphi 0, %s91
    %s106 = sphi 0, %s92
    %s110 = sphi 0, %s110
    %s112 = sphi 0, %s110
    %s113 = sphi 0, %s112
    %s127 = sphi 0, %s113
    %s131 = sphi 0, %s131
    %s133 = sphi 0, %s131
    %s134 = sphi 0, %s133
    %s148 = sphi 0, %s134
    %s152 = sphi 0, %s152
    %s154 = sphi 0, %s152
    %s155 = sphi 0, %s154
    %s169 = sphi 0, %s155
    %s175 = sphi 0, %s177
    %s178 = sphi 0, %s175
    %s179 = sphi 0, %s178
    %s195 = sphi 0, %s179
  $region4: #{generate.3} parent=0 // loop_header_branch
    %16 = sbr.rel (%p14) target = $region8
  $region5: #{generate.3} parent=0 // loop_body
    %s18 = ssub.s32 %s13, 1
    %s19 = ssub.s32 %s13, 2
    %s20 = sadd.s32 %s13, 1
    %s21 = ssub.s32 %s13, %s20
    %p22 = scmp.eq.s32.totalorder %s21, 0
    %s24 = sadd.s32 %s23, 1
    %s25 = scalar_select %p22, %s23, %s24
    %p28 = pneg %p22
    %p29 = scmp.eq.s32.totalorder %s13, 1
    %p30 = por %p28, %p29
    %p31 = scmp.ne.s32.totalorder %s23, %s26
    %p32 = scmp.eq.s32.totalorder %s13, 0
    %p33 = por %p31, %p32
    %p34 = scmp.ne.s32.totalorder %s23, %s26
    %p35 = scmp.eq.s32.totalorder %s18, 1
    %p36 = por %p34, %p35
    %p37 = scmp.ne.s32.totalorder %s26, %s27
    %p38 = scmp.eq.s32.totalorder %s18, 0
    %p39 = por %p37, %p38
    %p40 = scmp.ne.s32.totalorder %s26, %s27
    %p41 = scmp.eq.s32.totalorder %s19, 1
    %p42 = por %p40, %p41
    %p44 = scmp.ne.s32.totalorder %s27, %s43
    %p45 = scmp.eq.s32.totalorder %s19, 0
    %p46 = por %p44, %p45
    %s48 = sadd.s32 %s47, 1
    %p51 = scmp.eq.s32.totalorder %s13, 1
    %p52 = scmp.ne.s32.totalorder %s47, %s49
    %p53 = scmp.eq.s32.totalorder %s13, 0
    %p54 = por %p52, %p53
    %p55 = scmp.ne.s32.totalorder %s47, %s49
    %p56 = scmp.eq.s32.totalorder %s18, 1
    %p57 = por %p55, %p56
    %p58 = scmp.ne.s32.totalorder %s49, %s50
    %p59 = scmp.eq.s32.totalorder %s18, 0
    %p60 = por %p58, %p59
    %p61 = scmp.ne.s32.totalorder %s49, %s50
    %p62 = scmp.eq.s32.totalorder %s19, 1
    %p63 = por %p61, %p62
    %p65 = scmp.ne.s32.totalorder %s50, %s64
    %p66 = scmp.eq.s32.totalorder %s19, 0
    %p67 = por %p65, %p66
    %s69 = sadd.s32 %s68, 1
    %p72 = scmp.eq.s32.totalorder %s13, 1
    %p73 = scmp.ne.s32.totalorder %s68, %s70
    %p74 = scmp.eq.s32.totalorder %s13, 0
    %p75 = por %p73, %p74
    %p76 = scmp.ne.s32.totalorder %s68, %s70
    %p77 = scmp.eq.s32.totalorder %s18, 1
    %p78 = por %p76, %p77
    %p79 = scmp.ne.s32.totalorder %s70, %s71
    %p80 = scmp.eq.s32.totalorder %s18, 0
    %p81 = por %p79, %p80
    %p82 = scmp.ne.s32.totalorder %s70, %s71
    %p83 = scmp.eq.s32.totalorder %s19, 1
    %p84 = por %p82, %p83
    %p86 = scmp.ne.s32.totalorder %s71, %s85
    %p87 = scmp.eq.s32.totalorder %s19, 0
    %p88 = por %p86, %p87
    %s90 = sadd.s32 %s89, 1
    %p93 = scmp.eq.s32.totalorder %s13, 1
    %p94 = scmp.ne.s32.totalorder %s89, %s91
    %p95 = scmp.eq.s32.totalorder %s13, 0
    %p96 = por %p94, %p95
    %p97 = scmp.ne.s32.totalorder %s89, %s91
    %p98 = scmp.eq.s32.totalorder %s18, 1
    %p99 = por %p97, %p98
    %p100 = scmp.ne.s32.totalorder %s91, %s92
    %p101 = scmp.eq.s32.totalorder %s18, 0
    %p102 = por %p100, %p101
    %p103 = scmp.ne.s32.totalorder %s91, %s92
    %p104 = scmp.eq.s32.totalorder %s19, 1
    %p105 = por %p103, %p104
    %p107 = scmp.ne.s32.totalorder %s92, %s106
    %p108 = scmp.eq.s32.totalorder %s19, 0
    %p109 = por %p107, %p108
    %s111 = sadd.s32 %s110, 1
    %p114 = scmp.eq.s32.totalorder %s13, 1
    %p115 = scmp.ne.s32.totalorder %s110, %s112
    %p116 = scmp.eq.s32.totalorder %s13, 0
    %p117 = por %p115, %p116
    %p118 = scmp.ne.s32.totalorder %s110, %s112
    %p119 = scmp.eq.s32.totalorder %s18, 1
    %p120 = por %p118, %p119
    %p121 = scmp.ne.s32.totalorder %s112, %s113
    %p122 = scmp.eq.s32.totalorder %s18, 0
    %p123 = por %p121, %p122
    %p124 = scmp.ne.s32.totalorder %s112, %s113
    %p125 = scmp.eq.s32.totalorder %s19, 1
    %p126 = por %p124, %p125
    %p128 = scmp.ne.s32.totalorder %s113, %s127
    %p129 = scmp.eq.s32.totalorder %s19, 0
    %p130 = por %p128, %p129
    %s132 = sadd.s32 %s131, 1
    %p135 = scmp.eq.s32.totalorder %s13, 1
    %p136 = scmp.ne.s32.totalorder %s131, %s133
    %p137 = scmp.eq.s32.totalorder %s13, 0
    %p138 = por %p136, %p137
    %p139 = scmp.ne.s32.totalorder %s131, %s133
    %p140 = scmp.eq.s32.totalorder %s18, 1
    %p141 = por %p139, %p140
    %p142 = scmp.ne.s32.totalorder %s133, %s134
    %p143 = scmp.eq.s32.totalorder %s18, 0
    %p144 = por %p142, %p143
    %p145 = scmp.ne.s32.totalorder %s133, %s134
    %p146 = scmp.eq.s32.totalorder %s19, 1
    %p147 = por %p145, %p146
    %p149 = scmp.ne.s32.totalorder %s134, %s148
    %p150 = scmp.eq.s32.totalorder %s19, 0
    %p151 = por %p149, %p150
    %s153 = sadd.s32 %s152, 1
    %p156 = scmp.eq.s32.totalorder %s13, 1
    %p157 = scmp.ne.s32.totalorder %s152, %s154
    %p158 = scmp.eq.s32.totalorder %s13, 0
    %p159 = por %p157, %p158
    %p160 = scmp.ne.s32.totalorder %s152, %s154
    %p161 = scmp.eq.s32.totalorder %s18, 1
    %p162 = por %p160, %p161
    %p163 = scmp.ne.s32.totalorder %s154, %s155
    %p164 = scmp.eq.s32.totalorder %s18, 0
    %p165 = por %p163, %p164
    %p166 = scmp.ne.s32.totalorder %s154, %s155
    %p167 = scmp.eq.s32.totalorder %s19, 1
    %p168 = por %p166, %p167
    %p170 = scmp.ne.s32.totalorder %s155, %s169
    %p171 = scmp.eq.s32.totalorder %s19, 0
    %p172 = por %p170, %p171
    %s173 = ssub.s32 %s13, %s20
    %p174 = scmp.eq.s32.totalorder %s173, 0
    %s176 = sadd.s32 %s175, 1
    %s177 = scalar_select %p174, %s175, %s176
    %p180 = pneg %p174
    %p181 = scmp.eq.s32.totalorder %s13, 1
    %p182 = por %p180, %p181
    %p183 = scmp.ne.s32.totalorder %s175, %s178
    %p184 = scmp.eq.s32.totalorder %s13, 0
    %p185 = por %p183, %p184
    %p186 = scmp.ne.s32.totalorder %s175, %s178
    %p187 = scmp.eq.s32.totalorder %s18, 1
    %p188 = por %p186, %p187
    %p189 = scmp.ne.s32.totalorder %s178, %s179
    %p190 = scmp.eq.s32.totalorder %s18, 0
    %p191 = por %p189, %p190
    %p192 = scmp.ne.s32.totalorder %s178, %s179
    %p193 = scmp.eq.s32.totalorder %s19, 1
    %p194 = por %p192, %p193
    %p196 = scmp.ne.s32.totalorder %s179, %s195
    %p197 = scmp.eq.s32.totalorder %s19, 0
    %p198 = por %p196, %p197
    %p199 = scmp.le.s32.totalorder 1, %s13
    %p200 = scmp.lt.s32.totalorder %s13, 3
    %p201 = pnand %p199, %p200
    %p202 = pneg %p201
    // Predicated region
    $region9: #{generate.3} parent=5 // pred_check
      _
    $region10: #{generate.3} parent=5 // pred_check_branch
      %204 = sbr.rel (%p201) target = $region12
    $region11: #{generate.3} parent=5 // pred_region
      %s205 = ssub.s32 %s13, 1
      // Predicated region
      $region13: #{generate.3} parent=11 // pred_check
        %p206 = pneg %p60
      $region14: #{generate.3} parent=11 // pred_check_branch
        %208 = sbr.rel (%p206) target = $region16
      $region15: #{generate.3} parent=11 // pred_region
        _
      $region16: #{generate.3} parent=11 // pred_fallthru
        _
      // Predicated region
      $region17: #{generate.3} parent=11 // pred_check
        %p209 = pneg %p81
      $region18: #{generate.3} parent=11 // pred_check_branch
        %211 = sbr.rel (%p209) target = $region20
      $region19: #{generate.3} parent=11 // pred_region
        _
      $region20: #{generate.3} parent=11 // pred_fallthru
        _
      // Predicated region
      $region21: #{generate.3} parent=11 // pred_check
        %p212 = pneg %p102
      $region22: #{generate.3} parent=11 // pred_check_branch
        %214 = sbr.rel (%p212) target = $region24
      $region23: #{generate.3} parent=11 // pred_region
        _
      $region24: #{generate.3} parent=11 // pred_fallthru
        _
      // Predicated region
      $region25: #{generate.3} parent=11 // pred_check
        %p215 = pneg %p123
      $region26: #{generate.3} parent=11 // pred_check_branch
        %217 = sbr.rel (%p215) target = $region28
      $region27: #{generate.3} parent=11 // pred_region
        _
      $region28: #{generate.3} parent=11 // pred_fallthru
        _
      // Predicated region
      $region29: #{generate.3} parent=11 // pred_check
        %p218 = pneg %p144
      $region30: #{generate.3} parent=11 // pred_check_branch
        %220 = sbr.rel (%p218) target = $region32
      $region31: #{generate.3} parent=11 // pred_region
        _
      $region32: #{generate.3} parent=11 // pred_fallthru
        _
      // Predicated region
      $region33: #{generate.3} parent=11 // pred_check
        %p221 = pneg %p165
      $region34: #{generate.3} parent=11 // pred_check_branch
        %223 = sbr.rel (%p221) target = $region36
      $region35: #{generate.3} parent=11 // pred_region
        _
      $region36: #{generate.3} parent=11 // pred_fallthru
        _
    $region12: #{generate.3} parent=5 // pred_fallthru
      _
    %p224 = scmp.lt.s32.totalorder %s13, 2
    // Predicated region
    $region37: #{generate.3} parent=5 // pred_check
      %p225 = pneg %p224
    $region38: #{generate.3} parent=5 // pred_check_branch
      %227 = sbr.rel (%p225) target = $region40
    $region39: #{generate.3} parent=5 // pred_region
      // Predicated region
      $region41: #{generate.3} parent=39 // pred_check
        %p228 = pneg %p33
      $region42: #{generate.3} parent=39 // pred_check_branch
        %230 = sbr.rel (%p228) target = $region44
      $region43: #{generate.3} parent=39 // pred_region
        %p231 = scmp.lt.s32.totalorder %s13, 1
        %s232 = scalar_select %p231, %s13, 1
        %s233 = smul.addr %s232, 8
        %s234 = scalar_lea.vmem %s0, %s233
      $region44: #{generate.3} parent=39 // pred_fallthru
        _
    $region40: #{generate.3} parent=5 // pred_fallthru
      _
    %p235 = scmp.le.s32.totalorder 1, %s13
    %p236 = scmp.lt.s32.totalorder %s13, 3
    %p237 = pnand %p235, %p236
    %p238 = pneg %p237
    // Predicated region
    $region45: #{generate.3} parent=5 // pred_check
      _
    $region46: #{generate.3} parent=5 // pred_check_branch
      %240 = sbr.rel (%p237) target = $region48
    $region47: #{generate.3} parent=5 // pred_region
      %s241 = ssub.s32 %s13, 1
      %p242 = scmp.lt.s32.totalorder %s18, 1
      %s243 = scalar_select %p242, %s18, 1
      %s244 = smul.addr %s243, 8
      %s245 = scalar_lea.vmem %s0, %s244
      %p246 = pneg %p39
      %p247 = pneg %p36
      %p248 = pneg %p60
      %p249 = pneg %p57
      %p250 = pneg %p81
      %p251 = pneg %p78
      %p252 = pneg %p102
      %p253 = pneg %p99
      %p254 = pneg %p123
      %p255 = pneg %p120
      %p256 = pneg %p144
      %p257 = pneg %p141
      %p258 = pneg %p165
      %p259 = pneg %p162
      %p260 = pneg %p191
      %p261 = pneg %p188
      %p262 = scmp.lt.s32.totalorder %s18, 1
      %s263 = scalar_select %p262, %s18, 1
      %s264 = smul.addr %s263, 8
      %s265 = scalar_lea.vmem %s7, %s264
      %p266 = scmp.lt.s32.totalorder %s18, 1
      %s267 = scalar_select %p266, %s18, 1
      %s268 = smul.addr %s267, 8
      %s269 = scalar_lea.vmem %s0, %s268
      %p270 = scmp.lt.s32.totalorder %s18, 1
      %s271 = scalar_select %p270, %s18, 1
      %s272 = smul.addr %s271, 8
      %s273 = scalar_lea.vmem %s7, %s272
      %v274 = vld [vmem:[%s269] sm:$0xff]
      %v275 = vld [vmem:[%s1] sm:$0xff]
      %v276 = vld [vmem:[%s1 + $0x8] sm:$0xff]
      %v277 = vld [vmem:[%s1 + $0x10] sm:$0xff]
      %v278 = vld [vmem:[%s1 + $0x18] sm:$0xff]
      %v279 = vld [vmem:[%s2] sm:$0x1]
      %v281 = vlaneseq
      %v282 = vshrl.u32 %v281, 7
      %v283 = vsub.s32 0, %v282
      %v284 = vrot.slane %v279, %v283
      %vm286 = vcmask 261120
      %v288 = vsel %vm286, %v274, 0
      %290 = vmatprep.subr.mxu0 0.0
      %291 = vmatpush1.msra.mxu0 %v275
      %292 = vmatprep.subr.mxu0 0.0
      %293 = vmatpush1.msra.mxu0 %v276
      %294 = vmatprep.subr.mxu0 0.0
      %295 = vmatpush1.msra.mxu0 %v277
      %296 = vmatprep.subr.mxu0 0.0
      %297 = vmatpush1.msra.mxu0 %v278
      %298 = vmatprep.subr.mxu0 0.0
      %299 = vmatpush1.msra.mxu0 0.0
      %300 = vmatprep.subr.mxu0 0.0
      %301 = vmatpush1.msra.mxu0 0.0
      %302 = vmatprep.subr.mxu0 0.0
      %303 = vmatpush1.msra.mxu0 0.0
      %304 = vmatprep.subr.mxu0 0.0
      %305 = vmatpush1.msra.mxu0 0.0
      %306 = vmatprep.subr.mxu0 0.0
      %307 = vmatpush1.msra.mxu0 0.0
      %308 = vmatprep.subr.mxu0 0.0
      %309 = vmatpush1.msra.mxu0 0.0
      %310 = vmatprep.subr.mxu0 0.0
      %311 = vmatpush1.msra.mxu0 0.0
      %312 = vmatprep.subr.mxu0 0.0
      %313 = vmatpush1.msra.mxu0 0.0
      %314 = vmatprep.subr.mxu0 0.0
      %315 = vmatpush1.msra.mxu0 0.0
      %316 = vmatprep.subr.mxu0 0.0
      %317 = vmatpush1.msra.mxu0 0.0
      %318 = vmatprep.subr.mxu0 0.0
      %319 = vmatpush1.msra.mxu0 0.0
      %320 = vmatprep.subr.mxu0 0.0
      %321 = vmatpush1.msra.mxu0 0.0
      %322 = vmatprep.subr.mxu0 0.0
      %323 = vmatpush1.msra.mxu0 0.0
      %324 = vmatprep.subr.mxu0 0.0
      %325 = vmatpush1.msra.mxu0 0.0
      %326 = vmatprep.subr.mxu0 0.0
      %327 = vmatpush1.msra.mxu0 0.0
      %328 = vmatprep.subr.mxu0 0.0
      %329 = vmatpush1.msra.mxu0 0.0
      %330 = vmatprep.subr.mxu0 0.0
      %331 = vmatpush1.msra.mxu0 0.0
      %332 = vmatprep.subr.mxu0 0.0
      %333 = vmatpush1.msra.mxu0 0.0
      %334 = vmatprep.subr.mxu0 0.0
      %335 = vmatpush1.msra.mxu0 0.0
      %336 = vmatprep.subr.mxu0 0.0
      %337 = vmatpush1.msra.mxu0 0.0
      %338 = vmatprep.subr.mxu0 0.0
      %339 = vmatpush1.msra.mxu0 0.0
      %340 = vmatprep.subr.mxu0 0.0
      %341 = vmatpush1.msra.mxu0 0.0
      %342 = vmatprep.subr.mxu0 0.0
      %343 = vmatpush1.msra.mxu0 0.0
      %344 = vmatprep.subr.mxu0 0.0
      %345 = vmatpush1.msra.mxu0 0.0
      %346 = vmatprep.subr.mxu0 0.0
      %347 = vmatpush1.msra.mxu0 0.0
      %348 = vmatprep.subr.mxu0 0.0
      %349 = vmatpush1.msra.mxu0 0.0
      %350 = vmatprep.subr.mxu0 0.0
      %351 = vmatpush1.msra.mxu0 0.0
      %352 = vmatprep.subr.mxu0 0.0
      %353 = vmatpush1.msra.mxu0 0.0
      %354 = vmatprep.mubr.f32.mxu0 0.0
      %355 = vmatmul.mubr.f32.gmra.mrb[0].mxu0 %v288
      %v356 = vpop.f32.mrb[0].mxu0
      %v357 = vadd.f32 %v284, %v356
      %v358 = vpop.f32.mrb[0].mxu0
      %359 = vdwg.mxu0
      %361 = vrot.lane.b32.xlu0 %v357, 96
      %v362 = vpop.permute.xlu0 %361
      %vm363 = vcmask 64512
      %v364 = vsel %vm363, %v357, 0
      %v366 = vsel %vm363, %v362, 0
      %368 = vmatprep.subr.mxu0 0.0
      %369 = vmatpush1.xpose.msra.mxu0 %v366
      %370 = vmatprep.subr.mxu0 0.0
      %371 = vmatpush1.xpose.msra.mxu0 0.0
      %372 = vmatprep.subr.mxu0 0.0
      %373 = vmatpush1.xpose.msra.mxu0 0.0
      %374 = vmatprep.subr.mxu0 0.0
      %375 = vmatpush1.xpose.msra.mxu0 0.0
      %376 = vmatprep.subr.mxu0 0.0
      %377 = vmatpush1.xpose.msra.mxu0 0.0
      %378 = vmatprep.subr.mxu0 0.0
      %379 = vmatpush1.xpose.msra.mxu0 0.0
      %380 = vmatprep.subr.mxu0 0.0
      %381 = vmatpush1.xpose.msra.mxu0 0.0
      %382 = vmatprep.subr.mxu0 0.0
      %383 = vmatpush1.xpose.msra.mxu0 0.0
      %384 = vmatprep.subr.mxu0 0.0
      %385 = vmatpush1.xpose.msra.mxu0 0.0
      %386 = vmatprep.subr.mxu0 0.0
      %387 = vmatpush1.xpose.msra.mxu0 0.0
      %388 = vmatprep.subr.mxu0 0.0
      %389 = vmatpush1.xpose.msra.mxu0 0.0
      %390 = vmatprep.subr.mxu0 0.0
      %391 = vmatpush1.xpose.msra.mxu0 0.0
      %392 = vmatprep.subr.mxu0 0.0
      %393 = vmatpush1.xpose.msra.mxu0 0.0
      %394 = vmatprep.subr.mxu0 0.0
      %395 = vmatpush1.xpose.msra.mxu0 0.0
      %396 = vmatprep.subr.mxu0 0.0
      %397 = vmatpush1.xpose.msra.mxu0 0.0
      %398 = vmatprep.subr.mxu0 0.0
      %399 = vmatpush1.xpose.msra.mxu0 0.0
      %400 = vmatprep.subr.mxu0 0.0
      %401 = vmatpush1.xpose.msra.mxu0 0.0
      %402 = vmatprep.subr.mxu0 0.0
      %403 = vmatpush1.xpose.msra.mxu0 0.0
      %404 = vmatprep.subr.mxu0 0.0
      %405 = vmatpush1.xpose.msra.mxu0 0.0
      %406 = vmatprep.subr.mxu0 0.0
      %407 = vmatpush1.xpose.msra.mxu0 0.0
      %408 = vmatprep.subr.mxu0 0.0
      %409 = vmatpush1.xpose.msra.mxu0 0.0
      %410 = vmatprep.subr.mxu0 0.0
      %411 = vmatpush1.xpose.msra.mxu0 0.0
      %412 = vmatprep.subr.mxu0 0.0
      %413 = vmatpush1.xpose.msra.mxu0 0.0
      %414 = vmatprep.subr.mxu0 0.0
      %415 = vmatpush1.xpose.msra.mxu0 0.0
      %416 = vmatprep.subr.mxu0 0.0
      %417 = vmatpush1.xpose.msra.mxu0 0.0
      %418 = vmatprep.subr.mxu0 0.0
      %419 = vmatpush1.xpose.msra.mxu0 0.0
      %420 = vmatprep.subr.mxu0 0.0
      %421 = vmatpush1.xpose.msra.mxu0 0.0
      %422 = vmatprep.subr.mxu0 0.0
      %423 = vmatpush1.xpose.msra.mxu0 0.0
      %424 = vmatprep.subr.mxu0 0.0
      %425 = vmatpush1.xpose.msra.mxu0 0.0
      %426 = vmatprep.subr.mxu0 0.0
      %427 = vmatpush1.xpose.msra.mxu0 0.0
      %428 = vmatprep.subr.mxu0 0.0
      %429 = vmatpush1.xpose.msra.mxu0 0.0
      %430 = vmatprep.subr.mxu0 0.0
      %431 = vmatpush1.xpose.msra.mxu0 0.0
      %432 = vmatprep.mubr.f32.mxu0 0.0
      %433 = vmatmul.mubr.f32.gmra.mrb[0].mxu0 %v364
      %v434 = vpop.f32.mrb[0].mxu0
      %v435 = vadd.f32 0.0, %v434
      %v436 = vpop.f32.mrb[0].mxu0
      %437 = vdwg.mxu0
      %v438 = vmul.f32 %v435, 0.35355338
      %v439 = vsel %vm363, %v438, -inf
      %440 = vmax.xlane.f32.xlu0 %v439
      %v441 = vpop.xlane.xlu0 %440
      %v442 = vsub.f32 %v438, %v441
      %v443 = vmul.f32 %v442, 1.442695
      %v444 = vpow.pop %v443
      %v445 = vsel %vm363, %v444, 0.0
      %446 = vadd.xlane.f32.xlu0 %v445
      %v447 = vpop.xlane.xlu0 %446
      %v448 = vrcp.pop %v447
      %v449 = vmul.f32 %v444, %v448
      %450 = vrot.lane.b32.xlu0 %v357, 64
      %v451 = vpop.permute.xlu0 %450
      %v454 = vsel %vm363, %v449, 0
      %456 = vmatprep.subr.mxu0 0.0
      %457 = vmatpush1.msra.mxu0 %v451
      %458 = vmatprep.subr.mxu0 0.0
      %459 = vmatpush1.msra.mxu0 0.0
      %460 = vmatprep.subr.mxu0 0.0
      %461 = vmatpush1.msra.mxu0 0.0
      %462 = vmatprep.subr.mxu0 0.0
      %463 = vmatpush1.msra.mxu0 0.0
      %464 = vmatprep.subr.mxu0 0.0
      %465 = vmatpush1.msra.mxu0 0.0
      %466 = vmatprep.subr.mxu0 0.0
      %467 = vmatpush1.msra.mxu0 0.0
      %468 = vmatprep.subr.mxu0 0.0
      %469 = vmatpush1.msra.mxu0 0.0
      %470 = vmatprep.subr.mxu0 0.0
      %471 = vmatpush1.msra.mxu0 0.0
      %472 = vmatprep.subr.mxu0 0.0
      %473 = vmatpush1.msra.mxu0 0.0
      %474 = vmatprep.subr.mxu0 0.0
      %475 = vmatpush1.msra.mxu0 0.0
      %476 = vmatprep.subr.mxu0 0.0
      %477 = vmatpush1.msra.mxu0 0.0
      %478 = vmatprep.subr.mxu0 0.0
      %479 = vmatpush1.msra.mxu0 0.0
      %480 = vmatprep.subr.mxu0 0.0
      %481 = vmatpush1.msra.mxu0 0.0
      %482 = vmatprep.subr.mxu0 0.0
      %483 = vmatpush1.msra.mxu0 0.0
      %484 = vmatprep.subr.mxu0 0.0
      %485 = vmatpush1.msra.mxu0 0.0
      %486 = vmatprep.subr.mxu0 0.0
      %487 = vmatpush1.msra.mxu0 0.0
      %488 = vmatprep.subr.mxu0 0.0
      %489 = vmatpush1.msra.mxu0 0.0
      %490 = vmatprep.subr.mxu0 0.0
      %491 = vmatpush1.msra.mxu0 0.0
      %492 = vmatprep.subr.mxu0 0.0
      %493 = vmatpush1.msra.mxu0 0.0
      %494 = vmatprep.subr.mxu0 0.0
      %495 = vmatpush1.msra.mxu0 0.0
      %496 = vmatprep.subr.mxu0 0.0
      %497 = vmatpush1.msra.mxu0 0.0
      %498 = vmatprep.subr.mxu0 0.0
      %499 = vmatpush1.msra.mxu0 0.0
      %500 = vmatprep.subr.mxu0 0.0
      %501 = vmatpush1.msra.mxu0 0.0
      %502 = vmatprep.subr.mxu0 0.0
      %503 = vmatpush1.msra.mxu0 0.0
      %504 = vmatprep.subr.mxu0 0.0
      %505 = vmatpush1.msra.mxu0 0.0
      %506 = vmatprep.subr.mxu0 0.0
      %507 = vmatpush1.msra.mxu0 0.0
      %508 = vmatprep.subr.mxu0 0.0
      %509 = vmatpush1.msra.mxu0 0.0
      %510 = vmatprep.subr.mxu0 0.0
      %511 = vmatpush1.msra.mxu0 0.0
      %512 = vmatprep.subr.mxu0 0.0
      %513 = vmatpush1.msra.mxu0 0.0
      %514 = vmatprep.subr.mxu0 0.0
      %515 = vmatpush1.msra.mxu0 0.0
      %516 = vmatprep.subr.mxu0 0.0
      %517 = vmatpush1.msra.mxu0 0.0
      %518 = vmatprep.subr.mxu0 0.0
      %519 = vmatpush1.msra.mxu0 0.0
      %520 = vmatprep.mubr.f32.mxu0 0.0
      %521 = vmatmul.mubr.f32.gmra.mrb[0].mxu0 %v454
      %v522 = vpop.f32.mrb[0].mxu0
      %v523 = vadd.f32 0.0, %v522
      %v524 = vpop.f32.mrb[0].mxu0
      %525 = vdwg.mxu0
      %v526 = vld [vmem:[%s3] sm:$0xff]
      %527 = vrot.lane.b32.xlu0 %v357, 120
      %v528 = vpop.permute.xlu0 %527
      %529 = vrot.lane.b32.xlu0 %v357, 88
      %v530 = vpop.permute.xlu0 %529
      %v531 = vsel %vm363, %v528, 0
      %v533 = vsel %vm363, %v530, 0
      %535 = vmatprep.subr.mxu0 0.0
      %536 = vmatpush1.xpose.msra.mxu0 %v533
      %537 = vmatprep.subr.mxu0 0.0
      %538 = vmatpush1.xpose.msra.mxu0 0.0
      %539 = vmatprep.subr.mxu0 0.0
      %540 = vmatpush1.xpose.msra.mxu0 0.0
      %541 = vmatprep.subr.mxu0 0.0
      %542 = vmatpush1.xpose.msra.mxu0 0.0
      %543 = vmatprep.subr.mxu0 0.0
      %544 = vmatpush1.xpose.msra.mxu0 0.0
      %545 = vmatprep.subr.mxu0 0.0
      %546 = vmatpush1.xpose.msra.mxu0 0.0
      %547 = vmatprep.subr.mxu0 0.0
      %548 = vmatpush1.xpose.msra.mxu0 0.0
      %549 = vmatprep.subr.mxu0 0.0
      %550 = vmatpush1.xpose.msra.mxu0 0.0
      %551 = vmatprep.subr.mxu0 0.0
      %552 = vmatpush1.xpose.msra.mxu0 0.0
      %553 = vmatprep.subr.mxu0 0.0
      %554 = vmatpush1.xpose.msra.mxu0 0.0
      %555 = vmatprep.subr.mxu0 0.0
      %556 = vmatpush1.xpose.msra.mxu0 0.0
      %557 = vmatprep.subr.mxu0 0.0
      %558 = vmatpush1.xpose.msra.mxu0 0.0
      %559 = vmatprep.subr.mxu0 0.0
      %560 = vmatpush1.xpose.msra.mxu0 0.0
      %561 = vmatprep.subr.mxu0 0.0
      %562 = vmatpush1.xpose.msra.mxu0 0.0
      %563 = vmatprep.subr.mxu0 0.0
      %564 = vmatpush1.xpose.msra.mxu0 0.0
      %565 = vmatprep.subr.mxu0 0.0
      %566 = vmatpush1.xpose.msra.mxu0 0.0
      %567 = vmatprep.subr.mxu0 0.0
      %568 = vmatpush1.xpose.msra.mxu0 0.0
      %569 = vmatprep.subr.mxu0 0.0
      %570 = vmatpush1.xpose.msra.mxu0 0.0
      %571 = vmatprep.subr.mxu0 0.0
      %572 = vmatpush1.xpose.msra.mxu0 0.0
      %573 = vmatprep.subr.mxu0 0.0
      %574 = vmatpush1.xpose.msra.mxu0 0.0
      %575 = vmatprep.subr.mxu0 0.0
      %576 = vmatpush1.xpose.msra.mxu0 0.0
      %577 = vmatprep.subr.mxu0 0.0
      %578 = vmatpush1.xpose.msra.mxu0 0.0
      %579 = vmatprep.subr.mxu0 0.0
      %580 = vmatpush1.xpose.msra.mxu0 0.0
      %581 = vmatprep.subr.mxu0 0.0
      %582 = vmatpush1.xpose.msra.mxu0 0.0
      %583 = vmatprep.subr.mxu0 0.0
      %584 = vmatpush1.xpose.msra.mxu0 0.0
      %585 = vmatprep.subr.mxu0 0.0
      %586 = vmatpush1.xpose.msra.mxu0 0.0
      %587 = vmatprep.subr.mxu0 0.0
      %588 = vmatpush1.xpose.msra.mxu0 0.0
      %589 = vmatprep.subr.mxu0 0.0
      %590 = vmatpush1.xpose.msra.mxu0 0.0
      %591 = vmatprep.subr.mxu0 0.0
      %592 = vmatpush1.xpose.msra.mxu0 0.0
      %593 = vmatprep.subr.mxu0 0.0
      %594 = vmatpush1.xpose.msra.mxu0 0.0
      %595 = vmatprep.subr.mxu0 0.0
      %596 = vmatpush1.xpose.msra.mxu0 0.0
      %597 = vmatprep.subr.mxu0 0.0
      %598 = vmatpush1.xpose.msra.mxu0 0.0
      %599 = vmatprep.mubr.f32.mxu0 0.0
      %600 = vmatmul.mubr.f32.gmra.mrb[0].mxu0 %v531
      %v601 = vpop.f32.mrb[0].mxu0
      %v602 = vadd.f32 0.0, %v601
      %v603 = vpop.f32.mrb[0].mxu0
      %604 = vdwg.mxu0
      %v605 = vmul.f32 %v602, 0.35355338
      %v606 = vsel %vm363, %v605, -inf
      %607 = vmax.xlane.f32.xlu0 %v606
      %v608 = vpop.xlane.xlu0 %607
      %v609 = vsub.f32 %v605, %v608
      %v610 = vmul.f32 %v609, 1.442695
      %v611 = vpow.pop %v610
      %v612 = vsel %vm363, %v611, 0.0
      %613 = vadd.xlane.f32.xlu0 %v612
      %v614 = vpop.xlane.xlu0 %613
      %v615 = vrcp.pop %v614
      %v616 = vmul.f32 %v611, %v615
      %617 = vrot.lane.b32.xlu0 %v357, 56
      %v618 = vpop.permute.xlu0 %617
      %v621 = vsel %vm363, %v616, 0
      %623 = vmatprep.subr.mxu0 0.0
      %624 = vmatpush1.msra.mxu0 %v618
      %625 = vmatprep.subr.mxu0 0.0
      %626 = vmatpush1.msra.mxu0 0.0
      %627 = vmatprep.subr.mxu0 0.0
      %628 = vmatpush1.msra.mxu0 0.0
      %629 = vmatprep.subr.mxu0 0.0
      %630 = vmatpush1.msra.mxu0 0.0
      %631 = vmatprep.subr.mxu0 0.0
      %632 = vmatpush1.msra.mxu0 0.0
      %633 = vmatprep.subr.mxu0 0.0
      %634 = vmatpush1.msra.mxu0 0.0
      %635 = vmatprep.subr.mxu0 0.0
      %636 = vmatpush1.msra.mxu0 0.0
      %637 = vmatprep.subr.mxu0 0.0
      %638 = vmatpush1.msra.mxu0 0.0
      %639 = vmatprep.subr.mxu0 0.0
      %640 = vmatpush1.msra.mxu0 0.0
      %641 = vmatprep.subr.mxu0 0.0
      %642 = vmatpush1.msra.mxu0 0.0
      %643 = vmatprep.subr.mxu0 0.0
      %644 = vmatpush1.msra.mxu0 0.0
      %645 = vmatprep.subr.mxu0 0.0
      %646 = vmatpush1.msra.mxu0 0.0
      %647 = vmatprep.subr.mxu0 0.0
      %648 = vmatpush1.msra.mxu0 0.0
      %649 = vmatprep.subr.mxu0 0.0
      %650 = vmatpush1.msra.mxu0 0.0
      %651 = vmatprep.subr.mxu0 0.0
      %652 = vmatpush1.msra.mxu0 0.0
      %653 = vmatprep.subr.mxu0 0.0
      %654 = vmatpush1.msra.mxu0 0.0
      %655 = vmatprep.subr.mxu0 0.0
      %656 = vmatpush1.msra.mxu0 0.0
      %657 = vmatprep.subr.mxu0 0.0
      %658 = vmatpush1.msra.mxu0 0.0
      %659 = vmatprep.subr.mxu0 0.0
      %660 = vmatpush1.msra.mxu0 0.0
      %661 = vmatprep.subr.mxu0 0.0
      %662 = vmatpush1.msra.mxu0 0.0
      %663 = vmatprep.subr.mxu0 0.0
      %664 = vmatpush1.msra.mxu0 0.0
      %665 = vmatprep.subr.mxu0 0.0
      %666 = vmatpush1.msra.mxu0 0.0
      %667 = vmatprep.subr.mxu0 0.0
      %668 = vmatpush1.msra.mxu0 0.0
      %669 = vmatprep.subr.mxu0 0.0
      %670 = vmatpush1.msra.mxu0 0.0
      %671 = vmatprep.subr.mxu0 0.0
      %672 = vmatpush1.msra.mxu0 0.0
      %673 = vmatprep.subr.mxu0 0.0
      %674 = vmatpush1.msra.mxu0 0.0
      %675 = vmatprep.subr.mxu0 0.0
      %676 = vmatpush1.msra.mxu0 0.0
      %677 = vmatprep.subr.mxu0 0.0
      %678 = vmatpush1.msra.mxu0 0.0
      %679 = vmatprep.subr.mxu0 0.0
      %680 = vmatpush1.msra.mxu0 0.0
      %681 = vmatprep.subr.mxu0 0.0
      %682 = vmatpush1.msra.mxu0 0.0
      %683 = vmatprep.subr.mxu0 0.0
      %684 = vmatpush1.msra.mxu0 0.0
      %685 = vmatprep.subr.mxu0 0.0
      %686 = vmatpush1.msra.mxu0 0.0
      %687 = vmatprep.mubr.f32.mxu0 0.0
      %688 = vmatmul.mubr.f32.gmra.mrb[0].mxu0 %v621
      %v689 = vpop.f32.mrb[0].mxu0
      %v690 = vadd.f32 0.0, %v689
      %v691 = vpop.f32.mrb[0].mxu0
      %692 = vdwg.mxu0
      %v693 = vld [vmem:[%s3 + $0x8] sm:$0xff]
      %v695 = vsel %vm363, %v690, 0
      %697 = vmatprep.subr.mxu0 0.0
      %698 = vmatpush1.msra.mxu0 %v693
      %699 = vmatprep.subr.mxu0 0.0
      %700 = vmatpush1.msra.mxu0 0.0
      %701 = vmatprep.subr.mxu0 0.0
      %702 = vmatpush1.msra.mxu0 0.0
      %703 = vmatprep.subr.mxu0 0.0
      %704 = vmatpush1.msra.mxu0 0.0
      %705 = vmatprep.subr.mxu0 0.0
      %706 = vmatpush1.msra.mxu0 0.0
      %707 = vmatprep.subr.mxu0 0.0
      %708 = vmatpush1.msra.mxu0 0.0
      %709 = vmatprep.subr.mxu0 0.0
      %710 = vmatpush1.msra.mxu0 0.0
      %711 = vmatprep.subr.mxu0 0.0
      %712 = vmatpush1.msra.mxu0 0.0
      %713 = vmatprep.subr.mxu0 0.0
      %714 = vmatpush1.msra.mxu0 0.0
      %715 = vmatprep.subr.mxu0 0.0
      %716 = vmatpush1.msra.mxu0 0.0
      %717 = vmatprep.subr.mxu0 0.0
      %718 = vmatpush1.msra.mxu0 0.0
      %719 = vmatprep.subr.mxu0 0.0
      %720 = vmatpush1.msra.mxu0 0.0
      %721 = vmatprep.subr.mxu0 0.0
      %722 = vmatpush1.msra.mxu0 0.0
      %723 = vmatprep.subr.mxu0 0.0
      %724 = vmatpush1.msra.mxu0 0.0
      %725 = vmatprep.subr.mxu0 0.0
      %726 = vmatpush1.msra.mxu0 0.0
      %727 = vmatprep.subr.mxu0 0.0
      %728 = vmatpush1.msra.mxu0 0.0
      %729 = vmatprep.subr.mxu0 0.0
      %730 = vmatpush1.msra.mxu0 0.0
      %731 = vmatprep.subr.mxu0 0.0
      %732 = vmatpush1.msra.mxu0 0.0
      %733 = vmatprep.subr.mxu0 0.0
      %734 = vmatpush1.msra.mxu0 0.0
      %735 = vmatprep.subr.mxu0 0.0
      %736 = vmatpush1.msra.mxu0 0.0
      %737 = vmatprep.subr.mxu0 0.0
      %738 = vmatpush1.msra.mxu0 0.0
      %739 = vmatprep.subr.mxu0 0.0
      %740 = vmatpush1.msra.mxu0 0.0
      %741 = vmatprep.subr.mxu0 0.0
      %742 = vmatpush1.msra.mxu0 0.0
      %743 = vmatprep.subr.mxu0 0.0
      %744 = vmatpush1.msra.mxu0 0.0
      %745 = vmatprep.subr.mxu0 0.0
      %746 = vmatpush1.msra.mxu0 0.0
      %747 = vmatprep.subr.mxu0 0.0
      %748 = vmatpush1.msra.mxu0 0.0
      %749 = vmatprep.subr.mxu0 0.0
      %750 = vmatpush1.msra.mxu0 0.0
      %751 = vmatprep.subr.mxu0 0.0
      %752 = vmatpush1.msra.mxu0 0.0
      %753 = vmatprep.subr.mxu0 0.0
      %754 = vmatpush1.msra.mxu0 0.0
      %755 = vmatprep.subr.mxu0 0.0
      %756 = vmatpush1.msra.mxu0 0.0
      %757 = vmatprep.subr.mxu0 0.0
      %758 = vmatpush1.msra.mxu0 0.0
      %759 = vmatprep.subr.mxu0 0.0
      %760 = vmatpush1.msra.mxu0 0.0
      %761 = vmatprep.mubr.f32.mxu0 0.0
      %762 = vmatmul.mubr.f32.gmra.mrb[0].mxu0 %v695
      %v763 = vpop.f32.mrb[0].mxu0
      %v764 = vadd.f32 0.0, %v763
      %v765 = vpop.f32.mrb[0].mxu0
      %766 = vdwg.mxu0
      %v768 = vsel %vm363, %v523, 0
      %770 = vmatprep.subr.mxu0 0.0
      %771 = vmatpush1.msra.mxu0 %v526
      %772 = vmatprep.subr.mxu0 0.0
      %773 = vmatpush1.msra.mxu0 0.0
      %774 = vmatprep.subr.mxu0 0.0
      %775 = vmatpush1.msra.mxu0 0.0
      %776 = vmatprep.subr.mxu0 0.0
      %777 = vmatpush1.msra.mxu0 0.0
      %778 = vmatprep.subr.mxu0 0.0
      %779 = vmatpush1.msra.mxu0 0.0
      %780 = vmatprep.subr.mxu0 0.0
      %781 = vmatpush1.msra.mxu0 0.0
      %782 = vmatprep.subr.mxu0 0.0
      %783 = vmatpush1.msra.mxu0 0.0
      %784 = vmatprep.subr.mxu0 0.0
      %785 = vmatpush1.msra.mxu0 0.0
      %786 = vmatprep.subr.mxu0 0.0
      %787 = vmatpush1.msra.mxu0 0.0
      %788 = vmatprep.subr.mxu0 0.0
      %789 = vmatpush1.msra.mxu0 0.0
      %790 = vmatprep.subr.mxu0 0.0
      %791 = vmatpush1.msra.mxu0 0.0
      %792 = vmatprep.subr.mxu0 0.0
      %793 = vmatpush1.msra.mxu0 0.0
      %794 = vmatprep.subr.mxu0 0.0
      %795 = vmatpush1.msra.mxu0 0.0
      %796 = vmatprep.subr.mxu0 0.0
      %797 = vmatpush1.msra.mxu0 0.0
      %798 = vmatprep.subr.mxu0 0.0
      %799 = vmatpush1.msra.mxu0 0.0
      %800 = vmatprep.subr.mxu0 0.0
      %801 = vmatpush1.msra.mxu0 0.0
      %802 = vmatprep.subr.mxu0 0.0
      %803 = vmatpush1.msra.mxu0 0.0
      %804 = vmatprep.subr.mxu0 0.0
      %805 = vmatpush1.msra.mxu0 0.0
      %806 = vmatprep.subr.mxu0 0.0
      %807 = vmatpush1.msra.mxu0 0.0
      %808 = vmatprep.subr.mxu0 0.0
      %809 = vmatpush1.msra.mxu0 0.0
      %810 = vmatprep.subr.mxu0 0.0
      %811 = vmatpush1.msra.mxu0 0.0
      %812 = vmatprep.subr.mxu0 0.0
      %813 = vmatpush1.msra.mxu0 0.0
      %814 = vmatprep.subr.mxu0 0.0
      %815 = vmatpush1.msra.mxu0 0.0
      %816 = vmatprep.subr.mxu0 0.0
      %817 = vmatpush1.msra.mxu0 0.0
      %818 = vmatprep.subr.mxu0 0.0
      %819 = vmatpush1.msra.mxu0 0.0
      %820 = vmatprep.subr.mxu0 0.0
      %821 = vmatpush1.msra.mxu0 0.0
      %822 = vmatprep.subr.mxu0 0.0
      %823 = vmatpush1.msra.mxu0 0.0
      %824 = vmatprep.subr.mxu0 0.0
      %825 = vmatpush1.msra.mxu0 0.0
      %826 = vmatprep.subr.mxu0 0.0
      %827 = vmatpush1.msra.mxu0 0.0
      %828 = vmatprep.subr.mxu0 0.0
      %829 = vmatpush1.msra.mxu0 0.0
      %830 = vmatprep.subr.mxu0 0.0
      %831 = vmatpush1.msra.mxu0 0.0
      %832 = vmatprep.subr.mxu0 0.0
      %833 = vmatpush1.msra.mxu0 0.0
      %834 = vmatprep.mubr.f32.mxu0 0.0
      %835 = vmatmul.mubr.f32.gmra.mrb[0].mxu0 %v768
      %v836 = vpop.f32.mrb[0].mxu0
      %v837 = vadd.f32 %v764, %v836
      %v838 = vpop.f32.mrb[0].mxu0
      %839 = vdwg.mxu0
      %840 = vrot.lane.b32.xlu0 %v357, 112
      %v841 = vpop.permute.xlu0 %840
      %842 = vrot.lane.b32.xlu0 %v357, 80
      %v843 = vpop.permute.xlu0 %842
      %v844 = vsel %vm363, %v841, 0
      %v846 = vsel %vm363, %v843, 0
      %848 = vmatprep.subr.mxu0 0.0
      %849 = vmatpush1.xpose.msra.mxu0 %v846
      %850 = vmatprep.subr.mxu0 0.0
      %851 = vmatpush1.xpose.msra.mxu0 0.0
      %852 = vmatprep.subr.mxu0 0.0
      %853 = vmatpush1.xpose.msra.mxu0 0.0
      %854 = vmatprep.subr.mxu0 0.0
      %855 = vmatpush1.xpose.msra.mxu0 0.0
      %856 = vmatprep.subr.mxu0 0.0
      %857 = vmatpush1.xpose.msra.mxu0 0.0
      %858 = vmatprep.subr.mxu0 0.0
      %859 = vmatpush1.xpose.msra.mxu0 0.0
      %860 = vmatprep.subr.mxu0 0.0
      %861 = vmatpush1.xpose.msra.mxu0 0.0
      %862 = vmatprep.subr.mxu0 0.0
      %863 = vmatpush1.xpose.msra.mxu0 0.0
      %864 = vmatprep.subr.mxu0 0.0
      %865 = vmatpush1.xpose.msra.mxu0 0.0
      %866 = vmatprep.subr.mxu0 0.0
      %867 = vmatpush1.xpose.msra.mxu0 0.0
      %868 = vmatprep.subr.mxu0 0.0
      %869 = vmatpush1.xpose.msra.mxu0 0.0
      %870 = vmatprep.subr.mxu0 0.0
      %871 = vmatpush1.xpose.msra.mxu0 0.0
      %872 = vmatprep.subr.mxu0 0.0
      %873 = vmatpush1.xpose.msra.mxu0 0.0
      %874 = vmatprep.subr.mxu0 0.0
      %875 = vmatpush1.xpose.msra.mxu0 0.0
      %876 = vmatprep.subr.mxu0 0.0
      %877 = vmatpush1.xpose.msra.mxu0 0.0
      %878 = vmatprep.subr.mxu0 0.0
      %879 = vmatpush1.xpose.msra.mxu0 0.0
      %880 = vmatprep.subr.mxu0 0.0
      %881 = vmatpush1.xpose.msra.mxu0 0.0
      %882 = vmatprep.subr.mxu0 0.0
      %883 = vmatpush1.xpose.msra.mxu0 0.0
      %884 = vmatprep.subr.mxu0 0.0
      %885 = vmatpush1.xpose.msra.mxu0 0.0
      %886 = vmatprep.subr.mxu0 0.0
      %887 = vmatpush1.xpose.msra.mxu0 0.0
      %888 = vmatprep.subr.mxu0 0.0
      %889 = vmatpush1.xpose.msra.mxu0 0.0
      %890 = vmatprep.subr.mxu0 0.0
      %891 = vmatpush1.xpose.msra.mxu0 0.0
      %892 = vmatprep.subr.mxu0 0.0
      %893 = vmatpush1.xpose.msra.mxu0 0.0
      %894 = vmatprep.subr.mxu0 0.0
      %895 = vmatpush1.xpose.msra.mxu0 0.0
      %896 = vmatprep.subr.mxu0 0.0
      %897 = vmatpush1.xpose.msra.mxu0 0.0
      %898 = vmatprep.subr.mxu0 0.0
      %899 = vmatpush1.xpose.msra.mxu0 0.0
      %900 = vmatprep.subr.mxu0 0.0
      %901 = vmatpush1.xpose.msra.mxu0 0.0
      %902 = vmatprep.subr.mxu0 0.0
      %903 = vmatpush1.xpose.msra.mxu0 0.0
      %904 = vmatprep.subr.mxu0 0.0
      %905 = vmatpush1.xpose.msra.mxu0 0.0
      %906 = vmatprep.subr.mxu0 0.0
      %907 = vmatpush1.xpose.msra.mxu0 0.0
      %908 = vmatprep.subr.mxu0 0.0
      %909 = vmatpush1.xpose.msra.mxu0 0.0
      %910 = vmatprep.subr.mxu0 0.0
      %911 = vmatpush1.xpose.msra.mxu0 0.0
      %912 = vmatprep.mubr.f32.mxu0 0.0
      %913 = vmatmul.mubr.f32.gmra.mrb[0].mxu0 %v844
      %v914 = vpop.f32.mrb[0].mxu0
      %v915 = vadd.f32 0.0, %v914
      %v916 = vpop.f32.mrb[0].mxu0
      %917 = vdwg.mxu0
      %v918 = vmul.f32 %v915, 0.35355338
      %v919 = vsel %vm363, %v918, -inf
      %920 = vmax.xlane.f32.xlu0 %v919
      %v921 = vpop.xlane.xlu0 %920
      %v922 = vsub.f32 %v918, %v921
      %v923 = vmul.f32 %v922, 1.442695
      %v924 = vpow.pop %v923
      %v925 = vsel %vm363, %v924, 0.0
      %926 = vadd.xlane.f32.xlu0 %v925
      %v927 = vpop.xlane.xlu0 %926
      %v928 = vrcp.pop %v927
      %v929 = vmul.f32 %v924, %v928
      %930 = vrot.lane.b32.xlu0 %v357, 48
      %v931 = vpop.permute.xlu0 %930
      %v934 = vsel %vm363, %v929, 0
      %936 = vmatprep.subr.mxu0 0.0
      %937 = vmatpush1.msra.mxu0 %v931
      %938 = vmatprep.subr.mxu0 0.0
      %939 = vmatpush1.msra.mxu0 0.0
      %940 = vmatprep.subr.mxu0 0.0
      %941 = vmatpush1.msra.mxu0 0.0
      %942 = vmatprep.subr.mxu0 0.0
      %943 = vmatpush1.msra.mxu0 0.0
      %944 = vmatprep.subr.mxu0 0.0
      %945 = vmatpush1.msra.mxu0 0.0
      %946 = vmatprep.subr.mxu0 0.0
      %947 = vmatpush1.msra.mxu0 0.0
      %948 = vmatprep.subr.mxu0 0.0
      %949 = vmatpush1.msra.mxu0 0.0
      %950 = vmatprep.subr.mxu0 0.0
      %951 = vmatpush1.msra.mxu0 0.0
      %952 = vmatprep.subr.mxu0 0.0
      %953 = vmatpush1.msra.mxu0 0.0
      %954 = vmatprep.subr.mxu0 0.0
      %955 = vmatpush1.msra.mxu0 0.0
      %956 = vmatprep.subr.mxu0 0.0
      %957 = vmatpush1.msra.mxu0 0.0
      %958 = vmatprep.subr.mxu0 0.0
      %959 = vmatpush1.msra.mxu0 0.0
      %960 = vmatprep.subr.mxu0 0.0
      %961 = vmatpush1.msra.mxu0 0.0
      %962 = vmatprep.subr.mxu0 0.0
      %963 = vmatpush1.msra.mxu0 0.0
      %964 = vmatprep.subr.mxu0 0.0
      %965 = vmatpush1.msra.mxu0 0.0
      %966 = vmatprep.subr.mxu0 0.0
      %967 = vmatpush1.msra.mxu0 0.0
      %968 = vmatprep.subr.mxu0 0.0
      %969 = vmatpush1.msra.mxu0 0.0
      %970 = vmatprep.subr.mxu0 0.0
      %971 = vmatpush1.msra.mxu0 0.0
      %972 = vmatprep.subr.mxu0 0.0
      %973 = vmatpush1.msra.mxu0 0.0
      %974 = vmatprep.subr.mxu0 0.0
      %975 = vmatpush1.msra.mxu0 0.0
      %976 = vmatprep.subr.mxu0 0.0
      %977 = vmatpush1.msra.mxu0 0.0
      %978 = vmatprep.subr.mxu0 0.0
      %979 = vmatpush1.msra.mxu0 0.0
      %980 = vmatprep.subr.mxu0 0.0
      %981 = vmatpush1.msra.mxu0 0.0
      %982 = vmatprep.subr.mxu0 0.0
      %983 = vmatpush1.msra.mxu0 0.0
      %984 = vmatprep.subr.mxu0 0.0
      %985 = vmatpush1.msra.mxu0 0.0
      %986 = vmatprep.subr.mxu0 0.0
      %987 = vmatpush1.msra.mxu0 0.0
      %988 = vmatprep.subr.mxu0 0.0
      %989 = vmatpush1.msra.mxu0 0.0
      %990 = vmatprep.subr.mxu0 0.0
      %991 = vmatpush1.msra.mxu0 0.0
      %992 = vmatprep.subr.mxu0 0.0
      %993 = vmatpush1.msra.mxu0 0.0
      %994 = vmatprep.subr.mxu0 0.0
      %995 = vmatpush1.msra.mxu0 0.0
      %996 = vmatprep.subr.mxu0 0.0
      %997 = vmatpush1.msra.mxu0 0.0
      %998 = vmatprep.subr.mxu0 0.0
      %999 = vmatpush1.msra.mxu0 0.0
      %1000 = vmatprep.mubr.f32.mxu0 0.0
      %1001 = vmatmul.mubr.f32.gmra.mrb[0].mxu0 %v934
      %v1002 = vpop.f32.mrb[0].mxu0
      %v1003 = vadd.f32 0.0, %v1002
      %v1004 = vpop.f32.mrb[0].mxu0
      %1005 = vdwg.mxu0
      %v1006 = vld [vmem:[%s3 + $0x10] sm:$0xff]
      %v1008 = vsel %vm363, %v1003, 0
      %1010 = vmatprep.subr.mxu0 0.0
      %1011 = vmatpush1.msra.mxu0 %v1006
      %1012 = vmatprep.subr.mxu0 0.0
      %1013 = vmatpush1.msra.mxu0 0.0
      %1014 = vmatprep.subr.mxu0 0.0
      %1015 = vmatpush1.msra.mxu0 0.0
      %1016 = vmatprep.subr.mxu0 0.0
      %1017 = vmatpush1.msra.mxu0 0.0
      %1018 = vmatprep.subr.mxu0 0.0
      %1019 = vmatpush1.msra.mxu0 0.0
      %1020 = vmatprep.subr.mxu0 0.0
      %1021 = vmatpush1.msra.mxu0 0.0
      %1022 = vmatprep.subr.mxu0 0.0
      %1023 = vmatpush1.msra.mxu0 0.0
      %1024 = vmatprep.subr.mxu0 0.0
      %1025 = vmatpush1.msra.mxu0 0.0
      %1026 = vmatprep.subr.mxu0 0.0
      %1027 = vmatpush1.msra.mxu0 0.0
      %1028 = vmatprep.subr.mxu0 0.0
      %1029 = vmatpush1.msra.mxu0 0.0
      %1030 = vmatprep.subr.mxu0 0.0
      %1031 = vmatpush1.msra.mxu0 0.0
      %1032 = vmatprep.subr.mxu0 0.0
      %1033 = vmatpush1.msra.mxu0 0.0
      %1034 = vmatprep.subr.mxu0 0.0
      %1035 = vmatpush1.msra.mxu0 0.0
      %1036 = vmatprep.subr.mxu0 0.0
      %1037 = vmatpush1.msra.mxu0 0.0
      %1038 = vmatprep.subr.mxu0 0.0
      %1039 = vmatpush1.msra.mxu0 0.0
      %1040 = vmatprep.subr.mxu0 0.0
      %1041 = vmatpush1.msra.mxu0 0.0
      %1042 = vmatprep.subr.mxu0 0.0
      %1043 = vmatpush1.msra.mxu0 0.0
      %1044 = vmatprep.subr.mxu0 0.0
      %1045 = vmatpush1.msra.mxu0 0.0
      %1046 = vmatprep.subr.mxu0 0.0
      %1047 = vmatpush1.msra.mxu0 0.0
      %1048 = vmatprep.subr.mxu0 0.0
      %1049 = vmatpush1.msra.mxu0 0.0
      %1050 = vmatprep.subr.mxu0 0.0
      %1051 = vmatpush1.msra.mxu0 0.0
      %1052 = vmatprep.subr.mxu0 0.0
      %1053 = vmatpush1.msra.mxu0 0.0
      %1054 = vmatprep.subr.mxu0 0.0
      %1055 = vmatpush1.msra.mxu0 0.0
      %1056 = vmatprep.subr.mxu0 0.0
      %1057 = vmatpush1.msra.mxu0 0.0
      %1058 = vmatprep.subr.mxu0 0.0
      %1059 = vmatpush1.msra.mxu0 0.0
      %1060 = vmatprep.subr.mxu0 0.0
      %1061 = vmatpush1.msra.mxu0 0.0
      %1062 = vmatprep.subr.mxu0 0.0
      %1063 = vmatpush1.msra.mxu0 0.0
      %1064 = vmatprep.subr.mxu0 0.0
      %1065 = vmatpush1.msra.mxu0 0.0
      %1066 = vmatprep.subr.mxu0 0.0
      %1067 = vmatpush1.msra.mxu0 0.0
      %1068 = vmatprep.subr.mxu0 0.0
      %1069 = vmatpush1.msra.mxu0 0.0
      %1070 = vmatprep.subr.mxu0 0.0
      %1071 = vmatpush1.msra.mxu0 0.0
      %1072 = vmatprep.subr.mxu0 0.0
      %1073 = vmatpush1.msra.mxu0 0.0
      %1074 = vmatprep.mubr.f32.mxu0 0.0
      %1075 = vmatmul.mubr.f32.gmra.mrb[0].mxu0 %v1008
      %v1076 = vpop.f32.mrb[0].mxu0
      %v1077 = vadd.f32 0.0, %v1076
      %v1078 = vpop.f32.mrb[0].mxu0
      %1079 = vdwg.mxu0
      %v1080 = vadd.f32 %v837, %v1077
      %1081 = vrot.lane.b32.xlu0 %v357, 104
      %v1082 = vpop.permute.xlu0 %1081
      %1083 = vrot.lane.b32.xlu0 %v357, 72
      %v1084 = vpop.permute.xlu0 %1083
      %v1085 = vsel %vm363, %v1082, 0
      %v1087 = vsel %vm363, %v1084, 0
      %1089 = vmatprep.subr.mxu0 0.0
      %1090 = vmatpush1.xpose.msra.mxu0 %v1087
      %1091 = vmatprep.subr.mxu0 0.0
      %1092 = vmatpush1.xpose.msra.mxu0 0.0
      %1093 = vmatprep.subr.mxu0 0.0
      %1094 = vmatpush1.xpose.msra.mxu0 0.0
      %1095 = vmatprep.subr.mxu0 0.0
      %1096 = vmatpush1.xpose.msra.mxu0 0.0
      %1097 = vmatprep.subr.mxu0 0.0
      %1098 = vmatpush1.xpose.msra.mxu0 0.0
      %1099 = vmatprep.subr.mxu0 0.0
      %1100 = vmatpush1.xpose.msra.mxu0 0.0
      %1101 = vmatprep.subr.mxu0 0.0
      %1102 = vmatpush1.xpose.msra.mxu0 0.0
      %1103 = vmatprep.subr.mxu0 0.0
      %1104 = vmatpush1.xpose.msra.mxu0 0.0
      %1105 = vmatprep.subr.mxu0 0.0
      %1106 = vmatpush1.xpose.msra.mxu0 0.0
      %1107 = vmatprep.subr.mxu0 0.0
      %1108 = vmatpush1.xpose.msra.mxu0 0.0
      %1109 = vmatprep.subr.mxu0 0.0
      %1110 = vmatpush1.xpose.msra.mxu0 0.0
      %1111 = vmatprep.subr.mxu0 0.0
      %1112 = vmatpush1.xpose.msra.mxu0 0.0
      %1113 = vmatprep.subr.mxu0 0.0
      %1114 = vmatpush1.xpose.msra.mxu0 0.0
      %1115 = vmatprep.subr.mxu0 0.0
      %1116 = vmatpush1.xpose.msra.mxu0 0.0
      %1117 = vmatprep.subr.mxu0 0.0
      %1118 = vmatpush1.xpose.msra.mxu0 0.0
      %1119 = vmatprep.subr.mxu0 0.0
      %1120 = vmatpush1.xpose.msra.mxu0 0.0
      %1121 = vmatprep.subr.mxu0 0.0
      %1122 = vmatpush1.xpose.msra.mxu0 0.0
      %1123 = vmatprep.subr.mxu0 0.0
      %1124 = vmatpush1.xpose.msra.mxu0 0.0
      %1125 = vmatprep.subr.mxu0 0.0
      %1126 = vmatpush1.xpose.msra.mxu0 0.0
      %1127 = vmatprep.subr.mxu0 0.0
      %1128 = vmatpush1.xpose.msra.mxu0 0.0
      %1129 = vmatprep.subr.mxu0 0.0
      %1130 = vmatpush1.xpose.msra.mxu0 0.0
      %1131 = vmatprep.subr.mxu0 0.0
      %1132 = vmatpush1.xpose.msra.mxu0 0.0
      %1133 = vmatprep.subr.mxu0 0.0
      %1134 = vmatpush1.xpose.msra.mxu0 0.0
      %1135 = vmatprep.subr.mxu0 0.0
      %1136 = vmatpush1.xpose.msra.mxu0 0.0
      %1137 = vmatprep.subr.mxu0 0.0
      %1138 = vmatpush1.xpose.msra.mxu0 0.0
      %1139 = vmatprep.subr.mxu0 0.0
      %1140 = vmatpush1.xpose.msra.mxu0 0.0
      %1141 = vmatprep.subr.mxu0 0.0
      %1142 = vmatpush1.xpose.msra.mxu0 0.0
      %1143 = vmatprep.subr.mxu0 0.0
      %1144 = vmatpush1.xpose.msra.mxu0 0.0
      %1145 = vmatprep.subr.mxu0 0.0
      %1146 = vmatpush1.xpose.msra.mxu0 0.0
      %1147 = vmatprep.subr.mxu0 0.0
      %1148 = vmatpush1.xpose.msra.mxu0 0.0
      %1149 = vmatprep.subr.mxu0 0.0
      %1150 = vmatpush1.xpose.msra.mxu0 0.0
      %1151 = vmatprep.subr.mxu0 0.0
      %1152 = vmatpush1.xpose.msra.mxu0 0.0
      %1153 = vmatprep.mubr.f32.mxu0 0.0
      %1154 = vmatmul.mubr.f32.gmra.mrb[0].mxu0 %v1085
      %v1155 = vpop.f32.mrb[0].mxu0
      %v1156 = vadd.f32 0.0, %v1155
      %v1157 = vpop.f32.mrb[0].mxu0
      %1158 = vdwg.mxu0
      %v1159 = vmul.f32 %v1156, 0.35355338
      %v1160 = vsel %vm363, %v1159, -inf
      %1161 = vmax.xlane.f32.xlu0 %v1160
      %v1162 = vpop.xlane.xlu0 %1161
      %v1163 = vsub.f32 %v1159, %v1162
      %v1164 = vmul.f32 %v1163, 1.442695
      %v1165 = vpow.pop %v1164
      %v1166 = vsel %vm363, %v1165, 0.0
      %1167 = vadd.xlane.f32.xlu0 %v1166
      %v1168 = vpop.xlane.xlu0 %1167
      %v1169 = vrcp.pop %v1168
      %v1170 = vmul.f32 %v1165, %v1169
      %1171 = vrot.lane.b32.xlu0 %v357, 40
      %v1172 = vpop.permute.xlu0 %1171
      %v1175 = vsel %vm363, %v1170, 0
      %1177 = vmatprep.subr.mxu0 0.0
      %1178 = vmatpush1.msra.mxu0 %v1172
      %1179 = vmatprep.subr.mxu0 0.0
      %1180 = vmatpush1.msra.mxu0 0.0
      %1181 = vmatprep.subr.mxu0 0.0
      %1182 = vmatpush1.msra.mxu0 0.0
      %1183 = vmatprep.subr.mxu0 0.0
      %1184 = vmatpush1.msra.mxu0 0.0
      %1185 = vmatprep.subr.mxu0 0.0
      %1186 = vmatpush1.msra.mxu0 0.0
      %1187 = vmatprep.subr.mxu0 0.0
      %1188 = vmatpush1.msra.mxu0 0.0
      %1189 = vmatprep.subr.mxu0 0.0
      %1190 = vmatpush1.msra.mxu0 0.0
      %1191 = vmatprep.subr.mxu0 0.0
      %1192 = vmatpush1.msra.mxu0 0.0
      %1193 = vmatprep.subr.mxu0 0.0
      %1194 = vmatpush1.msra.mxu0 0.0
      %1195 = vmatprep.subr.mxu0 0.0
      %1196 = vmatpush1.msra.mxu0 0.0
      %1197 = vmatprep.subr.mxu0 0.0
      %1198 = vmatpush1.msra.mxu0 0.0
      %1199 = vmatprep.subr.mxu0 0.0
      %1200 = vmatpush1.msra.mxu0 0.0
      %1201 = vmatprep.subr.mxu0 0.0
      %1202 = vmatpush1.msra.mxu0 0.0
      %1203 = vmatprep.subr.mxu0 0.0
      %1204 = vmatpush1.msra.mxu0 0.0
      %1205 = vmatprep.subr.mxu0 0.0
      %1206 = vmatpush1.msra.mxu0 0.0
      %1207 = vmatprep.subr.mxu0 0.0
      %1208 = vmatpush1.msra.mxu0 0.0
      %1209 = vmatprep.subr.mxu0 0.0
      %1210 = vmatpush1.msra.mxu0 0.0
      %1211 = vmatprep.subr.mxu0 0.0
      %1212 = vmatpush1.msra.mxu0 0.0
      %1213 = vmatprep.subr.mxu0 0.0
      %1214 = vmatpush1.msra.mxu0 0.0
      %1215 = vmatprep.subr.mxu0 0.0
      %1216 = vmatpush1.msra.mxu0 0.0
      %1217 = vmatprep.subr.mxu0 0.0
      %1218 = vmatpush1.msra.mxu0 0.0
      %1219 = vmatprep.subr.mxu0 0.0
      %1220 = vmatpush1.msra.mxu0 0.0
      %1221 = vmatprep.subr.mxu0 0.0
      %1222 = vmatpush1.msra.mxu0 0.0
      %1223 = vmatprep.subr.mxu0 0.0
      %1224 = vmatpush1.msra.mxu0 0.0
      %1225 = vmatprep.subr.mxu0 0.0
      %1226 = vmatpush1.msra.mxu0 0.0
      %1227 = vmatprep.subr.mxu0 0.0
      %1228 = vmatpush1.msra.mxu0 0.0
      %1229 = vmatprep.subr.mxu0 0.0
      %1230 = vmatpush1.msra.mxu0 0.0
      %1231 = vmatprep.subr.mxu0 0.0
      %1232 = vmatpush1.msra.mxu0 0.0
      %1233 = vmatprep.subr.mxu0 0.0
      %1234 = vmatpush1.msra.mxu0 0.0
      %1235 = vmatprep.subr.mxu0 0.0
      %1236 = vmatpush1.msra.mxu0 0.0
      %1237 = vmatprep.subr.mxu0 0.0
      %1238 = vmatpush1.msra.mxu0 0.0
      %1239 = vmatprep.subr.mxu0 0.0
      %1240 = vmatpush1.msra.mxu0 0.0
      %1241 = vmatprep.mubr.f32.mxu0 0.0
      %1242 = vmatmul.mubr.f32.gmra.mrb[0].mxu0 %v1175
      %v1243 = vpop.f32.mrb[0].mxu0
      %v1244 = vadd.f32 0.0, %v1243
      %v1245 = vpop.f32.mrb[0].mxu0
      %1246 = vdwg.mxu0
      %v1247 = vld [vmem:[%s3 + $0x18] sm:$0xff]
      %v1249 = vsel %vm363, %v1244, 0
      %1251 = vmatprep.subr.mxu0 0.0
      %1252 = vmatpush1.msra.mxu0 %v1247
      %1253 = vmatprep.subr.mxu0 0.0
      %1254 = vmatpush1.msra.mxu0 0.0
      %1255 = vmatprep.subr.mxu0 0.0
      %1256 = vmatpush1.msra.mxu0 0.0
      %1257 = vmatprep.subr.mxu0 0.0
      %1258 = vmatpush1.msra.mxu0 0.0
      %1259 = vmatprep.subr.mxu0 0.0
      %1260 = vmatpush1.msra.mxu0 0.0
      %1261 = vmatprep.subr.mxu0 0.0
      %1262 = vmatpush1.msra.mxu0 0.0
      %1263 = vmatprep.subr.mxu0 0.0
      %1264 = vmatpush1.msra.mxu0 0.0
      %1265 = vmatprep.subr.mxu0 0.0
      %1266 = vmatpush1.msra.mxu0 0.0
      %1267 = vmatprep.subr.mxu0 0.0
      %1268 = vmatpush1.msra.mxu0 0.0
      %1269 = vmatprep.subr.mxu0 0.0
      %1270 = vmatpush1.msra.mxu0 0.0
      %1271 = vmatprep.subr.mxu0 0.0
      %1272 = vmatpush1.msra.mxu0 0.0
      %1273 = vmatprep.subr.mxu0 0.0
      %1274 = vmatpush1.msra.mxu0 0.0
      %1275 = vmatprep.subr.mxu0 0.0
      %1276 = vmatpush1.msra.mxu0 0.0
      %1277 = vmatprep.subr.mxu0 0.0
      %1278 = vmatpush1.msra.mxu0 0.0
      %1279 = vmatprep.subr.mxu0 0.0
      %1280 = vmatpush1.msra.mxu0 0.0
      %1281 = vmatprep.subr.mxu0 0.0
      %1282 = vmatpush1.msra.mxu0 0.0
      %1283 = vmatprep.subr.mxu0 0.0
      %1284 = vmatpush1.msra.mxu0 0.0
      %1285 = vmatprep.subr.mxu0 0.0
      %1286 = vmatpush1.msra.mxu0 0.0
      %1287 = vmatprep.subr.mxu0 0.0
      %1288 = vmatpush1.msra.mxu0 0.0
      %1289 = vmatprep.subr.mxu0 0.0
      %1290 = vmatpush1.msra.mxu0 0.0
      %1291 = vmatprep.subr.mxu0 0.0
      %1292 = vmatpush1.msra.mxu0 0.0
      %1293 = vmatprep.subr.mxu0 0.0
      %1294 = vmatpush1.msra.mxu0 0.0
      %1295 = vmatprep.subr.mxu0 0.0
      %1296 = vmatpush1.msra.mxu0 0.0
      %1297 = vmatprep.subr.mxu0 0.0
      %1298 = vmatpush1.msra.mxu0 0.0
      %1299 = vmatprep.subr.mxu0 0.0
      %1300 = vmatpush1.msra.mxu0 0.0
      %1301 = vmatprep.subr.mxu0 0.0
      %1302 = vmatpush1.msra.mxu0 0.0
      %1303 = vmatprep.subr.mxu0 0.0
      %1304 = vmatpush1.msra.mxu0 0.0
      %1305 = vmatprep.subr.mxu0 0.0
      %1306 = vmatpush1.msra.mxu0 0.0
      %1307 = vmatprep.subr.mxu0 0.0
      %1308 = vmatpush1.msra.mxu0 0.0
      %1309 = vmatprep.subr.mxu0 0.0
      %1310 = vmatpush1.msra.mxu0 0.0
      %1311 = vmatprep.subr.mxu0 0.0
      %1312 = vmatpush1.msra.mxu0 0.0
      %1313 = vmatprep.subr.mxu0 0.0
      %1314 = vmatpush1.msra.mxu0 0.0
      %1315 = vmatprep.mubr.f32.mxu0 0.0
      %1316 = vmatmul.mubr.f32.gmra.mrb[0].mxu0 %v1249
      %v1317 = vpop.f32.mrb[0].mxu0
      %v1318 = vadd.f32 0.0, %v1317
      %v1319 = vpop.f32.mrb[0].mxu0
      %1320 = vdwg.mxu0
      %v1321 = vadd.f32 %v1080, %v1318
      %v1322 = vadd.f32 %v274, %v1321
      %v1323 = vld [vmem:[%s4] sm:$0x1]
      %v1325 = vlaneseq
      %v1326 = vshrl.u32 %v1325, 7
      %v1327 = vsub.s32 0, %v1326
      %v1328 = vrot.slane %v1323, %v1327
      %v1330 = vadd.f32 %v1322, %v1328
      %v1331 = vld [vmem:[%s5] sm:$0x1]
      %v1332 = vld [vmem:[%s6] sm:$0x1]
      %v1333 = vsel %vm286, %v1330, 0.0
      %1334 = vadd.xlane.f32.xlu0 %v1333
      %v1335 = vpop.xlane.xlu0 %1334
      %v1336 = vrcp.pop 32.0
      %v1337 = vmul.f32 %v1335, %v1336
      %v1338 = vsub.f32 %v1330, %v1337
      %v1339 = vmul.f32 %v1338, %v1338
      %v1340 = vsel %vm286, %v1339, 0.0
      %1341 = vadd.xlane.f32.xlu0 %v1340
      %v1342 = vpop.xlane.xlu0 %1341
      %v1343 = vmul.f32 %v1342, %v1336
      %v1344 = vadd.f32 %v1343, 1e-05
      %v1345 = vrsqrt.pop %v1344
      %v1346 = vmul.f32 %v1338, %v1345
      %v1348 = vlaneseq
      %v1349 = vshrl.u32 %v1348, 7
      %v1350 = vsub.s32 0, %v1349
      %v1351 = vrot.slane %v1331, %v1350
      %v1353 = vmul.f32 %v1346, %v1351
      %v1355 = vlaneseq
      %v1356 = vshrl.u32 %v1355, 7
      %v1357 = vsub.s32 0, %v1356
      %v1358 = vrot.slane %v1332, %v1357
      %v1360 = vadd.f32 %v1353, %v1358
      %1361 = vst.msk [vmem:[%s273] sm:$0xff] %vm286, %v1360
      %p1362 = scmp.lt.s32.totalorder %s18, 1
      %s1363 = scalar_select %p1362, %s18, 1
      %s1364 = smul.addr %s1363, 8
      %s1365 = scalar_lea.vmem %s7, %s1364
      // Predicated region
      $region49: #{generate.3} parent=47 // pred_check
        %p1366 = pneg %p188
      $region50: #{generate.3} parent=47 // pred_check_branch
        %1368 = sbr.rel (%p1366) target = $region52
      $region51: #{generate.3} parent=47 // pred_region
        _
      $region52: #{generate.3} parent=47 // pred_fallthru
        _
    $region48: #{generate.3} parent=5 // pred_fallthru
      _
    %p1369 = scmp.le.s32.totalorder 2, %s13
    // Predicated region
    $region53: #{generate.3} parent=5 // pred_check
      %p1370 = pneg %p1369
    $region54: #{generate.3} parent=5 // pred_check_branch
      %1372 = sbr.rel (%p1370) target = $region56
    $region55: #{generate.3} parent=5 // pred_region
      %s1373 = ssub.s32 %s13, 2
      // Predicated region
      $region57: #{generate.3} parent=55 // pred_check
        %p1374 = pneg %p194
      $region58: #{generate.3} parent=55 // pred_check_branch
        %1376 = sbr.rel (%p1374) target = $region60
      $region59: #{generate.3} parent=55 // pred_region
        %p1377 = scmp.lt.s32.totalorder %s19, 1
        %s1378 = scalar_select %p1377, %s19, 1
        %s1379 = smul.addr %s1378, 8
        %s1380 = scalar_lea.vmem %s7, %s1379
      $region60: #{generate.3} parent=55 // pred_fallthru
        _
    $region56: #{generate.3} parent=5 // pred_fallthru
      _
  $region6: #{generate.3} parent=0 // loop_footer
    %s17 = sadd.s32 1, %s13
  $region7: #{generate.3} parent=0 // loop_footer_branch
    %12 = sbr.rel target = $region3
  $region8: #{generate.3} parent=0 // loop_exit
    _

// kernel: closed_call.43
$region0: #{closed_call.43}
  #allocation0 [shape = 'u32[]', space=smem, size = 0x4, offset = 0x4, fixed_abs, tag = 'smem constant byte address 0x4 - core index']
  #allocation1 [shape = 'u32[144,128]{1,0:T(1,128)}', space=vmem, size = 0x12000, scoped, tag = 'internal scratch']
  %s0 = inlined_call_operand.vmem [shape: f32[2,6,32], index: 0, kind: input, shape index: {}]
  %s1 = inlined_call_operand.vmem [shape: f32[32,96], index: 1, kind: input, shape index: {}]
  %s2 = inlined_call_operand.vmem [shape: f32[1,96], index: 2, kind: input, shape index: {}]
  %s3 = inlined_call_operand.vmem [shape: f32[32,32], index: 3, kind: input, shape index: {}]
  %s4 = inlined_call_operand.vmem [shape: f32[1,32], index: 4, kind: input, shape index: {}]
  %s5 = inlined_call_operand.vmem [shape: f32[1,32], index: 5, kind: input, shape index: {}]
  %s6 = inlined_call_operand.vmem [shape: f32[1,32], index: 6, kind: input, shape index: {}]
  %s7 = inlined_call_operand.vmem [shape: f32[2,6,32], index: 7, kind: output, shape index: {}]
  %s8 = sld [smem:[#allocation0]]
  $region61: #{closed_call.43} parent=0
    _
  %s10 = ssub.s32 1, %s8
  %s11 = scalar_select 0, %s10, %s8
  loop: start=0, step=1, limit=4
  $region2: #{closed_call.43} parent=0 // loop_pre_header
    _
  $region3: #{closed_call.43} parent=0 // loop_header
    %s13 = sphi 0, %s17
    %p14 = scmp.ge.s32.totalorder %s13, 4
    %s23 = sphi 0, %s25
    %s26 = sphi 0, %s23
    %s27 = sphi 0, %s26
    %s43 = sphi 0, %s27
    %s47 = sphi 0, %s47
    %s49 = sphi 0, %s47
    %s50 = sphi 0, %s49
    %s64 = sphi 0, %s50
    %s68 = sphi 0, %s68
    %s70 = sphi 0, %s68
    %s71 = sphi 0, %s70
    %s85 = sphi 0, %s71
    %s89 = sphi 0, %s89
    %s91 = sphi 0, %s89
    %s92 = sphi 0, %s91
    %s106 = sphi 0, %s92
    %s110 = sphi 0, %s110
    %s112 = sphi 0, %s110
    %s113 = sphi 0, %s112
    %s127 = sphi 0, %s113
    %s131 = sphi 0, %s131
    %s133 = sphi 0, %s131
    %s134 = sphi 0, %s133
    %s148 = sphi 0, %s134
    %s152 = sphi 0, %s152
    %s154 = sphi 0, %s152
    %s155 = sphi 0, %s154
    %s169 = sphi 0, %s155
    %s175 = sphi 0, %s177
    %s178 = sphi 0, %s175
    %s179 = sphi 0, %s178
    %s195 = sphi 0, %s179
  $region4: #{closed_call.43} parent=0 // loop_header_branch
    %16 = sbr.rel (%p14) target = $region8
  $region5: #{closed_call.43} parent=0 // loop_body
    %s18 = ssub.s32 %s13, 1
    %s19 = ssub.s32 %s13, 2
    %s20 = sadd.s32 %s13, 1
    %s21 = ssub.s32 %s13, %s20
    %p22 = scmp.eq.s32.totalorder %s21, 0
    %s24 = sadd.s32 %s23, 1
    %s25 = scalar_select %p22, %s23, %s24
    %p28 = pneg %p22
    %p29 = scmp.eq.s32.totalorder %s13, 1
    %p30 = por %p28, %p29
    %p31 = scmp.ne.s32.totalorder %s23, %s26
    %p32 = scmp.eq.s32.totalorder %s13, 0
    %p33 = por %p31, %p32
    %p34 = scmp.ne.s32.totalorder %s23, %s26
    %p35 = scmp.eq.s32.totalorder %s18, 1
    %p36 = por %p34, %p35
    %p37 = scmp.ne.s32.totalorder %s26, %s27
    %p38 = scmp.eq.s32.totalorder %s18, 0
    %p39 = por %p37, %p38
    %p40 = scmp.ne.s32.totalorder %s26, %s27
    %p41 = scmp.eq.s32.totalorder %s19, 1
    %p42 = por %p40, %p41
    %p44 = scmp.ne.s32.totalorder %s27, %s43
    %p45 = scmp.eq.s32.totalorder %s19, 0
    %p46 = por %p44, %p45
    %s48 = sadd.s32 %s47, 1
    %p51 = scmp.eq.s32.totalorder %s13, 1
    %p52 = scmp.ne.s32.totalorder %s47, %s49
    %p53 = scmp.eq.s32.totalorder %s13, 0
    %p54 = por %p52, %p53
    %p55 = scmp.ne.s32.totalorder %s47, %s49
    %p56 = scmp.eq.s32.totalorder %s18, 1
    %p57 = por %p55, %p56
    %p58 = scmp.ne.s32.totalorder %s49, %s50
    %p59 = scmp.eq.s32.totalorder %s18, 0
    %p60 = por %p58, %p59
    %p61 = scmp.ne.s32.totalorder %s49, %s50
    %p62 = scmp.eq.s32.totalorder %s19, 1
    %p63 = por %p61, %p62
    %p65 = scmp.ne.s32.totalorder %s50, %s64
    %p66 = scmp.eq.s32.totalorder %s19, 0
    %p67 = por %p65, %p66
    %s69 = sadd.s32 %s68, 1
    %p72 = scmp.eq.s32.totalorder %s13, 1
    %p73 = scmp.ne.s32.totalorder %s68, %s70
    %p74 = scmp.eq.s32.totalorder %s13, 0
    %p75 = por %p73, %p74
    %p76 = scmp.ne.s32.totalorder %s68, %s70
    %p77 = scmp.eq.s32.totalorder %s18, 1
    %p78 = por %p76, %p77
    %p79 = scmp.ne.s32.totalorder %s70, %s71
    %p80 = scmp.eq.s32.totalorder %s18, 0
    %p81 = por %p79, %p80
    %p82 = scmp.ne.s32.totalorder %s70, %s71
    %p83 = scmp.eq.s32.totalorder %s19, 1
    %p84 = por %p82, %p83
    %p86 = scmp.ne.s32.totalorder %s71, %s85
    %p87 = scmp.eq.s32.totalorder %s19, 0
    %p88 = por %p86, %p87
    %s90 = sadd.s32 %s89, 1
    %p93 = scmp.eq.s32.totalorder %s13, 1
    %p94 = scmp.ne.s32.totalorder %s89, %s91
    %p95 = scmp.eq.s32.totalorder %s13, 0
    %p96 = por %p94, %p95
    %p97 = scmp.ne.s32.totalorder %s89, %s91
    %p98 = scmp.eq.s32.totalorder %s18, 1
    %p99 = por %p97, %p98
    %p100 = scmp.ne.s32.totalorder %s91, %s92
    %p101 = scmp.eq.s32.totalorder %s18, 0
    %p102 = por %p100, %p101
    %p103 = scmp.ne.s32.totalorder %s91, %s92
    %p104 = scmp.eq.s32.totalorder %s19, 1
    %p105 = por %p103, %p104
    %p107 = scmp.ne.s32.totalorder %s92, %s106
    %p108 = scmp.eq.s32.totalorder %s19, 0
    %p109 = por %p107, %p108
    %s111 = sadd.s32 %s110, 1
    %p114 = scmp.eq.s32.totalorder %s13, 1
    %p115 = scmp.ne.s32.totalorder %s110, %s112
    %p116 = scmp.eq.s32.totalorder %s13, 0
    %p117 = por %p115, %p116
    %p118 = scmp.ne.s32.totalorder %s110, %s112
    %p119 = scmp.eq.s32.totalorder %s18, 1
    %p120 = por %p118, %p119
    %p121 = scmp.ne.s32.totalorder %s112, %s113
    %p122 = scmp.eq.s32.totalorder %s18, 0
    %p123 = por %p121, %p122
    %p124 = scmp.ne.s32.totalorder %s112, %s113
    %p125 = scmp.eq.s32.totalorder %s19, 1
    %p126 = por %p124, %p125
    %p128 = scmp.ne.s32.totalorder %s113, %s127
    %p129 = scmp.eq.s32.totalorder %s19, 0
    %p130 = por %p128, %p129
    %s132 = sadd.s32 %s131, 1
    %p135 = scmp.eq.s32.totalorder %s13, 1
    %p136 = scmp.ne.s32.totalorder %s131, %s133
    %p137 = scmp.eq.s32.totalorder %s13, 0
    %p138 = por %p136, %p137
    %p139 = scmp.ne.s32.totalorder %s131, %s133
    %p140 = scmp.eq.s32.totalorder %s18, 1
    %p141 = por %p139, %p140
    %p142 = scmp.ne.s32.totalorder %s133, %s134
    %p143 = scmp.eq.s32.totalorder %s18, 0
    %p144 = por %p142, %p143
    %p145 = scmp.ne.s32.totalorder %s133, %s134
    %p146 = scmp.eq.s32.totalorder %s19, 1
    %p147 = por %p145, %p146
    %p149 = scmp.ne.s32.totalorder %s134, %s148
    %p150 = scmp.eq.s32.totalorder %s19, 0
    %p151 = por %p149, %p150
    %s153 = sadd.s32 %s152, 1
    %p156 = scmp.eq.s32.totalorder %s13, 1
    %p157 = scmp.ne.s32.totalorder %s152, %s154
    %p158 = scmp.eq.s32.totalorder %s13, 0
    %p159 = por %p157, %p158
    %p160 = scmp.ne.s32.totalorder %s152, %s154
    %p161 = scmp.eq.s32.totalorder %s18, 1
    %p162 = por %p160, %p161
    %p163 = scmp.ne.s32.totalorder %s154, %s155
    %p164 = scmp.eq.s32.totalorder %s18, 0
    %p165 = por %p163, %p164
    %p166 = scmp.ne.s32.totalorder %s154, %s155
    %p167 = scmp.eq.s32.totalorder %s19, 1
    %p168 = por %p166, %p167
    %p170 = scmp.ne.s32.totalorder %s155, %s169
    %p171 = scmp.eq.s32.totalorder %s19, 0
    %p172 = por %p170, %p171
    %s173 = ssub.s32 %s13, %s20
    %p174 = scmp.eq.s32.totalorder %s173, 0
    %s176 = sadd.s32 %s175, 1
    %s177 = scalar_select %p174, %s175, %s176
    %p180 = pneg %p174
    %p181 = scmp.eq.s32.totalorder %s13, 1
    %p182 = por %p180, %p181
    %p183 = scmp.ne.s32.totalorder %s175, %s178
    %p184 = scmp.eq.s32.totalorder %s13, 0
    %p185 = por %p183, %p184
    %p186 = scmp.ne.s32.totalorder %s175, %s178
    %p187 = scmp.eq.s32.totalorder %s18, 1
    %p188 = por %p186, %p187
    %p189 = scmp.ne.s32.totalorder %s178, %s179
    %p190 = scmp.eq.s32.totalorder %s18, 0
    %p191 = por %p189, %p190
    %p192 = scmp.ne.s32.totalorder %s178, %s179
    %p193 = scmp.eq.s32.totalorder %s19, 1
    %p194 = por %p192, %p193
    %p196 = scmp.ne.s32.totalorder %s179, %s195
    %p197 = scmp.eq.s32.totalorder %s19, 0
    %p198 = por %p196, %p197
    %p199 = scmp.le.s32.totalorder 1, %s13
    %p200 = scmp.lt.s32.totalorder %s13, 3
    %p201 = pnand %p199, %p200
    %p202 = pneg %p201
    // Predicated region
    $region9: #{closed_call.43} parent=5 // pred_check
      _
    $region10: #{closed_call.43} parent=5 // pred_check_branch
      %204 = sbr.rel (%p201) target = $region12
    $region11: #{closed_call.43} parent=5 // pred_region
      %s205 = ssub.s32 %s13, 1
      // Predicated region
      $region13: #{closed_call.43} parent=11 // pred_check
        %p206 = pneg %p60
      $region14: #{closed_call.43} parent=11 // pred_check_branch
        %208 = sbr.rel (%p206) target = $region16
      $region15: #{closed_call.43} parent=11 // pred_region
        _
      $region16: #{closed_call.43} parent=11 // pred_fallthru
        _
      // Predicated region
      $region17: #{closed_call.43} parent=11 // pred_check
        %p209 = pneg %p81
      $region18: #{closed_call.43} parent=11 // pred_check_branch
        %211 = sbr.rel (%p209) target = $region20
      $region19: #{closed_call.43} parent=11 // pred_region
        _
      $region20: #{closed_call.43} parent=11 // pred_fallthru
        _
      // Predicated region
      $region21: #{closed_call.43} parent=11 // pred_check
        %p212 = pneg %p102
      $region22: #{closed_call.43} parent=11 // pred_check_branch
        %214 = sbr.rel (%p212) target = $region24
      $region23: #{closed_call.43} parent=11 // pred_region
        _
      $region24: #{closed_call.43} parent=11 // pred_fallthru
        _
      // Predicated region
      $region25: #{closed_call.43} parent=11 // pred_check
        %p215 = pneg %p123
      $region26: #{closed_call.43} parent=11 // pred_check_branch
        %217 = sbr.rel (%p215) target = $region28
      $region27: #{closed_call.43} parent=11 // pred_region
        _
      $region28: #{closed_call.43} parent=11 // pred_fallthru
        _
      // Predicated region
      $region29: #{closed_call.43} parent=11 // pred_check
        %p218 = pneg %p144
      $region30: #{closed_call.43} parent=11 // pred_check_branch
        %220 = sbr.rel (%p218) target = $region32
      $region31: #{closed_call.43} parent=11 // pred_region
        _
      $region32: #{closed_call.43} parent=11 // pred_fallthru
        _
      // Predicated region
      $region33: #{closed_call.43} parent=11 // pred_check
        %p221 = pneg %p165
      $region34: #{closed_call.43} parent=11 // pred_check_branch
        %223 = sbr.rel (%p221) target = $region36
      $region35: #{closed_call.43} parent=11 // pred_region
        _
      $region36: #{closed_call.43} parent=11 // pred_fallthru
        _
    $region12: #{closed_call.43} parent=5 // pred_fallthru
      _
    %p224 = scmp.lt.s32.totalorder %s13, 2
    // Predicated region
    $region37: #{closed_call.43} parent=5 // pred_check
      %p225 = pneg %p224
    $region38: #{closed_call.43} parent=5 // pred_check_branch
      %227 = sbr.rel (%p225) target = $region40
    $region39: #{closed_call.43} parent=5 // pred_region
      // Predicated region
      $region41: #{closed_call.43} parent=39 // pred_check
        %p228 = pneg %p33
      $region42: #{closed_call.43} parent=39 // pred_check_branch
        %230 = sbr.rel (%p228) target = $region44
      $region43: #{closed_call.43} parent=39 // pred_region
        %p231 = scmp.lt.s32.totalorder %s13, 1
        %s232 = scalar_select %p231, %s13, 1
        %s233 = smul.addr %s232, 8
        %s234 = scalar_lea.vmem %s0, %s233
      $region44: #{closed_call.43} parent=39 // pred_fallthru
        _
    $region40: #{closed_call.43} parent=5 // pred_fallthru
      _
    %p235 = scmp.le.s32.totalorder 1, %s13
    %p236 = scmp.lt.s32.totalorder %s13, 3
    %p237 = pnand %p235, %p236
    %p238 = pneg %p237
    // Predicated region
    $region45: #{closed_call.43} parent=5 // pred_check
      _
    $region46: #{closed_call.43} parent=5 // pred_check_branch
      %240 = sbr.rel (%p237) target = $region48
    $region47: #{closed_call.43} parent=5 // pred_region
      %s241 = ssub.s32 %s13, 1
      %p242 = scmp.lt.s32.totalorder %s18, 1
      %s243 = scalar_select %p242, %s18, 1
      %s244 = smul.addr %s243, 8
      %s245 = scalar_lea.vmem %s0, %s244
      %p246 = pneg %p39
      %p247 = pneg %p36
      %p248 = pneg %p60
      %p249 = pneg %p57
      %p250 = pneg %p81
      %p251 = pneg %p78
      %p252 = pneg %p102
      %p253 = pneg %p99
      %p254 = pneg %p123
      %p255 = pneg %p120
      %p256 = pneg %p144
      %p257 = pneg %p141
      %p258 = pneg %p165
      %p259 = pneg %p162
      %p260 = pneg %p191
      %p261 = pneg %p188
      %p262 = scmp.lt.s32.totalorder %s18, 1
      %s263 = scalar_select %p262, %s18, 1
      %s264 = smul.addr %s263, 8
      %s265 = scalar_lea.vmem %s7, %s264
      %p266 = scmp.lt.s32.totalorder %s18, 1
      %s267 = scalar_select %p266, %s18, 1
      %s268 = smul.addr %s267, 8
      %s269 = scalar_lea.vmem %s0, %s268
      %p270 = scmp.lt.s32.totalorder %s18, 1
      %s271 = scalar_select %p270, %s18, 1
      %s272 = smul.addr %s271, 8
      %s273 = scalar_lea.vmem %s7, %s272
      %v274 = vld [vmem:[%s269] sm:$0x3f]
      %v275 = vld [vmem:[%s1] sm:$0xff]
      %v276 = vld [vmem:[%s1 + $0x8] sm:$0xff]
      %v277 = vld [vmem:[%s1 + $0x10] sm:$0xff]
      %v278 = vld [vmem:[%s1 + $0x18] sm:$0xff]
      %v279 = vld [vmem:[%s2] sm:$0x1]
      %v281 = vlaneseq
      %v282 = vshrl.u32 %v281, 7
      %v283 = vsub.s32 0, %v282
      %v284 = vrot.slane %v279, %v283
      %vm286 = vcmask 261120
      %v288 = vsel %vm286, %v274, 0
      %290 = vmatprep.subr.mxu0 0.0
      %291 = vmatpush1.msra.mxu0 %v275
      %292 = vmatprep.subr.mxu0 0.0
      %293 = vmatpush1.msra.mxu0 %v276
      %294 = vmatprep.subr.mxu0 0.0
      %295 = vmatpush1.msra.mxu0 %v277
      %296 = vmatprep.subr.mxu0 0.0
      %297 = vmatpush1.msra.mxu0 %v278
      %298 = vmatprep.subr.mxu0 0.0
      %299 = vmatpush1.msra.mxu0 0.0
      %300 = vmatprep.subr.mxu0 0.0
      %301 = vmatpush1.msra.mxu0 0.0
      %302 = vmatprep.subr.mxu0 0.0
      %303 = vmatpush1.msra.mxu0 0.0
      %304 = vmatprep.subr.mxu0 0.0
      %305 = vmatpush1.msra.mxu0 0.0
      %306 = vmatprep.subr.mxu0 0.0
      %307 = vmatpush1.msra.mxu0 0.0
      %308 = vmatprep.subr.mxu0 0.0
      %309 = vmatpush1.msra.mxu0 0.0
      %310 = vmatprep.subr.mxu0 0.0
      %311 = vmatpush1.msra.mxu0 0.0
      %312 = vmatprep.subr.mxu0 0.0
      %313 = vmatpush1.msra.mxu0 0.0
      %314 = vmatprep.subr.mxu0 0.0
      %315 = vmatpush1.msra.mxu0 0.0
      %316 = vmatprep.subr.mxu0 0.0
      %317 = vmatpush1.msra.mxu0 0.0
      %318 = vmatprep.subr.mxu0 0.0
      %319 = vmatpush1.msra.mxu0 0.0
      %320 = vmatprep.subr.mxu0 0.0
      %321 = vmatpush1.msra.mxu0 0.0
      %322 = vmatprep.subr.mxu0 0.0
      %323 = vmatpush1.msra.mxu0 0.0
      %324 = vmatprep.subr.mxu0 0.0
      %325 = vmatpush1.msra.mxu0 0.0
      %326 = vmatprep.subr.mxu0 0.0
      %327 = vmatpush1.msra.mxu0 0.0
      %328 = vmatprep.subr.mxu0 0.0
      %329 = vmatpush1.msra.mxu0 0.0
      %330 = vmatprep.subr.mxu0 0.0
      %331 = vmatpush1.msra.mxu0 0.0
      %332 = vmatprep.subr.mxu0 0.0
      %333 = vmatpush1.msra.mxu0 0.0
      %334 = vmatprep.subr.mxu0 0.0
      %335 = vmatpush1.msra.mxu0 0.0
      %336 = vmatprep.subr.mxu0 0.0
      %337 = vmatpush1.msra.mxu0 0.0
      %338 = vmatprep.subr.mxu0 0.0
      %339 = vmatpush1.msra.mxu0 0.0
      %340 = vmatprep.subr.mxu0 0.0
      %341 = vmatpush1.msra.mxu0 0.0
      %342 = vmatprep.subr.mxu0 0.0
      %343 = vmatpush1.msra.mxu0 0.0
      %344 = vmatprep.subr.mxu0 0.0
      %345 = vmatpush1.msra.mxu0 0.0
      %346 = vmatprep.subr.mxu0 0.0
      %347 = vmatpush1.msra.mxu0 0.0
      %348 = vmatprep.subr.mxu0 0.0
      %349 = vmatpush1.msra.mxu0 0.0
      %350 = vmatprep.subr.mxu0 0.0
      %351 = vmatpush1.msra.mxu0 0.0
      %352 = vmatprep.subr.mxu0 0.0
      %353 = vmatpush1.msra.mxu0 0.0
      %354 = vmatprep.mubr.f32.mxu0 0.0
      %355 = vmatmul.mubr.f32.gmra.mrb[0].mxu0 %v288
      %v356 = vpop.f32.mrb[0].mxu0
      %v357 = vadd.f32 %v284, %v356
      %v358 = vpop.f32.mrb[0].mxu0
      %359 = vdwg.mxu0
      %v360 = vlaneseq
      %v361 = vshrl.u32 %v360, 7
      %v362 = vlaneseq
      %v363 = vand.u32 %v362, 127
      %vm364 = vcmp.ge.s32.totalorder %v361, %v363
      %v365 = vsel %vm364, 0.0, -1e+09
      %367 = vrot.lane.b32.xlu0 %v357, 96
      %v368 = vpop.permute.xlu0 %367
      %vm369 = vcmask 64512
      %v370 = vsel %vm369, %v357, 0
      %v372 = vsel %vm369, %v368, 0
      %374 = vmatprep.subr.mxu0 0.0
      %375 = vmatpush1.xpose.msra.mxu0 %v372
      %376 = vmatprep.subr.mxu0 0.0
      %377 = vmatpush1.xpose.msra.mxu0 0.0
      %378 = vmatprep.subr.mxu0 0.0
      %379 = vmatpush1.xpose.msra.mxu0 0.0
      %380 = vmatprep.subr.mxu0 0.0
      %381 = vmatpush1.xpose.msra.mxu0 0.0
      %382 = vmatprep.subr.mxu0 0.0
      %383 = vmatpush1.xpose.msra.mxu0 0.0
      %384 = vmatprep.subr.mxu0 0.0
      %385 = vmatpush1.xpose.msra.mxu0 0.0
      %386 = vmatprep.subr.mxu0 0.0
      %387 = vmatpush1.xpose.msra.mxu0 0.0
      %388 = vmatprep.subr.mxu0 0.0
      %389 = vmatpush1.xpose.msra.mxu0 0.0
      %390 = vmatprep.subr.mxu0 0.0
      %391 = vmatpush1.xpose.msra.mxu0 0.0
      %392 = vmatprep.subr.mxu0 0.0
      %393 = vmatpush1.xpose.msra.mxu0 0.0
      %394 = vmatprep.subr.mxu0 0.0
      %395 = vmatpush1.xpose.msra.mxu0 0.0
      %396 = vmatprep.subr.mxu0 0.0
      %397 = vmatpush1.xpose.msra.mxu0 0.0
      %398 = vmatprep.subr.mxu0 0.0
      %399 = vmatpush1.xpose.msra.mxu0 0.0
      %400 = vmatprep.subr.mxu0 0.0
      %401 = vmatpush1.xpose.msra.mxu0 0.0
      %402 = vmatprep.subr.mxu0 0.0
      %403 = vmatpush1.xpose.msra.mxu0 0.0
      %404 = vmatprep.subr.mxu0 0.0
      %405 = vmatpush1.xpose.msra.mxu0 0.0
      %406 = vmatprep.subr.mxu0 0.0
      %407 = vmatpush1.xpose.msra.mxu0 0.0
      %408 = vmatprep.subr.mxu0 0.0
      %409 = vmatpush1.xpose.msra.mxu0 0.0
      %410 = vmatprep.subr.mxu0 0.0
      %411 = vmatpush1.xpose.msra.mxu0 0.0
      %412 = vmatprep.subr.mxu0 0.0
      %413 = vmatpush1.xpose.msra.mxu0 0.0
      %414 = vmatprep.subr.mxu0 0.0
      %415 = vmatpush1.xpose.msra.mxu0 0.0
      %416 = vmatprep.subr.mxu0 0.0
      %417 = vmatpush1.xpose.msra.mxu0 0.0
      %418 = vmatprep.subr.mxu0 0.0
      %419 = vmatpush1.xpose.msra.mxu0 0.0
      %420 = vmatprep.subr.mxu0 0.0
      %421 = vmatpush1.xpose.msra.mxu0 0.0
      %422 = vmatprep.subr.mxu0 0.0
      %423 = vmatpush1.xpose.msra.mxu0 0.0
      %424 = vmatprep.subr.mxu0 0.0
      %425 = vmatpush1.xpose.msra.mxu0 0.0
      %426 = vmatprep.subr.mxu0 0.0
      %427 = vmatpush1.xpose.msra.mxu0 0.0
      %428 = vmatprep.subr.mxu0 0.0
      %429 = vmatpush1.xpose.msra.mxu0 0.0
      %430 = vmatprep.subr.mxu0 0.0
      %431 = vmatpush1.xpose.msra.mxu0 0.0
      %432 = vmatprep.subr.mxu0 0.0
      %433 = vmatpush1.xpose.msra.mxu0 0.0
      %434 = vmatprep.subr.mxu0 0.0
      %435 = vmatpush1.xpose.msra.mxu0 0.0
      %436 = vmatprep.subr.mxu0 0.0
      %437 = vmatpush1.xpose.msra.mxu0 0.0
      %438 = vmatprep.mubr.f32.mxu0 0.0
      %439 = vmatmul.mubr.f32.gmra.mrb[0].mxu0 %v370
      %v440 = vpop.f32.mrb[0].mxu0
      %v441 = vadd.f32 0.0, %v440
      %v442 = vpop.f32.mrb[0].mxu0
      %443 = vdwg.mxu0
      %v444 = vmul.f32 %v441, 0.35355338
      %v445 = vadd.f32 %v444, %v365
      %vm446 = vcmask 46080
      %v447 = vsel %vm446, %v445, -inf
      %448 = vmax.xlane.f32.xlu0 %v447
      %v449 = vpop.xlane.xlu0 %448
      %v450 = vsub.f32 %v445, %v449
      %v451 = vmul.f32 %v450, 1.442695
      %v452 = vpow.pop %v451
      %v453 = vsel %vm446, %v452, 0.0
      %454 = vadd.xlane.f32.xlu0 %v453
      %v455 = vpop.xlane.xlu0 %454
      %v456 = vrcp.pop %v455
      %v457 = vmul.f32 %v452, %v456
      %458 = vrot.lane.b32.xlu0 %v357, 64
      %v459 = vpop.permute.xlu0 %458
      %vm460 = vcmask 48128
      %v462 = vsel %vm460, %v457, 0
      %vm464 = vcmask 1045504
      %v465 = vsel %vm464, %v459, 0
      %467 = vmatprep.subr.mxu0 0.0
      %468 = vmatpush1.msra.mxu0 %v465
      %469 = vmatprep.subr.mxu0 0.0
      %470 = vmatpush1.msra.mxu0 0.0
      %471 = vmatprep.subr.mxu0 0.0
      %472 = vmatpush1.msra.mxu0 0.0
      %473 = vmatprep.subr.mxu0 0.0
      %474 = vmatpush1.msra.mxu0 0.0
      %475 = vmatprep.subr.mxu0 0.0
      %476 = vmatpush1.msra.mxu0 0.0
      %477 = vmatprep.subr.mxu0 0.0
      %478 = vmatpush1.msra.mxu0 0.0
      %479 = vmatprep.subr.mxu0 0.0
      %480 = vmatpush1.msra.mxu0 0.0
      %481 = vmatprep.subr.mxu0 0.0
      %482 = vmatpush1.msra.mxu0 0.0
      %483 = vmatprep.subr.mxu0 0.0
      %484 = vmatpush1.msra.mxu0 0.0
      %485 = vmatprep.subr.mxu0 0.0
      %486 = vmatpush1.msra.mxu0 0.0
      %487 = vmatprep.subr.mxu0 0.0
      %488 = vmatpush1.msra.mxu0 0.0
      %489 = vmatprep.subr.mxu0 0.0
      %490 = vmatpush1.msra.mxu0 0.0
      %491 = vmatprep.subr.mxu0 0.0
      %492 = vmatpush1.msra.mxu0 0.0
      %493 = vmatprep.subr.mxu0 0.0
      %494 = vmatpush1.msra.mxu0 0.0
      %495 = vmatprep.subr.mxu0 0.0
      %496 = vmatpush1.msra.mxu0 0.0
      %497 = vmatprep.subr.mxu0 0.0
      %498 = vmatpush1.msra.mxu0 0.0
      %499 = vmatprep.subr.mxu0 0.0
      %500 = vmatpush1.msra.mxu0 0.0
      %501 = vmatprep.subr.mxu0 0.0
      %502 = vmatpush1.msra.mxu0 0.0
      %503 = vmatprep.subr.mxu0 0.0
      %504 = vmatpush1.msra.mxu0 0.0
      %505 = vmatprep.subr.mxu0 0.0
      %506 = vmatpush1.msra.mxu0 0.0
      %507 = vmatprep.subr.mxu0 0.0
      %508 = vmatpush1.msra.mxu0 0.0
      %509 = vmatprep.subr.mxu0 0.0
      %510 = vmatpush1.msra.mxu0 0.0
      %511 = vmatprep.subr.mxu0 0.0
      %512 = vmatpush1.msra.mxu0 0.0
      %513 = vmatprep.subr.mxu0 0.0
      %514 = vmatpush1.msra.mxu0 0.0
      %515 = vmatprep.subr.mxu0 0.0
      %516 = vmatpush1.msra.mxu0 0.0
      %517 = vmatprep.subr.mxu0 0.0
      %518 = vmatpush1.msra.mxu0 0.0
      %519 = vmatprep.subr.mxu0 0.0
      %520 = vmatpush1.msra.mxu0 0.0
      %521 = vmatprep.subr.mxu0 0.0
      %522 = vmatpush1.msra.mxu0 0.0
      %523 = vmatprep.subr.mxu0 0.0
      %524 = vmatpush1.msra.mxu0 0.0
      %525 = vmatprep.subr.mxu0 0.0
      %526 = vmatpush1.msra.mxu0 0.0
      %527 = vmatprep.subr.mxu0 0.0
      %528 = vmatpush1.msra.mxu0 0.0
      %529 = vmatprep.subr.mxu0 0.0
      %530 = vmatpush1.msra.mxu0 0.0
      %531 = vmatprep.mubr.f32.mxu0 0.0
      %532 = vmatmul.mubr.f32.gmra.mrb[0].mxu0 %v462
      %v533 = vpop.f32.mrb[0].mxu0
      %v534 = vadd.f32 0.0, %v533
      %v535 = vpop.f32.mrb[0].mxu0
      %536 = vdwg.mxu0
      %v537 = vld [vmem:[%s3] sm:$0xff]
      %538 = vrot.lane.b32.xlu0 %v357, 120
      %v539 = vpop.permute.xlu0 %538
      %540 = vrot.lane.b32.xlu0 %v357, 88
      %v541 = vpop.permute.xlu0 %540
      %v542 = vsel %vm369, %v539, 0
      %v544 = vsel %vm369, %v541, 0
      %546 = vmatprep.subr.mxu0 0.0
      %547 = vmatpush1.xpose.msra.mxu0 %v544
      %548 = vmatprep.subr.mxu0 0.0
      %549 = vmatpush1.xpose.msra.mxu0 0.0
      %550 = vmatprep.subr.mxu0 0.0
      %551 = vmatpush1.xpose.msra.mxu0 0.0
      %552 = vmatprep.subr.mxu0 0.0
      %553 = vmatpush1.xpose.msra.mxu0 0.0
      %554 = vmatprep.subr.mxu0 0.0
      %555 = vmatpush1.xpose.msra.mxu0 0.0
      %556 = vmatprep.subr.mxu0 0.0
      %557 = vmatpush1.xpose.msra.mxu0 0.0
      %558 = vmatprep.subr.mxu0 0.0
      %559 = vmatpush1.xpose.msra.mxu0 0.0
      %560 = vmatprep.subr.mxu0 0.0
      %561 = vmatpush1.xpose.msra.mxu0 0.0
      %562 = vmatprep.subr.mxu0 0.0
      %563 = vmatpush1.xpose.msra.mxu0 0.0
      %564 = vmatprep.subr.mxu0 0.0
      %565 = vmatpush1.xpose.msra.mxu0 0.0
      %566 = vmatprep.subr.mxu0 0.0
      %567 = vmatpush1.xpose.msra.mxu0 0.0
      %568 = vmatprep.subr.mxu0 0.0
      %569 = vmatpush1.xpose.msra.mxu0 0.0
      %570 = vmatprep.subr.mxu0 0.0
      %571 = vmatpush1.xpose.msra.mxu0 0.0
      %572 = vmatprep.subr.mxu0 0.0
      %573 = vmatpush1.xpose.msra.mxu0 0.0
      %574 = vmatprep.subr.mxu0 0.0
      %575 = vmatpush1.xpose.msra.mxu0 0.0
      %576 = vmatprep.subr.mxu0 0.0
      %577 = vmatpush1.xpose.msra.mxu0 0.0
      %578 = vmatprep.subr.mxu0 0.0
      %579 = vmatpush1.xpose.msra.mxu0 0.0
      %580 = vmatprep.subr.mxu0 0.0
      %581 = vmatpush1.xpose.msra.mxu0 0.0
      %582 = vmatprep.subr.mxu0 0.0
      %583 = vmatpush1.xpose.msra.mxu0 0.0
      %584 = vmatprep.subr.mxu0 0.0
      %585 = vmatpush1.xpose.msra.mxu0 0.0
      %586 = vmatprep.subr.mxu0 0.0
      %587 = vmatpush1.xpose.msra.mxu0 0.0
      %588 = vmatprep.subr.mxu0 0.0
      %589 = vmatpush1.xpose.msra.mxu0 0.0
      %590 = vmatprep.subr.mxu0 0.0
      %591 = vmatpush1.xpose.msra.mxu0 0.0
      %592 = vmatprep.subr.mxu0 0.0
      %593 = vmatpush1.xpose.msra.mxu0 0.0
      %594 = vmatprep.subr.mxu0 0.0
      %595 = vmatpush1.xpose.msra.mxu0 0.0
      %596 = vmatprep.subr.mxu0 0.0
      %597 = vmatpush1.xpose.msra.mxu0 0.0
      %598 = vmatprep.subr.mxu0 0.0
      %599 = vmatpush1.xpose.msra.mxu0 0.0
      %600 = vmatprep.subr.mxu0 0.0
      %601 = vmatpush1.xpose.msra.mxu0 0.0
      %602 = vmatprep.subr.mxu0 0.0
      %603 = vmatpush1.xpose.msra.mxu0 0.0
      %604 = vmatprep.subr.mxu0 0.0
      %605 = vmatpush1.xpose.msra.mxu0 0.0
      %606 = vmatprep.subr.mxu0 0.0
      %607 = vmatpush1.xpose.msra.mxu0 0.0
      %608 = vmatprep.subr.mxu0 0.0
      %609 = vmatpush1.xpose.msra.mxu0 0.0
      %610 = vmatprep.mubr.f32.mxu0 0.0
      %611 = vmatmul.mubr.f32.gmra.mrb[0].mxu0 %v542
      %v612 = vpop.f32.mrb[0].mxu0
      %v613 = vadd.f32 0.0, %v612
      %v614 = vpop.f32.mrb[0].mxu0
      %615 = vdwg.mxu0
      %v616 = vmul.f32 %v613, 0.35355338
      %v617 = vadd.f32 %v616, %v365
      %v618 = vsel %vm446, %v617, -inf
      %619 = vmax.xlane.f32.xlu0 %v618
      %v620 = vpop.xlane.xlu0 %619
      %v621 = vsub.f32 %v617, %v620
      %v622 = vmul.f32 %v621, 1.442695
      %v623 = vpow.pop %v622
      %v624 = vsel %vm446, %v623, 0.0
      %625 = vadd.xlane.f32.xlu0 %v624
      %v626 = vpop.xlane.xlu0 %625
      %v627 = vrcp.pop %v626
      %v628 = vmul.f32 %v623, %v627
      %629 = vrot.lane.b32.xlu0 %v357, 56
      %v630 = vpop.permute.xlu0 %629
      %v632 = vsel %vm460, %v628, 0
      %v634 = vsel %vm464, %v630, 0
      %636 = vmatprep.subr.mxu0 0.0
      %637 = vmatpush1.msra.mxu0 %v634
      %638 = vmatprep.subr.mxu0 0.0
      %639 = vmatpush1.msra.mxu0 0.0
      %640 = vmatprep.subr.mxu0 0.0
      %641 = vmatpush1.msra.mxu0 0.0
      %642 = vmatprep.subr.mxu0 0.0
      %643 = vmatpush1.msra.mxu0 0.0
      %644 = vmatprep.subr.mxu0 0.0
      %645 = vmatpush1.msra.mxu0 0.0
      %646 = vmatprep.subr.mxu0 0.0
      %647 = vmatpush1.msra.mxu0 0.0
      %648 = vmatprep.subr.mxu0 0.0
      %649 = vmatpush1.msra.mxu0 0.0
      %650 = vmatprep.subr.mxu0 0.0
      %651 = vmatpush1.msra.mxu0 0.0
      %652 = vmatprep.subr.mxu0 0.0
      %653 = vmatpush1.msra.mxu0 0.0
      %654 = vmatprep.subr.mxu0 0.0
      %655 = vmatpush1.msra.mxu0 0.0
      %656 = vmatprep.subr.mxu0 0.0
      %657 = vmatpush1.msra.mxu0 0.0
      %658 = vmatprep.subr.mxu0 0.0
      %659 = vmatpush1.msra.mxu0 0.0
      %660 = vmatprep.subr.mxu0 0.0
      %661 = vmatpush1.msra.mxu0 0.0
      %662 = vmatprep.subr.mxu0 0.0
      %663 = vmatpush1.msra.mxu0 0.0
      %664 = vmatprep.subr.mxu0 0.0
      %665 = vmatpush1.msra.mxu0 0.0
      %666 = vmatprep.subr.mxu0 0.0
      %667 = vmatpush1.msra.mxu0 0.0
      %668 = vmatprep.subr.mxu0 0.0
      %669 = vmatpush1.msra.mxu0 0.0
      %670 = vmatprep.subr.mxu0 0.0
      %671 = vmatpush1.msra.mxu0 0.0
      %672 = vmatprep.subr.mxu0 0.0
      %673 = vmatpush1.msra.mxu0 0.0
      %674 = vmatprep.subr.mxu0 0.0
      %675 = vmatpush1.msra.mxu0 0.0
      %676 = vmatprep.subr.mxu0 0.0
      %677 = vmatpush1.msra.mxu0 0.0
      %678 = vmatprep.subr.mxu0 0.0
      %679 = vmatpush1.msra.mxu0 0.0
      %680 = vmatprep.subr.mxu0 0.0
      %681 = vmatpush1.msra.mxu0 0.0
      %682 = vmatprep.subr.mxu0 0.0
      %683 = vmatpush1.msra.mxu0 0.0
      %684 = vmatprep.subr.mxu0 0.0
      %685 = vmatpush1.msra.mxu0 0.0
      %686 = vmatprep.subr.mxu0 0.0
      %687 = vmatpush1.msra.mxu0 0.0
      %688 = vmatprep.subr.mxu0 0.0
      %689 = vmatpush1.msra.mxu0 0.0
      %690 = vmatprep.subr.mxu0 0.0
      %691 = vmatpush1.msra.mxu0 0.0
      %692 = vmatprep.subr.mxu0 0.0
      %693 = vmatpush1.msra.mxu0 0.0
      %694 = vmatprep.subr.mxu0 0.0
      %695 = vmatpush1.msra.mxu0 0.0
      %696 = vmatprep.subr.mxu0 0.0
      %697 = vmatpush1.msra.mxu0 0.0
      %698 = vmatprep.subr.mxu0 0.0
      %699 = vmatpush1.msra.mxu0 0.0
      %700 = vmatprep.mubr.f32.mxu0 0.0
      %701 = vmatmul.mubr.f32.gmra.mrb[0].mxu0 %v632
      %v702 = vpop.f32.mrb[0].mxu0
      %v703 = vadd.f32 0.0, %v702
      %v704 = vpop.f32.mrb[0].mxu0
      %705 = vdwg.mxu0
      %v706 = vld [vmem:[%s3 + $0x8] sm:$0xff]
      %v708 = vsel %vm369, %v703, 0
      %710 = vmatprep.subr.mxu0 0.0
      %711 = vmatpush1.msra.mxu0 %v706
      %712 = vmatprep.subr.mxu0 0.0
      %713 = vmatpush1.msra.mxu0 0.0
      %714 = vmatprep.subr.mxu0 0.0
      %715 = vmatpush1.msra.mxu0 0.0
      %716 = vmatprep.subr.mxu0 0.0
      %717 = vmatpush1.msra.mxu0 0.0
      %718 = vmatprep.subr.mxu0 0.0
      %719 = vmatpush1.msra.mxu0 0.0
      %720 = vmatprep.subr.mxu0 0.0
      %721 = vmatpush1.msra.mxu0 0.0
      %722 = vmatprep.subr.mxu0 0.0
      %723 = vmatpush1.msra.mxu0 0.0
      %724 = vmatprep.subr.mxu0 0.0
      %725 = vmatpush1.msra.mxu0 0.0
      %726 = vmatprep.subr.mxu0 0.0
      %727 = vmatpush1.msra.mxu0 0.0
      %728 = vmatprep.subr.mxu0 0.0
      %729 = vmatpush1.msra.mxu0 0.0
      %730 = vmatprep.subr.mxu0 0.0
      %731 = vmatpush1.msra.mxu0 0.0
      %732 = vmatprep.subr.mxu0 0.0
      %733 = vmatpush1.msra.mxu0 0.0
      %734 = vmatprep.subr.mxu0 0.0
      %735 = vmatpush1.msra.mxu0 0.0
      %736 = vmatprep.subr.mxu0 0.0
      %737 = vmatpush1.msra.mxu0 0.0
      %738 = vmatprep.subr.mxu0 0.0
      %739 = vmatpush1.msra.mxu0 0.0
      %740 = vmatprep.subr.mxu0 0.0
      %741 = vmatpush1.msra.mxu0 0.0
      %742 = vmatprep.subr.mxu0 0.0
      %743 = vmatpush1.msra.mxu0 0.0
      %744 = vmatprep.subr.mxu0 0.0
      %745 = vmatpush1.msra.mxu0 0.0
      %746 = vmatprep.subr.mxu0 0.0
      %747 = vmatpush1.msra.mxu0 0.0
      %748 = vmatprep.subr.mxu0 0.0
      %749 = vmatpush1.msra.mxu0 0.0
      %750 = vmatprep.subr.mxu0 0.0
      %751 = vmatpush1.msra.mxu0 0.0
      %752 = vmatprep.subr.mxu0 0.0
      %753 = vmatpush1.msra.mxu0 0.0
      %754 = vmatprep.subr.mxu0 0.0
      %755 = vmatpush1.msra.mxu0 0.0
      %756 = vmatprep.subr.mxu0 0.0
      %757 = vmatpush1.msra.mxu0 0.0
      %758 = vmatprep.subr.mxu0 0.0
      %759 = vmatpush1.msra.mxu0 0.0
      %760 = vmatprep.subr.mxu0 0.0
      %761 = vmatpush1.msra.mxu0 0.0
      %762 = vmatprep.subr.mxu0 0.0
      %763 = vmatpush1.msra.mxu0 0.0
      %764 = vmatprep.subr.mxu0 0.0
      %765 = vmatpush1.msra.mxu0 0.0
      %766 = vmatprep.subr.mxu0 0.0
      %767 = vmatpush1.msra.mxu0 0.0
      %768 = vmatprep.subr.mxu0 0.0
      %769 = vmatpush1.msra.mxu0 0.0
      %770 = vmatprep.subr.mxu0 0.0
      %771 = vmatpush1.msra.mxu0 0.0
      %772 = vmatprep.subr.mxu0 0.0
      %773 = vmatpush1.msra.mxu0 0.0
      %774 = vmatprep.mubr.f32.mxu0 0.0
      %775 = vmatmul.mubr.f32.gmra.mrb[0].mxu0 %v708
      %v776 = vpop.f32.mrb[0].mxu0
      %v777 = vadd.f32 0.0, %v776
      %v778 = vpop.f32.mrb[0].mxu0
      %779 = vdwg.mxu0
      %v781 = vsel %vm369, %v534, 0
      %783 = vmatprep.subr.mxu0 0.0
      %784 = vmatpush1.msra.mxu0 %v537
      %785 = vmatprep.subr.mxu0 0.0
      %786 = vmatpush1.msra.mxu0 0.0
      %787 = vmatprep.subr.mxu0 0.0
      %788 = vmatpush1.msra.mxu0 0.0
      %789 = vmatprep.subr.mxu0 0.0
      %790 = vmatpush1.msra.mxu0 0.0
      %791 = vmatprep.subr.mxu0 0.0
      %792 = vmatpush1.msra.mxu0 0.0
      %793 = vmatprep.subr.mxu0 0.0
      %794 = vmatpush1.msra.mxu0 0.0
      %795 = vmatprep.subr.mxu0 0.0
      %796 = vmatpush1.msra.mxu0 0.0
      %797 = vmatprep.subr.mxu0 0.0
      %798 = vmatpush1.msra.mxu0 0.0
      %799 = vmatprep.subr.mxu0 0.0
      %800 = vmatpush1.msra.mxu0 0.0
      %801 = vmatprep.subr.mxu0 0.0
      %802 = vmatpush1.msra.mxu0 0.0
      %803 = vmatprep.subr.mxu0 0.0
      %804 = vmatpush1.msra.mxu0 0.0
      %805 = vmatprep.subr.mxu0 0.0
      %806 = vmatpush1.msra.mxu0 0.0
      %807 = vmatprep.subr.mxu0 0.0
      %808 = vmatpush1.msra.mxu0 0.0
      %809 = vmatprep.subr.mxu0 0.0
      %810 = vmatpush1.msra.mxu0 0.0
      %811 = vmatprep.subr.mxu0 0.0
      %812 = vmatpush1.msra.mxu0 0.0
      %813 = vmatprep.subr.mxu0 0.0
      %814 = vmatpush1.msra.mxu0 0.0
      %815 = vmatprep.subr.mxu0 0.0
      %816 = vmatpush1.msra.mxu0 0.0
      %817 = vmatprep.subr.mxu0 0.0
      %818 = vmatpush1.msra.mxu0 0.0
      %819 = vmatprep.subr.mxu0 0.0
      %820 = vmatpush1.msra.mxu0 0.0
      %821 = vmatprep.subr.mxu0 0.0
      %822 = vmatpush1.msra.mxu0 0.0
      %823 = vmatprep.subr.mxu0 0.0
      %824 = vmatpush1.msra.mxu0 0.0
      %825 = vmatprep.subr.mxu0 0.0
      %826 = vmatpush1.msra.mxu0 0.0
      %827 = vmatprep.subr.mxu0 0.0
      %828 = vmatpush1.msra.mxu0 0.0
      %829 = vmatprep.subr.mxu0 0.0
      %830 = vmatpush1.msra.mxu0 0.0
      %831 = vmatprep.subr.mxu0 0.0
      %832 = vmatpush1.msra.mxu0 0.0
      %833 = vmatprep.subr.mxu0 0.0
      %834 = vmatpush1.msra.mxu0 0.0
      %835 = vmatprep.subr.mxu0 0.0
      %836 = vmatpush1.msra.mxu0 0.0
      %837 = vmatprep.subr.mxu0 0.0
      %838 = vmatpush1.msra.mxu0 0.0
      %839 = vmatprep.subr.mxu0 0.0
      %840 = vmatpush1.msra.mxu0 0.0
      %841 = vmatprep.subr.mxu0 0.0
      %842 = vmatpush1.msra.mxu0 0.0
      %843 = vmatprep.subr.mxu0 0.0
      %844 = vmatpush1.msra.mxu0 0.0
      %845 = vmatprep.subr.mxu0 0.0
      %846 = vmatpush1.msra.mxu0 0.0
      %847 = vmatprep.mubr.f32.mxu0 0.0
      %848 = vmatmul.mubr.f32.gmra.mrb[0].mxu0 %v781
      %v849 = vpop.f32.mrb[0].mxu0
      %v850 = vadd.f32 %v777, %v849
      %v851 = vpop.f32.mrb[0].mxu0
      %852 = vdwg.mxu0
      %853 = vrot.lane.b32.xlu0 %v357, 112
      %v854 = vpop.permute.xlu0 %853
      %855 = vrot.lane.b32.xlu0 %v357, 80
      %v856 = vpop.permute.xlu0 %855
      %v857 = vsel %vm369, %v854, 0
      %v859 = vsel %vm369, %v856, 0
      %861 = vmatprep.subr.mxu0 0.0
      %862 = vmatpush1.xpose.msra.mxu0 %v859
      %863 = vmatprep.subr.mxu0 0.0
      %864 = vmatpush1.xpose.msra.mxu0 0.0
      %865 = vmatprep.subr.mxu0 0.0
      %866 = vmatpush1.xpose.msra.mxu0 0.0
      %867 = vmatprep.subr.mxu0 0.0
      %868 = vmatpush1.xpose.msra.mxu0 0.0
      %869 = vmatprep.subr.mxu0 0.0
      %870 = vmatpush1.xpose.msra.mxu0 0.0
      %871 = vmatprep.subr.mxu0 0.0
      %872 = vmatpush1.xpose.msra.mxu0 0.0
      %873 = vmatprep.subr.mxu0 0.0
      %874 = vmatpush1.xpose.msra.mxu0 0.0
      %875 = vmatprep.subr.mxu0 0.0
      %876 = vmatpush1.xpose.msra.mxu0 0.0
      %877 = vmatprep.subr.mxu0 0.0
      %878 = vmatpush1.xpose.msra.mxu0 0.0
      %879 = vmatprep.subr.mxu0 0.0
      %880 = vmatpush1.xpose.msra.mxu0 0.0
      %881 = vmatprep.subr.mxu0 0.0
      %882 = vmatpush1.xpose.msra.mxu0 0.0
      %883 = vmatprep.subr.mxu0 0.0
      %884 = vmatpush1.xpose.msra.mxu0 0.0
      %885 = vmatprep.subr.mxu0 0.0
      %886 = vmatpush1.xpose.msra.mxu0 0.0
      %887 = vmatprep.subr.mxu0 0.0
      %888 = vmatpush1.xpose.msra.mxu0 0.0
      %889 = vmatprep.subr.mxu0 0.0
      %890 = vmatpush1.xpose.msra.mxu0 0.0
      %891 = vmatprep.subr.mxu0 0.0
      %892 = vmatpush1.xpose.msra.mxu0 0.0
      %893 = vmatprep.subr.mxu0 0.0
      %894 = vmatpush1.xpose.msra.mxu0 0.0
      %895 = vmatprep.subr.mxu0 0.0
      %896 = vmatpush1.xpose.msra.mxu0 0.0
      %897 = vmatprep.subr.mxu0 0.0
      %898 = vmatpush1.xpose.msra.mxu0 0.0
      %899 = vmatprep.subr.mxu0 0.0
      %900 = vmatpush1.xpose.msra.mxu0 0.0
      %901 = vmatprep.subr.mxu0 0.0
      %902 = vmatpush1.xpose.msra.mxu0 0.0
      %903 = vmatprep.subr.mxu0 0.0
      %904 = vmatpush1.xpose.msra.mxu0 0.0
      %905 = vmatprep.subr.mxu0 0.0
      %906 = vmatpush1.xpose.msra.mxu0 0.0
      %907 = vmatprep.subr.mxu0 0.0
      %908 = vmatpush1.xpose.msra.mxu0 0.0
      %909 = vmatprep.subr.mxu0 0.0
      %910 = vmatpush1.xpose.msra.mxu0 0.0
      %911 = vmatprep.subr.mxu0 0.0
      %912 = vmatpush1.xpose.msra.mxu0 0.0
      %913 = vmatprep.subr.mxu0 0.0
      %914 = vmatpush1.xpose.msra.mxu0 0.0
      %915 = vmatprep.subr.mxu0 0.0
      %916 = vmatpush1.xpose.msra.mxu0 0.0
      %917 = vmatprep.subr.mxu0 0.0
      %918 = vmatpush1.xpose.msra.mxu0 0.0
      %919 = vmatprep.subr.mxu0 0.0
      %920 = vmatpush1.xpose.msra.mxu0 0.0
      %921 = vmatprep.subr.mxu0 0.0
      %922 = vmatpush1.xpose.msra.mxu0 0.0
      %923 = vmatprep.subr.mxu0 0.0
      %924 = vmatpush1.xpose.msra.mxu0 0.0
      %925 = vmatprep.mubr.f32.mxu0 0.0
      %926 = vmatmul.mubr.f32.gmra.mrb[0].mxu0 %v857
      %v927 = vpop.f32.mrb[0].mxu0
      %v928 = vadd.f32 0.0, %v927
      %v929 = vpop.f32.mrb[0].mxu0
      %930 = vdwg.mxu0
      %v931 = vmul.f32 %v928, 0.35355338
      %v932 = vadd.f32 %v931, %v365
      %v933 = vsel %vm446, %v932, -inf
      %934 = vmax.xlane.f32.xlu0 %v933
      %v935 = vpop.xlane.xlu0 %934
      %v936 = vsub.f32 %v932, %v935
      %v937 = vmul.f32 %v936, 1.442695
      %v938 = vpow.pop %v937
      %v939 = vsel %vm446, %v938, 0.0
      %940 = vadd.xlane.f32.xlu0 %v939
      %v941 = vpop.xlane.xlu0 %940
      %v942 = vrcp.pop %v941
      %v943 = vmul.f32 %v938, %v942
      %944 = vrot.lane.b32.xlu0 %v357, 48
      %v945 = vpop.permute.xlu0 %944
      %v947 = vsel %vm460, %v943, 0
      %v949 = vsel %vm464, %v945, 0
      %951 = vmatprep.subr.mxu0 0.0
      %952 = vmatpush1.msra.mxu0 %v949
      %953 = vmatprep.subr.mxu0 0.0
      %954 = vmatpush1.msra.mxu0 0.0
      %955 = vmatprep.subr.mxu0 0.0
      %956 = vmatpush1.msra.mxu0 0.0
      %957 = vmatprep.subr.mxu0 0.0
      %958 = vmatpush1.msra.mxu0 0.0
      %959 = vmatprep.subr.mxu0 0.0
      %960 = vmatpush1.msra.mxu0 0.0
      %961 = vmatprep.subr.mxu0 0.0
      %962 = vmatpush1.msra.mxu0 0.0
      %963 = vmatprep.subr.mxu0 0.0
      %964 = vmatpush1.msra.mxu0 0.0
      %965 = vmatprep.subr.mxu0 0.0
      %966 = vmatpush1.msra.mxu0 0.0
      %967 = vmatprep.subr.mxu0 0.0
      %968 = vmatpush1.msra.mxu0 0.0
      %969 = vmatprep.subr.mxu0 0.0
      %970 = vmatpush1.msra.mxu0 0.0
      %971 = vmatprep.subr.mxu0 0.0
      %972 = vmatpush1.msra.mxu0 0.0
      %973 = vmatprep.subr.mxu0 0.0
      %974 = vmatpush1.msra.mxu0 0.0
      %975 = vmatprep.subr.mxu0 0.0
      %976 = vmatpush1.msra.mxu0 0.0
      %977 = vmatprep.subr.mxu0 0.0
      %978 = vmatpush1.msra.mxu0 0.0
      %979 = vmatprep.subr.mxu0 0.0
      %980 = vmatpush1.msra.mxu0 0.0
      %981 = vmatprep.subr.mxu0 0.0
      %982 = vmatpush1.msra.mxu0 0.0
      %983 = vmatprep.subr.mxu0 0.0
      %984 = vmatpush1.msra.mxu0 0.0
      %985 = vmatprep.subr.mxu0 0.0
      %986 = vmatpush1.msra.mxu0 0.0
      %987 = vmatprep.subr.mxu0 0.0
      %988 = vmatpush1.msra.mxu0 0.0
      %989 = vmatprep.subr.mxu0 0.0
      %990 = vmatpush1.msra.mxu0 0.0
      %991 = vmatprep.subr.mxu0 0.0
      %992 = vmatpush1.msra.mxu0 0.0
      %993 = vmatprep.subr.mxu0 0.0
      %994 = vmatpush1.msra.mxu0 0.0
      %995 = vmatprep.subr.mxu0 0.0
      %996 = vmatpush1.msra.mxu0 0.0
      %997 = vmatprep.subr.mxu0 0.0
      %998 = vmatpush1.msra.mxu0 0.0
      %999 = vmatprep.subr.mxu0 0.0
      %1000 = vmatpush1.msra.mxu0 0.0
      %1001 = vmatprep.subr.mxu0 0.0
      %1002 = vmatpush1.msra.mxu0 0.0
      %1003 = vmatprep.subr.mxu0 0.0
      %1004 = vmatpush1.msra.mxu0 0.0
      %1005 = vmatprep.subr.mxu0 0.0
      %1006 = vmatpush1.msra.mxu0 0.0
      %1007 = vmatprep.subr.mxu0 0.0
      %1008 = vmatpush1.msra.mxu0 0.0
      %1009 = vmatprep.subr.mxu0 0.0
      %1010 = vmatpush1.msra.mxu0 0.0
      %1011 = vmatprep.subr.mxu0 0.0
      %1012 = vmatpush1.msra.mxu0 0.0
      %1013 = vmatprep.subr.mxu0 0.0
      %1014 = vmatpush1.msra.mxu0 0.0
      %1015 = vmatprep.mubr.f32.mxu0 0.0
      %1016 = vmatmul.mubr.f32.gmra.mrb[0].mxu0 %v947
      %v1017 = vpop.f32.mrb[0].mxu0
      %v1018 = vadd.f32 0.0, %v1017
      %v1019 = vpop.f32.mrb[0].mxu0
      %1020 = vdwg.mxu0
      %v1021 = vld [vmem:[%s3 + $0x10] sm:$0xff]
      %v1023 = vsel %vm369, %v1018, 0
      %1025 = vmatprep.subr.mxu0 0.0
      %1026 = vmatpush1.msra.mxu0 %v1021
      %1027 = vmatprep.subr.mxu0 0.0
      %1028 = vmatpush1.msra.mxu0 0.0
      %1029 = vmatprep.subr.mxu0 0.0
      %1030 = vmatpush1.msra.mxu0 0.0
      %1031 = vmatprep.subr.mxu0 0.0
      %1032 = vmatpush1.msra.mxu0 0.0
      %1033 = vmatprep.subr.mxu0 0.0
      %1034 = vmatpush1.msra.mxu0 0.0
      %1035 = vmatprep.subr.mxu0 0.0
      %1036 = vmatpush1.msra.mxu0 0.0
      %1037 = vmatprep.subr.mxu0 0.0
      %1038 = vmatpush1.msra.mxu0 0.0
      %1039 = vmatprep.subr.mxu0 0.0
      %1040 = vmatpush1.msra.mxu0 0.0
      %1041 = vmatprep.subr.mxu0 0.0
      %1042 = vmatpush1.msra.mxu0 0.0
      %1043 = vmatprep.subr.mxu0 0.0
      %1044 = vmatpush1.msra.mxu0 0.0
      %1045 = vmatprep.subr.mxu0 0.0
      %1046 = vmatpush1.msra.mxu0 0.0
      %1047 = vmatprep.subr.mxu0 0.0
      %1048 = vmatpush1.msra.mxu0 0.0
      %1049 = vmatprep.subr.mxu0 0.0
      %1050 = vmatpush1.msra.mxu0 0.0
      %1051 = vmatprep.subr.mxu0 0.0
      %1052 = vmatpush1.msra.mxu0 0.0
      %1053 = vmatprep.subr.mxu0 0.0
      %1054 = vmatpush1.msra.mxu0 0.0
      %1055 = vmatprep.subr.mxu0 0.0
      %1056 = vmatpush1.msra.mxu0 0.0
      %1057 = vmatprep.subr.mxu0 0.0
      %1058 = vmatpush1.msra.mxu0 0.0
      %1059 = vmatprep.subr.mxu0 0.0
      %1060 = vmatpush1.msra.mxu0 0.0
      %1061 = vmatprep.subr.mxu0 0.0
      %1062 = vmatpush1.msra.mxu0 0.0
      %1063 = vmatprep.subr.mxu0 0.0
      %1064 = vmatpush1.msra.mxu0 0.0
      %1065 = vmatprep.subr.mxu0 0.0
      %1066 = vmatpush1.msra.mxu0 0.0
      %1067 = vmatprep.subr.mxu0 0.0
      %1068 = vmatpush1.msra.mxu0 0.0
      %1069 = vmatprep.subr.mxu0 0.0
      %1070 = vmatpush1.msra.mxu0 0.0
      %1071 = vmatprep.subr.mxu0 0.0
      %1072 = vmatpush1.msra.mxu0 0.0
      %1073 = vmatprep.subr.mxu0 0.0
      %1074 = vmatpush1.msra.mxu0 0.0
      %1075 = vmatprep.subr.mxu0 0.0
      %1076 = vmatpush1.msra.mxu0 0.0
      %1077 = vmatprep.subr.mxu0 0.0
      %1078 = vmatpush1.msra.mxu0 0.0
      %1079 = vmatprep.subr.mxu0 0.0
      %1080 = vmatpush1.msra.mxu0 0.0
      %1081 = vmatprep.subr.mxu0 0.0
      %1082 = vmatpush1.msra.mxu0 0.0
      %1083 = vmatprep.subr.mxu0 0.0
      %1084 = vmatpush1.msra.mxu0 0.0
      %1085 = vmatprep.subr.mxu0 0.0
      %1086 = vmatpush1.msra.mxu0 0.0
      %1087 = vmatprep.subr.mxu0 0.0
      %1088 = vmatpush1.msra.mxu0 0.0
      %1089 = vmatprep.mubr.f32.mxu0 0.0
      %1090 = vmatmul.mubr.f32.gmra.mrb[0].mxu0 %v1023
      %v1091 = vpop.f32.mrb[0].mxu0
      %v1092 = vadd.f32 0.0, %v1091
      %v1093 = vpop.f32.mrb[0].mxu0
      %1094 = vdwg.mxu0
      %v1095 = vadd.f32 %v850, %v1092
      %1096 = vrot.lane.b32.xlu0 %v357, 104
      %v1097 = vpop.permute.xlu0 %1096
      %1098 = vrot.lane.b32.xlu0 %v357, 72
      %v1099 = vpop.permute.xlu0 %1098
      %v1100 = vsel %vm369, %v1097, 0
      %v1102 = vsel %vm369, %v1099, 0
      %1104 = vmatprep.subr.mxu0 0.0
      %1105 = vmatpush1.xpose.msra.mxu0 %v1102
      %1106 = vmatprep.subr.mxu0 0.0
      %1107 = vmatpush1.xpose.msra.mxu0 0.0
      %1108 = vmatprep.subr.mxu0 0.0
      %1109 = vmatpush1.xpose.msra.mxu0 0.0
      %1110 = vmatprep.subr.mxu0 0.0
      %1111 = vmatpush1.xpose.msra.mxu0 0.0
      %1112 = vmatprep.subr.mxu0 0.0
      %1113 = vmatpush1.xpose.msra.mxu0 0.0
      %1114 = vmatprep.subr.mxu0 0.0
      %1115 = vmatpush1.xpose.msra.mxu0 0.0
      %1116 = vmatprep.subr.mxu0 0.0
      %1117 = vmatpush1.xpose.msra.mxu0 0.0
      %1118 = vmatprep.subr.mxu0 0.0
      %1119 = vmatpush1.xpose.msra.mxu0 0.0
      %1120 = vmatprep.subr.mxu0 0.0
      %1121 = vmatpush1.xpose.msra.mxu0 0.0
      %1122 = vmatprep.subr.mxu0 0.0
      %1123 = vmatpush1.xpose.msra.mxu0 0.0
      %1124 = vmatprep.subr.mxu0 0.0
      %1125 = vmatpush1.xpose.msra.mxu0 0.0
      %1126 = vmatprep.subr.mxu0 0.0
      %1127 = vmatpush1.xpose.msra.mxu0 0.0
      %1128 = vmatprep.subr.mxu0 0.0
      %1129 = vmatpush1.xpose.msra.mxu0 0.0
      %1130 = vmatprep.subr.mxu0 0.0
      %1131 = vmatpush1.xpose.msra.mxu0 0.0
      %1132 = vmatprep.subr.mxu0 0.0
      %1133 = vmatpush1.xpose.msra.mxu0 0.0
      %1134 = vmatprep.subr.mxu0 0.0
      %1135 = vmatpush1.xpose.msra.mxu0 0.0
      %1136 = vmatprep.subr.mxu0 0.0
      %1137 = vmatpush1.xpose.msra.mxu0 0.0
      %1138 = vmatprep.subr.mxu0 0.0
      %1139 = vmatpush1.xpose.msra.mxu0 0.0
      %1140 = vmatprep.subr.mxu0 0.0
      %1141 = vmatpush1.xpose.msra.mxu0 0.0
      %1142 = vmatprep.subr.mxu0 0.0
      %1143 = vmatpush1.xpose.msra.mxu0 0.0
      %1144 = vmatprep.subr.mxu0 0.0
      %1145 = vmatpush1.xpose.msra.mxu0 0.0
      %1146 = vmatprep.subr.mxu0 0.0
      %1147 = vmatpush1.xpose.msra.mxu0 0.0
      %1148 = vmatprep.subr.mxu0 0.0
      %1149 = vmatpush1.xpose.msra.mxu0 0.0
      %1150 = vmatprep.subr.mxu0 0.0
      %1151 = vmatpush1.xpose.msra.mxu0 0.0
      %1152 = vmatprep.subr.mxu0 0.0
      %1153 = vmatpush1.xpose.msra.mxu0 0.0
      %1154 = vmatprep.subr.mxu0 0.0
      %1155 = vmatpush1.xpose.msra.mxu0 0.0
      %1156 = vmatprep.subr.mxu0 0.0
      %1157 = vmatpush1.xpose.msra.mxu0 0.0
      %1158 = vmatprep.subr.mxu0 0.0
      %1159 = vmatpush1.xpose.msra.mxu0 0.0
      %1160 = vmatprep.subr.mxu0 0.0
      %1161 = vmatpush1.xpose.msra.mxu0 0.0
      %1162 = vmatprep.subr.mxu0 0.0
      %1163 = vmatpush1.xpose.msra.mxu0 0.0
      %1164 = vmatprep.subr.mxu0 0.0
      %1165 = vmatpush1.xpose.msra.mxu0 0.0
      %1166 = vmatprep.subr.mxu0 0.0
      %1167 = vmatpush1.xpose.msra.mxu0 0.0
      %1168 = vmatprep.mubr.f32.mxu0 0.0
      %1169 = vmatmul.mubr.f32.gmra.mrb[0].mxu0 %v1100
      %v1170 = vpop.f32.mrb[0].mxu0
      %v1171 = vadd.f32 0.0, %v1170
      %v1172 = vpop.f32.mrb[0].mxu0
      %1173 = vdwg.mxu0
      %v1174 = vmul.f32 %v1171, 0.35355338
      %v1175 = vadd.f32 %v1174, %v365
      %v1176 = vsel %vm446, %v1175, -inf
      %1177 = vmax.xlane.f32.xlu0 %v1176
      %v1178 = vpop.xlane.xlu0 %1177
      %v1179 = vsub.f32 %v1175, %v1178
      %v1180 = vmul.f32 %v1179, 1.442695
      %v1181 = vpow.pop %v1180
      %v1182 = vsel %vm446, %v1181, 0.0
      %1183 = vadd.xlane.f32.xlu0 %v1182
      %v1184 = vpop.xlane.xlu0 %1183
      %v1185 = vrcp.pop %v1184
      %v1186 = vmul.f32 %v1181, %v1185
      %1187 = vrot.lane.b32.xlu0 %v357, 40
      %v1188 = vpop.permute.xlu0 %1187
      %v1190 = vsel %vm460, %v1186, 0
      %v1192 = vsel %vm464, %v1188, 0
      %1194 = vmatprep.subr.mxu0 0.0
      %1195 = vmatpush1.msra.mxu0 %v1192
      %1196 = vmatprep.subr.mxu0 0.0
      %1197 = vmatpush1.msra.mxu0 0.0
      %1198 = vmatprep.subr.mxu0 0.0
      %1199 = vmatpush1.msra.mxu0 0.0
      %1200 = vmatprep.subr.mxu0 0.0
      %1201 = vmatpush1.msra.mxu0 0.0
      %1202 = vmatprep.subr.mxu0 0.0
      %1203 = vmatpush1.msra.mxu0 0.0
      %1204 = vmatprep.subr.mxu0 0.0
      %1205 = vmatpush1.msra.mxu0 0.0
      %1206 = vmatprep.subr.mxu0 0.0
      %1207 = vmatpush1.msra.mxu0 0.0
      %1208 = vmatprep.subr.mxu0 0.0
      %1209 = vmatpush1.msra.mxu0 0.0
      %1210 = vmatprep.subr.mxu0 0.0
      %1211 = vmatpush1.msra.mxu0 0.0
      %1212 = vmatprep.subr.mxu0 0.0
      %1213 = vmatpush1.msra.mxu0 0.0
      %1214 = vmatprep.subr.mxu0 0.0
      %1215 = vmatpush1.msra.mxu0 0.0
      %1216 = vmatprep.subr.mxu0 0.0
      %1217 = vmatpush1.msra.mxu0 0.0
      %1218 = vmatprep.subr.mxu0 0.0
      %1219 = vmatpush1.msra.mxu0 0.0
      %1220 = vmatprep.subr.mxu0 0.0
      %1221 = vmatpush1.msra.mxu0 0.0
      %1222 = vmatprep.subr.mxu0 0.0
      %1223 = vmatpush1.msra.mxu0 0.0
      %1224 = vmatprep.subr.mxu0 0.0
      %1225 = vmatpush1.msra.mxu0 0.0
      %1226 = vmatprep.subr.mxu0 0.0
      %1227 = vmatpush1.msra.mxu0 0.0
      %1228 = vmatprep.subr.mxu0 0.0
      %1229 = vmatpush1.msra.mxu0 0.0
      %1230 = vmatprep.subr.mxu0 0.0
      %1231 = vmatpush1.msra.mxu0 0.0
      %1232 = vmatprep.subr.mxu0 0.0
      %1233 = vmatpush1.msra.mxu0 0.0
      %1234 = vmatprep.subr.mxu0 0.0
      %1235 = vmatpush1.msra.mxu0 0.0
      %1236 = vmatprep.subr.mxu0 0.0
      %1237 = vmatpush1.msra.mxu0 0.0
      %1238 = vmatprep.subr.mxu0 0.0
      %1239 = vmatpush1.msra.mxu0 0.0
      %1240 = vmatprep.subr.mxu0 0.0
      %1241 = vmatpush1.msra.mxu0 0.0
      %1242 = vmatprep.subr.mxu0 0.0
      %1243 = vmatpush1.msra.mxu0 0.0
      %1244 = vmatprep.subr.mxu0 0.0
      %1245 = vmatpush1.msra.mxu0 0.0
      %1246 = vmatprep.subr.mxu0 0.0
      %1247 = vmatpush1.msra.mxu0 0.0
      %1248 = vmatprep.subr.mxu0 0.0
      %1249 = vmatpush1.msra.mxu0 0.0
      %1250 = vmatprep.subr.mxu0 0.0
      %1251 = vmatpush1.msra.mxu0 0.0
      %1252 = vmatprep.subr.mxu0 0.0
      %1253 = vmatpush1.msra.mxu0 0.0
      %1254 = vmatprep.subr.mxu0 0.0
      %1255 = vmatpush1.msra.mxu0 0.0
      %1256 = vmatprep.subr.mxu0 0.0
      %1257 = vmatpush1.msra.mxu0 0.0
      %1258 = vmatprep.mubr.f32.mxu0 0.0
      %1259 = vmatmul.mubr.f32.gmra.mrb[0].mxu0 %v1190
      %v1260 = vpop.f32.mrb[0].mxu0
      %v1261 = vadd.f32 0.0, %v1260
      %v1262 = vpop.f32.mrb[0].mxu0
      %1263 = vdwg.mxu0
      %v1264 = vld [vmem:[%s3 + $0x18] sm:$0xff]
      %v1266 = vsel %vm369, %v1261, 0
      %1268 = vmatprep.subr.mxu0 0.0
      %1269 = vmatpush1.msra.mxu0 %v1264
      %1270 = vmatprep.subr.mxu0 0.0
      %1271 = vmatpush1.msra.mxu0 0.0
      %1272 = vmatprep.subr.mxu0 0.0
      %1273 = vmatpush1.msra.mxu0 0.0
      %1274 = vmatprep.subr.mxu0 0.0
      %1275 = vmatpush1.msra.mxu0 0.0
      %1276 = vmatprep.subr.mxu0 0.0
      %1277 = vmatpush1.msra.mxu0 0.0
      %1278 = vmatprep.subr.mxu0 0.0
      %1279 = vmatpush1.msra.mxu0 0.0
      %1280 = vmatprep.subr.mxu0 0.0
      %1281 = vmatpush1.msra.mxu0 0.0
      %1282 = vmatprep.subr.mxu0 0.0
      %1283 = vmatpush1.msra.mxu0 0.0
      %1284 = vmatprep.subr.mxu0 0.0
      %1285 = vmatpush1.msra.mxu0 0.0
      %1286 = vmatprep.subr.mxu0 0.0
      %1287 = vmatpush1.msra.mxu0 0.0
      %1288 = vmatprep.subr.mxu0 0.0
      %1289 = vmatpush1.msra.mxu0 0.0
      %1290 = vmatprep.subr.mxu0 0.0
      %1291 = vmatpush1.msra.mxu0 0.0
      %1292 = vmatprep.subr.mxu0 0.0
      %1293 = vmatpush1.msra.mxu0 0.0
      %1294 = vmatprep.subr.mxu0 0.0
      %1295 = vmatpush1.msra.mxu0 0.0
      %1296 = vmatprep.subr.mxu0 0.0
      %1297 = vmatpush1.msra.mxu0 0.0
      %1298 = vmatprep.subr.mxu0 0.0
      %1299 = vmatpush1.msra.mxu0 0.0
      %1300 = vmatprep.subr.mxu0 0.0
      %1301 = vmatpush1.msra.mxu0 0.0
      %1302 = vmatprep.subr.mxu0 0.0
      %1303 = vmatpush1.msra.mxu0 0.0
      %1304 = vmatprep.subr.mxu0 0.0
      %1305 = vmatpush1.msra.mxu0 0.0
      %1306 = vmatprep.subr.mxu0 0.0
      %1307 = vmatpush1.msra.mxu0 0.0
      %1308 = vmatprep.subr.mxu0 0.0
      %1309 = vmatpush1.msra.mxu0 0.0
      %1310 = vmatprep.subr.mxu0 0.0
      %1311 = vmatpush1.msra.mxu0 0.0
      %1312 = vmatprep.subr.mxu0 0.0
      %1313 = vmatpush1.msra.mxu0 0.0
      %1314 = vmatprep.subr.mxu0 0.0
      %1315 = vmatpush1.msra.mxu0 0.0
      %1316 = vmatprep.subr.mxu0 0.0
      %1317 = vmatpush1.msra.mxu0 0.0
      %1318 = vmatprep.subr.mxu0 0.0
      %1319 = vmatpush1.msra.mxu0 0.0
      %1320 = vmatprep.subr.mxu0 0.0
      %1321 = vmatpush1.msra.mxu0 0.0
      %1322 = vmatprep.subr.mxu0 0.0
      %1323 = vmatpush1.msra.mxu0 0.0
      %1324 = vmatprep.subr.mxu0 0.0
      %1325 = vmatpush1.msra.mxu0 0.0
      %1326 = vmatprep.subr.mxu0 0.0
      %1327 = vmatpush1.msra.mxu0 0.0
      %1328 = vmatprep.subr.mxu0 0.0
      %1329 = vmatpush1.msra.mxu0 0.0
      %1330 = vmatprep.subr.mxu0 0.0
      %1331 = vmatpush1.msra.mxu0 0.0
      %1332 = vmatprep.mubr.f32.mxu0 0.0
      %1333 = vmatmul.mubr.f32.gmra.mrb[0].mxu0 %v1266
      %v1334 = vpop.f32.mrb[0].mxu0
      %v1335 = vadd.f32 0.0, %v1334
      %v1336 = vpop.f32.mrb[0].mxu0
      %1337 = vdwg.mxu0
      %v1338 = vadd.f32 %v1095, %v1335
      %v1339 = vadd.f32 %v274, %v1338
      %v1340 = vld [vmem:[%s4] sm:$0x1]
      %v1342 = vlaneseq
      %v1343 = vshrl.u32 %v1342, 7
      %v1344 = vsub.s32 0, %v1343
      %v1345 = vrot.slane %v1340, %v1344
      %v1347 = vadd.f32 %v1339, %v1345
      %v1348 = vld [vmem:[%s5] sm:$0x1]
      %v1349 = vld [vmem:[%s6] sm:$0x1]
      %vm1350 = vcmask 259072
      %v1351 = vsel %vm1350, %v1347, 0.0
      %1352 = vadd.xlane.f32.xlu0 %v1351
      %v1353 = vpop.xlane.xlu0 %1352
      %v1354 = vrcp.pop 32.0
      %v1355 = vmul.f32 %v1353, %v1354
      %v1356 = vsub.f32 %v1347, %v1355
      %v1357 = vmul.f32 %v1356, %v1356
      %v1358 = vsel %vm1350, %v1357, 0.0
      %1359 = vadd.xlane.f32.xlu0 %v1358
      %v1360 = vpop.xlane.xlu0 %1359
      %v1361 = vmul.f32 %v1360, %v1354
      %v1362 = vadd.f32 %v1361, 1e-05
      %v1363 = vrsqrt.pop %v1362
      %v1364 = vmul.f32 %v1356, %v1363
      %v1366 = vlaneseq
      %v1367 = vshrl.u32 %v1366, 7
      %v1368 = vsub.s32 0, %v1367
      %v1369 = vrot.slane %v1348, %v1368
      %v1371 = vmul.f32 %v1364, %v1369
      %v1373 = vlaneseq
      %v1374 = vshrl.u32 %v1373, 7
      %v1375 = vsub.s32 0, %v1374
      %v1376 = vrot.slane %v1349, %v1375
      %v1378 = vadd.f32 %v1371, %v1376
      %1379 = vst.msk [vmem:[%s273] sm:$0x3f] %vm1350, %v1378
      %p1380 = scmp.lt.s32.totalorder %s18, 1
      %s1381 = scalar_select %p1380, %s18, 1
      %s1382 = smul.addr %s1381, 8
      %s1383 = scalar_lea.vmem %s7, %s1382
      // Predicated region
      $region49: #{closed_call.43} parent=47 // pred_check
        %p1384 = pneg %p188
      $region50: #{closed_call.43} parent=47 // pred_check_branch
        %1386 = sbr.rel (%p1384) target = $region52
      $region51: #{closed_call.43} parent=47 // pred_region
        _
      $region52: #{closed_call.43} parent=47 // pred_fallthru
        _
    $region48: #{closed_call.43} parent=5 // pred_fallthru
      _
    %p1387 = scmp.le.s32.totalorder 2, %s13
    // Predicated region
    $region53: #{closed_call.43} parent=5 // pred_check
      %p1388 = pneg %p1387
    $region54: #{closed_call.43} parent=5 // pred_check_branch
      %1390 = sbr.rel (%p1388) target = $region56
    $region55: #{closed_call.43} parent=5 // pred_region
      %s1391 = ssub.s32 %s13, 2
      // Predicated region
      $region57: #{closed_call.43} parent=55 // pred_check
        %p1392 = pneg %p194
      $region58: #{closed_call.43} parent=55 // pred_check_branch
        %1394 = sbr.rel (%p1392) target = $region60
      $region59: #{closed_call.43} parent=55 // pred_region
        %p1395 = scmp.lt.s32.totalorder %s19, 1
        %s1396 = scalar_select %p1395, %s19, 1
        %s1397 = smul.addr %s1396, 8
        %s1398 = scalar_lea.vmem %s7, %s1397
      $region60: #{closed_call.43} parent=55 // pred_fallthru
        _
    $region56: #{closed_call.43} parent=5 // pred_fallthru
      _
  $region6: #{closed_call.43} parent=0 // loop_footer
    %s17 = sadd.s32 1, %s13
  $region7: #{closed_call.43} parent=0 // loop_footer_branch
    %12 = sbr.rel target = $region3
  $region8: #{closed_call.43} parent=0 // loop_exit
    _

// kernel: closed_call.45
$region0: #{closed_call.45}
  #allocation0 [shape = 'u32[]', space=smem, size = 0x4, offset = 0x4, fixed_abs, tag = 'smem constant byte address 0x4 - core index']
  #allocation1 [shape = 'u32[144,128]{1,0:T(1,128)}', space=vmem, size = 0x12000, scoped, tag = 'internal scratch']
  %s0 = inlined_call_operand.vmem [shape: f32[2,6,32], index: 0, kind: input, shape index: {}]
  %s1 = inlined_call_operand.vmem [shape: f32[32,64], index: 1, kind: input, shape index: {}]
  %s2 = inlined_call_operand.vmem [shape: f32[1,64], index: 2, kind: input, shape index: {}]
  %s3 = inlined_call_operand.vmem [shape: f32[64,32], index: 3, kind: input, shape index: {}]
  %s4 = inlined_call_operand.vmem [shape: f32[1,32], index: 4, kind: input, shape index: {}]
  %s5 = inlined_call_operand.vmem [shape: f32[1,32], index: 5, kind: input, shape index: {}]
  %s6 = inlined_call_operand.vmem [shape: f32[1,32], index: 6, kind: input, shape index: {}]
  %s7 = inlined_call_operand.vmem [shape: f32[2,6,32], index: 7, kind: output, shape index: {}]
  %s8 = sld [smem:[#allocation0]]
  $region61: #{closed_call.45} parent=0
    _
  %s10 = ssub.s32 1, %s8
  %s11 = scalar_select 0, %s10, %s8
  loop: start=0, step=1, limit=4
  $region2: #{closed_call.45} parent=0 // loop_pre_header
    _
  $region3: #{closed_call.45} parent=0 // loop_header
    %s13 = sphi 0, %s17
    %p14 = scmp.ge.s32.totalorder %s13, 4
    %s23 = sphi 0, %s25
    %s26 = sphi 0, %s23
    %s27 = sphi 0, %s26
    %s43 = sphi 0, %s27
    %s47 = sphi 0, %s47
    %s49 = sphi 0, %s47
    %s50 = sphi 0, %s49
    %s64 = sphi 0, %s50
    %s68 = sphi 0, %s68
    %s70 = sphi 0, %s68
    %s71 = sphi 0, %s70
    %s85 = sphi 0, %s71
    %s89 = sphi 0, %s89
    %s91 = sphi 0, %s89
    %s92 = sphi 0, %s91
    %s106 = sphi 0, %s92
    %s110 = sphi 0, %s110
    %s112 = sphi 0, %s110
    %s113 = sphi 0, %s112
    %s127 = sphi 0, %s113
    %s131 = sphi 0, %s131
    %s133 = sphi 0, %s131
    %s134 = sphi 0, %s133
    %s148 = sphi 0, %s134
    %s152 = sphi 0, %s152
    %s154 = sphi 0, %s152
    %s155 = sphi 0, %s154
    %s169 = sphi 0, %s155
    %s175 = sphi 0, %s177
    %s178 = sphi 0, %s175
    %s179 = sphi 0, %s178
    %s195 = sphi 0, %s179
  $region4: #{closed_call.45} parent=0 // loop_header_branch
    %16 = sbr.rel (%p14) target = $region8
  $region5: #{closed_call.45} parent=0 // loop_body
    %s18 = ssub.s32 %s13, 1
    %s19 = ssub.s32 %s13, 2
    %s20 = sadd.s32 %s13, 1
    %s21 = ssub.s32 %s13, %s20
    %p22 = scmp.eq.s32.totalorder %s21, 0
    %s24 = sadd.s32 %s23, 1
    %s25 = scalar_select %p22, %s23, %s24
    %p28 = pneg %p22
    %p29 = scmp.eq.s32.totalorder %s13, 1
    %p30 = por %p28, %p29
    %p31 = scmp.ne.s32.totalorder %s23, %s26
    %p32 = scmp.eq.s32.totalorder %s13, 0
    %p33 = por %p31, %p32
    %p34 = scmp.ne.s32.totalorder %s23, %s26
    %p35 = scmp.eq.s32.totalorder %s18, 1
    %p36 = por %p34, %p35
    %p37 = scmp.ne.s32.totalorder %s26, %s27
    %p38 = scmp.eq.s32.totalorder %s18, 0
    %p39 = por %p37, %p38
    %p40 = scmp.ne.s32.totalorder %s26, %s27
    %p41 = scmp.eq.s32.totalorder %s19, 1
    %p42 = por %p40, %p41
    %p44 = scmp.ne.s32.totalorder %s27, %s43
    %p45 = scmp.eq.s32.totalorder %s19, 0
    %p46 = por %p44, %p45
    %s48 = sadd.s32 %s47, 1
    %p51 = scmp.eq.s32.totalorder %s13, 1
    %p52 = scmp.ne.s32.totalorder %s47, %s49
    %p53 = scmp.eq.s32.totalorder %s13, 0
    %p54 = por %p52, %p53
    %p55 = scmp.ne.s32.totalorder %s47, %s49
    %p56 = scmp.eq.s32.totalorder %s18, 1
    %p57 = por %p55, %p56
    %p58 = scmp.ne.s32.totalorder %s49, %s50
    %p59 = scmp.eq.s32.totalorder %s18, 0
    %p60 = por %p58, %p59
    %p61 = scmp.ne.s32.totalorder %s49, %s50
    %p62 = scmp.eq.s32.totalorder %s19, 1
    %p63 = por %p61, %p62
    %p65 = scmp.ne.s32.totalorder %s50, %s64
    %p66 = scmp.eq.s32.totalorder %s19, 0
    %p67 = por %p65, %p66
    %s69 = sadd.s32 %s68, 1
    %p72 = scmp.eq.s32.totalorder %s13, 1
    %p73 = scmp.ne.s32.totalorder %s68, %s70
    %p74 = scmp.eq.s32.totalorder %s13, 0
    %p75 = por %p73, %p74
    %p76 = scmp.ne.s32.totalorder %s68, %s70
    %p77 = scmp.eq.s32.totalorder %s18, 1
    %p78 = por %p76, %p77
    %p79 = scmp.ne.s32.totalorder %s70, %s71
    %p80 = scmp.eq.s32.totalorder %s18, 0
    %p81 = por %p79, %p80
    %p82 = scmp.ne.s32.totalorder %s70, %s71
    %p83 = scmp.eq.s32.totalorder %s19, 1
    %p84 = por %p82, %p83
    %p86 = scmp.ne.s32.totalorder %s71, %s85
    %p87 = scmp.eq.s32.totalorder %s19, 0
    %p88 = por %p86, %p87
    %s90 = sadd.s32 %s89, 1
    %p93 = scmp.eq.s32.totalorder %s13, 1
    %p94 = scmp.ne.s32.totalorder %s89, %s91
    %p95 = scmp.eq.s32.totalorder %s13, 0
    %p96 = por %p94, %p95
    %p97 = scmp.ne.s32.totalorder %s89, %s91
    %p98 = scmp.eq.s32.totalorder %s18, 1
    %p99 = por %p97, %p98
    %p100 = scmp.ne.s32.totalorder %s91, %s92
    %p101 = scmp.eq.s32.totalorder %s18, 0
    %p102 = por %p100, %p101
    %p103 = scmp.ne.s32.totalorder %s91, %s92
    %p104 = scmp.eq.s32.totalorder %s19, 1
    %p105 = por %p103, %p104
    %p107 = scmp.ne.s32.totalorder %s92, %s106
    %p108 = scmp.eq.s32.totalorder %s19, 0
    %p109 = por %p107, %p108
    %s111 = sadd.s32 %s110, 1
    %p114 = scmp.eq.s32.totalorder %s13, 1
    %p115 = scmp.ne.s32.totalorder %s110, %s112
    %p116 = scmp.eq.s32.totalorder %s13, 0
    %p117 = por %p115, %p116
    %p118 = scmp.ne.s32.totalorder %s110, %s112
    %p119 = scmp.eq.s32.totalorder %s18, 1
    %p120 = por %p118, %p119
    %p121 = scmp.ne.s32.totalorder %s112, %s113
    %p122 = scmp.eq.s32.totalorder %s18, 0
    %p123 = por %p121, %p122
    %p124 = scmp.ne.s32.totalorder %s112, %s113
    %p125 = scmp.eq.s32.totalorder %s19, 1
    %p126 = por %p124, %p125
    %p128 = scmp.ne.s32.totalorder %s113, %s127
    %p129 = scmp.eq.s32.totalorder %s19, 0
    %p130 = por %p128, %p129
    %s132 = sadd.s32 %s131, 1
    %p135 = scmp.eq.s32.totalorder %s13, 1
    %p136 = scmp.ne.s32.totalorder %s131, %s133
    %p137 = scmp.eq.s32.totalorder %s13, 0
    %p138 = por %p136, %p137
    %p139 = scmp.ne.s32.totalorder %s131, %s133
    %p140 = scmp.eq.s32.totalorder %s18, 1
    %p141 = por %p139, %p140
    %p142 = scmp.ne.s32.totalorder %s133, %s134
    %p143 = scmp.eq.s32.totalorder %s18, 0
    %p144 = por %p142, %p143
    %p145 = scmp.ne.s32.totalorder %s133, %s134
    %p146 = scmp.eq.s32.totalorder %s19, 1
    %p147 = por %p145, %p146
    %p149 = scmp.ne.s32.totalorder %s134, %s148
    %p150 = scmp.eq.s32.totalorder %s19, 0
    %p151 = por %p149, %p150
    %s153 = sadd.s32 %s152, 1
    %p156 = scmp.eq.s32.totalorder %s13, 1
    %p157 = scmp.ne.s32.totalorder %s152, %s154
    %p158 = scmp.eq.s32.totalorder %s13, 0
    %p159 = por %p157, %p158
    %p160 = scmp.ne.s32.totalorder %s152, %s154
    %p161 = scmp.eq.s32.totalorder %s18, 1
    %p162 = por %p160, %p161
    %p163 = scmp.ne.s32.totalorder %s154, %s155
    %p164 = scmp.eq.s32.totalorder %s18, 0
    %p165 = por %p163, %p164
    %p166 = scmp.ne.s32.totalorder %s154, %s155
    %p167 = scmp.eq.s32.totalorder %s19, 1
    %p168 = por %p166, %p167
    %p170 = scmp.ne.s32.totalorder %s155, %s169
    %p171 = scmp.eq.s32.totalorder %s19, 0
    %p172 = por %p170, %p171
    %s173 = ssub.s32 %s13, %s20
    %p174 = scmp.eq.s32.totalorder %s173, 0
    %s176 = sadd.s32 %s175, 1
    %s177 = scalar_select %p174, %s175, %s176
    %p180 = pneg %p174
    %p181 = scmp.eq.s32.totalorder %s13, 1
    %p182 = por %p180, %p181
    %p183 = scmp.ne.s32.totalorder %s175, %s178
    %p184 = scmp.eq.s32.totalorder %s13, 0
    %p185 = por %p183, %p184
    %p186 = scmp.ne.s32.totalorder %s175, %s178
    %p187 = scmp.eq.s32.totalorder %s18, 1
    %p188 = por %p186, %p187
    %p189 = scmp.ne.s32.totalorder %s178, %s179
    %p190 = scmp.eq.s32.totalorder %s18, 0
    %p191 = por %p189, %p190
    %p192 = scmp.ne.s32.totalorder %s178, %s179
    %p193 = scmp.eq.s32.totalorder %s19, 1
    %p194 = por %p192, %p193
    %p196 = scmp.ne.s32.totalorder %s179, %s195
    %p197 = scmp.eq.s32.totalorder %s19, 0
    %p198 = por %p196, %p197
    %p199 = scmp.le.s32.totalorder 1, %s13
    %p200 = scmp.lt.s32.totalorder %s13, 3
    %p201 = pnand %p199, %p200
    %p202 = pneg %p201
    // Predicated region
    $region9: #{closed_call.45} parent=5 // pred_check
      _
    $region10: #{closed_call.45} parent=5 // pred_check_branch
      %204 = sbr.rel (%p201) target = $region12
    $region11: #{closed_call.45} parent=5 // pred_region
      %s205 = ssub.s32 %s13, 1
      // Predicated region
      $region13: #{closed_call.45} parent=11 // pred_check
        %p206 = pneg %p60
      $region14: #{closed_call.45} parent=11 // pred_check_branch
        %208 = sbr.rel (%p206) target = $region16
      $region15: #{closed_call.45} parent=11 // pred_region
        _
      $region16: #{closed_call.45} parent=11 // pred_fallthru
        _
      // Predicated region
      $region17: #{closed_call.45} parent=11 // pred_check
        %p209 = pneg %p81
      $region18: #{closed_call.45} parent=11 // pred_check_branch
        %211 = sbr.rel (%p209) target = $region20
      $region19: #{closed_call.45} parent=11 // pred_region
        _
      $region20: #{closed_call.45} parent=11 // pred_fallthru
        _
      // Predicated region
      $region21: #{closed_call.45} parent=11 // pred_check
        %p212 = pneg %p102
      $region22: #{closed_call.45} parent=11 // pred_check_branch
        %214 = sbr.rel (%p212) target = $region24
      $region23: #{closed_call.45} parent=11 // pred_region
        _
      $region24: #{closed_call.45} parent=11 // pred_fallthru
        _
      // Predicated region
      $region25: #{closed_call.45} parent=11 // pred_check
        %p215 = pneg %p123
      $region26: #{closed_call.45} parent=11 // pred_check_branch
        %217 = sbr.rel (%p215) target = $region28
      $region27: #{closed_call.45} parent=11 // pred_region
        _
      $region28: #{closed_call.45} parent=11 // pred_fallthru
        _
      // Predicated region
      $region29: #{closed_call.45} parent=11 // pred_check
        %p218 = pneg %p144
      $region30: #{closed_call.45} parent=11 // pred_check_branch
        %220 = sbr.rel (%p218) target = $region32
      $region31: #{closed_call.45} parent=11 // pred_region
        _
      $region32: #{closed_call.45} parent=11 // pred_fallthru
        _
      // Predicated region
      $region33: #{closed_call.45} parent=11 // pred_check
        %p221 = pneg %p165
      $region34: #{closed_call.45} parent=11 // pred_check_branch
        %223 = sbr.rel (%p221) target = $region36
      $region35: #{closed_call.45} parent=11 // pred_region
        _
      $region36: #{closed_call.45} parent=11 // pred_fallthru
        _
    $region12: #{closed_call.45} parent=5 // pred_fallthru
      _
    %p224 = scmp.lt.s32.totalorder %s13, 2
    // Predicated region
    $region37: #{closed_call.45} parent=5 // pred_check
      %p225 = pneg %p224
    $region38: #{closed_call.45} parent=5 // pred_check_branch
      %227 = sbr.rel (%p225) target = $region40
    $region39: #{closed_call.45} parent=5 // pred_region
      // Predicated region
      $region41: #{closed_call.45} parent=39 // pred_check
        %p228 = pneg %p33
      $region42: #{closed_call.45} parent=39 // pred_check_branch
        %230 = sbr.rel (%p228) target = $region44
      $region43: #{closed_call.45} parent=39 // pred_region
        %p231 = scmp.lt.s32.totalorder %s13, 1
        %s232 = scalar_select %p231, %s13, 1
        %s233 = smul.addr %s232, 8
        %s234 = scalar_lea.vmem %s0, %s233
      $region44: #{closed_call.45} parent=39 // pred_fallthru
        _
    $region40: #{closed_call.45} parent=5 // pred_fallthru
      _
    %p235 = scmp.le.s32.totalorder 1, %s13
    %p236 = scmp.lt.s32.totalorder %s13, 3
    %p237 = pnand %p235, %p236
    %p238 = pneg %p237
    // Predicated region
    $region45: #{closed_call.45} parent=5 // pred_check
      _
    $region46: #{closed_call.45} parent=5 // pred_check_branch
      %240 = sbr.rel (%p237) target = $region48
    $region47: #{closed_call.45} parent=5 // pred_region
      %s241 = ssub.s32 %s13, 1
      %p242 = scmp.lt.s32.totalorder %s18, 1
      %s243 = scalar_select %p242, %s18, 1
      %s244 = smul.addr %s243, 8
      %s245 = scalar_lea.vmem %s0, %s244
      %p246 = pneg %p39
      %p247 = pneg %p36
      %p248 = pneg %p60
      %p249 = pneg %p57
      %p250 = pneg %p81
      %p251 = pneg %p78
      %p252 = pneg %p102
      %p253 = pneg %p99
      %p254 = pneg %p123
      %p255 = pneg %p120
      %p256 = pneg %p144
      %p257 = pneg %p141
      %p258 = pneg %p165
      %p259 = pneg %p162
      %p260 = pneg %p191
      %p261 = pneg %p188
      %p262 = scmp.lt.s32.totalorder %s18, 1
      %s263 = scalar_select %p262, %s18, 1
      %s264 = smul.addr %s263, 8
      %s265 = scalar_lea.vmem %s7, %s264
      %p266 = scmp.lt.s32.totalorder %s18, 1
      %s267 = scalar_select %p266, %s18, 1
      %s268 = smul.addr %s267, 8
      %s269 = scalar_lea.vmem %s0, %s268
      %p270 = scmp.lt.s32.totalorder %s18, 1
      %s271 = scalar_select %p270, %s18, 1
      %s272 = smul.addr %s271, 8
      %s273 = scalar_lea.vmem %s7, %s272
      %v274 = vld [vmem:[%s269] sm:$0x3f]
      %v275 = vld [vmem:[%s1] sm:$0xff]
      %v276 = vld [vmem:[%s1 + $0x8] sm:$0xff]
      %v277 = vld [vmem:[%s1 + $0x10] sm:$0xff]
      %v278 = vld [vmem:[%s1 + $0x18] sm:$0xff]
      %v279 = vld [vmem:[%s2] sm:$0x1]
      %v281 = vlaneseq
      %v282 = vshrl.u32 %v281, 7
      %v283 = vsub.s32 0, %v282
      %v284 = vrot.slane %v279, %v283
      %vm286 = vcmask 261120
      %v288 = vsel %vm286, %v274, 0
      %290 = vmatprep.subr.mxu0 0.0
      %291 = vmatpush1.msra.mxu0 %v275
      %292 = vmatprep.subr.mxu0 0.0
      %293 = vmatpush1.msra.mxu0 %v276
      %294 = vmatprep.subr.mxu0 0.0
      %295 = vmatpush1.msra.mxu0 %v277
      %296 = vmatprep.subr.mxu0 0.0
      %297 = vmatpush1.msra.mxu0 %v278
      %298 = vmatprep.subr.mxu0 0.0
      %299 = vmatpush1.msra.mxu0 0.0
      %300 = vmatprep.subr.mxu0 0.0
      %301 = vmatpush1.msra.mxu0 0.0
      %302 = vmatprep.subr.mxu0 0.0
      %303 = vmatpush1.msra.mxu0 0.0
      %304 = vmatprep.subr.mxu0 0.0
      %305 = vmatpush1.msra.mxu0 0.0
      %306 = vmatprep.subr.mxu0 0.0
      %307 = vmatpush1.msra.mxu0 0.0
      %308 = vmatprep.subr.mxu0 0.0
      %309 = vmatpush1.msra.mxu0 0.0
      %310 = vmatprep.subr.mxu0 0.0
      %311 = vmatpush1.msra.mxu0 0.0
      %312 = vmatprep.subr.mxu0 0.0
      %313 = vmatpush1.msra.mxu0 0.0
      %314 = vmatprep.subr.mxu0 0.0
      %315 = vmatpush1.msra.mxu0 0.0
      %316 = vmatprep.subr.mxu0 0.0
      %317 = vmatpush1.msra.mxu0 0.0
      %318 = vmatprep.subr.mxu0 0.0
      %319 = vmatpush1.msra.mxu0 0.0
      %320 = vmatprep.subr.mxu0 0.0
      %321 = vmatpush1.msra.mxu0 0.0
      %322 = vmatprep.subr.mxu0 0.0
      %323 = vmatpush1.msra.mxu0 0.0
      %324 = vmatprep.subr.mxu0 0.0
      %325 = vmatpush1.msra.mxu0 0.0
      %326 = vmatprep.subr.mxu0 0.0
      %327 = vmatpush1.msra.mxu0 0.0
      %328 = vmatprep.subr.mxu0 0.0
      %329 = vmatpush1.msra.mxu0 0.0
      %330 = vmatprep.subr.mxu0 0.0
      %331 = vmatpush1.msra.mxu0 0.0
      %332 = vmatprep.subr.mxu0 0.0
      %333 = vmatpush1.msra.mxu0 0.0
      %334 = vmatprep.subr.mxu0 0.0
      %335 = vmatpush1.msra.mxu0 0.0
      %336 = vmatprep.subr.mxu0 0.0
      %337 = vmatpush1.msra.mxu0 0.0
      %338 = vmatprep.subr.mxu0 0.0
      %339 = vmatpush1.msra.mxu0 0.0
      %340 = vmatprep.subr.mxu0 0.0
      %341 = vmatpush1.msra.mxu0 0.0
      %342 = vmatprep.subr.mxu0 0.0
      %343 = vmatpush1.msra.mxu0 0.0
      %344 = vmatprep.subr.mxu0 0.0
      %345 = vmatpush1.msra.mxu0 0.0
      %346 = vmatprep.subr.mxu0 0.0
      %347 = vmatpush1.msra.mxu0 0.0
      %348 = vmatprep.subr.mxu0 0.0
      %349 = vmatpush1.msra.mxu0 0.0
      %350 = vmatprep.subr.mxu0 0.0
      %351 = vmatpush1.msra.mxu0 0.0
      %352 = vmatprep.subr.mxu0 0.0
      %353 = vmatpush1.msra.mxu0 0.0
      %354 = vmatprep.mubr.f32.mxu0 0.0
      %355 = vmatmul.mubr.f32.gmra.mrb[0].mxu0 %v288
      %v356 = vpop.f32.mrb[0].mxu0
      %v357 = vadd.f32 %v284, %v356
      %v358 = vpop.f32.mrb[0].mxu0
      %359 = vdwg.mxu0
      %v360 = vmul.f32 %v357, %v357
      %v361 = vmul.f32 %v357, %v360
      %v362 = vmul.f32 %v361, 0.044715
      %v363 = vadd.f32 %v357, %v362
      %v364 = vmul.f32 %v363, 0.7978846
      %v365 = vtanh.pop %v364
      %v366 = vadd.f32 %v365, 1.0
      %v367 = vmul.f32 %v366, 0.5
      %v368 = vmul.f32 %v357, %v367
      %v369 = vld [vmem:[%s3] sm:$0xff]
      %v370 = vld [vmem:[%s3 + $0x8] sm:$0xff]
      %v371 = vld [vmem:[%s3 + $0x10] sm:$0xff]
      %v372 = vld [vmem:[%s3 + $0x18] sm:$0xff]
      %v373 = vld [vmem:[%s3 + $0x20] sm:$0xff]
      %v374 = vld [vmem:[%s3 + $0x28] sm:$0xff]
      %v375 = vld [vmem:[%s3 + $0x30] sm:$0xff]
      %v376 = vld [vmem:[%s3 + $0x38] sm:$0xff]
      %vm377 = vcmask 523264
      %v379 = vsel %vm377, %v368, 0
      %381 = vmatprep.subr.mxu0 0.0
      %382 = vmatpush1.msra.mxu0 %v369
      %383 = vmatprep.subr.mxu0 0.0
      %384 = vmatpush1.msra.mxu0 %v370
      %385 = vmatprep.subr.mxu0 0.0
      %386 = vmatpush1.msra.mxu0 %v371
      %387 = vmatprep.subr.mxu0 0.0
      %388 = vmatpush1.msra.mxu0 %v372
      %389 = vmatprep.subr.mxu0 0.0
      %390 = vmatpush1.msra.mxu0 %v373
      %391 = vmatprep.subr.mxu0 0.0
      %392 = vmatpush1.msra.mxu0 %v374
      %393 = vmatprep.subr.mxu0 0.0
      %394 = vmatpush1.msra.mxu0 %v375
      %395 = vmatprep.subr.mxu0 0.0
      %396 = vmatpush1.msra.mxu0 %v376
      %397 = vmatprep.subr.mxu0 0.0
      %398 = vmatpush1.msra.mxu0 0.0
      %399 = vmatprep.subr.mxu0 0.0
      %400 = vmatpush1.msra.mxu0 0.0
      %401 = vmatprep.subr.mxu0 0.0
      %402 = vmatpush1.msra.mxu0 0.0
      %403 = vmatprep.subr.mxu0 0.0
      %404 = vmatpush1.msra.mxu0 0.0
      %405 = vmatprep.subr.mxu0 0.0
      %406 = vmatpush1.msra.mxu0 0.0
      %407 = vmatprep.subr.mxu0 0.0
      %408 = vmatpush1.msra.mxu0 0.0
      %409 = vmatprep.subr.mxu0 0.0
      %410 = vmatpush1.msra.mxu0 0.0
      %411 = vmatprep.subr.mxu0 0.0
      %412 = vmatpush1.msra.mxu0 0.0
      %413 = vmatprep.subr.mxu0 0.0
      %414 = vmatpush1.msra.mxu0 0.0
      %415 = vmatprep.subr.mxu0 0.0
      %416 = vmatpush1.msra.mxu0 0.0
      %417 = vmatprep.subr.mxu0 0.0
      %418 = vmatpush1.msra.mxu0 0.0
      %419 = vmatprep.subr.mxu0 0.0
      %420 = vmatpush1.msra.mxu0 0.0
      %421 = vmatprep.subr.mxu0 0.0
      %422 = vmatpush1.msra.mxu0 0.0
      %423 = vmatprep.subr.mxu0 0.0
      %424 = vmatpush1.msra.mxu0 0.0
      %425 = vmatprep.subr.mxu0 0.0
      %426 = vmatpush1.msra.mxu0 0.0
      %427 = vmatprep.subr.mxu0 0.0
      %428 = vmatpush1.msra.mxu0 0.0
      %429 = vmatprep.subr.mxu0 0.0
      %430 = vmatpush1.msra.mxu0 0.0
      %431 = vmatprep.subr.mxu0 0.0
      %432 = vmatpush1.msra.mxu0 0.0
      %433 = vmatprep.subr.mxu0 0.0
      %434 = vmatpush1.msra.mxu0 0.0
      %435 = vmatprep.subr.mxu0 0.0
      %436 = vmatpush1.msra.mxu0 0.0
      %437 = vmatprep.subr.mxu0 0.0
      %438 = vmatpush1.msra.mxu0 0.0
      %439 = vmatprep.subr.mxu0 0.0
      %440 = vmatpush1.msra.mxu0 0.0
      %441 = vmatprep.subr.mxu0 0.0
      %442 = vmatpush1.msra.mxu0 0.0
      %443 = vmatprep.subr.mxu0 0.0
      %444 = vmatpush1.msra.mxu0 0.0
      %445 = vmatprep.mubr.f32.mxu0 0.0
      %446 = vmatmul.mubr.f32.gmra.mrb[0].mxu0 %v379
      %v447 = vpop.f32.mrb[0].mxu0
      %v448 = vadd.f32 0.0, %v447
      %v449 = vpop.f32.mrb[0].mxu0
      %450 = vdwg.mxu0
      %v451 = vadd.f32 %v274, %v448
      %v452 = vld [vmem:[%s4] sm:$0x1]
      %v454 = vlaneseq
      %v455 = vshrl.u32 %v454, 7
      %v456 = vsub.s32 0, %v455
      %v457 = vrot.slane %v452, %v456
      %v459 = vadd.f32 %v451, %v457
      %v460 = vld [vmem:[%s5] sm:$0x1]
      %v461 = vld [vmem:[%s6] sm:$0x1]
      %vm462 = vcmask 259072
      %v463 = vsel %vm462, %v459, 0.0
      %464 = vadd.xlane.f32.xlu0 %v463
      %v465 = vpop.xlane.xlu0 %464
      %v466 = vrcp.pop 32.0
      %v467 = vmul.f32 %v465, %v466
      %v468 = vsub.f32 %v459, %v467
      %v469 = vmul.f32 %v468, %v468
      %v470 = vsel %vm462, %v469, 0.0
      %471 = vadd.xlane.f32.xlu0 %v470
      %v472 = vpop.xlane.xlu0 %471
      %v473 = vmul.f32 %v472, %v466
      %v474 = vadd.f32 %v473, 1e-05
      %v475 = vrsqrt.pop %v474
      %v476 = vmul.f32 %v468, %v475
      %v478 = vlaneseq
      %v479 = vshrl.u32 %v478, 7
      %v480 = vsub.s32 0, %v479
      %v481 = vrot.slane %v460, %v480
      %v483 = vmul.f32 %v476, %v481
      %v485 = vlaneseq
      %v486 = vshrl.u32 %v485, 7
      %v487 = vsub.s32 0, %v486
      %v488 = vrot.slane %v461, %v487
      %v490 = vadd.f32 %v483, %v488
      %491 = vst.msk [vmem:[%s273] sm:$0x3f] %vm462, %v490
      %p492 = scmp.lt.s32.totalorder %s18, 1
      %s493 = scalar_select %p492, %s18, 1
      %s494 = smul.addr %s493, 8
      %s495 = scalar_lea.vmem %s7, %s494
      // Predicated region
      $region49: #{closed_call.45} parent=47 // pred_check
        %p496 = pneg %p188
      $region50: #{closed_call.45} parent=47 // pred_check_branch
        %498 = sbr.rel (%p496) target = $region52
      $region51: #{closed_call.45} parent=47 // pred_region
        _
      $region52: #{closed_call.45} parent=47 // pred_fallthru
        _
    $region48: #{closed_call.45} parent=5 // pred_fallthru
      _
    %p499 = scmp.le.s32.totalorder 2, %s13
    // Predicated region
    $region53: #{closed_call.45} parent=5 // pred_check
      %p500 = pneg %p499
    $region54: #{closed_call.45} parent=5 // pred_check_branch
      %502 = sbr.rel (%p500) target = $region56
    $region55: #{closed_call.45} parent=5 // pred_region
      %s503 = ssub.s32 %s13, 2
      // Predicated region
      $region57: #{closed_call.45} parent=55 // pred_check
        %p504 = pneg %p194
      $region58: #{closed_call.45} parent=55 // pred_check_branch
        %506 = sbr.rel (%p504) target = $region60
      $region59: #{closed_call.45} parent=55 // pred_region
        %p507 = scmp.lt.s32.totalorder %s19, 1
        %s508 = scalar_select %p507, %s19, 1
        %s509 = smul.addr %s508, 8
        %s510 = scalar_lea.vmem %s7, %s509
      $region60: #{closed_call.45} parent=55 // pred_fallthru
        _
    $region56: #{closed_call.45} parent=5 // pred_fallthru
      _
  $region6: #{closed_call.45} parent=0 // loop_footer
    %s17 = sadd.s32 1, %s13
  $region7: #{closed_call.45} parent=0 // loop_footer_branch
    %12 = sbr.rel target = $region3
  $region8: #{closed_call.45} parent=0 // loop_exit
    _

// kernel: closed_call.46
$region0: #{closed_call.46}
  #allocation0 [shape = 'u32[]', space=smem, size = 0x4, offset = 0x4, fixed_abs, tag = 'smem constant byte address 0x4 - core index']
  #allocation1 [shape = 'u32[144,128]{1,0:T(1,128)}', space=vmem, size = 0x12000, scoped, tag = 'internal scratch']
  %s0 = inlined_call_operand.vmem [shape: f32[2,32], index: 0, kind: input, shape index: {}]
  %s1 = inlined_call_operand.vmem [shape: f32[32,128], index: 1, kind: input, shape index: {}]
  %s2 = inlined_call_operand.vmem [shape: f32[2,128], index: 2, kind: output, shape index: {}]
  %s3 = sld [smem:[#allocation0]]
  $region18: #{closed_call.46} parent=0
    _
  %s5 = ssub.s32 1, %s3
  %s6 = scalar_select 0, %s5, %s3
  // Predicated region
  $region2: #{closed_call.46} parent=0 // pred_check
    _
  $region3: #{closed_call.46} parent=0 // pred_check_branch
    %8 = sbr.rel (0) target = $region5
  $region4: #{closed_call.46} parent=0 // pred_region
    _
  $region5: #{closed_call.46} parent=0 // pred_fallthru
    _
  // Predicated region
  $region6: #{closed_call.46} parent=0 // pred_check
    _
  $region7: #{closed_call.46} parent=0 // pred_check_branch
    %10 = sbr.rel (0) target = $region9
  $region8: #{closed_call.46} parent=0 // pred_region
    _
  $region9: #{closed_call.46} parent=0 // pred_fallthru
    _
  %v11 = vld [vmem:[%s0] sm:$0x3]
  %v12 = vld [vmem:[%s1] sm:$0xff]
  %v13 = vld [vmem:[%s1 + $0x8] sm:$0xff]
  %v14 = vld [vmem:[%s1 + $0x10] sm:$0xff]
  %v15 = vld [vmem:[%s1 + $0x18] sm:$0xff]
  %vm16 = vcmask 261120
  %v18 = vsel %vm16, %v11, 0
  %20 = vmatprep.subr.mxu0 0.0
  %21 = vmatpush1.msra.mxu0 %v12
  %22 = vmatprep.subr.mxu0 0.0
  %23 = vmatpush1.msra.mxu0 %v13
  %24 = vmatprep.subr.mxu0 0.0
  %25 = vmatpush1.msra.mxu0 %v14
  %26 = vmatprep.subr.mxu0 0.0
  %27 = vmatpush1.msra.mxu0 %v15
  %28 = vmatprep.subr.mxu0 0.0
  %29 = vmatpush1.msra.mxu0 0.0
  %30 = vmatprep.subr.mxu0 0.0
  %31 = vmatpush1.msra.mxu0 0.0
  %32 = vmatprep.subr.mxu0 0.0
  %33 = vmatpush1.msra.mxu0 0.0
  %34 = vmatprep.subr.mxu0 0.0
  %35 = vmatpush1.msra.mxu0 0.0
  %36 = vmatprep.subr.mxu0 0.0
  %37 = vmatpush1.msra.mxu0 0.0
  %38 = vmatprep.subr.mxu0 0.0
  %39 = vmatpush1.msra.mxu0 0.0
  %40 = vmatprep.subr.mxu0 0.0
  %41 = vmatpush1.msra.mxu0 0.0
  %42 = vmatprep.subr.mxu0 0.0
  %43 = vmatpush1.msra.mxu0 0.0
  %44 = vmatprep.subr.mxu0 0.0
  %45 = vmatpush1.msra.mxu0 0.0
  %46 = vmatprep.subr.mxu0 0.0
  %47 = vmatpush1.msra.mxu0 0.0
  %48 = vmatprep.subr.mxu0 0.0
  %49 = vmatpush1.msra.mxu0 0.0
  %50 = vmatprep.subr.mxu0 0.0
  %51 = vmatpush1.msra.mxu0 0.0
  %52 = vmatprep.subr.mxu0 0.0
  %53 = vmatpush1.msra.mxu0 0.0
  %54 = vmatprep.subr.mxu0 0.0
  %55 = vmatpush1.msra.mxu0 0.0
  %56 = vmatprep.subr.mxu0 0.0
  %57 = vmatpush1.msra.mxu0 0.0
  %58 = vmatprep.subr.mxu0 0.0
  %59 = vmatpush1.msra.mxu0 0.0
  %60 = vmatprep.subr.mxu0 0.0
  %61 = vmatpush1.msra.mxu0 0.0
  %62 = vmatprep.subr.mxu0 0.0
  %63 = vmatpush1.msra.mxu0 0.0
  %64 = vmatprep.subr.mxu0 0.0
  %65 = vmatpush1.msra.mxu0 0.0
  %66 = vmatprep.subr.mxu0 0.0
  %67 = vmatpush1.msra.mxu0 0.0
  %68 = vmatprep.subr.mxu0 0.0
  %69 = vmatpush1.msra.mxu0 0.0
  %70 = vmatprep.subr.mxu0 0.0
  %71 = vmatpush1.msra.mxu0 0.0
  %72 = vmatprep.subr.mxu0 0.0
  %73 = vmatpush1.msra.mxu0 0.0
  %74 = vmatprep.subr.mxu0 0.0
  %75 = vmatpush1.msra.mxu0 0.0
  %76 = vmatprep.subr.mxu0 0.0
  %77 = vmatpush1.msra.mxu0 0.0
  %78 = vmatprep.subr.mxu0 0.0
  %79 = vmatpush1.msra.mxu0 0.0
  %80 = vmatprep.subr.mxu0 0.0
  %81 = vmatpush1.msra.mxu0 0.0
  %82 = vmatprep.subr.mxu0 0.0
  %83 = vmatpush1.msra.mxu0 0.0
  %84 = vmatprep.mubr.f32.mxu0 0.0
  %85 = vmatmul.mubr.f32.gmra.mrb[0].mxu0 %v18
  %v86 = vpop.f32.mrb[0].mxu0
  %v87 = vadd.f32 0.0, %v86
  %v88 = vpop.f32.mrb[0].mxu0
  %89 = vdwg.mxu0
  %v90 = vlaneseq
  %v91 = vand.u32 %v90, 127
  %vm92 = vcmp.lt.s32.totalorder %v91, 96
  %v93 = vsel %vm92, %v87, -1e+09
  %94 = vst [vmem:[%s2] sm:$0x3] %v93
  // Predicated region
  $region10: #{closed_call.46} parent=0 // pred_check
    _
  $region11: #{closed_call.46} parent=0 // pred_check_branch
    %96 = sbr.rel (0) target = $region13
  $region12: #{closed_call.46} parent=0 // pred_region
    _
  $region13: #{closed_call.46} parent=0 // pred_fallthru
    _
  // Predicated region
  $region14: #{closed_call.46} parent=0 // pred_check
    _
  $region15: #{closed_call.46} parent=0 // pred_check_branch
    %98 = sbr.rel (0) target = $region17
  $region16: #{closed_call.46} parent=0 // pred_region
    _
  $region17: #{closed_call.46} parent=0 // pred_fallthru
    _

// kernel: closed_call.44
$region0: #{closed_call.44}
  #allocation0 [shape = 'u32[]', space=smem, size = 0x4, offset = 0x4, fixed_abs, tag = 'smem constant byte address 0x4 - core index']
  #allocation1 [shape = 'u32[144,128]{1,0:T(1,128)}', space=vmem, size = 0x12000, scoped, tag = 'internal scratch']
  %s0 = inlined_call_operand.vmem [shape: f32[2,6,32], index: 0, kind: input, shape index: {}]
  %s1 = inlined_call_operand.vmem [shape: f32[2,8,64], index: 1, kind: input, shape index: {}]
  %s2 = inlined_call_operand.vmem [shape: f32[32,32], index: 2, kind: input, shape index: {}]
  %s3 = inlined_call_operand.vmem [shape: f32[1,32], index: 3, kind: input, shape index: {}]
  %s4 = inlined_call_operand.vmem [shape: f32[32,32], index: 4, kind: input, shape index: {}]
  %s5 = inlined_call_operand.vmem [shape: f32[1,32], index: 5, kind: input, shape index: {}]
  %s6 = inlined_call_operand.vmem [shape: f32[1,32], index: 6, kind: input, shape index: {}]
  %s7 = inlined_call_operand.vmem [shape: f32[1,32], index: 7, kind: input, shape index: {}]
  %s8 = inlined_call_operand.vmem [shape: f32[2,6,32], index: 8, kind: output, shape index: {}]
  %s9 = sld [smem:[#allocation0]]
  $region65: #{closed_call.44} parent=0
    _
  %s11 = ssub.s32 1, %s9
  %s12 = scalar_select 0, %s11, %s9
  loop: start=0, step=1, limit=4
  $region2: #{closed_call.44} parent=0 // loop_pre_header
    _
  $region3: #{closed_call.44} parent=0 // loop_header
    %s14 = sphi 0, %s18
    %p15 = scmp.ge.s32.totalorder %s14, 4
    %s24 = sphi 0, %s26
    %s27 = sphi 0, %s24
    %s28 = sphi 0, %s27
    %s44 = sphi 0, %s28
    %s50 = sphi 0, %s52
    %s53 = sphi 0, %s50
    %s54 = sphi 0, %s53
    %s70 = sphi 0, %s54
    %s74 = sphi 0, %s74
    %s76 = sphi 0, %s74
    %s77 = sphi 0, %s76
    %s91 = sphi 0, %s77
    %s95 = sphi 0, %s95
    %s97 = sphi 0, %s95
    %s98 = sphi 0, %s97
    %s112 = sphi 0, %s98
    %s116 = sphi 0, %s116
    %s118 = sphi 0, %s116
    %s119 = sphi 0, %s118
    %s133 = sphi 0, %s119
    %s137 = sphi 0, %s137
    %s139 = sphi 0, %s137
    %s140 = sphi 0, %s139
    %s154 = sphi 0, %s140
    %s158 = sphi 0, %s158
    %s160 = sphi 0, %s158
    %s161 = sphi 0, %s160
    %s175 = sphi 0, %s161
    %s179 = sphi 0, %s179
    %s181 = sphi 0, %s179
    %s182 = sphi 0, %s181
    %s196 = sphi 0, %s182
    %s202 = sphi 0, %s204
    %s205 = sphi 0, %s202
    %s206 = sphi 0, %s205
    %s222 = sphi 0, %s206
  $region4: #{closed_call.44} parent=0 // loop_header_branch
    %17 = sbr.rel (%p15) target = $region8
  $region5: #{closed_call.44} parent=0 // loop_body
    %s19 = ssub.s32 %s14, 1
    %s20 = ssub.s32 %s14, 2
    %s21 = sadd.s32 %s14, 1
    %s22 = ssub.s32 %s14, %s21
    %p23 = scmp.eq.s32.totalorder %s22, 0
    %s25 = sadd.s32 %s24, 1
    %s26 = scalar_select %p23, %s24, %s25
    %p29 = pneg %p23
    %p30 = scmp.eq.s32.totalorder %s14, 1
    %p31 = por %p29, %p30
    %p32 = scmp.ne.s32.totalorder %s24, %s27
    %p33 = scmp.eq.s32.totalorder %s14, 0
    %p34 = por %p32, %p33
    %p35 = scmp.ne.s32.totalorder %s24, %s27
    %p36 = scmp.eq.s32.totalorder %s19, 1
    %p37 = por %p35, %p36
    %p38 = scmp.ne.s32.totalorder %s27, %s28
    %p39 = scmp.eq.s32.totalorder %s19, 0
    %p40 = por %p38, %p39
    %p41 = scmp.ne.s32.totalorder %s27, %s28
    %p42 = scmp.eq.s32.totalorder %s20, 1
    %p43 = por %p41, %p42
    %p45 = scmp.ne.s32.totalorder %s28, %s44
    %p46 = scmp.eq.s32.totalorder %s20, 0
    %p47 = por %p45, %p46
    %s48 = ssub.s32 %s14, %s21
    %p49 = scmp.eq.s32.totalorder %s48, 0
    %s51 = sadd.s32 %s50, 1
    %s52 = scalar_select %p49, %s50, %s51
    %p55 = pneg %p49
    %p56 = scmp.eq.s32.totalorder %s14, 1
    %p57 = por %p55, %p56
    %p58 = scmp.ne.s32.totalorder %s50, %s53
    %p59 = scmp.eq.s32.totalorder %s14, 0
    %p60 = por %p58, %p59
    %p61 = scmp.ne.s32.totalorder %s50, %s53
    %p62 = scmp.eq.s32.totalorder %s19, 1
    %p63 = por %p61, %p62
    %p64 = scmp.ne.s32.totalorder %s53, %s54
    %p65 = scmp.eq.s32.totalorder %s19, 0
    %p66 = por %p64, %p65
    %p67 = scmp.ne.s32.totalorder %s53, %s54
    %p68 = scmp.eq.s32.totalorder %s20, 1
    %p69 = por %p67, %p68
    %p71 = scmp.ne.s32.totalorder %s54, %s70
    %p72 = scmp.eq.s32.totalorder %s20, 0
    %p73 = por %p71, %p72
    %s75 = sadd.s32 %s74, 1
    %p78 = scmp.eq.s32.totalorder %s14, 1
    %p79 = scmp.ne.s32.totalorder %s74, %s76
    %p80 = scmp.eq.s32.totalorder %s14, 0
    %p81 = por %p79, %p80
    %p82 = scmp.ne.s32.totalorder %s74, %s76
    %p83 = scmp.eq.s32.totalorder %s19, 1
    %p84 = por %p82, %p83
    %p85 = scmp.ne.s32.totalorder %s76, %s77
    %p86 = scmp.eq.s32.totalorder %s19, 0
    %p87 = por %p85, %p86
    %p88 = scmp.ne.s32.totalorder %s76, %s77
    %p89 = scmp.eq.s32.totalorder %s20, 1
    %p90 = por %p88, %p89
    %p92 = scmp.ne.s32.totalorder %s77, %s91
    %p93 = scmp.eq.s32.totalorder %s20, 0
    %p94 = por %p92, %p93
    %s96 = sadd.s32 %s95, 1
    %p99 = scmp.eq.s32.totalorder %s14, 1
    %p100 = scmp.ne.s32.totalorder %s95, %s97
    %p101 = scmp.eq.s32.totalorder %s14, 0
    %p102 = por %p100, %p101
    %p103 = scmp.ne.s32.totalorder %s95, %s97
    %p104 = scmp.eq.s32.totalorder %s19, 1
    %p105 = por %p103, %p104
    %p106 = scmp.ne.s32.totalorder %s97, %s98
    %p107 = scmp.eq.s32.totalorder %s19, 0
    %p108 = por %p106, %p107
    %p109 = scmp.ne.s32.totalorder %s97, %s98
    %p110 = scmp.eq.s32.totalorder %s20, 1
    %p111 = por %p109, %p110
    %p113 = scmp.ne.s32.totalorder %s98, %s112
    %p114 = scmp.eq.s32.totalorder %s20, 0
    %p115 = por %p113, %p114
    %s117 = sadd.s32 %s116, 1
    %p120 = scmp.eq.s32.totalorder %s14, 1
    %p121 = scmp.ne.s32.totalorder %s116, %s118
    %p122 = scmp.eq.s32.totalorder %s14, 0
    %p123 = por %p121, %p122
    %p124 = scmp.ne.s32.totalorder %s116, %s118
    %p125 = scmp.eq.s32.totalorder %s19, 1
    %p126 = por %p124, %p125
    %p127 = scmp.ne.s32.totalorder %s118, %s119
    %p128 = scmp.eq.s32.totalorder %s19, 0
    %p129 = por %p127, %p128
    %p130 = scmp.ne.s32.totalorder %s118, %s119
    %p131 = scmp.eq.s32.totalorder %s20, 1
    %p132 = por %p130, %p131
    %p134 = scmp.ne.s32.totalorder %s119, %s133
    %p135 = scmp.eq.s32.totalorder %s20, 0
    %p136 = por %p134, %p135
    %s138 = sadd.s32 %s137, 1
    %p141 = scmp.eq.s32.totalorder %s14, 1
    %p142 = scmp.ne.s32.totalorder %s137, %s139
    %p143 = scmp.eq.s32.totalorder %s14, 0
    %p144 = por %p142, %p143
    %p145 = scmp.ne.s32.totalorder %s137, %s139
    %p146 = scmp.eq.s32.totalorder %s19, 1
    %p147 = por %p145, %p146
    %p148 = scmp.ne.s32.totalorder %s139, %s140
    %p149 = scmp.eq.s32.totalorder %s19, 0
    %p150 = por %p148, %p149
    %p151 = scmp.ne.s32.totalorder %s139, %s140
    %p152 = scmp.eq.s32.totalorder %s20, 1
    %p153 = por %p151, %p152
    %p155 = scmp.ne.s32.totalorder %s140, %s154
    %p156 = scmp.eq.s32.totalorder %s20, 0
    %p157 = por %p155, %p156
    %s159 = sadd.s32 %s158, 1
    %p162 = scmp.eq.s32.totalorder %s14, 1
    %p163 = scmp.ne.s32.totalorder %s158, %s160
    %p164 = scmp.eq.s32.totalorder %s14, 0
    %p165 = por %p163, %p164
    %p166 = scmp.ne.s32.totalorder %s158, %s160
    %p167 = scmp.eq.s32.totalorder %s19, 1
    %p168 = por %p166, %p167
    %p169 = scmp.ne.s32.totalorder %s160, %s161
    %p170 = scmp.eq.s32.totalorder %s19, 0
    %p171 = por %p169, %p170
    %p172 = scmp.ne.s32.totalorder %s160, %s161
    %p173 = scmp.eq.s32.totalorder %s20, 1
    %p174 = por %p172, %p173
    %p176 = scmp.ne.s32.totalorder %s161, %s175
    %p177 = scmp.eq.s32.totalorder %s20, 0
    %p178 = por %p176, %p177
    %s180 = sadd.s32 %s179, 1
    %p183 = scmp.eq.s32.totalorder %s14, 1
    %p184 = scmp.ne.s32.totalorder %s179, %s181
    %p185 = scmp.eq.s32.totalorder %s14, 0
    %p186 = por %p184, %p185
    %p187 = scmp.ne.s32.totalorder %s179, %s181
    %p188 = scmp.eq.s32.totalorder %s19, 1
    %p189 = por %p187, %p188
    %p190 = scmp.ne.s32.totalorder %s181, %s182
    %p191 = scmp.eq.s32.totalorder %s19, 0
    %p192 = por %p190, %p191
    %p193 = scmp.ne.s32.totalorder %s181, %s182
    %p194 = scmp.eq.s32.totalorder %s20, 1
    %p195 = por %p193, %p194
    %p197 = scmp.ne.s32.totalorder %s182, %s196
    %p198 = scmp.eq.s32.totalorder %s20, 0
    %p199 = por %p197, %p198
    %s200 = ssub.s32 %s14, %s21
    %p201 = scmp.eq.s32.totalorder %s200, 0
    %s203 = sadd.s32 %s202, 1
    %s204 = scalar_select %p201, %s202, %s203
    %p207 = pneg %p201
    %p208 = scmp.eq.s32.totalorder %s14, 1
    %p209 = por %p207, %p208
    %p210 = scmp.ne.s32.totalorder %s202, %s205
    %p211 = scmp.eq.s32.totalorder %s14, 0
    %p212 = por %p210, %p211
    %p213 = scmp.ne.s32.totalorder %s202, %s205
    %p214 = scmp.eq.s32.totalorder %s19, 1
    %p215 = por %p213, %p214
    %p216 = scmp.ne.s32.totalorder %s205, %s206
    %p217 = scmp.eq.s32.totalorder %s19, 0
    %p218 = por %p216, %p217
    %p219 = scmp.ne.s32.totalorder %s205, %s206
    %p220 = scmp.eq.s32.totalorder %s20, 1
    %p221 = por %p219, %p220
    %p223 = scmp.ne.s32.totalorder %s206, %s222
    %p224 = scmp.eq.s32.totalorder %s20, 0
    %p225 = por %p223, %p224
    %p226 = scmp.le.s32.totalorder 1, %s14
    %p227 = scmp.lt.s32.totalorder %s14, 3
    %p228 = pnand %p226, %p227
    %p229 = pneg %p228
    // Predicated region
    $region9: #{closed_call.44} parent=5 // pred_check
      _
    $region10: #{closed_call.44} parent=5 // pred_check_branch
      %231 = sbr.rel (%p228) target = $region12
    $region11: #{closed_call.44} parent=5 // pred_region
      %s232 = ssub.s32 %s14, 1
      // Predicated region
      $region13: #{closed_call.44} parent=11 // pred_check
        %p233 = pneg %p87
      $region14: #{closed_call.44} parent=11 // pred_check_branch
        %235 = sbr.rel (%p233) target = $region16
      $region15: #{closed_call.44} parent=11 // pred_region
        _
      $region16: #{closed_call.44} parent=11 // pred_fallthru
        _
      // Predicated region
      $region17: #{closed_call.44} parent=11 // pred_check
        %p236 = pneg %p108
      $region18: #{closed_call.44} parent=11 // pred_check_branch
        %238 = sbr.rel (%p236) target = $region20
      $region19: #{closed_call.44} parent=11 // pred_region
        _
      $region20: #{closed_call.44} parent=11 // pred_fallthru
        _
      // Predicated region
      $region21: #{closed_call.44} parent=11 // pred_check
        %p239 = pneg %p129
      $region22: #{closed_call.44} parent=11 // pred_check_branch
        %241 = sbr.rel (%p239) target = $region24
      $region23: #{closed_call.44} parent=11 // pred_region
        _
      $region24: #{closed_call.44} parent=11 // pred_fallthru
        _
      // Predicated region
      $region25: #{closed_call.44} parent=11 // pred_check
        %p242 = pneg %p150
      $region26: #{closed_call.44} parent=11 // pred_check_branch
        %244 = sbr.rel (%p242) target = $region28
      $region27: #{closed_call.44} parent=11 // pred_region
        _
      $region28: #{closed_call.44} parent=11 // pred_fallthru
        _
      // Predicated region
      $region29: #{closed_call.44} parent=11 // pred_check
        %p245 = pneg %p171
      $region30: #{closed_call.44} parent=11 // pred_check_branch
        %247 = sbr.rel (%p245) target = $region32
      $region31: #{closed_call.44} parent=11 // pred_region
        _
      $region32: #{closed_call.44} parent=11 // pred_fallthru
        _
      // Predicated region
      $region33: #{closed_call.44} parent=11 // pred_check
        %p248 = pneg %p192
      $region34: #{closed_call.44} parent=11 // pred_check_branch
        %250 = sbr.rel (%p248) target = $region36
      $region35: #{closed_call.44} parent=11 // pred_region
        _
      $region36: #{closed_call.44} parent=11 // pred_fallthru
        _
    $region12: #{closed_call.44} parent=5 // pred_fallthru
      _
    %p251 = scmp.lt.s32.totalorder %s14, 2
    // Predicated region
    $region37: #{closed_call.44} parent=5 // pred_check
      %p252 = pneg %p251
    $region38: #{closed_call.44} parent=5 // pred_check_branch
      %254 = sbr.rel (%p252) target = $region40
    $region39: #{closed_call.44} parent=5 // pred_region
      // Predicated region
      $region41: #{closed_call.44} parent=39 // pred_check
        %p255 = pneg %p34
      $region42: #{closed_call.44} parent=39 // pred_check_branch
        %257 = sbr.rel (%p255) target = $region44
      $region43: #{closed_call.44} parent=39 // pred_region
        %p258 = scmp.lt.s32.totalorder %s14, 1
        %s259 = scalar_select %p258, %s14, 1
        %s260 = smul.addr %s259, 8
        %s261 = scalar_lea.vmem %s0, %s260
      $region44: #{closed_call.44} parent=39 // pred_fallthru
        _
      // Predicated region
      $region45: #{closed_call.44} parent=39 // pred_check
        %p262 = pneg %p60
      $region46: #{closed_call.44} parent=39 // pred_check_branch
        %264 = sbr.rel (%p262) target = $region48
      $region47: #{closed_call.44} parent=39 // pred_region
        %p265 = scmp.lt.s32.totalorder %s14, 1
        %s266 = scalar_select %p265, %s14, 1
        %s267 = smul.addr %s266, 8
        %s268 = scalar_lea.vmem %s1, %s267
      $region48: #{closed_call.44} parent=39 // pred_fallthru
        _
    $region40: #{closed_call.44} parent=5 // pred_fallthru
      _
    %p269 = scmp.le.s32.totalorder 1, %s14
    %p270 = scmp.lt.s32.totalorder %s14, 3
    %p271 = pnand %p269, %p270
    %p272 = pneg %p271
    // Predicated region
    $region49: #{closed_call.44} parent=5 // pred_check
      _
    $region50: #{closed_call.44} parent=5 // pred_check_branch
      %274 = sbr.rel (%p271) target = $region52
    $region51: #{closed_call.44} parent=5 // pred_region
      %s275 = ssub.s32 %s14, 1
      %p276 = scmp.lt.s32.totalorder %s19, 1
      %s277 = scalar_select %p276, %s19, 1
      %s278 = smul.addr %s277, 8
      %s279 = scalar_lea.vmem %s0, %s278
      %p280 = pneg %p40
      %p281 = pneg %p37
      %p282 = scmp.lt.s32.totalorder %s19, 1
      %s283 = scalar_select %p282, %s19, 1
      %s284 = smul.addr %s283, 8
      %s285 = scalar_lea.vmem %s1, %s284
      %p286 = pneg %p66
      %p287 = pneg %p63
      %p288 = pneg %p87
      %p289 = pneg %p84
      %p290 = pneg %p108
      %p291 = pneg %p105
      %p292 = pneg %p129
      %p293 = pneg %p126
      %p294 = pneg %p150
      %p295 = pneg %p147
      %p296 = pneg %p171
      %p297 = pneg %p168
      %p298 = pneg %p192
      %p299 = pneg %p189
      %p300 = pneg %p218
      %p301 = pneg %p215
      %p302 = scmp.lt.s32.totalorder %s19, 1
      %s303 = scalar_select %p302, %s19, 1
      %s304 = smul.addr %s303, 8
      %s305 = scalar_lea.vmem %s8, %s304
      %p306 = scmp.lt.s32.totalorder %s19, 1
      %s307 = scalar_select %p306, %s19, 1
      %s308 = smul.addr %s307, 8
      %s309 = scalar_lea.vmem %s0, %s308
      %p310 = scmp.lt.s32.totalorder %s19, 1
      %s311 = scalar_select %p310, %s19, 1
      %s312 = smul.addr %s311, 8
      %s313 = scalar_lea.vmem %s1, %s312
      %p314 = scmp.lt.s32.totalorder %s19, 1
      %s315 = scalar_select %p314, %s19, 1
      %s316 = smul.addr %s315, 8
      %s317 = scalar_lea.vmem %s8, %s316
      %v318 = vld [vmem:[%s309] sm:$0x3f]
      %v319 = vld [vmem:[%s313] sm:$0xff]
      %v320 = vld [vmem:[%s2] sm:$0xff]
      %v321 = vld [vmem:[%s2 + $0x8] sm:$0xff]
      %v322 = vld [vmem:[%s2 + $0x10] sm:$0xff]
      %v323 = vld [vmem:[%s2 + $0x18] sm:$0xff]
      %v324 = vld [vmem:[%s3] sm:$0x1]
      %v326 = vlaneseq
      %v327 = vshrl.u32 %v326, 7
      %v328 = vsub.s32 0, %v327
      %v329 = vrot.slane %v324, %v328
      %vm331 = vcmask 261120
      %v333 = vsel %vm331, %v318, 0
      %335 = vmatprep.subr.mxu0 0.0
      %336 = vmatpush1.msra.mxu0 %v320
      %337 = vmatprep.subr.mxu0 0.0
      %338 = vmatpush1.msra.mxu0 %v321
      %339 = vmatprep.subr.mxu0 0.0
      %340 = vmatpush1.msra.mxu0 %v322
      %341 = vmatprep.subr.mxu0 0.0
      %342 = vmatpush1.msra.mxu0 %v323
      %343 = vmatprep.subr.mxu0 0.0
      %344 = vmatpush1.msra.mxu0 0.0
      %345 = vmatprep.subr.mxu0 0.0
      %346 = vmatpush1.msra.mxu0 0.0
      %347 = vmatprep.subr.mxu0 0.0
      %348 = vmatpush1.msra.mxu0 0.0
      %349 = vmatprep.subr.mxu0 0.0
      %350 = vmatpush1.msra.mxu0 0.0
      %351 = vmatprep.subr.mxu0 0.0
      %352 = vmatpush1.msra.mxu0 0.0
      %353 = vmatprep.subr.mxu0 0.0
      %354 = vmatpush1.msra.mxu0 0.0
      %355 = vmatprep.subr.mxu0 0.0
      %356 = vmatpush1.msra.mxu0 0.0
      %357 = vmatprep.subr.mxu0 0.0
      %358 = vmatpush1.msra.mxu0 0.0
      %359 = vmatprep.subr.mxu0 0.0
      %360 = vmatpush1.msra.mxu0 0.0
      %361 = vmatprep.subr.mxu0 0.0
      %362 = vmatpush1.msra.mxu0 0.0
      %363 = vmatprep.subr.mxu0 0.0
      %364 = vmatpush1.msra.mxu0 0.0
      %365 = vmatprep.subr.mxu0 0.0
      %366 = vmatpush1.msra.mxu0 0.0
      %367 = vmatprep.subr.mxu0 0.0
      %368 = vmatpush1.msra.mxu0 0.0
      %369 = vmatprep.subr.mxu0 0.0
      %370 = vmatpush1.msra.mxu0 0.0
      %371 = vmatprep.subr.mxu0 0.0
      %372 = vmatpush1.msra.mxu0 0.0
      %373 = vmatprep.subr.mxu0 0.0
      %374 = vmatpush1.msra.mxu0 0.0
      %375 = vmatprep.subr.mxu0 0.0
      %376 = vmatpush1.msra.mxu0 0.0
      %377 = vmatprep.subr.mxu0 0.0
      %378 = vmatpush1.msra.mxu0 0.0
      %379 = vmatprep.subr.mxu0 0.0
      %380 = vmatpush1.msra.mxu0 0.0
      %381 = vmatprep.subr.mxu0 0.0
      %382 = vmatpush1.msra.mxu0 0.0
      %383 = vmatprep.subr.mxu0 0.0
      %384 = vmatpush1.msra.mxu0 0.0
      %385 = vmatprep.subr.mxu0 0.0
      %386 = vmatpush1.msra.mxu0 0.0
      %387 = vmatprep.subr.mxu0 0.0
      %388 = vmatpush1.msra.mxu0 0.0
      %389 = vmatprep.subr.mxu0 0.0
      %390 = vmatpush1.msra.mxu0 0.0
      %391 = vmatprep.subr.mxu0 0.0
      %392 = vmatpush1.msra.mxu0 0.0
      %393 = vmatprep.subr.mxu0 0.0
      %394 = vmatpush1.msra.mxu0 0.0
      %395 = vmatprep.subr.mxu0 0.0
      %396 = vmatpush1.msra.mxu0 0.0
      %397 = vmatprep.subr.mxu0 0.0
      %398 = vmatpush1.msra.mxu0 0.0
      %399 = vmatprep.mubr.f32.mxu0 0.0
      %400 = vmatmul.mubr.f32.gmra.mrb[0].mxu0 %v333
      %v401 = vpop.f32.mrb[0].mxu0
      %v402 = vadd.f32 %v329, %v401
      %v403 = vpop.f32.mrb[0].mxu0
      %404 = vdwg.mxu0
      %vm405 = vcmask 64512
      %v407 = vsel %vm405, %v402, 0
      %v410 = vsel %vm405, %v319, 0
      %412 = vmatprep.subr.mxu0 0.0
      %413 = vmatpush1.xpose.msra.mxu0 %v410
      %414 = vmatprep.subr.mxu0 0.0
      %415 = vmatpush1.xpose.msra.mxu0 0.0
      %416 = vmatprep.subr.mxu0 0.0
      %417 = vmatpush1.xpose.msra.mxu0 0.0
      %418 = vmatprep.subr.mxu0 0.0
      %419 = vmatpush1.xpose.msra.mxu0 0.0
      %420 = vmatprep.subr.mxu0 0.0
      %421 = vmatpush1.xpose.msra.mxu0 0.0
      %422 = vmatprep.subr.mxu0 0.0
      %423 = vmatpush1.xpose.msra.mxu0 0.0
      %424 = vmatprep.subr.mxu0 0.0
      %425 = vmatpush1.xpose.msra.mxu0 0.0
      %426 = vmatprep.subr.mxu0 0.0
      %427 = vmatpush1.xpose.msra.mxu0 0.0
      %428 = vmatprep.subr.mxu0 0.0
      %429 = vmatpush1.xpose.msra.mxu0 0.0
      %430 = vmatprep.subr.mxu0 0.0
      %431 = vmatpush1.xpose.msra.mxu0 0.0
      %432 = vmatprep.subr.mxu0 0.0
      %433 = vmatpush1.xpose.msra.mxu0 0.0
      %434 = vmatprep.subr.mxu0 0.0
      %435 = vmatpush1.xpose.msra.mxu0 0.0
      %436 = vmatprep.subr.mxu0 0.0
      %437 = vmatpush1.xpose.msra.mxu0 0.0
      %438 = vmatprep.subr.mxu0 0.0
      %439 = vmatpush1.xpose.msra.mxu0 0.0
      %440 = vmatprep.subr.mxu0 0.0
      %441 = vmatpush1.xpose.msra.mxu0 0.0
      %442 = vmatprep.subr.mxu0 0.0
      %443 = vmatpush1.xpose.msra.mxu0 0.0
      %444 = vmatprep.subr.mxu0 0.0
      %445 = vmatpush1.xpose.msra.mxu0 0.0
      %446 = vmatprep.subr.mxu0 0.0
      %447 = vmatpush1.xpose.msra.mxu0 0.0
      %448 = vmatprep.subr.mxu0 0.0
      %449 = vmatpush1.xpose.msra.mxu0 0.0
      %450 = vmatprep.subr.mxu0 0.0
      %451 = vmatpush1.xpose.msra.mxu0 0.0
      %452 = vmatprep.subr.mxu0 0.0
      %453 = vmatpush1.xpose.msra.mxu0 0.0
      %454 = vmatprep.subr.mxu0 0.0
      %455 = vmatpush1.xpose.msra.mxu0 0.0
      %456 = vmatprep.subr.mxu0 0.0
      %457 = vmatpush1.xpose.msra.mxu0 0.0
      %458 = vmatprep.subr.mxu0 0.0
      %459 = vmatpush1.xpose.msra.mxu0 0.0
      %460 = vmatprep.subr.mxu0 0.0
      %461 = vmatpush1.xpose.msra.mxu0 0.0
      %462 = vmatprep.subr.mxu0 0.0
      %463 = vmatpush1.xpose.msra.mxu0 0.0
      %464 = vmatprep.subr.mxu0 0.0
      %465 = vmatpush1.xpose.msra.mxu0 0.0
      %466 = vmatprep.subr.mxu0 0.0
      %467 = vmatpush1.xpose.msra.mxu0 0.0
      %468 = vmatprep.subr.mxu0 0.0
      %469 = vmatpush1.xpose.msra.mxu0 0.0
      %470 = vmatprep.subr.mxu0 0.0
      %471 = vmatpush1.xpose.msra.mxu0 0.0
      %472 = vmatprep.subr.mxu0 0.0
      %473 = vmatpush1.xpose.msra.mxu0 0.0
      %474 = vmatprep.subr.mxu0 0.0
      %475 = vmatpush1.xpose.msra.mxu0 0.0
      %476 = vmatprep.mubr.f32.mxu0 0.0
      %477 = vmatmul.mubr.f32.gmra.mrb[0].mxu0 %v407
      %v478 = vpop.f32.mrb[0].mxu0
      %v479 = vadd.f32 0.0, %v478
      %v480 = vpop.f32.mrb[0].mxu0
      %481 = vdwg.mxu0
      %v482 = vmul.f32 %v479, 0.35355338
      %vm483 = vcmask 62464
      %v484 = vsel %vm483, %v482, -inf
      %485 = vmax.xlane.f32.xlu0 %v484
      %v486 = vpop.xlane.xlu0 %485
      %v487 = vsub.f32 %v482, %v486
      %v488 = vmul.f32 %v487, 1.442695
      %v489 = vpow.pop %v488
      %v490 = vsel %vm483, %v489, 0.0
      %491 = vadd.xlane.f32.xlu0 %v490
      %v492 = vpop.xlane.xlu0 %491
      %v493 = vrcp.pop %v492
      %v494 = vmul.f32 %v489, %v493
      %495 = vrot.lane.b32.xlu0 %v319, 96
      %v496 = vpop.permute.xlu0 %495
      %v499 = vsel %vm405, %v494, 0
      %501 = vmatprep.subr.mxu0 0.0
      %502 = vmatpush1.msra.mxu0 %v496
      %503 = vmatprep.subr.mxu0 0.0
      %504 = vmatpush1.msra.mxu0 0.0
      %505 = vmatprep.subr.mxu0 0.0
      %506 = vmatpush1.msra.mxu0 0.0
      %507 = vmatprep.subr.mxu0 0.0
      %508 = vmatpush1.msra.mxu0 0.0
      %509 = vmatprep.subr.mxu0 0.0
      %510 = vmatpush1.msra.mxu0 0.0
      %511 = vmatprep.subr.mxu0 0.0
      %512 = vmatpush1.msra.mxu0 0.0
      %513 = vmatprep.subr.mxu0 0.0
      %514 = vmatpush1.msra.mxu0 0.0
      %515 = vmatprep.subr.mxu0 0.0
      %516 = vmatpush1.msra.mxu0 0.0
      %517 = vmatprep.subr.mxu0 0.0
      %518 = vmatpush1.msra.mxu0 0.0
      %519 = vmatprep.subr.mxu0 0.0
      %520 = vmatpush1.msra.mxu0 0.0
      %521 = vmatprep.subr.mxu0 0.0
      %522 = vmatpush1.msra.mxu0 0.0
      %523 = vmatprep.subr.mxu0 0.0
      %524 = vmatpush1.msra.mxu0 0.0
      %525 = vmatprep.subr.mxu0 0.0
      %526 = vmatpush1.msra.mxu0 0.0
      %527 = vmatprep.subr.mxu0 0.0
      %528 = vmatpush1.msra.mxu0 0.0
      %529 = vmatprep.subr.mxu0 0.0
      %530 = vmatpush1.msra.mxu0 0.0
      %531 = vmatprep.subr.mxu0 0.0
      %532 = vmatpush1.msra.mxu0 0.0
      %533 = vmatprep.subr.mxu0 0.0
      %534 = vmatpush1.msra.mxu0 0.0
      %535 = vmatprep.subr.mxu0 0.0
      %536 = vmatpush1.msra.mxu0 0.0
      %537 = vmatprep.subr.mxu0 0.0
      %538 = vmatpush1.msra.mxu0 0.0
      %539 = vmatprep.subr.mxu0 0.0
      %540 = vmatpush1.msra.mxu0 0.0
      %541 = vmatprep.subr.mxu0 0.0
      %542 = vmatpush1.msra.mxu0 0.0
      %543 = vmatprep.subr.mxu0 0.0
      %544 = vmatpush1.msra.mxu0 0.0
      %545 = vmatprep.subr.mxu0 0.0
      %546 = vmatpush1.msra.mxu0 0.0
      %547 = vmatprep.subr.mxu0 0.0
      %548 = vmatpush1.msra.mxu0 0.0
      %549 = vmatprep.subr.mxu0 0.0
      %550 = vmatpush1.msra.mxu0 0.0
      %551 = vmatprep.subr.mxu0 0.0
      %552 = vmatpush1.msra.mxu0 0.0
      %553 = vmatprep.subr.mxu0 0.0
      %554 = vmatpush1.msra.mxu0 0.0
      %555 = vmatprep.subr.mxu0 0.0
      %556 = vmatpush1.msra.mxu0 0.0
      %557 = vmatprep.subr.mxu0 0.0
      %558 = vmatpush1.msra.mxu0 0.0
      %559 = vmatprep.subr.mxu0 0.0
      %560 = vmatpush1.msra.mxu0 0.0
      %561 = vmatprep.subr.mxu0 0.0
      %562 = vmatpush1.msra.mxu0 0.0
      %563 = vmatprep.subr.mxu0 0.0
      %564 = vmatpush1.msra.mxu0 0.0
      %565 = vmatprep.mubr.f32.mxu0 0.0
      %566 = vmatmul.mubr.f32.gmra.mrb[0].mxu0 %v499
      %v567 = vpop.f32.mrb[0].mxu0
      %v568 = vadd.f32 0.0, %v567
      %v569 = vpop.f32.mrb[0].mxu0
      %570 = vdwg.mxu0
      %v571 = vld [vmem:[%s4] sm:$0xff]
      %572 = vrot.lane.b32.xlu0 %v402, 120
      %v573 = vpop.permute.xlu0 %572
      %574 = vrot.lane.b32.xlu0 %v319, 120
      %v575 = vpop.permute.xlu0 %574
      %v576 = vsel %vm405, %v573, 0
      %v578 = vsel %vm405, %v575, 0
      %580 = vmatprep.subr.mxu0 0.0
      %581 = vmatpush1.xpose.msra.mxu0 %v578
      %582 = vmatprep.subr.mxu0 0.0
      %583 = vmatpush1.xpose.msra.mxu0 0.0
      %584 = vmatprep.subr.mxu0 0.0
      %585 = vmatpush1.xpose.msra.mxu0 0.0
      %586 = vmatprep.subr.mxu0 0.0
      %587 = vmatpush1.xpose.msra.mxu0 0.0
      %588 = vmatprep.subr.mxu0 0.0
      %589 = vmatpush1.xpose.msra.mxu0 0.0
      %590 = vmatprep.subr.mxu0 0.0
      %591 = vmatpush1.xpose.msra.mxu0 0.0
      %592 = vmatprep.subr.mxu0 0.0
      %593 = vmatpush1.xpose.msra.mxu0 0.0
      %594 = vmatprep.subr.mxu0 0.0
      %595 = vmatpush1.xpose.msra.mxu0 0.0
      %596 = vmatprep.subr.mxu0 0.0
      %597 = vmatpush1.xpose.msra.mxu0 0.0
      %598 = vmatprep.subr.mxu0 0.0
      %599 = vmatpush1.xpose.msra.mxu0 0.0
      %600 = vmatprep.subr.mxu0 0.0
      %601 = vmatpush1.xpose.msra.mxu0 0.0
      %602 = vmatprep.subr.mxu0 0.0
      %603 = vmatpush1.xpose.msra.mxu0 0.0
      %604 = vmatprep.subr.mxu0 0.0
      %605 = vmatpush1.xpose.msra.mxu0 0.0
      %606 = vmatprep.subr.mxu0 0.0
      %607 = vmatpush1.xpose.msra.mxu0 0.0
      %608 = vmatprep.subr.mxu0 0.0
      %609 = vmatpush1.xpose.msra.mxu0 0.0
      %610 = vmatprep.subr.mxu0 0.0
      %611 = vmatpush1.xpose.msra.mxu0 0.0
      %612 = vmatprep.subr.mxu0 0.0
      %613 = vmatpush1.xpose.msra.mxu0 0.0
      %614 = vmatprep.subr.mxu0 0.0
      %615 = vmatpush1.xpose.msra.mxu0 0.0
      %616 = vmatprep.subr.mxu0 0.0
      %617 = vmatpush1.xpose.msra.mxu0 0.0
      %618 = vmatprep.subr.mxu0 0.0
      %619 = vmatpush1.xpose.msra.mxu0 0.0
      %620 = vmatprep.subr.mxu0 0.0
      %621 = vmatpush1.xpose.msra.mxu0 0.0
      %622 = vmatprep.subr.mxu0 0.0
      %623 = vmatpush1.xpose.msra.mxu0 0.0
      %624 = vmatprep.subr.mxu0 0.0
      %625 = vmatpush1.xpose.msra.mxu0 0.0
      %626 = vmatprep.subr.mxu0 0.0
      %627 = vmatpush1.xpose.msra.mxu0 0.0
      %628 = vmatprep.subr.mxu0 0.0
      %629 = vmatpush1.xpose.msra.mxu0 0.0
      %630 = vmatprep.subr.mxu0 0.0
      %631 = vmatpush1.xpose.msra.mxu0 0.0
      %632 = vmatprep.subr.mxu0 0.0
      %633 = vmatpush1.xpose.msra.mxu0 0.0
      %634 = vmatprep.subr.mxu0 0.0
      %635 = vmatpush1.xpose.msra.mxu0 0.0
      %636 = vmatprep.subr.mxu0 0.0
      %637 = vmatpush1.xpose.msra.mxu0 0.0
      %638 = vmatprep.subr.mxu0 0.0
      %639 = vmatpush1.xpose.msra.mxu0 0.0
      %640 = vmatprep.subr.mxu0 0.0
      %641 = vmatpush1.xpose.msra.mxu0 0.0
      %642 = vmatprep.subr.mxu0 0.0
      %643 = vmatpush1.xpose.msra.mxu0 0.0
      %644 = vmatprep.mubr.f32.mxu0 0.0
      %645 = vmatmul.mubr.f32.gmra.mrb[0].mxu0 %v576
      %v646 = vpop.f32.mrb[0].mxu0
      %v647 = vadd.f32 0.0, %v646
      %v648 = vpop.f32.mrb[0].mxu0
      %649 = vdwg.mxu0
      %v650 = vmul.f32 %v647, 0.35355338
      %v651 = vsel %vm483, %v650, -inf
      %652 = vmax.xlane.f32.xlu0 %v651
      %v653 = vpop.xlane.xlu0 %652
      %v654 = vsub.f32 %v650, %v653
      %v655 = vmul.f32 %v654, 1.442695
      %v656 = vpow.pop %v655
      %v657 = vsel %vm483, %v656, 0.0
      %658 = vadd.xlane.f32.xlu0 %v657
      %v659 = vpop.xlane.xlu0 %658
      %v660 = vrcp.pop %v659
      %v661 = vmul.f32 %v656, %v660
      %662 = vrot.lane.b32.xlu0 %v319, 88
      %v663 = vpop.permute.xlu0 %662
      %v666 = vsel %vm405, %v661, 0
      %668 = vmatprep.subr.mxu0 0.0
      %669 = vmatpush1.msra.mxu0 %v663
      %670 = vmatprep.subr.mxu0 0.0
      %671 = vmatpush1.msra.mxu0 0.0
      %672 = vmatprep.subr.mxu0 0.0
      %673 = vmatpush1.msra.mxu0 0.0
      %674 = vmatprep.subr.mxu0 0.0
      %675 = vmatpush1.msra.mxu0 0.0
      %676 = vmatprep.subr.mxu0 0.0
      %677 = vmatpush1.msra.mxu0 0.0
      %678 = vmatprep.subr.mxu0 0.0
      %679 = vmatpush1.msra.mxu0 0.0
      %680 = vmatprep.subr.mxu0 0.0
      %681 = vmatpush1.msra.mxu0 0.0
      %682 = vmatprep.subr.mxu0 0.0
      %683 = vmatpush1.msra.mxu0 0.0
      %684 = vmatprep.subr.mxu0 0.0
      %685 = vmatpush1.msra.mxu0 0.0
      %686 = vmatprep.subr.mxu0 0.0
      %687 = vmatpush1.msra.mxu0 0.0
      %688 = vmatprep.subr.mxu0 0.0
      %689 = vmatpush1.msra.mxu0 0.0
      %690 = vmatprep.subr.mxu0 0.0
      %691 = vmatpush1.msra.mxu0 0.0
      %692 = vmatprep.subr.mxu0 0.0
      %693 = vmatpush1.msra.mxu0 0.0
      %694 = vmatprep.subr.mxu0 0.0
      %695 = vmatpush1.msra.mxu0 0.0
      %696 = vmatprep.subr.mxu0 0.0
      %697 = vmatpush1.msra.mxu0 0.0
      %698 = vmatprep.subr.mxu0 0.0
      %699 = vmatpush1.msra.mxu0 0.0
      %700 = vmatprep.subr.mxu0 0.0
      %701 = vmatpush1.msra.mxu0 0.0
      %702 = vmatprep.subr.mxu0 0.0
      %703 = vmatpush1.msra.mxu0 0.0
      %704 = vmatprep.subr.mxu0 0.0
      %705 = vmatpush1.msra.mxu0 0.0
      %706 = vmatprep.subr.mxu0 0.0
      %707 = vmatpush1.msra.mxu0 0.0
      %708 = vmatprep.subr.mxu0 0.0
      %709 = vmatpush1.msra.mxu0 0.0
      %710 = vmatprep.subr.mxu0 0.0
      %711 = vmatpush1.msra.mxu0 0.0
      %712 = vmatprep.subr.mxu0 0.0
      %713 = vmatpush1.msra.mxu0 0.0
      %714 = vmatprep.subr.mxu0 0.0
      %715 = vmatpush1.msra.mxu0 0.0
      %716 = vmatprep.subr.mxu0 0.0
      %717 = vmatpush1.msra.mxu0 0.0
      %718 = vmatprep.subr.mxu0 0.0
      %719 = vmatpush1.msra.mxu0 0.0
      %720 = vmatprep.subr.mxu0 0.0
      %721 = vmatpush1.msra.mxu0 0.0
      %722 = vmatprep.subr.mxu0 0.0
      %723 = vmatpush1.msra.mxu0 0.0
      %724 = vmatprep.subr.mxu0 0.0
      %725 = vmatpush1.msra.mxu0 0.0
      %726 = vmatprep.subr.mxu0 0.0
      %727 = vmatpush1.msra.mxu0 0.0
      %728 = vmatprep.subr.mxu0 0.0
      %729 = vmatpush1.msra.mxu0 0.0
      %730 = vmatprep.subr.mxu0 0.0
      %731 = vmatpush1.msra.mxu0 0.0
      %732 = vmatprep.mubr.f32.mxu0 0.0
      %733 = vmatmul.mubr.f32.gmra.mrb[0].mxu0 %v666
      %v734 = vpop.f32.mrb[0].mxu0
      %v735 = vadd.f32 0.0, %v734
      %v736 = vpop.f32.mrb[0].mxu0
      %737 = vdwg.mxu0
      %v738 = vld [vmem:[%s4 + $0x8] sm:$0xff]
      %v740 = vsel %vm405, %v735, 0
      %742 = vmatprep.subr.mxu0 0.0
      %743 = vmatpush1.msra.mxu0 %v738
      %744 = vmatprep.subr.mxu0 0.0
      %745 = vmatpush1.msra.mxu0 0.0
      %746 = vmatprep.subr.mxu0 0.0
      %747 = vmatpush1.msra.mxu0 0.0
      %748 = vmatprep.subr.mxu0 0.0
      %749 = vmatpush1.msra.mxu0 0.0
      %750 = vmatprep.subr.mxu0 0.0
      %751 = vmatpush1.msra.mxu0 0.0
      %752 = vmatprep.subr.mxu0 0.0
      %753 = vmatpush1.msra.mxu0 0.0
      %754 = vmatprep.subr.mxu0 0.0
      %755 = vmatpush1.msra.mxu0 0.0
      %756 = vmatprep.subr.mxu0 0.0
      %757 = vmatpush1.msra.mxu0 0.0
      %758 = vmatprep.subr.mxu0 0.0
      %759 = vmatpush1.msra.mxu0 0.0
      %760 = vmatprep.subr.mxu0 0.0
      %761 = vmatpush1.msra.mxu0 0.0
      %762 = vmatprep.subr.mxu0 0.0
      %763 = vmatpush1.msra.mxu0 0.0
      %764 = vmatprep.subr.mxu0 0.0
      %765 = vmatpush1.msra.mxu0 0.0
      %766 = vmatprep.subr.mxu0 0.0
      %767 = vmatpush1.msra.mxu0 0.0
      %768 = vmatprep.subr.mxu0 0.0
      %769 = vmatpush1.msra.mxu0 0.0
      %770 = vmatprep.subr.mxu0 0.0
      %771 = vmatpush1.msra.mxu0 0.0
      %772 = vmatprep.subr.mxu0 0.0
      %773 = vmatpush1.msra.mxu0 0.0
      %774 = vmatprep.subr.mxu0 0.0
      %775 = vmatpush1.msra.mxu0 0.0
      %776 = vmatprep.subr.mxu0 0.0
      %777 = vmatpush1.msra.mxu0 0.0
      %778 = vmatprep.subr.mxu0 0.0
      %779 = vmatpush1.msra.mxu0 0.0
      %780 = vmatprep.subr.mxu0 0.0
      %781 = vmatpush1.msra.mxu0 0.0
      %782 = vmatprep.subr.mxu0 0.0
      %783 = vmatpush1.msra.mxu0 0.0
      %784 = vmatprep.subr.mxu0 0.0
      %785 = vmatpush1.msra.mxu0 0.0
      %786 = vmatprep.subr.mxu0 0.0
      %787 = vmatpush1.msra.mxu0 0.0
      %788 = vmatprep.subr.mxu0 0.0
      %789 = vmatpush1.msra.mxu0 0.0
      %790 = vmatprep.subr.mxu0 0.0
      %791 = vmatpush1.msra.mxu0 0.0
      %792 = vmatprep.subr.mxu0 0.0
      %793 = vmatpush1.msra.mxu0 0.0
      %794 = vmatprep.subr.mxu0 0.0
      %795 = vmatpush1.msra.mxu0 0.0
      %796 = vmatprep.subr.mxu0 0.0
      %797 = vmatpush1.msra.mxu0 0.0
      %798 = vmatprep.subr.mxu0 0.0
      %799 = vmatpush1.msra.mxu0 0.0
      %800 = vmatprep.subr.mxu0 0.0
      %801 = vmatpush1.msra.mxu0 0.0
      %802 = vmatprep.subr.mxu0 0.0
      %803 = vmatpush1.msra.mxu0 0.0
      %804 = vmatprep.subr.mxu0 0.0
      %805 = vmatpush1.msra.mxu0 0.0
      %806 = vmatprep.mubr.f32.mxu0 0.0
      %807 = vmatmul.mubr.f32.gmra.mrb[0].mxu0 %v740
      %v808 = vpop.f32.mrb[0].mxu0
      %v809 = vadd.f32 0.0, %v808
      %v810 = vpop.f32.mrb[0].mxu0
      %811 = vdwg.mxu0
      %v813 = vsel %vm405, %v568, 0
      %815 = vmatprep.subr.mxu0 0.0
      %816 = vmatpush1.msra.mxu0 %v571
      %817 = vmatprep.subr.mxu0 0.0
      %818 = vmatpush1.msra.mxu0 0.0
      %819 = vmatprep.subr.mxu0 0.0
      %820 = vmatpush1.msra.mxu0 0.0
      %821 = vmatprep.subr.mxu0 0.0
      %822 = vmatpush1.msra.mxu0 0.0
      %823 = vmatprep.subr.mxu0 0.0
      %824 = vmatpush1.msra.mxu0 0.0
      %825 = vmatprep.subr.mxu0 0.0
      %826 = vmatpush1.msra.mxu0 0.0
      %827 = vmatprep.subr.mxu0 0.0
      %828 = vmatpush1.msra.mxu0 0.0
      %829 = vmatprep.subr.mxu0 0.0
      %830 = vmatpush1.msra.mxu0 0.0
      %831 = vmatprep.subr.mxu0 0.0
      %832 = vmatpush1.msra.mxu0 0.0
      %833 = vmatprep.subr.mxu0 0.0
      %834 = vmatpush1.msra.mxu0 0.0
      %835 = vmatprep.subr.mxu0 0.0
      %836 = vmatpush1.msra.mxu0 0.0
      %837 = vmatprep.subr.mxu0 0.0
      %838 = vmatpush1.msra.mxu0 0.0
      %839 = vmatprep.subr.mxu0 0.0
      %840 = vmatpush1.msra.mxu0 0.0
      %841 = vmatprep.subr.mxu0 0.0
      %842 = vmatpush1.msra.mxu0 0.0
      %843 = vmatprep.subr.mxu0 0.0
      %844 = vmatpush1.msra.mxu0 0.0
      %845 = vmatprep.subr.mxu0 0.0
      %846 = vmatpush1.msra.mxu0 0.0
      %847 = vmatprep.subr.mxu0 0.0
      %848 = vmatpush1.msra.mxu0 0.0
      %849 = vmatprep.subr.mxu0 0.0
      %850 = vmatpush1.msra.mxu0 0.0
      %851 = vmatprep.subr.mxu0 0.0
      %852 = vmatpush1.msra.mxu0 0.0
      %853 = vmatprep.subr.mxu0 0.0
      %854 = vmatpush1.msra.mxu0 0.0
      %855 = vmatprep.subr.mxu0 0.0
      %856 = vmatpush1.msra.mxu0 0.0
      %857 = vmatprep.subr.mxu0 0.0
      %858 = vmatpush1.msra.mxu0 0.0
      %859 = vmatprep.subr.mxu0 0.0
      %860 = vmatpush1.msra.mxu0 0.0
      %861 = vmatprep.subr.mxu0 0.0
      %862 = vmatpush1.msra.mxu0 0.0
      %863 = vmatprep.subr.mxu0 0.0
      %864 = vmatpush1.msra.mxu0 0.0
      %865 = vmatprep.subr.mxu0 0.0
      %866 = vmatpush1.msra.mxu0 0.0
      %867 = vmatprep.subr.mxu0 0.0
      %868 = vmatpush1.msra.mxu0 0.0
      %869 = vmatprep.subr.mxu0 0.0
      %870 = vmatpush1.msra.mxu0 0.0
      %871 = vmatprep.subr.mxu0 0.0
      %872 = vmatpush1.msra.mxu0 0.0
      %873 = vmatprep.subr.mxu0 0.0
      %874 = vmatpush1.msra.mxu0 0.0
      %875 = vmatprep.subr.mxu0 0.0
      %876 = vmatpush1.msra.mxu0 0.0
      %877 = vmatprep.subr.mxu0 0.0
      %878 = vmatpush1.msra.mxu0 0.0
      %879 = vmatprep.mubr.f32.mxu0 0.0
      %880 = vmatmul.mubr.f32.gmra.mrb[0].mxu0 %v813
      %v881 = vpop.f32.mrb[0].mxu0
      %v882 = vadd.f32 %v809, %v881
      %v883 = vpop.f32.mrb[0].mxu0
      %884 = vdwg.mxu0
      %885 = vrot.lane.b32.xlu0 %v402, 112
      %v886 = vpop.permute.xlu0 %885
      %887 = vrot.lane.b32.xlu0 %v319, 112
      %v888 = vpop.permute.xlu0 %887
      %v889 = vsel %vm405, %v886, 0
      %v891 = vsel %vm405, %v888, 0
      %893 = vmatprep.subr.mxu0 0.0
      %894 = vmatpush1.xpose.msra.mxu0 %v891
      %895 = vmatprep.subr.mxu0 0.0
      %896 = vmatpush1.xpose.msra.mxu0 0.0
      %897 = vmatprep.subr.mxu0 0.0
      %898 = vmatpush1.xpose.msra.mxu0 0.0
      %899 = vmatprep.subr.mxu0 0.0
      %900 = vmatpush1.xpose.msra.mxu0 0.0
      %901 = vmatprep.subr.mxu0 0.0
      %902 = vmatpush1.xpose.msra.mxu0 0.0
      %903 = vmatprep.subr.mxu0 0.0
      %904 = vmatpush1.xpose.msra.mxu0 0.0
      %905 = vmatprep.subr.mxu0 0.0
      %906 = vmatpush1.xpose.msra.mxu0 0.0
      %907 = vmatprep.subr.mxu0 0.0
      %908 = vmatpush1.xpose.msra.mxu0 0.0
      %909 = vmatprep.subr.mxu0 0.0
      %910 = vmatpush1.xpose.msra.mxu0 0.0
      %911 = vmatprep.subr.mxu0 0.0
      %912 = vmatpush1.xpose.msra.mxu0 0.0
      %913 = vmatprep.subr.mxu0 0.0
      %914 = vmatpush1.xpose.msra.mxu0 0.0
      %915 = vmatprep.subr.mxu0 0.0
      %916 = vmatpush1.xpose.msra.mxu0 0.0
      %917 = vmatprep.subr.mxu0 0.0
      %918 = vmatpush1.xpose.msra.mxu0 0.0
      %919 = vmatprep.subr.mxu0 0.0
      %920 = vmatpush1.xpose.msra.mxu0 0.0
      %921 = vmatprep.subr.mxu0 0.0
      %922 = vmatpush1.xpose.msra.mxu0 0.0
      %923 = vmatprep.subr.mxu0 0.0
      %924 = vmatpush1.xpose.msra.mxu0 0.0
      %925 = vmatprep.subr.mxu0 0.0
      %926 = vmatpush1.xpose.msra.mxu0 0.0
      %927 = vmatprep.subr.mxu0 0.0
      %928 = vmatpush1.xpose.msra.mxu0 0.0
      %929 = vmatprep.subr.mxu0 0.0
      %930 = vmatpush1.xpose.msra.mxu0 0.0
      %931 = vmatprep.subr.mxu0 0.0
      %932 = vmatpush1.xpose.msra.mxu0 0.0
      %933 = vmatprep.subr.mxu0 0.0
      %934 = vmatpush1.xpose.msra.mxu0 0.0
      %935 = vmatprep.subr.mxu0 0.0
      %936 = vmatpush1.xpose.msra.mxu0 0.0
      %937 = vmatprep.subr.mxu0 0.0
      %938 = vmatpush1.xpose.msra.mxu0 0.0
      %939 = vmatprep.subr.mxu0 0.0
      %940 = vmatpush1.xpose.msra.mxu0 0.0
      %941 = vmatprep.subr.mxu0 0.0
      %942 = vmatpush1.xpose.msra.mxu0 0.0
      %943 = vmatprep.subr.mxu0 0.0
      %944 = vmatpush1.xpose.msra.mxu0 0.0
      %945 = vmatprep.subr.mxu0 0.0
      %946 = vmatpush1.xpose.msra.mxu0 0.0
      %947 = vmatprep.subr.mxu0 0.0
      %948 = vmatpush1.xpose.msra.mxu0 0.0
      %949 = vmatprep.subr.mxu0 0.0
      %950 = vmatpush1.xpose.msra.mxu0 0.0
      %951 = vmatprep.subr.mxu0 0.0
      %952 = vmatpush1.xpose.msra.mxu0 0.0
      %953 = vmatprep.subr.mxu0 0.0
      %954 = vmatpush1.xpose.msra.mxu0 0.0
      %955 = vmatprep.subr.mxu0 0.0
      %956 = vmatpush1.xpose.msra.mxu0 0.0
      %957 = vmatprep.mubr.f32.mxu0 0.0
      %958 = vmatmul.mubr.f32.gmra.mrb[0].mxu0 %v889
      %v959 = vpop.f32.mrb[0].mxu0
      %v960 = vadd.f32 0.0, %v959
      %v961 = vpop.f32.mrb[0].mxu0
      %962 = vdwg.mxu0
      %v963 = vmul.f32 %v960, 0.35355338
      %v964 = vsel %vm483, %v963, -inf
      %965 = vmax.xlane.f32.xlu0 %v964
      %v966 = vpop.xlane.xlu0 %965
      %v967 = vsub.f32 %v963, %v966
      %v968 = vmul.f32 %v967, 1.442695
      %v969 = vpow.pop %v968
      %v970 = vsel %vm483, %v969, 0.0
      %971 = vadd.xlane.f32.xlu0 %v970
      %v972 = vpop.xlane.xlu0 %971
      %v973 = vrcp.pop %v972
      %v974 = vmul.f32 %v969, %v973
      %975 = vrot.lane.b32.xlu0 %v319, 80
      %v976 = vpop.permute.xlu0 %975
      %v979 = vsel %vm405, %v974, 0
      %981 = vmatprep.subr.mxu0 0.0
      %982 = vmatpush1.msra.mxu0 %v976
      %983 = vmatprep.subr.mxu0 0.0
      %984 = vmatpush1.msra.mxu0 0.0
      %985 = vmatprep.subr.mxu0 0.0
      %986 = vmatpush1.msra.mxu0 0.0
      %987 = vmatprep.subr.mxu0 0.0
      %988 = vmatpush1.msra.mxu0 0.0
      %989 = vmatprep.subr.mxu0 0.0
      %990 = vmatpush1.msra.mxu0 0.0
      %991 = vmatprep.subr.mxu0 0.0
      %992 = vmatpush1.msra.mxu0 0.0
      %993 = vmatprep.subr.mxu0 0.0
      %994 = vmatpush1.msra.mxu0 0.0
      %995 = vmatprep.subr.mxu0 0.0
      %996 = vmatpush1.msra.mxu0 0.0
      %997 = vmatprep.subr.mxu0 0.0
      %998 = vmatpush1.msra.mxu0 0.0
      %999 = vmatprep.subr.mxu0 0.0
      %1000 = vmatpush1.msra.mxu0 0.0
      %1001 = vmatprep.subr.mxu0 0.0
      %1002 = vmatpush1.msra.mxu0 0.0
      %1003 = vmatprep.subr.mxu0 0.0
      %1004 = vmatpush1.msra.mxu0 0.0
      %1005 = vmatprep.subr.mxu0 0.0
      %1006 = vmatpush1.msra.mxu0 0.0
      %1007 = vmatprep.subr.mxu0 0.0
      %1008 = vmatpush1.msra.mxu0 0.0
      %1009 = vmatprep.subr.mxu0 0.0
      %1010 = vmatpush1.msra.mxu0 0.0
      %1011 = vmatprep.subr.mxu0 0.0
      %1012 = vmatpush1.msra.mxu0 0.0
      %1013 = vmatprep.subr.mxu0 0.0
      %1014 = vmatpush1.msra.mxu0 0.0
      %1015 = vmatprep.subr.mxu0 0.0
      %1016 = vmatpush1.msra.mxu0 0.0
      %1017 = vmatprep.subr.mxu0 0.0
      %1018 = vmatpush1.msra.mxu0 0.0
      %1019 = vmatprep.subr.mxu0 0.0
      %1020 = vmatpush1.msra.mxu0 0.0
      %1021 = vmatprep.subr.mxu0 0.0
      %1022 = vmatpush1.msra.mxu0 0.0
      %1023 = vmatprep.subr.mxu0 0.0
      %1024 = vmatpush1.msra.mxu0 0.0
      %1025 = vmatprep.subr.mxu0 0.0
      %1026 = vmatpush1.msra.mxu0 0.0
      %1027 = vmatprep.subr.mxu0 0.0
      %1028 = vmatpush1.msra.mxu0 0.0
      %1029 = vmatprep.subr.mxu0 0.0
      %1030 = vmatpush1.msra.mxu0 0.0
      %1031 = vmatprep.subr.mxu0 0.0
      %1032 = vmatpush1.msra.mxu0 0.0
      %1033 = vmatprep.subr.mxu0 0.0
      %1034 = vmatpush1.msra.mxu0 0.0
      %1035 = vmatprep.subr.mxu0 0.0
      %1036 = vmatpush1.msra.mxu0 0.0
      %1037 = vmatprep.subr.mxu0 0.0
      %1038 = vmatpush1.msra.mxu0 0.0
      %1039 = vmatprep.subr.mxu0 0.0
      %1040 = vmatpush1.msra.mxu0 0.0
      %1041 = vmatprep.subr.mxu0 0.0
      %1042 = vmatpush1.msra.mxu0 0.0
      %1043 = vmatprep.subr.mxu0 0.0
      %1044 = vmatpush1.msra.mxu0 0.0
      %1045 = vmatprep.mubr.f32.mxu0 0.0
      %1046 = vmatmul.mubr.f32.gmra.mrb[0].mxu0 %v979
      %v1047 = vpop.f32.mrb[0].mxu0
      %v1048 = vadd.f32 0.0, %v1047
      %v1049 = vpop.f32.mrb[0].mxu0
      %1050 = vdwg.mxu0
      %v1051 = vld [vmem:[%s4 + $0x10] sm:$0xff]
      %v1053 = vsel %vm405, %v1048, 0
      %1055 = vmatprep.subr.mxu0 0.0
      %1056 = vmatpush1.msra.mxu0 %v1051
      %1057 = vmatprep.subr.mxu0 0.0
      %1058 = vmatpush1.msra.mxu0 0.0
      %1059 = vmatprep.subr.mxu0 0.0
      %1060 = vmatpush1.msra.mxu0 0.0
      %1061 = vmatprep.subr.mxu0 0.0
      %1062 = vmatpush1.msra.mxu0 0.0
      %1063 = vmatprep.subr.mxu0 0.0
      %1064 = vmatpush1.msra.mxu0 0.0
      %1065 = vmatprep.subr.mxu0 0.0
      %1066 = vmatpush1.msra.mxu0 0.0
      %1067 = vmatprep.subr.mxu0 0.0
      %1068 = vmatpush1.msra.mxu0 0.0
      %1069 = vmatprep.subr.mxu0 0.0
      %1070 = vmatpush1.msra.mxu0 0.0
      %1071 = vmatprep.subr.mxu0 0.0
      %1072 = vmatpush1.msra.mxu0 0.0
      %1073 = vmatprep.subr.mxu0 0.0
      %1074 = vmatpush1.msra.mxu0 0.0
      %1075 = vmatprep.subr.mxu0 0.0
      %1076 = vmatpush1.msra.mxu0 0.0
      %1077 = vmatprep.subr.mxu0 0.0
      %1078 = vmatpush1.msra.mxu0 0.0
      %1079 = vmatprep.subr.mxu0 0.0
      %1080 = vmatpush1.msra.mxu0 0.0
      %1081 = vmatprep.subr.mxu0 0.0
      %1082 = vmatpush1.msra.mxu0 0.0
      %1083 = vmatprep.subr.mxu0 0.0
      %1084 = vmatpush1.msra.mxu0 0.0
      %1085 = vmatprep.subr.mxu0 0.0
      %1086 = vmatpush1.msra.mxu0 0.0
      %1087 = vmatprep.subr.mxu0 0.0
      %1088 = vmatpush1.msra.mxu0 0.0
      %1089 = vmatprep.subr.mxu0 0.0
      %1090 = vmatpush1.msra.mxu0 0.0
      %1091 = vmatprep.subr.mxu0 0.0
      %1092 = vmatpush1.msra.mxu0 0.0
      %1093 = vmatprep.subr.mxu0 0.0
      %1094 = vmatpush1.msra.mxu0 0.0
      %1095 = vmatprep.subr.mxu0 0.0
      %1096 = vmatpush1.msra.mxu0 0.0
      %1097 = vmatprep.subr.mxu0 0.0
      %1098 = vmatpush1.msra.mxu0 0.0
      %1099 = vmatprep.subr.mxu0 0.0
      %1100 = vmatpush1.msra.mxu0 0.0
      %1101 = vmatprep.subr.mxu0 0.0
      %1102 = vmatpush1.msra.mxu0 0.0
      %1103 = vmatprep.subr.mxu0 0.0
      %1104 = vmatpush1.msra.mxu0 0.0
      %1105 = vmatprep.subr.mxu0 0.0
      %1106 = vmatpush1.msra.mxu0 0.0
      %1107 = vmatprep.subr.mxu0 0.0
      %1108 = vmatpush1.msra.mxu0 0.0
      %1109 = vmatprep.subr.mxu0 0.0
      %1110 = vmatpush1.msra.mxu0 0.0
      %1111 = vmatprep.subr.mxu0 0.0
      %1112 = vmatpush1.msra.mxu0 0.0
      %1113 = vmatprep.subr.mxu0 0.0
      %1114 = vmatpush1.msra.mxu0 0.0
      %1115 = vmatprep.subr.mxu0 0.0
      %1116 = vmatpush1.msra.mxu0 0.0
      %1117 = vmatprep.subr.mxu0 0.0
      %1118 = vmatpush1.msra.mxu0 0.0
      %1119 = vmatprep.mubr.f32.mxu0 0.0
      %1120 = vmatmul.mubr.f32.gmra.mrb[0].mxu0 %v1053
      %v1121 = vpop.f32.mrb[0].mxu0
      %v1122 = vadd.f32 0.0, %v1121
      %v1123 = vpop.f32.mrb[0].mxu0
      %1124 = vdwg.mxu0
      %v1125 = vadd.f32 %v882, %v1122
      %1126 = vrot.lane.b32.xlu0 %v402, 104
      %v1127 = vpop.permute.xlu0 %1126
      %1128 = vrot.lane.b32.xlu0 %v319, 104
      %v1129 = vpop.permute.xlu0 %1128
      %v1130 = vsel %vm405, %v1127, 0
      %v1132 = vsel %vm405, %v1129, 0
      %1134 = vmatprep.subr.mxu0 0.0
      %1135 = vmatpush1.xpose.msra.mxu0 %v1132
      %1136 = vmatprep.subr.mxu0 0.0
      %1137 = vmatpush1.xpose.msra.mxu0 0.0
      %1138 = vmatprep.subr.mxu0 0.0
      %1139 = vmatpush1.xpose.msra.mxu0 0.0
      %1140 = vmatprep.subr.mxu0 0.0
      %1141 = vmatpush1.xpose.msra.mxu0 0.0
      %1142 = vmatprep.subr.mxu0 0.0
      %1143 = vmatpush1.xpose.msra.mxu0 0.0
      %1144 = vmatprep.subr.mxu0 0.0
      %1145 = vmatpush1.xpose.msra.mxu0 0.0
      %1146 = vmatprep.subr.mxu0 0.0
      %1147 = vmatpush1.xpose.msra.mxu0 0.0
      %1148 = vmatprep.subr.mxu0 0.0
      %1149 = vmatpush1.xpose.msra.mxu0 0.0
      %1150 = vmatprep.subr.mxu0 0.0
      %1151 = vmatpush1.xpose.msra.mxu0 0.0
      %1152 = vmatprep.subr.mxu0 0.0
      %1153 = vmatpush1.xpose.msra.mxu0 0.0
      %1154 = vmatprep.subr.mxu0 0.0
      %1155 = vmatpush1.xpose.msra.mxu0 0.0
      %1156 = vmatprep.subr.mxu0 0.0
      %1157 = vmatpush1.xpose.msra.mxu0 0.0
      %1158 = vmatprep.subr.mxu0 0.0
      %1159 = vmatpush1.xpose.msra.mxu0 0.0
      %1160 = vmatprep.subr.mxu0 0.0
      %1161 = vmatpush1.xpose.msra.mxu0 0.0
      %1162 = vmatprep.subr.mxu0 0.0
      %1163 = vmatpush1.xpose.msra.mxu0 0.0
      %1164 = vmatprep.subr.mxu0 0.0
      %1165 = vmatpush1.xpose.msra.mxu0 0.0
      %1166 = vmatprep.subr.mxu0 0.0
      %1167 = vmatpush1.xpose.msra.mxu0 0.0
      %1168 = vmatprep.subr.mxu0 0.0
      %1169 = vmatpush1.xpose.msra.mxu0 0.0
      %1170 = vmatprep.subr.mxu0 0.0
      %1171 = vmatpush1.xpose.msra.mxu0 0.0
      %1172 = vmatprep.subr.mxu0 0.0
      %1173 = vmatpush1.xpose.msra.mxu0 0.0
      %1174 = vmatprep.subr.mxu0 0.0
      %1175 = vmatpush1.xpose.msra.mxu0 0.0
      %1176 = vmatprep.subr.mxu0 0.0
      %1177 = vmatpush1.xpose.msra.mxu0 0.0
      %1178 = vmatprep.subr.mxu0 0.0
      %1179 = vmatpush1.xpose.msra.mxu0 0.0
      %1180 = vmatprep.subr.mxu0 0.0
      %1181 = vmatpush1.xpose.msra.mxu0 0.0
      %1182 = vmatprep.subr.mxu0 0.0
      %1183 = vmatpush1.xpose.msra.mxu0 0.0
      %1184 = vmatprep.subr.mxu0 0.0
      %1185 = vmatpush1.xpose.msra.mxu0 0.0
      %1186 = vmatprep.subr.mxu0 0.0
      %1187 = vmatpush1.xpose.msra.mxu0 0.0
      %1188 = vmatprep.subr.mxu0 0.0
      %1189 = vmatpush1.xpose.msra.mxu0 0.0
      %1190 = vmatprep.subr.mxu0 0.0
      %1191 = vmatpush1.xpose.msra.mxu0 0.0
      %1192 = vmatprep.subr.mxu0 0.0
      %1193 = vmatpush1.xpose.msra.mxu0 0.0
      %1194 = vmatprep.subr.mxu0 0.0
      %1195 = vmatpush1.xpose.msra.mxu0 0.0
      %1196 = vmatprep.subr.mxu0 0.0
      %1197 = vmatpush1.xpose.msra.mxu0 0.0
      %1198 = vmatprep.mubr.f32.mxu0 0.0
      %1199 = vmatmul.mubr.f32.gmra.mrb[0].mxu0 %v1130
      %v1200 = vpop.f32.mrb[0].mxu0
      %v1201 = vadd.f32 0.0, %v1200
      %v1202 = vpop.f32.mrb[0].mxu0
      %1203 = vdwg.mxu0
      %v1204 = vmul.f32 %v1201, 0.35355338
      %v1205 = vsel %vm483, %v1204, -inf
      %1206 = vmax.xlane.f32.xlu0 %v1205
      %v1207 = vpop.xlane.xlu0 %1206
      %v1208 = vsub.f32 %v1204, %v1207
      %v1209 = vmul.f32 %v1208, 1.442695
      %v1210 = vpow.pop %v1209
      %v1211 = vsel %vm483, %v1210, 0.0
      %1212 = vadd.xlane.f32.xlu0 %v1211
      %v1213 = vpop.xlane.xlu0 %1212
      %v1214 = vrcp.pop %v1213
      %v1215 = vmul.f32 %v1210, %v1214
      %1216 = vrot.lane.b32.xlu0 %v319, 72
      %v1217 = vpop.permute.xlu0 %1216
      %v1220 = vsel %vm405, %v1215, 0
      %1222 = vmatprep.subr.mxu0 0.0
      %1223 = vmatpush1.msra.mxu0 %v1217
      %1224 = vmatprep.subr.mxu0 0.0
      %1225 = vmatpush1.msra.mxu0 0.0
      %1226 = vmatprep.subr.mxu0 0.0
      %1227 = vmatpush1.msra.mxu0 0.0
      %1228 = vmatprep.subr.mxu0 0.0
      %1229 = vmatpush1.msra.mxu0 0.0
      %1230 = vmatprep.subr.mxu0 0.0
      %1231 = vmatpush1.msra.mxu0 0.0
      %1232 = vmatprep.subr.mxu0 0.0
      %1233 = vmatpush1.msra.mxu0 0.0
      %1234 = vmatprep.subr.mxu0 0.0
      %1235 = vmatpush1.msra.mxu0 0.0
      %1236 = vmatprep.subr.mxu0 0.0
      %1237 = vmatpush1.msra.mxu0 0.0
      %1238 = vmatprep.subr.mxu0 0.0
      %1239 = vmatpush1.msra.mxu0 0.0
      %1240 = vmatprep.subr.mxu0 0.0
      %1241 = vmatpush1.msra.mxu0 0.0
      %1242 = vmatprep.subr.mxu0 0.0
      %1243 = vmatpush1.msra.mxu0 0.0
      %1244 = vmatprep.subr.mxu0 0.0
      %1245 = vmatpush1.msra.mxu0 0.0
      %1246 = vmatprep.subr.mxu0 0.0
      %1247 = vmatpush1.msra.mxu0 0.0
      %1248 = vmatprep.subr.mxu0 0.0
      %1249 = vmatpush1.msra.mxu0 0.0
      %1250 = vmatprep.subr.mxu0 0.0
      %1251 = vmatpush1.msra.mxu0 0.0
      %1252 = vmatprep.subr.mxu0 0.0
      %1253 = vmatpush1.msra.mxu0 0.0
      %1254 = vmatprep.subr.mxu0 0.0
      %1255 = vmatpush1.msra.mxu0 0.0
      %1256 = vmatprep.subr.mxu0 0.0
      %1257 = vmatpush1.msra.mxu0 0.0
      %1258 = vmatprep.subr.mxu0 0.0
      %1259 = vmatpush1.msra.mxu0 0.0
      %1260 = vmatprep.subr.mxu0 0.0
      %1261 = vmatpush1.msra.mxu0 0.0
      %1262 = vmatprep.subr.mxu0 0.0
      %1263 = vmatpush1.msra.mxu0 0.0
      %1264 = vmatprep.subr.mxu0 0.0
      %1265 = vmatpush1.msra.mxu0 0.0
      %1266 = vmatprep.subr.mxu0 0.0
      %1267 = vmatpush1.msra.mxu0 0.0
      %1268 = vmatprep.subr.mxu0 0.0
      %1269 = vmatpush1.msra.mxu0 0.0
      %1270 = vmatprep.subr.mxu0 0.0
      %1271 = vmatpush1.msra.mxu0 0.0
      %1272 = vmatprep.subr.mxu0 0.0
      %1273 = vmatpush1.msra.mxu0 0.0
      %1274 = vmatprep.subr.mxu0 0.0
      %1275 = vmatpush1.msra.mxu0 0.0
      %1276 = vmatprep.subr.mxu0 0.0
      %1277 = vmatpush1.msra.mxu0 0.0
      %1278 = vmatprep.subr.mxu0 0.0
      %1279 = vmatpush1.msra.mxu0 0.0
      %1280 = vmatprep.subr.mxu0 0.0
      %1281 = vmatpush1.msra.mxu0 0.0
      %1282 = vmatprep.subr.mxu0 0.0
      %1283 = vmatpush1.msra.mxu0 0.0
      %1284 = vmatprep.subr.mxu0 0.0
      %1285 = vmatpush1.msra.mxu0 0.0
      %1286 = vmatprep.mubr.f32.mxu0 0.0
      %1287 = vmatmul.mubr.f32.gmra.mrb[0].mxu0 %v1220
      %v1288 = vpop.f32.mrb[0].mxu0
      %v1289 = vadd.f32 0.0, %v1288
      %v1290 = vpop.f32.mrb[0].mxu0
      %1291 = vdwg.mxu0
      %v1292 = vld [vmem:[%s4 + $0x18] sm:$0xff]
      %v1294 = vsel %vm405, %v1289, 0
      %1296 = vmatprep.subr.mxu0 0.0
      %1297 = vmatpush1.msra.mxu0 %v1292
      %1298 = vmatprep.subr.mxu0 0.0
      %1299 = vmatpush1.msra.mxu0 0.0
      %1300 = vmatprep.subr.mxu0 0.0
      %1301 = vmatpush1.msra.mxu0 0.0
      %1302 = vmatprep.subr.mxu0 0.0
      %1303 = vmatpush1.msra.mxu0 0.0
      %1304 = vmatprep.subr.mxu0 0.0
      %1305 = vmatpush1.msra.mxu0 0.0
      %1306 = vmatprep.subr.mxu0 0.0
      %1307 = vmatpush1.msra.mxu0 0.0
      %1308 = vmatprep.subr.mxu0 0.0
      %1309 = vmatpush1.msra.mxu0 0.0
      %1310 = vmatprep.subr.mxu0 0.0
      %1311 = vmatpush1.msra.mxu0 0.0
      %1312 = vmatprep.subr.mxu0 0.0
      %1313 = vmatpush1.msra.mxu0 0.0
      %1314 = vmatprep.subr.mxu0 0.0
      %1315 = vmatpush1.msra.mxu0 0.0
      %1316 = vmatprep.subr.mxu0 0.0
      %1317 = vmatpush1.msra.mxu0 0.0
      %1318 = vmatprep.subr.mxu0 0.0
      %1319 = vmatpush1.msra.mxu0 0.0
      %1320 = vmatprep.subr.mxu0 0.0
      %1321 = vmatpush1.msra.mxu0 0.0
      %1322 = vmatprep.subr.mxu0 0.0
      %1323 = vmatpush1.msra.mxu0 0.0
      %1324 = vmatprep.subr.mxu0 0.0
      %1325 = vmatpush1.msra.mxu0 0.0
      %1326 = vmatprep.subr.mxu0 0.0
      %1327 = vmatpush1.msra.mxu0 0.0
      %1328 = vmatprep.subr.mxu0 0.0
      %1329 = vmatpush1.msra.mxu0 0.0
      %1330 = vmatprep.subr.mxu0 0.0
      %1331 = vmatpush1.msra.mxu0 0.0
      %1332 = vmatprep.subr.mxu0 0.0
      %1333 = vmatpush1.msra.mxu0 0.0
      %1334 = vmatprep.subr.mxu0 0.0
      %1335 = vmatpush1.msra.mxu0 0.0
      %1336 = vmatprep.subr.mxu0 0.0
      %1337 = vmatpush1.msra.mxu0 0.0
      %1338 = vmatprep.subr.mxu0 0.0
      %1339 = vmatpush1.msra.mxu0 0.0
      %1340 = vmatprep.subr.mxu0 0.0
      %1341 = vmatpush1.msra.mxu0 0.0
      %1342 = vmatprep.subr.mxu0 0.0
      %1343 = vmatpush1.msra.mxu0 0.0
      %1344 = vmatprep.subr.mxu0 0.0
      %1345 = vmatpush1.msra.mxu0 0.0
      %1346 = vmatprep.subr.mxu0 0.0
      %1347 = vmatpush1.msra.mxu0 0.0
      %1348 = vmatprep.subr.mxu0 0.0
      %1349 = vmatpush1.msra.mxu0 0.0
      %1350 = vmatprep.subr.mxu0 0.0
      %1351 = vmatpush1.msra.mxu0 0.0
      %1352 = vmatprep.subr.mxu0 0.0
      %1353 = vmatpush1.msra.mxu0 0.0
      %1354 = vmatprep.subr.mxu0 0.0
      %1355 = vmatpush1.msra.mxu0 0.0
      %1356 = vmatprep.subr.mxu0 0.0
      %1357 = vmatpush1.msra.mxu0 0.0
      %1358 = vmatprep.subr.mxu0 0.0
      %1359 = vmatpush1.msra.mxu0 0.0
      %1360 = vmatprep.mubr.f32.mxu0 0.0
      %1361 = vmatmul.mubr.f32.gmra.mrb[0].mxu0 %v1294
      %v1362 = vpop.f32.mrb[0].mxu0
      %v1363 = vadd.f32 0.0, %v1362
      %v1364 = vpop.f32.mrb[0].mxu0
      %1365 = vdwg.mxu0
      %v1366 = vadd.f32 %v1125, %v1363
      %v1367 = vadd.f32 %v318, %v1366
      %v1368 = vld [vmem:[%s5] sm:$0x1]
      %v1370 = vlaneseq
      %v1371 = vshrl.u32 %v1370, 7
      %v1372 = vsub.s32 0, %v1371
      %v1373 = vrot.slane %v1368, %v1372
      %v1375 = vadd.f32 %v1367, %v1373
      %v1376 = vld [vmem:[%s6] sm:$0x1]
      %v1377 = vld [vmem:[%s7] sm:$0x1]
      %vm1378 = vcmask 259072
      %v1379 = vsel %vm1378, %v1375, 0.0
      %1380 = vadd.xlane.f32.xlu0 %v1379
      %v1381 = vpop.xlane.xlu0 %1380
      %v1382 = vrcp.pop 32.0
      %v1383 = vmul.f32 %v1381, %v1382
      %v1384 = vsub.f32 %v1375, %v1383
      %v1385 = vmul.f32 %v1384, %v1384
      %v1386 = vsel %vm1378, %v1385, 0.0
      %1387 = vadd.xlane.f32.xlu0 %v1386
      %v1388 = vpop.xlane.xlu0 %1387
      %v1389 = vmul.f32 %v1388, %v1382
      %v1390 = vadd.f32 %v1389, 1e-05
      %v1391 = vrsqrt.pop %v1390
      %v1392 = vmul.f32 %v1384, %v1391
      %v1394 = vlaneseq
      %v1395 = vshrl.u32 %v1394, 7
      %v1396 = vsub.s32 0, %v1395
      %v1397 = vrot.slane %v1376, %v1396
      %v1399 = vmul.f32 %v1392, %v1397
      %v1401 = vlaneseq
      %v1402 = vshrl.u32 %v1401, 7
      %v1403 = vsub.s32 0, %v1402
      %v1404 = vrot.slane %v1377, %v1403
      %v1406 = vadd.f32 %v1399, %v1404
      %1407 = vst.msk [vmem:[%s317] sm:$0x3f] %vm1378, %v1406
      %p1408 = scmp.lt.s32.totalorder %s19, 1
      %s1409 = scalar_select %p1408, %s19, 1
      %s1410 = smul.addr %s1409, 8
      %s1411 = scalar_lea.vmem %s8, %s1410
      // Predicated region
      $region53: #{closed_call.44} parent=51 // pred_check
        %p1412 = pneg %p215
      $region54: #{closed_call.44} parent=51 // pred_check_branch
        %1414 = sbr.rel (%p1412) target = $region56
      $region55: #{closed_call.44} parent=51 // pred_region
        _
      $region56: #{closed_call.44} parent=51 // pred_fallthru
        _
    $region52: #{closed_call.44} parent=5 // pred_fallthru
      _
    %p1415 = scmp.le.s32.totalorder 2, %s14
    // Predicated region
    $region57: #{closed_call.44} parent=5 // pred_check
      %p1416 = pneg %p1415
    $region58: #{closed_call.44} parent=5 // pred_check_branch
      %1418 = sbr.rel (%p1416) target = $region60
    $region59: #{closed_call.44} parent=5 // pred_region
      %s1419 = ssub.s32 %s14, 2
      // Predicated region
      $region61: #{closed_call.44} parent=59 // pred_check
        %p1420 = pneg %p221
      $region62: #{closed_call.44} parent=59 // pred_check_branch
        %1422 = sbr.rel (%p1420) target = $region64
      $region63: #{closed_call.44} parent=59 // pred_region
        %p1423 = scmp.lt.s32.totalorder %s20, 1
        %s1424 = scalar_select %p1423, %s20, 1
        %s1425 = smul.addr %s1424, 8
        %s1426 = scalar_lea.vmem %s8, %s1425
      $region64: #{closed_call.44} parent=59 // pred_fallthru
        _
    $region60: #{closed_call.44} parent=5 // pred_fallthru
      _
  $region6: #{closed_call.44} parent=0 // loop_footer
    %s18 = sadd.s32 1, %s14
  $region7: #{closed_call.44} parent=0 // loop_footer_branch
    %13 = sbr.rel target = $region3
  $region8: #{closed_call.44} parent=0 // loop_exit
    _

</llo_original>
